<compile_context>
chip_gen: v6e
topology: v6e:2x2x1
jax: 0.10.0
libtpu: 0.0.40
codegen_flags: <defaults>
</compile_context>

<pallas_src>
import numpy as np
import jax
import jax.numpy as jnp
from jax.experimental import pallas as pl
from jax.experimental.pallas import tpu as pltpu


_MiB = 1024 * 1024
# Double-buffered pipeline working-set budget: safe on v7x (64 MiB physical),
# trivially safe on v5e/v6e (128 MiB physical).
_VMEM_PIPELINE_BUDGET_BYTES = 32 * _MiB
# Raise the scoped VMEM limit above the v5e 16 MiB default, stay under v7x's
# 64 MiB physical capacity with headroom.
_VMEM_LIMIT_BYTES = 48 * _MiB


# ----------------------------- Pallas kernels -------------------------------

def _abc_kernel_bias(x_ref, w_ref, b_ref, o_ref):
    # x_ref: (tile_p, J, B)  w_ref: (tile_p, K, J)  b_ref: (1, K, 1)
    # o_ref: (tile_p, K, B)
    acc = jnp.einsum(
        "pkj,pjb->pkb", w_ref[...], x_ref[...],
        preferred_element_type=jnp.float32,
    )
    o_ref[...] = (acc + b_ref[...].astype(jnp.float32)).astype(o_ref.dtype)


def _abc_kernel_nobias(x_ref, w_ref, o_ref):
    acc = jnp.einsum(
        "pkj,pjb->pkb", w_ref[...], x_ref[...],
        preferred_element_type=jnp.float32,
    )
    o_ref[...] = acc.astype(o_ref.dtype)


def _choose_tile_p(P, bytes_per_pixel, budget_bytes):
    """Largest divisor of P whose double-buffered footprint fits the budget,
    preferring a grid of length >= 2 (megacore sharding on v7x)."""
    divisors = [d for d in range(1, P + 1) if P % d == 0]
    fitting = [d for d in divisors if 2 * d * bytes_per_pixel <= budget_bytes]
    if not fitting:
        return 1
    multi = [d for d in fitting if P // d >= 2]
    return max(multi) if multi else max(fitting)


def abc_pixelwise_matmul(x_pjb, w_pkj, bias_1k1, *, use_bias,
                         out_dtype=jnp.float32):
    """x_pjb: (P, J, B); w_pkj: (P, K, J); bias_1k1: (1, K, 1).

    Returns (P, K, B) = per-pixel  W[p] @ x[p]  (+ bias)."""
    P, J, B = x_pjb.shape
    Pw, K, Jw = w_pkj.shape
    assert Pw == P and Jw == J

    out_itemsize = jnp.dtype(out_dtype).itemsize
    bytes_per_pixel = (J * B * x_pjb.dtype.itemsize
                       + K * J * w_pkj.dtype.itemsize
                       + K * B * out_itemsize)
    tile_p = _choose_tile_p(P, bytes_per_pixel, _VMEM_PIPELINE_BUDGET_BYTES)
    grid = (P // tile_p,)

    x_spec = pl.BlockSpec((tile_p, J, B), lambda p: (p, 0, 0))
    w_spec = pl.BlockSpec((tile_p, K, J), lambda p: (p, 0, 0))
    o_spec = pl.BlockSpec((tile_p, K, B), lambda p: (p, 0, 0))
    out_shape = jax.ShapeDtypeStruct((P, K, B), out_dtype)
    cparams = pltpu.CompilerParams(
        dimension_semantics=("parallel",),
        vmem_limit_bytes=_VMEM_LIMIT_BYTES,
    )

    if use_bias:
        b_spec = pl.BlockSpec((1, K, 1), lambda p: (0, 0, 0))
        return pl.pallas_call(
            _abc_kernel_bias,
            out_shape=out_shape,
            grid_spec=pltpu.PrefetchScalarGridSpec(
                num_scalar_prefetch=0,
                grid=grid,
                in_specs=[x_spec, w_spec, b_spec],
                out_specs=o_spec,
            ),
            compiler_params=cparams,
        )(x_pjb, w_pkj, bias_1k1)
    else:
        return pl.pallas_call(
            _abc_kernel_nobias,
            out_shape=out_shape,
            grid_spec=pltpu.PrefetchScalarGridSpec(
                num_scalar_prefetch=0,
                grid=grid,
                in_specs=[x_spec, w_spec],
                out_specs=o_spec,
            ),
            compiler_params=cparams,
        )(x_pjb, w_pkj)


# ----------------------------- Module wrapper -------------------------------

class ABC2DSpecificPallas:
    """JAX/Pallas port of ABC_2D_Specific."""

    def __init__(self, in_channel, kernel_number_per_pixel, kernel_size,
                 hashtable, bias=False, batch_size=128, key=None,
                 compute_dtype=jnp.bfloat16, out_dtype=jnp.float32):
        self.in_channel = in_channel
        self.kernel_size = kernel_size
        self.kernel_number_per_pixel = kernel_number_per_pixel
        self.batch_size = batch_size
        self.if_bias = bias
        self.compute_dtype = compute_dtype
        self.out_dtype = out_dtype

        HC, HH, HW, HHW = hashtable.shape
        if in_channel % HC != 0:
            raise ValueError("in_channel must be divisible by hash dim 0")
        if HH * HW != HHW:
            raise ValueError("hash last dim must equal HH*HW")
        if HHW < kernel_size:
            raise ValueError("kernel_size must be <= HH*HW")
        self.HC, self.HH, self.HW, self.HHW = HC, HH, HW, HHW

        # Per-channel-group pixel indices: argsort descending, top kernel_size.
        # NOTE: tie-breaking on equal hash scores may differ from torch.argsort.
        pix_idx = jnp.argsort(-hashtable, axis=-1)[..., :kernel_size]
        reps = in_channel // HC
        # (C, HH, HW, ks); values index the flattened H*W plane per channel.
        self.pix_idx = jnp.tile(pix_idx, (reps, 1, 1, 1)).astype(jnp.int32)

        # Deterministic parameter init (same bounds as the nn.Module).
        if key is None:
            key = jax.random.PRNGKey(0)
        kw, kb = jax.random.split(key)
        bound = float(np.sqrt(1.0 / in_channel / kernel_size))
        J = in_channel * kernel_size
        K = kernel_number_per_pixel
        # Torch layout (P, K, J) is used directly by the kernel.
        self.weights_f32 = jax.random.uniform(
            kw, (HHW, K, J), minval=-bound, maxval=bound, dtype=jnp.float32)
        self.weights_kernel = self.weights_f32.astype(compute_dtype)
        # Torch layout (1, K, 1), kept in f32 (added after f32 accumulation).
        self.bias_f32 = jax.random.uniform(
            kb, (1, K, 1), minval=-bound, maxval=bound, dtype=jnp.float32)

    def img_reconstruction(self, x):
        """x: (B, C, H, W) -> (P, J, B) with J = C*ks (c-major, ks-minor)."""
        B, C, H, W = x.shape
        if B > self.batch_size:
            raise ValueError("batch larger than configured batch_size")
        P, ks = H * W, self.kernel_size
        x_flat = x.reshape(B, C, P)                           # (B, C, P)
        idx = self.pix_idx.reshape(C, P * ks)                 # (C, P*ks)
        g = jnp.take_along_axis(x_flat, idx[None], axis=-1)   # (B, C, P*ks)
        g = g.reshape(B, C, P, ks)
        g = jnp.transpose(g, (2, 1, 3, 0)).reshape(P, C * ks, B)
        return g.astype(self.compute_dtype)

    def __call__(self, x):
        B, C, H, W = x.shape
        K = self.kernel_number_per_pixel
        xg = self.img_reconstruction(x)                       # (P, J, B)
        out_pkb = abc_pixelwise_matmul(
            xg, self.weights_kernel, self.bias_f32,
            use_bias=self.if_bias, out_dtype=self.out_dtype)  # (P, K, B)
        # (P, K, B) -> (B, K, P) -> (B, K, H, W)  (matches torch transpose+reshape)
        out = jnp.transpose(out_pkb, (2, 1, 0)).reshape(B, K, H, W)
        return out

    # Pure-JAX reference of the PyTorch forward using the same precision path
    # (bf16 operands, f32 accumulation) for tight verification.
    def reference(self, x):
        B, C, H, W = x.shape
        K = self.kernel_number_per_pixel
        xg = self.img_reconstruction(x)                       # (P, J, B)
        out = jnp.einsum("pkj,pjb->pkb", self.weights_kernel, xg,
                         preferred_element_type=jnp.float32)
        if self.if_bias:
            out = out + self.bias_f32
        out = jnp.transpose(out, (2, 1, 0)).reshape(B, K, H, W)
        return out.astype(self.out_dtype)


# --------------------------------- Demo -------------------------------------

if __name__ == "__main__":
    key = jax.random.PRNGKey(0)
    k_x, k_hash, k_param = jax.random.split(key, 3)

    # Small shapes consistent with the module.
    B, C, H, W = 2, 4, 16, 16       # input NCHW
    HC = 2                          # hash channel groups (C % HC == 0)
    ks = 9                          # kernel_size (pixels gathered per location)
    K = 8                           # kernel_number_per_pixel (out channels)
    HHW = H * W

    # Synthetic hashtable (HC, H, W, H*W) of random scores.
    hashtable = jax.random.uniform(k_hash, (HC, H, W, HHW), dtype=jnp.float32)

    module = ABC2DSpecificPallas(
        in_channel=C, kernel_number_per_pixel=K, kernel_size=ks,
        hashtable=hashtable, bias=True, batch_size=4, key=k_param)

    x = jax.random.normal(k_x, (B, C, H, W), dtype=jnp.float32)

    out = jax.block_until_ready(module(x))
    ref = jax.block_until_ready(module.reference(x))

    assert out.shape == (B, K, H, W)
    np.testing.assert_allclose(np.asarray(out, dtype=np.float32),
                               np.asarray(ref, dtype=np.float32),
                               rtol=2e-2, atol=2e-2)
    print("KERNEL_OK")
</pallas_src>

<mosaic_0001>
module attributes {stable_mosaic.version = 11 : i64} {
  func.func @_abc_kernel_bias(%arg0: i32, %arg1: memref<128x36x2xbf16, #tpu.memory_space<vmem>>, %arg2: memref<128x8x36xbf16, #tpu.memory_space<vmem>>, %arg3: memref<1x8x1xf32, #tpu.memory_space<vmem>>, %arg4: memref<128x8x2xf32, #tpu.memory_space<vmem>>) attributes {dimension_semantics = [#tpu.dimension_semantics<parallel>], iteration_bounds = array<i64: 2>, scalar_prefetch = 0 : i64, scratch_operands = 0 : i64, tpu.core_type = #tpu.core_type<tc>, window_params = [{transform_indices = @transform_0, window_bounds = array<i64: 128, 36, 2>}, {transform_indices = @transform_1, window_bounds = array<i64: 128, 8, 36>}, {pipeline_mode = #tpu.pipeline_mode<synchronous>, transform_indices = @transform_2, window_bounds = array<i64: 1, 8, 1>}, {transform_indices = @transform_3, window_bounds = array<i64: 128, 8, 2>}]} {
    %c0 = arith.constant 0 : index
    %c0_0 = arith.constant 0 : index
    %c0_1 = arith.constant 0 : index
    %0 = vector.load %arg2[%c0, %c0_0, %c0_1] : memref<128x8x36xbf16, #tpu.memory_space<vmem>>, vector<128x8x36xbf16>
    %c0_2 = arith.constant 0 : index
    %c0_3 = arith.constant 0 : index
    %c0_4 = arith.constant 0 : index
    %1 = vector.load %arg1[%c0_2, %c0_3, %c0_4] : memref<128x36x2xbf16, #tpu.memory_space<vmem>>, vector<128x36x2xbf16>
    "tpu.trace_start"() <{level = 10 : i32, message = "pkj,pjb->pkb"}> : () -> ()
    %cst = arith.constant dense<0.000000e+00> : vector<128x8x2xf32>
    %2 = tpu.matmul %0, %1, %cst {dimension_numbers = #tpu.dot_dimension_numbers<[2], [1], [1], [2], [0, 0, 0, 1, 1, 2], [0], [0]>} : vector<128x8x36xbf16>, vector<128x36x2xbf16>, vector<128x8x2xf32> -> vector<128x8x2xf32>
    "tpu.trace_stop"() : () -> ()
    %c0_5 = arith.constant 0 : index
    %c0_6 = arith.constant 0 : index
    %c0_7 = arith.constant 0 : index
    %3 = vector.load %arg3[%c0_5, %c0_6, %c0_7] : memref<1x8x1xf32, #tpu.memory_space<vmem>>, vector<1x8x1xf32>
    %4 = vector.broadcast %3 : vector<1x8x1xf32> to vector<128x8x2xf32>
    %5 = arith.addf %2, %4 : vector<128x8x2xf32>
    %c0_8 = arith.constant 0 : index
    %c0_9 = arith.constant 0 : index
    %c0_10 = arith.constant 0 : index
    %6 = vector.load %arg4[%c0_8, %c0_9, %c0_10] : memref<128x8x2xf32, #tpu.memory_space<vmem>>, vector<128x8x2xf32>
    tpu.vector_store %arg4[%c0_8, %c0_9, %c0_10], %5 {strides = array<i32>} : memref<128x8x2xf32, #tpu.memory_space<vmem>>, vector<128x8x2xf32>,
    return
  }
  func.func @transform_0(%arg0: i32) -> (i32, i32, i32) {
    %c0_i32 = arith.constant 0 : i32
    %c0_i32_0 = arith.constant 0 : i32
    %c0_i32_1 = arith.constant 0 : i32
    return %arg0, %c0_i32, %c0_i32_0 : i32, i32, i32
  }
  func.func @transform_1(%arg0: i32) -> (i32, i32, i32) {
    %c0_i32 = arith.constant 0 : i32
    %c0_i32_0 = arith.constant 0 : i32
    %c0_i32_1 = arith.constant 0 : i32
    return %arg0, %c0_i32, %c0_i32_0 : i32, i32, i32
  }
  func.func @transform_2(%arg0: i32) -> (i32, i32, i32) {
    %c0_i32 = arith.constant 0 : i32
    %c0_i32_0 = arith.constant 0 : i32
    %c0_i32_1 = arith.constant 0 : i32
    %c0_i32_2 = arith.constant 0 : i32
    return %c0_i32, %c0_i32_0, %c0_i32_1 : i32, i32, i32
  }
  func.func @transform_3(%arg0: i32) -> (i32, i32, i32) {
    %c0_i32 = arith.constant 0 : i32
    %c0_i32_0 = arith.constant 0 : i32
    %c0_i32_1 = arith.constant 0 : i32
    return %arg0, %c0_i32, %c0_i32_0 : i32, i32, i32
  }
}

</mosaic_0001>

<llo_original>
// kernel: tpu_custom_call.1
$region0: #{tpu_custom_call.1}
  #allocation0 [shape = 'u32[]', space=smem, size = 0x4, offset = 0x4, fixed_abs, tag = 'smem constant byte address 0x4 - core index']
  #allocation1 [shape = 'u32[144,128]{1,0:T(1,128)}', space=vmem, size = 0x12000, scoped, tag = 'internal scratch']
  %s0 = inlined_call_operand.vmem [shape: bf16[256,36,2], index: 0, kind: input, shape index: {}]
  %s1 = inlined_call_operand.vmem [shape: bf16[256,8,36], index: 1, kind: input, shape index: {}]
  %s2 = inlined_call_operand.vmem [shape: f32[1,8,1], index: 2, kind: input, shape index: {}]
  %s3 = inlined_call_operand.vmem [shape: f32[256,8,2], index: 3, kind: output, shape index: {}]
  %s4 = sld [smem:[#allocation0]]
  $region45: #{tpu_custom_call.1} parent=0
    _
  %s6 = ssub.s32 1, %s4
  %s7 = scalar_select 0, %s6, %s4
  loop: start=0, step=1, limit=4
  $region2: #{tpu_custom_call.1} parent=0 // loop_pre_header
    _
  $region3: #{tpu_custom_call.1} parent=0 // loop_header
    %s9 = sphi 0, %s13
    %p10 = scmp.ge.s32.totalorder %s9, 4
    %s19 = sphi 0, %s21
    %s22 = sphi 0, %s19
    %s23 = sphi 0, %s22
    %s39 = sphi 0, %s23
    %s45 = sphi 0, %s47
    %s48 = sphi 0, %s45
    %s49 = sphi 0, %s48
    %s65 = sphi 0, %s49
    %s69 = sphi 0, %s69
    %s71 = sphi 0, %s69
    %s72 = sphi 0, %s71
    %s86 = sphi 0, %s72
    %s92 = sphi 0, %s94
    %s95 = sphi 0, %s92
    %s96 = sphi 0, %s95
    %s112 = sphi 0, %s96
  $region4: #{tpu_custom_call.1} parent=0 // loop_header_branch
    %12 = sbr.rel (%p10) target = $region8
  $region5: #{tpu_custom_call.1} parent=0 // loop_body
    %s14 = ssub.s32 %s9, 1
    %s15 = ssub.s32 %s9, 2
    %s16 = sadd.s32 %s9, 1
    %s17 = ssub.s32 %s9, %s16
    %p18 = scmp.eq.s32.totalorder %s17, 0
    %s20 = sadd.s32 %s19, 1
    %s21 = scalar_select %p18, %s19, %s20
    %p24 = pneg %p18
    %p25 = scmp.eq.s32.totalorder %s9, 1
    %p26 = por %p24, %p25
    %p27 = scmp.ne.s32.totalorder %s19, %s22
    %p28 = scmp.eq.s32.totalorder %s9, 0
    %p29 = por %p27, %p28
    %p30 = scmp.ne.s32.totalorder %s19, %s22
    %p31 = scmp.eq.s32.totalorder %s14, 1
    %p32 = por %p30, %p31
    %p33 = scmp.ne.s32.totalorder %s22, %s23
    %p34 = scmp.eq.s32.totalorder %s14, 0
    %p35 = por %p33, %p34
    %p36 = scmp.ne.s32.totalorder %s22, %s23
    %p37 = scmp.eq.s32.totalorder %s15, 1
    %p38 = por %p36, %p37
    %p40 = scmp.ne.s32.totalorder %s23, %s39
    %p41 = scmp.eq.s32.totalorder %s15, 0
    %p42 = por %p40, %p41
    %s43 = ssub.s32 %s9, %s16
    %p44 = scmp.eq.s32.totalorder %s43, 0
    %s46 = sadd.s32 %s45, 1
    %s47 = scalar_select %p44, %s45, %s46
    %p50 = pneg %p44
    %p51 = scmp.eq.s32.totalorder %s9, 1
    %p52 = por %p50, %p51
    %p53 = scmp.ne.s32.totalorder %s45, %s48
    %p54 = scmp.eq.s32.totalorder %s9, 0
    %p55 = por %p53, %p54
    %p56 = scmp.ne.s32.totalorder %s45, %s48
    %p57 = scmp.eq.s32.totalorder %s14, 1
    %p58 = por %p56, %p57
    %p59 = scmp.ne.s32.totalorder %s48, %s49
    %p60 = scmp.eq.s32.totalorder %s14, 0
    %p61 = por %p59, %p60
    %p62 = scmp.ne.s32.totalorder %s48, %s49
    %p63 = scmp.eq.s32.totalorder %s15, 1
    %p64 = por %p62, %p63
    %p66 = scmp.ne.s32.totalorder %s49, %s65
    %p67 = scmp.eq.s32.totalorder %s15, 0
    %p68 = por %p66, %p67
    %s70 = sadd.s32 %s69, 1
    %p73 = scmp.eq.s32.totalorder %s9, 1
    %p74 = scmp.ne.s32.totalorder %s69, %s71
    %p75 = scmp.eq.s32.totalorder %s9, 0
    %p76 = por %p74, %p75
    %p77 = scmp.ne.s32.totalorder %s69, %s71
    %p78 = scmp.eq.s32.totalorder %s14, 1
    %p79 = por %p77, %p78
    %p80 = scmp.ne.s32.totalorder %s71, %s72
    %p81 = scmp.eq.s32.totalorder %s14, 0
    %p82 = por %p80, %p81
    %p83 = scmp.ne.s32.totalorder %s71, %s72
    %p84 = scmp.eq.s32.totalorder %s15, 1
    %p85 = por %p83, %p84
    %p87 = scmp.ne.s32.totalorder %s72, %s86
    %p88 = scmp.eq.s32.totalorder %s15, 0
    %p89 = por %p87, %p88
    %s90 = ssub.s32 %s9, %s16
    %p91 = scmp.eq.s32.totalorder %s90, 0
    %s93 = sadd.s32 %s92, 1
    %s94 = scalar_select %p91, %s92, %s93
    %p97 = pneg %p91
    %p98 = scmp.eq.s32.totalorder %s9, 1
    %p99 = por %p97, %p98
    %p100 = scmp.ne.s32.totalorder %s92, %s95
    %p101 = scmp.eq.s32.totalorder %s9, 0
    %p102 = por %p100, %p101
    %p103 = scmp.ne.s32.totalorder %s92, %s95
    %p104 = scmp.eq.s32.totalorder %s14, 1
    %p105 = por %p103, %p104
    %p106 = scmp.ne.s32.totalorder %s95, %s96
    %p107 = scmp.eq.s32.totalorder %s14, 0
    %p108 = por %p106, %p107
    %p109 = scmp.ne.s32.totalorder %s95, %s96
    %p110 = scmp.eq.s32.totalorder %s15, 1
    %p111 = por %p109, %p110
    %p113 = scmp.ne.s32.totalorder %s96, %s112
    %p114 = scmp.eq.s32.totalorder %s15, 0
    %p115 = por %p113, %p114
    %p116 = scmp.le.s32.totalorder 1, %s9
    %p117 = scmp.lt.s32.totalorder %s9, 3
    %p118 = pnand %p116, %p117
    %p119 = pneg %p118
    // Predicated region
    $region9: #{tpu_custom_call.1} parent=5 // pred_check
      _
    $region10: #{tpu_custom_call.1} parent=5 // pred_check_branch
      %121 = sbr.rel (%p118) target = $region12
    $region11: #{tpu_custom_call.1} parent=5 // pred_region
      %s122 = ssub.s32 %s9, 1
      // Predicated region
      $region13: #{tpu_custom_call.1} parent=11 // pred_check
        %p123 = pneg %p82
      $region14: #{tpu_custom_call.1} parent=11 // pred_check_branch
        %125 = sbr.rel (%p123) target = $region16
      $region15: #{tpu_custom_call.1} parent=11 // pred_region
        _
      $region16: #{tpu_custom_call.1} parent=11 // pred_fallthru
        _
    $region12: #{tpu_custom_call.1} parent=5 // pred_fallthru
      _
    %p126 = scmp.lt.s32.totalorder %s9, 2
    // Predicated region
    $region17: #{tpu_custom_call.1} parent=5 // pred_check
      %p127 = pneg %p126
    $region18: #{tpu_custom_call.1} parent=5 // pred_check_branch
      %129 = sbr.rel (%p127) target = $region20
    $region19: #{tpu_custom_call.1} parent=5 // pred_region
      // Predicated region
      $region21: #{tpu_custom_call.1} parent=19 // pred_check
        %p130 = pneg %p29
      $region22: #{tpu_custom_call.1} parent=19 // pred_check_branch
        %132 = sbr.rel (%p130) target = $region24
      $region23: #{tpu_custom_call.1} parent=19 // pred_region
        %s133 = smul.u32 128, %s9
        %p134 = scmp.lt.s32.totalorder %s133, 255
        %s135 = scalar_select %p134, %s133, 255
        %s136 = smul.addr %s135, 5
        %s137 = smul.addr %s136, 4
        %s138 = scalar_lea.vmem %s0, %s137
        %s139 = smul.u32 128, %s9
      $region24: #{tpu_custom_call.1} parent=19 // pred_fallthru
        _
      // Predicated region
      $region25: #{tpu_custom_call.1} parent=19 // pred_check
        %p140 = pneg %p55
      $region26: #{tpu_custom_call.1} parent=19 // pred_check_branch
        %142 = sbr.rel (%p140) target = $region28
      $region27: #{tpu_custom_call.1} parent=19 // pred_region
        %s143 = smul.u32 128, %s9
        %p144 = scmp.lt.s32.totalorder %s143, 255
        %s145 = scalar_select %p144, %s143, 255
        %s146 = smul.addr %s145, 4
        %s147 = scalar_lea.vmem %s1, %s146
        %s148 = smul.u32 128, %s9
      $region28: #{tpu_custom_call.1} parent=19 // pred_fallthru
        _
    $region20: #{tpu_custom_call.1} parent=5 // pred_fallthru
      _
    %p149 = scmp.le.s32.totalorder 1, %s9
    %p150 = scmp.lt.s32.totalorder %s9, 3
    %p151 = pnand %p149, %p150
    %p152 = pneg %p151
    // Predicated region
    $region29: #{tpu_custom_call.1} parent=5 // pred_check
      _
    $region30: #{tpu_custom_call.1} parent=5 // pred_check_branch
      %154 = sbr.rel (%p151) target = $region32
    $region31: #{tpu_custom_call.1} parent=5 // pred_region
      %s155 = ssub.s32 %s9, 1
      %s156 = smul.u32 128, %s14
      %p157 = scmp.lt.s32.totalorder %s156, 255
      %s158 = scalar_select %p157, %s156, 255
      %s159 = smul.addr %s158, 5
      %s160 = smul.addr %s159, 4
      %s161 = scalar_lea.vmem %s0, %s160
      %p162 = pneg %p35
      %p163 = pneg %p32
      %s164 = smul.u32 128, %s14
      %p165 = scmp.lt.s32.totalorder %s164, 255
      %s166 = scalar_select %p165, %s164, 255
      %s167 = smul.addr %s166, 4
      %s168 = scalar_lea.vmem %s1, %s167
      %p169 = pneg %p61
      %p170 = pneg %p58
      %p171 = pneg %p82
      %p172 = pneg %p79
      %p173 = pneg %p108
      %p174 = pneg %p105
      %s175 = smul.u32 128, %s14
      %p176 = scmp.lt.s32.totalorder %s175, 255
      %s177 = scalar_select %p176, %s175, 255
      %s178 = smul.addr %s177, 8
      %s179 = scalar_lea.vmem %s3, %s178
      %s180 = smul.u32 128, %s14
      %p181 = scmp.lt.s32.totalorder %s180, 255
      %s182 = scalar_select %p181, %s180, 255
      %s183 = smul.addr %s182, 5
      %s184 = smul.addr %s183, 4
      %s185 = scalar_lea.vmem %s0, %s184
      %s186 = smul.u32 128, %s14
      %s187 = smul.u32 128, %s14
      %p188 = scmp.lt.s32.totalorder %s187, 255
      %s189 = scalar_select %p188, %s187, 255
      %s190 = smul.addr %s189, 4
      %s191 = scalar_lea.vmem %s1, %s190
      %s192 = smul.u32 128, %s14
      %s193 = smul.u32 128, %s14
      %p194 = scmp.lt.s32.totalorder %s193, 255
      %s195 = scalar_select %p194, %s193, 255
      %s196 = smul.addr %s195, 8
      %s197 = scalar_lea.vmem %s3, %s196
      %s198 = smul.u32 128, %s14
      %v200 = vld [vmem:[%s191] sm:$0xf]
      %v201 = vld [vmem:[%s191 + $0x4] sm:$0xf]
      %v202 = vld [vmem:[%s191 + $0x8] sm:$0xf]
      %v203 = vld [vmem:[%s191 + $0xc] sm:$0xf]
      %v204 = vld [vmem:[%s191 + $0x10] sm:$0xf]
      %v205 = vld [vmem:[%s191 + $0x14] sm:$0xf]
      %v206 = vld [vmem:[%s191 + $0x18] sm:$0xf]
      %v207 = vld [vmem:[%s191 + $0x1c] sm:$0xf]
      %v208 = vld [vmem:[%s191 + $0x20] sm:$0xf]
      %v209 = vld [vmem:[%s191 + $0x24] sm:$0xf]
      %v210 = vld [vmem:[%s191 + $0x28] sm:$0xf]
      %v211 = vld [vmem:[%s191 + $0x2c] sm:$0xf]
      %v212 = vld [vmem:[%s191 + $0x30] sm:$0xf]
      %v213 = vld [vmem:[%s191 + $0x34] sm:$0xf]
      %v214 = vld [vmem:[%s191 + $0x38] sm:$0xf]
      %v215 = vld [vmem:[%s191 + $0x3c] sm:$0xf]
      %v216 = vld [vmem:[%s191 + $0x40] sm:$0xf]
      %v217 = vld [vmem:[%s191 + $0x44] sm:$0xf]
      %v218 = vld [vmem:[%s191 + $0x48] sm:$0xf]
      %v219 = vld [vmem:[%s191 + $0x4c] sm:$0xf]
      %v220 = vld [vmem:[%s191 + $0x50] sm:$0xf]
      %v221 = vld [vmem:[%s191 + $0x54] sm:$0xf]
      %v222 = vld [vmem:[%s191 + $0x58] sm:$0xf]
      %v223 = vld [vmem:[%s191 + $0x5c] sm:$0xf]
      %v224 = vld [vmem:[%s191 + $0x60] sm:$0xf]
      %v225 = vld [vmem:[%s191 + $0x64] sm:$0xf]
      %v226 = vld [vmem:[%s191 + $0x68] sm:$0xf]
      %v227 = vld [vmem:[%s191 + $0x6c] sm:$0xf]
      %v228 = vld [vmem:[%s191 + $0x70] sm:$0xf]
      %v229 = vld [vmem:[%s191 + $0x74] sm:$0xf]
      %v230 = vld [vmem:[%s191 + $0x78] sm:$0xf]
      %v231 = vld [vmem:[%s191 + $0x7c] sm:$0xf]
      %v232 = vld [vmem:[%s191 + $0x80] sm:$0xf]
      %v233 = vld [vmem:[%s191 + $0x84] sm:$0xf]
      %v234 = vld [vmem:[%s191 + $0x88] sm:$0xf]
      %v235 = vld [vmem:[%s191 + $0x8c] sm:$0xf]
      %v236 = vld [vmem:[%s191 + $0x90] sm:$0xf]
      %v237 = vld [vmem:[%s191 + $0x94] sm:$0xf]
      %v238 = vld [vmem:[%s191 + $0x98] sm:$0xf]
      %v239 = vld [vmem:[%s191 + $0x9c] sm:$0xf]
      %v240 = vld [vmem:[%s191 + $0xa0] sm:$0xf]
      %v241 = vld [vmem:[%s191 + $0xa4] sm:$0xf]
      %v242 = vld [vmem:[%s191 + $0xa8] sm:$0xf]
      %v243 = vld [vmem:[%s191 + $0xac] sm:$0xf]
      %v244 = vld [vmem:[%s191 + $0xb0] sm:$0xf]
      %v245 = vld [vmem:[%s191 + $0xb4] sm:$0xf]
      %v246 = vld [vmem:[%s191 + $0xb8] sm:$0xf]
      %v247 = vld [vmem:[%s191 + $0xbc] sm:$0xf]
      %v248 = vld [vmem:[%s191 + $0xc0] sm:$0xf]
      %v249 = vld [vmem:[%s191 + $0xc4] sm:$0xf]
      %v250 = vld [vmem:[%s191 + $0xc8] sm:$0xf]
      %v251 = vld [vmem:[%s191 + $0xcc] sm:$0xf]
      %v252 = vld [vmem:[%s191 + $0xd0] sm:$0xf]
      %v253 = vld [vmem:[%s191 + $0xd4] sm:$0xf]
      %v254 = vld [vmem:[%s191 + $0xd8] sm:$0xf]
      %v255 = vld [vmem:[%s191 + $0xdc] sm:$0xf]
      %v256 = vld [vmem:[%s191 + $0xe0] sm:$0xf]
      %v257 = vld [vmem:[%s191 + $0xe4] sm:$0xf]
      %v258 = vld [vmem:[%s191 + $0xe8] sm:$0xf]
      %v259 = vld [vmem:[%s191 + $0xec] sm:$0xf]
      %v260 = vld [vmem:[%s191 + $0xf0] sm:$0xf]
      %v261 = vld [vmem:[%s191 + $0xf4] sm:$0xf]
      %v262 = vld [vmem:[%s191 + $0xf8] sm:$0xf]
      %v263 = vld [vmem:[%s191 + $0xfc] sm:$0xf]
      %v264 = vld [vmem:[%s191 + $0x100] sm:$0xf]
      %v265 = vld [vmem:[%s191 + $0x104] sm:$0xf]
      %v266 = vld [vmem:[%s191 + $0x108] sm:$0xf]
      %v267 = vld [vmem:[%s191 + $0x10c] sm:$0xf]
      %v268 = vld [vmem:[%s191 + $0x110] sm:$0xf]
      %v269 = vld [vmem:[%s191 + $0x114] sm:$0xf]
      %v270 = vld [vmem:[%s191 + $0x118] sm:$0xf]
      %v271 = vld [vmem:[%s191 + $0x11c] sm:$0xf]
      %v272 = vld [vmem:[%s191 + $0x120] sm:$0xf]
      %v273 = vld [vmem:[%s191 + $0x124] sm:$0xf]
      %v274 = vld [vmem:[%s191 + $0x128] sm:$0xf]
      %v275 = vld [vmem:[%s191 + $0x12c] sm:$0xf]
      %v276 = vld [vmem:[%s191 + $0x130] sm:$0xf]
      %v277 = vld [vmem:[%s191 + $0x134] sm:$0xf]
      %v278 = vld [vmem:[%s191 + $0x138] sm:$0xf]
      %v279 = vld [vmem:[%s191 + $0x13c] sm:$0xf]
      %v280 = vld [vmem:[%s191 + $0x140] sm:$0xf]
      %v281 = vld [vmem:[%s191 + $0x144] sm:$0xf]
      %v282 = vld [vmem:[%s191 + $0x148] sm:$0xf]
      %v283 = vld [vmem:[%s191 + $0x14c] sm:$0xf]
      %v284 = vld [vmem:[%s191 + $0x150] sm:$0xf]
      %v285 = vld [vmem:[%s191 + $0x154] sm:$0xf]
      %v286 = vld [vmem:[%s191 + $0x158] sm:$0xf]
      %v287 = vld [vmem:[%s191 + $0x15c] sm:$0xf]
      %v288 = vld [vmem:[%s191 + $0x160] sm:$0xf]
      %v289 = vld [vmem:[%s191 + $0x164] sm:$0xf]
      %v290 = vld [vmem:[%s191 + $0x168] sm:$0xf]
      %v291 = vld [vmem:[%s191 + $0x16c] sm:$0xf]
      %v292 = vld [vmem:[%s191 + $0x170] sm:$0xf]
      %v293 = vld [vmem:[%s191 + $0x174] sm:$0xf]
      %v294 = vld [vmem:[%s191 + $0x178] sm:$0xf]
      %v295 = vld [vmem:[%s191 + $0x17c] sm:$0xf]
      %v296 = vld [vmem:[%s191 + $0x180] sm:$0xf]
      %v297 = vld [vmem:[%s191 + $0x184] sm:$0xf]
      %v298 = vld [vmem:[%s191 + $0x188] sm:$0xf]
      %v299 = vld [vmem:[%s191 + $0x18c] sm:$0xf]
      %v300 = vld [vmem:[%s191 + $0x190] sm:$0xf]
      %v301 = vld [vmem:[%s191 + $0x194] sm:$0xf]
      %v302 = vld [vmem:[%s191 + $0x198] sm:$0xf]
      %v303 = vld [vmem:[%s191 + $0x19c] sm:$0xf]
      %v304 = vld [vmem:[%s191 + $0x1a0] sm:$0xf]
      %v305 = vld [vmem:[%s191 + $0x1a4] sm:$0xf]
      %v306 = vld [vmem:[%s191 + $0x1a8] sm:$0xf]
      %v307 = vld [vmem:[%s191 + $0x1ac] sm:$0xf]
      %v308 = vld [vmem:[%s191 + $0x1b0] sm:$0xf]
      %v309 = vld [vmem:[%s191 + $0x1b4] sm:$0xf]
      %v310 = vld [vmem:[%s191 + $0x1b8] sm:$0xf]
      %v311 = vld [vmem:[%s191 + $0x1bc] sm:$0xf]
      %v312 = vld [vmem:[%s191 + $0x1c0] sm:$0xf]
      %v313 = vld [vmem:[%s191 + $0x1c4] sm:$0xf]
      %v314 = vld [vmem:[%s191 + $0x1c8] sm:$0xf]
      %v315 = vld [vmem:[%s191 + $0x1cc] sm:$0xf]
      %v316 = vld [vmem:[%s191 + $0x1d0] sm:$0xf]
      %v317 = vld [vmem:[%s191 + $0x1d4] sm:$0xf]
      %v318 = vld [vmem:[%s191 + $0x1d8] sm:$0xf]
      %v319 = vld [vmem:[%s191 + $0x1dc] sm:$0xf]
      %v320 = vld [vmem:[%s191 + $0x1e0] sm:$0xf]
      %v321 = vld [vmem:[%s191 + $0x1e4] sm:$0xf]
      %v322 = vld [vmem:[%s191 + $0x1e8] sm:$0xf]
      %v323 = vld [vmem:[%s191 + $0x1ec] sm:$0xf]
      %v324 = vld [vmem:[%s191 + $0x1f0] sm:$0xf]
      %v325 = vld [vmem:[%s191 + $0x1f4] sm:$0xf]
      %v326 = vld [vmem:[%s191 + $0x1f8] sm:$0xf]
      %v327 = vld [vmem:[%s191 + $0x1fc] sm:$0xf]
      %v328 = vld [vmem:[%s185] sm:$0xf]
      %v329 = vld [vmem:[%s185 + $0x4] sm:$0xf]
      %v330 = vld [vmem:[%s185 + $0x8] sm:$0xf]
      %v331 = vld [vmem:[%s185 + $0xc] sm:$0xf]
      %v332 = vld [vmem:[%s185 + $0x10] sm:$0x3]
      %v333 = vld [vmem:[%s185 + $0x14] sm:$0xf]
      %v334 = vld [vmem:[%s185 + $0x18] sm:$0xf]
      %v335 = vld [vmem:[%s185 + $0x1c] sm:$0xf]
      %v336 = vld [vmem:[%s185 + $0x20] sm:$0xf]
      %v337 = vld [vmem:[%s185 + $0x24] sm:$0x3]
      %v338 = vld [vmem:[%s185 + $0x28] sm:$0xf]
      %v339 = vld [vmem:[%s185 + $0x2c] sm:$0xf]
      %v340 = vld [vmem:[%s185 + $0x30] sm:$0xf]
      %v341 = vld [vmem:[%s185 + $0x34] sm:$0xf]
      %v342 = vld [vmem:[%s185 + $0x38] sm:$0x3]
      %v343 = vld [vmem:[%s185 + $0x3c] sm:$0xf]
      %v344 = vld [vmem:[%s185 + $0x40] sm:$0xf]
      %v345 = vld [vmem:[%s185 + $0x44] sm:$0xf]
      %v346 = vld [vmem:[%s185 + $0x48] sm:$0xf]
      %v347 = vld [vmem:[%s185 + $0x4c] sm:$0x3]
      %v348 = vld [vmem:[%s185 + $0x50] sm:$0xf]
      %v349 = vld [vmem:[%s185 + $0x54] sm:$0xf]
      %v350 = vld [vmem:[%s185 + $0x58] sm:$0xf]
      %v351 = vld [vmem:[%s185 + $0x5c] sm:$0xf]
      %v352 = vld [vmem:[%s185 + $0x60] sm:$0x3]
      %v353 = vld [vmem:[%s185 + $0x64] sm:$0xf]
      %v354 = vld [vmem:[%s185 + $0x68] sm:$0xf]
      %v355 = vld [vmem:[%s185 + $0x6c] sm:$0xf]
      %v356 = vld [vmem:[%s185 + $0x70] sm:$0xf]
      %v357 = vld [vmem:[%s185 + $0x74] sm:$0x3]
      %v358 = vld [vmem:[%s185 + $0x78] sm:$0xf]
      %v359 = vld [vmem:[%s185 + $0x7c] sm:$0xf]
      %v360 = vld [vmem:[%s185 + $0x80] sm:$0xf]
      %v361 = vld [vmem:[%s185 + $0x84] sm:$0xf]
      %v362 = vld [vmem:[%s185 + $0x88] sm:$0x3]
      %v363 = vld [vmem:[%s185 + $0x8c] sm:$0xf]
      %v364 = vld [vmem:[%s185 + $0x90] sm:$0xf]
      %v365 = vld [vmem:[%s185 + $0x94] sm:$0xf]
      %v366 = vld [vmem:[%s185 + $0x98] sm:$0xf]
      %v367 = vld [vmem:[%s185 + $0x9c] sm:$0x3]
      %v368 = vld [vmem:[%s185 + $0xa0] sm:$0xf]
      %v369 = vld [vmem:[%s185 + $0xa4] sm:$0xf]
      %v370 = vld [vmem:[%s185 + $0xa8] sm:$0xf]
      %v371 = vld [vmem:[%s185 + $0xac] sm:$0xf]
      %v372 = vld [vmem:[%s185 + $0xb0] sm:$0x3]
      %v373 = vld [vmem:[%s185 + $0xb4] sm:$0xf]
      %v374 = vld [vmem:[%s185 + $0xb8] sm:$0xf]
      %v375 = vld [vmem:[%s185 + $0xbc] sm:$0xf]
      %v376 = vld [vmem:[%s185 + $0xc0] sm:$0xf]
      %v377 = vld [vmem:[%s185 + $0xc4] sm:$0x3]
      %v378 = vld [vmem:[%s185 + $0xc8] sm:$0xf]
      %v379 = vld [vmem:[%s185 + $0xcc] sm:$0xf]
      %v380 = vld [vmem:[%s185 + $0xd0] sm:$0xf]
      %v381 = vld [vmem:[%s185 + $0xd4] sm:$0xf]
      %v382 = vld [vmem:[%s185 + $0xd8] sm:$0x3]
      %v383 = vld [vmem:[%s185 + $0xdc] sm:$0xf]
      %v384 = vld [vmem:[%s185 + $0xe0] sm:$0xf]
      %v385 = vld [vmem:[%s185 + $0xe4] sm:$0xf]
      %v386 = vld [vmem:[%s185 + $0xe8] sm:$0xf]
      %v387 = vld [vmem:[%s185 + $0xec] sm:$0x3]
      %v388 = vld [vmem:[%s185 + $0xf0] sm:$0xf]
      %v389 = vld [vmem:[%s185 + $0xf4] sm:$0xf]
      %v390 = vld [vmem:[%s185 + $0xf8] sm:$0xf]
      %v391 = vld [vmem:[%s185 + $0xfc] sm:$0xf]
      %v392 = vld [vmem:[%s185 + $0x100] sm:$0x3]
      %v393 = vld [vmem:[%s185 + $0x104] sm:$0xf]
      %v394 = vld [vmem:[%s185 + $0x108] sm:$0xf]
      %v395 = vld [vmem:[%s185 + $0x10c] sm:$0xf]
      %v396 = vld [vmem:[%s185 + $0x110] sm:$0xf]
      %v397 = vld [vmem:[%s185 + $0x114] sm:$0x3]
      %v398 = vld [vmem:[%s185 + $0x118] sm:$0xf]
      %v399 = vld [vmem:[%s185 + $0x11c] sm:$0xf]
      %v400 = vld [vmem:[%s185 + $0x120] sm:$0xf]
      %v401 = vld [vmem:[%s185 + $0x124] sm:$0xf]
      %v402 = vld [vmem:[%s185 + $0x128] sm:$0x3]
      %v403 = vld [vmem:[%s185 + $0x12c] sm:$0xf]
      %v404 = vld [vmem:[%s185 + $0x130] sm:$0xf]
      %v405 = vld [vmem:[%s185 + $0x134] sm:$0xf]
      %v406 = vld [vmem:[%s185 + $0x138] sm:$0xf]
      %v407 = vld [vmem:[%s185 + $0x13c] sm:$0x3]
      %v408 = vld [vmem:[%s185 + $0x140] sm:$0xf]
      %v409 = vld [vmem:[%s185 + $0x144] sm:$0xf]
      %v410 = vld [vmem:[%s185 + $0x148] sm:$0xf]
      %v411 = vld [vmem:[%s185 + $0x14c] sm:$0xf]
      %v412 = vld [vmem:[%s185 + $0x150] sm:$0x3]
      %v413 = vld [vmem:[%s185 + $0x154] sm:$0xf]
      %v414 = vld [vmem:[%s185 + $0x158] sm:$0xf]
      %v415 = vld [vmem:[%s185 + $0x15c] sm:$0xf]
      %v416 = vld [vmem:[%s185 + $0x160] sm:$0xf]
      %v417 = vld [vmem:[%s185 + $0x164] sm:$0x3]
      %v418 = vld [vmem:[%s185 + $0x168] sm:$0xf]
      %v419 = vld [vmem:[%s185 + $0x16c] sm:$0xf]
      %v420 = vld [vmem:[%s185 + $0x170] sm:$0xf]
      %v421 = vld [vmem:[%s185 + $0x174] sm:$0xf]
      %v422 = vld [vmem:[%s185 + $0x178] sm:$0x3]
      %v423 = vld [vmem:[%s185 + $0x17c] sm:$0xf]
      %v424 = vld [vmem:[%s185 + $0x180] sm:$0xf]
      %v425 = vld [vmem:[%s185 + $0x184] sm:$0xf]
      %v426 = vld [vmem:[%s185 + $0x188] sm:$0xf]
      %v427 = vld [vmem:[%s185 + $0x18c] sm:$0x3]
      %v428 = vld [vmem:[%s185 + $0x190] sm:$0xf]
      %v429 = vld [vmem:[%s185 + $0x194] sm:$0xf]
      %v430 = vld [vmem:[%s185 + $0x198] sm:$0xf]
      %v431 = vld [vmem:[%s185 + $0x19c] sm:$0xf]
      %v432 = vld [vmem:[%s185 + $0x1a0] sm:$0x3]
      %v433 = vld [vmem:[%s185 + $0x1a4] sm:$0xf]
      %v434 = vld [vmem:[%s185 + $0x1a8] sm:$0xf]
      %v435 = vld [vmem:[%s185 + $0x1ac] sm:$0xf]
      %v436 = vld [vmem:[%s185 + $0x1b0] sm:$0xf]
      %v437 = vld [vmem:[%s185 + $0x1b4] sm:$0x3]
      %v438 = vld [vmem:[%s185 + $0x1b8] sm:$0xf]
      %v439 = vld [vmem:[%s185 + $0x1bc] sm:$0xf]
      %v440 = vld [vmem:[%s185 + $0x1c0] sm:$0xf]
      %v441 = vld [vmem:[%s185 + $0x1c4] sm:$0xf]
      %v442 = vld [vmem:[%s185 + $0x1c8] sm:$0x3]
      %v443 = vld [vmem:[%s185 + $0x1cc] sm:$0xf]
      %v444 = vld [vmem:[%s185 + $0x1d0] sm:$0xf]
      %v445 = vld [vmem:[%s185 + $0x1d4] sm:$0xf]
      %v446 = vld [vmem:[%s185 + $0x1d8] sm:$0xf]
      %v447 = vld [vmem:[%s185 + $0x1dc] sm:$0x3]
      %v448 = vld [vmem:[%s185 + $0x1e0] sm:$0xf]
      %v449 = vld [vmem:[%s185 + $0x1e4] sm:$0xf]
      %v450 = vld [vmem:[%s185 + $0x1e8] sm:$0xf]
      %v451 = vld [vmem:[%s185 + $0x1ec] sm:$0xf]
      %v452 = vld [vmem:[%s185 + $0x1f0] sm:$0x3]
      %v453 = vld [vmem:[%s185 + $0x1f4] sm:$0xf]
      %v454 = vld [vmem:[%s185 + $0x1f8] sm:$0xf]
      %v455 = vld [vmem:[%s185 + $0x1fc] sm:$0xf]
      %v456 = vld [vmem:[%s185 + $0x200] sm:$0xf]
      %v457 = vld [vmem:[%s185 + $0x204] sm:$0x3]
      %v458 = vld [vmem:[%s185 + $0x208] sm:$0xf]
      %v459 = vld [vmem:[%s185 + $0x20c] sm:$0xf]
      %v460 = vld [vmem:[%s185 + $0x210] sm:$0xf]
      %v461 = vld [vmem:[%s185 + $0x214] sm:$0xf]
      %v462 = vld [vmem:[%s185 + $0x218] sm:$0x3]
      %v463 = vld [vmem:[%s185 + $0x21c] sm:$0xf]
      %v464 = vld [vmem:[%s185 + $0x220] sm:$0xf]
      %v465 = vld [vmem:[%s185 + $0x224] sm:$0xf]
      %v466 = vld [vmem:[%s185 + $0x228] sm:$0xf]
      %v467 = vld [vmem:[%s185 + $0x22c] sm:$0x3]
      %v468 = vld [vmem:[%s185 + $0x230] sm:$0xf]
      %v469 = vld [vmem:[%s185 + $0x234] sm:$0xf]
      %v470 = vld [vmem:[%s185 + $0x238] sm:$0xf]
      %v471 = vld [vmem:[%s185 + $0x23c] sm:$0xf]
      %v472 = vld [vmem:[%s185 + $0x240] sm:$0x3]
      %v473 = vld [vmem:[%s185 + $0x244] sm:$0xf]
      %v474 = vld [vmem:[%s185 + $0x248] sm:$0xf]
      %v475 = vld [vmem:[%s185 + $0x24c] sm:$0xf]
      %v476 = vld [vmem:[%s185 + $0x250] sm:$0xf]
      %v477 = vld [vmem:[%s185 + $0x254] sm:$0x3]
      %v478 = vld [vmem:[%s185 + $0x258] sm:$0xf]
      %v479 = vld [vmem:[%s185 + $0x25c] sm:$0xf]
      %v480 = vld [vmem:[%s185 + $0x260] sm:$0xf]
      %v481 = vld [vmem:[%s185 + $0x264] sm:$0xf]
      %v482 = vld [vmem:[%s185 + $0x268] sm:$0x3]
      %v483 = vld [vmem:[%s185 + $0x26c] sm:$0xf]
      %v484 = vld [vmem:[%s185 + $0x270] sm:$0xf]
      %v485 = vld [vmem:[%s185 + $0x274] sm:$0xf]
      %v486 = vld [vmem:[%s185 + $0x278] sm:$0xf]
      %v487 = vld [vmem:[%s185 + $0x27c] sm:$0x3]
      %v488 = vld [vmem:[%s185 + $0x280] sm:$0xf]
      %v489 = vld [vmem:[%s185 + $0x284] sm:$0xf]
      %v490 = vld [vmem:[%s185 + $0x288] sm:$0xf]
      %v491 = vld [vmem:[%s185 + $0x28c] sm:$0xf]
      %v492 = vld [vmem:[%s185 + $0x290] sm:$0x3]
      %v493 = vld [vmem:[%s185 + $0x294] sm:$0xf]
      %v494 = vld [vmem:[%s185 + $0x298] sm:$0xf]
      %v495 = vld [vmem:[%s185 + $0x29c] sm:$0xf]
      %v496 = vld [vmem:[%s185 + $0x2a0] sm:$0xf]
      %v497 = vld [vmem:[%s185 + $0x2a4] sm:$0x3]
      %v498 = vld [vmem:[%s185 + $0x2a8] sm:$0xf]
      %v499 = vld [vmem:[%s185 + $0x2ac] sm:$0xf]
      %v500 = vld [vmem:[%s185 + $0x2b0] sm:$0xf]
      %v501 = vld [vmem:[%s185 + $0x2b4] sm:$0xf]
      %v502 = vld [vmem:[%s185 + $0x2b8] sm:$0x3]
      %v503 = vld [vmem:[%s185 + $0x2bc] sm:$0xf]
      %v504 = vld [vmem:[%s185 + $0x2c0] sm:$0xf]
      %v505 = vld [vmem:[%s185 + $0x2c4] sm:$0xf]
      %v506 = vld [vmem:[%s185 + $0x2c8] sm:$0xf]
      %v507 = vld [vmem:[%s185 + $0x2cc] sm:$0x3]
      %v508 = vld [vmem:[%s185 + $0x2d0] sm:$0xf]
      %v509 = vld [vmem:[%s185 + $0x2d4] sm:$0xf]
      %v510 = vld [vmem:[%s185 + $0x2d8] sm:$0xf]
      %v511 = vld [vmem:[%s185 + $0x2dc] sm:$0xf]
      %v512 = vld [vmem:[%s185 + $0x2e0] sm:$0x3]
      %v513 = vld [vmem:[%s185 + $0x2e4] sm:$0xf]
      %v514 = vld [vmem:[%s185 + $0x2e8] sm:$0xf]
      %v515 = vld [vmem:[%s185 + $0x2ec] sm:$0xf]
      %v516 = vld [vmem:[%s185 + $0x2f0] sm:$0xf]
      %v517 = vld [vmem:[%s185 + $0x2f4] sm:$0x3]
      %v518 = vld [vmem:[%s185 + $0x2f8] sm:$0xf]
      %v519 = vld [vmem:[%s185 + $0x2fc] sm:$0xf]
      %v520 = vld [vmem:[%s185 + $0x300] sm:$0xf]
      %v521 = vld [vmem:[%s185 + $0x304] sm:$0xf]
      %v522 = vld [vmem:[%s185 + $0x308] sm:$0x3]
      %v523 = vld [vmem:[%s185 + $0x30c] sm:$0xf]
      %v524 = vld [vmem:[%s185 + $0x310] sm:$0xf]
      %v525 = vld [vmem:[%s185 + $0x314] sm:$0xf]
      %v526 = vld [vmem:[%s185 + $0x318] sm:$0xf]
      %v527 = vld [vmem:[%s185 + $0x31c] sm:$0x3]
      %v528 = vld [vmem:[%s185 + $0x320] sm:$0xf]
      %v529 = vld [vmem:[%s185 + $0x324] sm:$0xf]
      %v530 = vld [vmem:[%s185 + $0x328] sm:$0xf]
      %v531 = vld [vmem:[%s185 + $0x32c] sm:$0xf]
      %v532 = vld [vmem:[%s185 + $0x330] sm:$0x3]
      %v533 = vld [vmem:[%s185 + $0x334] sm:$0xf]
      %v534 = vld [vmem:[%s185 + $0x338] sm:$0xf]
      %v535 = vld [vmem:[%s185 + $0x33c] sm:$0xf]
      %v536 = vld [vmem:[%s185 + $0x340] sm:$0xf]
      %v537 = vld [vmem:[%s185 + $0x344] sm:$0x3]
      %v538 = vld [vmem:[%s185 + $0x348] sm:$0xf]
      %v539 = vld [vmem:[%s185 + $0x34c] sm:$0xf]
      %v540 = vld [vmem:[%s185 + $0x350] sm:$0xf]
      %v541 = vld [vmem:[%s185 + $0x354] sm:$0xf]
      %v542 = vld [vmem:[%s185 + $0x358] sm:$0x3]
      %v543 = vld [vmem:[%s185 + $0x35c] sm:$0xf]
      %v544 = vld [vmem:[%s185 + $0x360] sm:$0xf]
      %v545 = vld [vmem:[%s185 + $0x364] sm:$0xf]
      %v546 = vld [vmem:[%s185 + $0x368] sm:$0xf]
      %v547 = vld [vmem:[%s185 + $0x36c] sm:$0x3]
      %v548 = vld [vmem:[%s185 + $0x370] sm:$0xf]
      %v549 = vld [vmem:[%s185 + $0x374] sm:$0xf]
      %v550 = vld [vmem:[%s185 + $0x378] sm:$0xf]
      %v551 = vld [vmem:[%s185 + $0x37c] sm:$0xf]
      %v552 = vld [vmem:[%s185 + $0x380] sm:$0x3]
      %v553 = vld [vmem:[%s185 + $0x384] sm:$0xf]
      %v554 = vld [vmem:[%s185 + $0x388] sm:$0xf]
      %v555 = vld [vmem:[%s185 + $0x38c] sm:$0xf]
      %v556 = vld [vmem:[%s185 + $0x390] sm:$0xf]
      %v557 = vld [vmem:[%s185 + $0x394] sm:$0x3]
      %v558 = vld [vmem:[%s185 + $0x398] sm:$0xf]
      %v559 = vld [vmem:[%s185 + $0x39c] sm:$0xf]
      %v560 = vld [vmem:[%s185 + $0x3a0] sm:$0xf]
      %v561 = vld [vmem:[%s185 + $0x3a4] sm:$0xf]
      %v562 = vld [vmem:[%s185 + $0x3a8] sm:$0x3]
      %v563 = vld [vmem:[%s185 + $0x3ac] sm:$0xf]
      %v564 = vld [vmem:[%s185 + $0x3b0] sm:$0xf]
      %v565 = vld [vmem:[%s185 + $0x3b4] sm:$0xf]
      %v566 = vld [vmem:[%s185 + $0x3b8] sm:$0xf]
      %v567 = vld [vmem:[%s185 + $0x3bc] sm:$0x3]
      %v568 = vld [vmem:[%s185 + $0x3c0] sm:$0xf]
      %v569 = vld [vmem:[%s185 + $0x3c4] sm:$0xf]
      %v570 = vld [vmem:[%s185 + $0x3c8] sm:$0xf]
      %v571 = vld [vmem:[%s185 + $0x3cc] sm:$0xf]
      %v572 = vld [vmem:[%s185 + $0x3d0] sm:$0x3]
      %v573 = vld [vmem:[%s185 + $0x3d4] sm:$0xf]
      %v574 = vld [vmem:[%s185 + $0x3d8] sm:$0xf]
      %v575 = vld [vmem:[%s185 + $0x3dc] sm:$0xf]
      %v576 = vld [vmem:[%s185 + $0x3e0] sm:$0xf]
      %v577 = vld [vmem:[%s185 + $0x3e4] sm:$0x3]
      %v578 = vld [vmem:[%s185 + $0x3e8] sm:$0xf]
      %v579 = vld [vmem:[%s185 + $0x3ec] sm:$0xf]
      %v580 = vld [vmem:[%s185 + $0x3f0] sm:$0xf]
      %v581 = vld [vmem:[%s185 + $0x3f4] sm:$0xf]
      %v582 = vld [vmem:[%s185 + $0x3f8] sm:$0x3]
      %v583 = vld [vmem:[%s185 + $0x3fc] sm:$0xf]
      %v584 = vld [vmem:[%s185 + $0x400] sm:$0xf]
      %v585 = vld [vmem:[%s185 + $0x404] sm:$0xf]
      %v586 = vld [vmem:[%s185 + $0x408] sm:$0xf]
      %v587 = vld [vmem:[%s185 + $0x40c] sm:$0x3]
      %v588 = vld [vmem:[%s185 + $0x410] sm:$0xf]
      %v589 = vld [vmem:[%s185 + $0x414] sm:$0xf]
      %v590 = vld [vmem:[%s185 + $0x418] sm:$0xf]
      %v591 = vld [vmem:[%s185 + $0x41c] sm:$0xf]
      %v592 = vld [vmem:[%s185 + $0x420] sm:$0x3]
      %v593 = vld [vmem:[%s185 + $0x424] sm:$0xf]
      %v594 = vld [vmem:[%s185 + $0x428] sm:$0xf]
      %v595 = vld [vmem:[%s185 + $0x42c] sm:$0xf]
      %v596 = vld [vmem:[%s185 + $0x430] sm:$0xf]
      %v597 = vld [vmem:[%s185 + $0x434] sm:$0x3]
      %v598 = vld [vmem:[%s185 + $0x438] sm:$0xf]
      %v599 = vld [vmem:[%s185 + $0x43c] sm:$0xf]
      %v600 = vld [vmem:[%s185 + $0x440] sm:$0xf]
      %v601 = vld [vmem:[%s185 + $0x444] sm:$0xf]
      %v602 = vld [vmem:[%s185 + $0x448] sm:$0x3]
      %v603 = vld [vmem:[%s185 + $0x44c] sm:$0xf]
      %v604 = vld [vmem:[%s185 + $0x450] sm:$0xf]
      %v605 = vld [vmem:[%s185 + $0x454] sm:$0xf]
      %v606 = vld [vmem:[%s185 + $0x458] sm:$0xf]
      %v607 = vld [vmem:[%s185 + $0x45c] sm:$0x3]
      %v608 = vld [vmem:[%s185 + $0x460] sm:$0xf]
      %v609 = vld [vmem:[%s185 + $0x464] sm:$0xf]
      %v610 = vld [vmem:[%s185 + $0x468] sm:$0xf]
      %v611 = vld [vmem:[%s185 + $0x46c] sm:$0xf]
      %v612 = vld [vmem:[%s185 + $0x470] sm:$0x3]
      %v613 = vld [vmem:[%s185 + $0x474] sm:$0xf]
      %v614 = vld [vmem:[%s185 + $0x478] sm:$0xf]
      %v615 = vld [vmem:[%s185 + $0x47c] sm:$0xf]
      %v616 = vld [vmem:[%s185 + $0x480] sm:$0xf]
      %v617 = vld [vmem:[%s185 + $0x484] sm:$0x3]
      %v618 = vld [vmem:[%s185 + $0x488] sm:$0xf]
      %v619 = vld [vmem:[%s185 + $0x48c] sm:$0xf]
      %v620 = vld [vmem:[%s185 + $0x490] sm:$0xf]
      %v621 = vld [vmem:[%s185 + $0x494] sm:$0xf]
      %v622 = vld [vmem:[%s185 + $0x498] sm:$0x3]
      %v623 = vld [vmem:[%s185 + $0x49c] sm:$0xf]
      %v624 = vld [vmem:[%s185 + $0x4a0] sm:$0xf]
      %v625 = vld [vmem:[%s185 + $0x4a4] sm:$0xf]
      %v626 = vld [vmem:[%s185 + $0x4a8] sm:$0xf]
      %v627 = vld [vmem:[%s185 + $0x4ac] sm:$0x3]
      %v628 = vld [vmem:[%s185 + $0x4b0] sm:$0xf]
      %v629 = vld [vmem:[%s185 + $0x4b4] sm:$0xf]
      %v630 = vld [vmem:[%s185 + $0x4b8] sm:$0xf]
      %v631 = vld [vmem:[%s185 + $0x4bc] sm:$0xf]
      %v632 = vld [vmem:[%s185 + $0x4c0] sm:$0x3]
      %v633 = vld [vmem:[%s185 + $0x4c4] sm:$0xf]
      %v634 = vld [vmem:[%s185 + $0x4c8] sm:$0xf]
      %v635 = vld [vmem:[%s185 + $0x4cc] sm:$0xf]
      %v636 = vld [vmem:[%s185 + $0x4d0] sm:$0xf]
      %v637 = vld [vmem:[%s185 + $0x4d4] sm:$0x3]
      %v638 = vld [vmem:[%s185 + $0x4d8] sm:$0xf]
      %v639 = vld [vmem:[%s185 + $0x4dc] sm:$0xf]
      %v640 = vld [vmem:[%s185 + $0x4e0] sm:$0xf]
      %v641 = vld [vmem:[%s185 + $0x4e4] sm:$0xf]
      %v642 = vld [vmem:[%s185 + $0x4e8] sm:$0x3]
      %v643 = vld [vmem:[%s185 + $0x4ec] sm:$0xf]
      %v644 = vld [vmem:[%s185 + $0x4f0] sm:$0xf]
      %v645 = vld [vmem:[%s185 + $0x4f4] sm:$0xf]
      %v646 = vld [vmem:[%s185 + $0x4f8] sm:$0xf]
      %v647 = vld [vmem:[%s185 + $0x4fc] sm:$0x3]
      %v648 = vld [vmem:[%s185 + $0x500] sm:$0xf]
      %v649 = vld [vmem:[%s185 + $0x504] sm:$0xf]
      %v650 = vld [vmem:[%s185 + $0x508] sm:$0xf]
      %v651 = vld [vmem:[%s185 + $0x50c] sm:$0xf]
      %v652 = vld [vmem:[%s185 + $0x510] sm:$0x3]
      %v653 = vld [vmem:[%s185 + $0x514] sm:$0xf]
      %v654 = vld [vmem:[%s185 + $0x518] sm:$0xf]
      %v655 = vld [vmem:[%s185 + $0x51c] sm:$0xf]
      %v656 = vld [vmem:[%s185 + $0x520] sm:$0xf]
      %v657 = vld [vmem:[%s185 + $0x524] sm:$0x3]
      %v658 = vld [vmem:[%s185 + $0x528] sm:$0xf]
      %v659 = vld [vmem:[%s185 + $0x52c] sm:$0xf]
      %v660 = vld [vmem:[%s185 + $0x530] sm:$0xf]
      %v661 = vld [vmem:[%s185 + $0x534] sm:$0xf]
      %v662 = vld [vmem:[%s185 + $0x538] sm:$0x3]
      %v663 = vld [vmem:[%s185 + $0x53c] sm:$0xf]
      %v664 = vld [vmem:[%s185 + $0x540] sm:$0xf]
      %v665 = vld [vmem:[%s185 + $0x544] sm:$0xf]
      %v666 = vld [vmem:[%s185 + $0x548] sm:$0xf]
      %v667 = vld [vmem:[%s185 + $0x54c] sm:$0x3]
      %v668 = vld [vmem:[%s185 + $0x550] sm:$0xf]
      %v669 = vld [vmem:[%s185 + $0x554] sm:$0xf]
      %v670 = vld [vmem:[%s185 + $0x558] sm:$0xf]
      %v671 = vld [vmem:[%s185 + $0x55c] sm:$0xf]
      %v672 = vld [vmem:[%s185 + $0x560] sm:$0x3]
      %v673 = vld [vmem:[%s185 + $0x564] sm:$0xf]
      %v674 = vld [vmem:[%s185 + $0x568] sm:$0xf]
      %v675 = vld [vmem:[%s185 + $0x56c] sm:$0xf]
      %v676 = vld [vmem:[%s185 + $0x570] sm:$0xf]
      %v677 = vld [vmem:[%s185 + $0x574] sm:$0x3]
      %v678 = vld [vmem:[%s185 + $0x578] sm:$0xf]
      %v679 = vld [vmem:[%s185 + $0x57c] sm:$0xf]
      %v680 = vld [vmem:[%s185 + $0x580] sm:$0xf]
      %v681 = vld [vmem:[%s185 + $0x584] sm:$0xf]
      %v682 = vld [vmem:[%s185 + $0x588] sm:$0x3]
      %v683 = vld [vmem:[%s185 + $0x58c] sm:$0xf]
      %v684 = vld [vmem:[%s185 + $0x590] sm:$0xf]
      %v685 = vld [vmem:[%s185 + $0x594] sm:$0xf]
      %v686 = vld [vmem:[%s185 + $0x598] sm:$0xf]
      %v687 = vld [vmem:[%s185 + $0x59c] sm:$0x3]
      %v688 = vld [vmem:[%s185 + $0x5a0] sm:$0xf]
      %v689 = vld [vmem:[%s185 + $0x5a4] sm:$0xf]
      %v690 = vld [vmem:[%s185 + $0x5a8] sm:$0xf]
      %v691 = vld [vmem:[%s185 + $0x5ac] sm:$0xf]
      %v692 = vld [vmem:[%s185 + $0x5b0] sm:$0x3]
      %v693 = vld [vmem:[%s185 + $0x5b4] sm:$0xf]
      %v694 = vld [vmem:[%s185 + $0x5b8] sm:$0xf]
      %v695 = vld [vmem:[%s185 + $0x5bc] sm:$0xf]
      %v696 = vld [vmem:[%s185 + $0x5c0] sm:$0xf]
      %v697 = vld [vmem:[%s185 + $0x5c4] sm:$0x3]
      %v698 = vld [vmem:[%s185 + $0x5c8] sm:$0xf]
      %v699 = vld [vmem:[%s185 + $0x5cc] sm:$0xf]
      %v700 = vld [vmem:[%s185 + $0x5d0] sm:$0xf]
      %v701 = vld [vmem:[%s185 + $0x5d4] sm:$0xf]
      %v702 = vld [vmem:[%s185 + $0x5d8] sm:$0x3]
      %v703 = vld [vmem:[%s185 + $0x5dc] sm:$0xf]
      %v704 = vld [vmem:[%s185 + $0x5e0] sm:$0xf]
      %v705 = vld [vmem:[%s185 + $0x5e4] sm:$0xf]
      %v706 = vld [vmem:[%s185 + $0x5e8] sm:$0xf]
      %v707 = vld [vmem:[%s185 + $0x5ec] sm:$0x3]
      %v708 = vld [vmem:[%s185 + $0x5f0] sm:$0xf]
      %v709 = vld [vmem:[%s185 + $0x5f4] sm:$0xf]
      %v710 = vld [vmem:[%s185 + $0x5f8] sm:$0xf]
      %v711 = vld [vmem:[%s185 + $0x5fc] sm:$0xf]
      %v712 = vld [vmem:[%s185 + $0x600] sm:$0x3]
      %v713 = vld [vmem:[%s185 + $0x604] sm:$0xf]
      %v714 = vld [vmem:[%s185 + $0x608] sm:$0xf]
      %v715 = vld [vmem:[%s185 + $0x60c] sm:$0xf]
      %v716 = vld [vmem:[%s185 + $0x610] sm:$0xf]
      %v717 = vld [vmem:[%s185 + $0x614] sm:$0x3]
      %v718 = vld [vmem:[%s185 + $0x618] sm:$0xf]
      %v719 = vld [vmem:[%s185 + $0x61c] sm:$0xf]
      %v720 = vld [vmem:[%s185 + $0x620] sm:$0xf]
      %v721 = vld [vmem:[%s185 + $0x624] sm:$0xf]
      %v722 = vld [vmem:[%s185 + $0x628] sm:$0x3]
      %v723 = vld [vmem:[%s185 + $0x62c] sm:$0xf]
      %v724 = vld [vmem:[%s185 + $0x630] sm:$0xf]
      %v725 = vld [vmem:[%s185 + $0x634] sm:$0xf]
      %v726 = vld [vmem:[%s185 + $0x638] sm:$0xf]
      %v727 = vld [vmem:[%s185 + $0x63c] sm:$0x3]
      %v728 = vld [vmem:[%s185 + $0x640] sm:$0xf]
      %v729 = vld [vmem:[%s185 + $0x644] sm:$0xf]
      %v730 = vld [vmem:[%s185 + $0x648] sm:$0xf]
      %v731 = vld [vmem:[%s185 + $0x64c] sm:$0xf]
      %v732 = vld [vmem:[%s185 + $0x650] sm:$0x3]
      %v733 = vld [vmem:[%s185 + $0x654] sm:$0xf]
      %v734 = vld [vmem:[%s185 + $0x658] sm:$0xf]
      %v735 = vld [vmem:[%s185 + $0x65c] sm:$0xf]
      %v736 = vld [vmem:[%s185 + $0x660] sm:$0xf]
      %v737 = vld [vmem:[%s185 + $0x664] sm:$0x3]
      %v738 = vld [vmem:[%s185 + $0x668] sm:$0xf]
      %v739 = vld [vmem:[%s185 + $0x66c] sm:$0xf]
      %v740 = vld [vmem:[%s185 + $0x670] sm:$0xf]
      %v741 = vld [vmem:[%s185 + $0x674] sm:$0xf]
      %v742 = vld [vmem:[%s185 + $0x678] sm:$0x3]
      %v743 = vld [vmem:[%s185 + $0x67c] sm:$0xf]
      %v744 = vld [vmem:[%s185 + $0x680] sm:$0xf]
      %v745 = vld [vmem:[%s185 + $0x684] sm:$0xf]
      %v746 = vld [vmem:[%s185 + $0x688] sm:$0xf]
      %v747 = vld [vmem:[%s185 + $0x68c] sm:$0x3]
      %v748 = vld [vmem:[%s185 + $0x690] sm:$0xf]
      %v749 = vld [vmem:[%s185 + $0x694] sm:$0xf]
      %v750 = vld [vmem:[%s185 + $0x698] sm:$0xf]
      %v751 = vld [vmem:[%s185 + $0x69c] sm:$0xf]
      %v752 = vld [vmem:[%s185 + $0x6a0] sm:$0x3]
      %v753 = vld [vmem:[%s185 + $0x6a4] sm:$0xf]
      %v754 = vld [vmem:[%s185 + $0x6a8] sm:$0xf]
      %v755 = vld [vmem:[%s185 + $0x6ac] sm:$0xf]
      %v756 = vld [vmem:[%s185 + $0x6b0] sm:$0xf]
      %v757 = vld [vmem:[%s185 + $0x6b4] sm:$0x3]
      %v758 = vld [vmem:[%s185 + $0x6b8] sm:$0xf]
      %v759 = vld [vmem:[%s185 + $0x6bc] sm:$0xf]
      %v760 = vld [vmem:[%s185 + $0x6c0] sm:$0xf]
      %v761 = vld [vmem:[%s185 + $0x6c4] sm:$0xf]
      %v762 = vld [vmem:[%s185 + $0x6c8] sm:$0x3]
      %v763 = vld [vmem:[%s185 + $0x6cc] sm:$0xf]
      %v764 = vld [vmem:[%s185 + $0x6d0] sm:$0xf]
      %v765 = vld [vmem:[%s185 + $0x6d4] sm:$0xf]
      %v766 = vld [vmem:[%s185 + $0x6d8] sm:$0xf]
      %v767 = vld [vmem:[%s185 + $0x6dc] sm:$0x3]
      %v768 = vld [vmem:[%s185 + $0x6e0] sm:$0xf]
      %v769 = vld [vmem:[%s185 + $0x6e4] sm:$0xf]
      %v770 = vld [vmem:[%s185 + $0x6e8] sm:$0xf]
      %v771 = vld [vmem:[%s185 + $0x6ec] sm:$0xf]
      %v772 = vld [vmem:[%s185 + $0x6f0] sm:$0x3]
      %v773 = vld [vmem:[%s185 + $0x6f4] sm:$0xf]
      %v774 = vld [vmem:[%s185 + $0x6f8] sm:$0xf]
      %v775 = vld [vmem:[%s185 + $0x6fc] sm:$0xf]
      %v776 = vld [vmem:[%s185 + $0x700] sm:$0xf]
      %v777 = vld [vmem:[%s185 + $0x704] sm:$0x3]
      %v778 = vld [vmem:[%s185 + $0x708] sm:$0xf]
      %v779 = vld [vmem:[%s185 + $0x70c] sm:$0xf]
      %v780 = vld [vmem:[%s185 + $0x710] sm:$0xf]
      %v781 = vld [vmem:[%s185 + $0x714] sm:$0xf]
      %v782 = vld [vmem:[%s185 + $0x718] sm:$0x3]
      %v783 = vld [vmem:[%s185 + $0x71c] sm:$0xf]
      %v784 = vld [vmem:[%s185 + $0x720] sm:$0xf]
      %v785 = vld [vmem:[%s185 + $0x724] sm:$0xf]
      %v786 = vld [vmem:[%s185 + $0x728] sm:$0xf]
      %v787 = vld [vmem:[%s185 + $0x72c] sm:$0x3]
      %v788 = vld [vmem:[%s185 + $0x730] sm:$0xf]
      %v789 = vld [vmem:[%s185 + $0x734] sm:$0xf]
      %v790 = vld [vmem:[%s185 + $0x738] sm:$0xf]
      %v791 = vld [vmem:[%s185 + $0x73c] sm:$0xf]
      %v792 = vld [vmem:[%s185 + $0x740] sm:$0x3]
      %v793 = vld [vmem:[%s185 + $0x744] sm:$0xf]
      %v794 = vld [vmem:[%s185 + $0x748] sm:$0xf]
      %v795 = vld [vmem:[%s185 + $0x74c] sm:$0xf]
      %v796 = vld [vmem:[%s185 + $0x750] sm:$0xf]
      %v797 = vld [vmem:[%s185 + $0x754] sm:$0x3]
      %v798 = vld [vmem:[%s185 + $0x758] sm:$0xf]
      %v799 = vld [vmem:[%s185 + $0x75c] sm:$0xf]
      %v800 = vld [vmem:[%s185 + $0x760] sm:$0xf]
      %v801 = vld [vmem:[%s185 + $0x764] sm:$0xf]
      %v802 = vld [vmem:[%s185 + $0x768] sm:$0x3]
      %v803 = vld [vmem:[%s185 + $0x76c] sm:$0xf]
      %v804 = vld [vmem:[%s185 + $0x770] sm:$0xf]
      %v805 = vld [vmem:[%s185 + $0x774] sm:$0xf]
      %v806 = vld [vmem:[%s185 + $0x778] sm:$0xf]
      %v807 = vld [vmem:[%s185 + $0x77c] sm:$0x3]
      %v808 = vld [vmem:[%s185 + $0x780] sm:$0xf]
      %v809 = vld [vmem:[%s185 + $0x784] sm:$0xf]
      %v810 = vld [vmem:[%s185 + $0x788] sm:$0xf]
      %v811 = vld [vmem:[%s185 + $0x78c] sm:$0xf]
      %v812 = vld [vmem:[%s185 + $0x790] sm:$0x3]
      %v813 = vld [vmem:[%s185 + $0x794] sm:$0xf]
      %v814 = vld [vmem:[%s185 + $0x798] sm:$0xf]
      %v815 = vld [vmem:[%s185 + $0x79c] sm:$0xf]
      %v816 = vld [vmem:[%s185 + $0x7a0] sm:$0xf]
      %v817 = vld [vmem:[%s185 + $0x7a4] sm:$0x3]
      %v818 = vld [vmem:[%s185 + $0x7a8] sm:$0xf]
      %v819 = vld [vmem:[%s185 + $0x7ac] sm:$0xf]
      %v820 = vld [vmem:[%s185 + $0x7b0] sm:$0xf]
      %v821 = vld [vmem:[%s185 + $0x7b4] sm:$0xf]
      %v822 = vld [vmem:[%s185 + $0x7b8] sm:$0x3]
      %v823 = vld [vmem:[%s185 + $0x7bc] sm:$0xf]
      %v824 = vld [vmem:[%s185 + $0x7c0] sm:$0xf]
      %v825 = vld [vmem:[%s185 + $0x7c4] sm:$0xf]
      %v826 = vld [vmem:[%s185 + $0x7c8] sm:$0xf]
      %v827 = vld [vmem:[%s185 + $0x7cc] sm:$0x3]
      %v828 = vld [vmem:[%s185 + $0x7d0] sm:$0xf]
      %v829 = vld [vmem:[%s185 + $0x7d4] sm:$0xf]
      %v830 = vld [vmem:[%s185 + $0x7d8] sm:$0xf]
      %v831 = vld [vmem:[%s185 + $0x7dc] sm:$0xf]
      %v832 = vld [vmem:[%s185 + $0x7e0] sm:$0x3]
      %v833 = vld [vmem:[%s185 + $0x7e4] sm:$0xf]
      %v834 = vld [vmem:[%s185 + $0x7e8] sm:$0xf]
      %v835 = vld [vmem:[%s185 + $0x7ec] sm:$0xf]
      %v836 = vld [vmem:[%s185 + $0x7f0] sm:$0xf]
      %v837 = vld [vmem:[%s185 + $0x7f4] sm:$0x3]
      %v838 = vld [vmem:[%s185 + $0x7f8] sm:$0xf]
      %v839 = vld [vmem:[%s185 + $0x7fc] sm:$0xf]
      %v840 = vld [vmem:[%s185 + $0x800] sm:$0xf]
      %v841 = vld [vmem:[%s185 + $0x804] sm:$0xf]
      %v842 = vld [vmem:[%s185 + $0x808] sm:$0x3]
      %v843 = vld [vmem:[%s185 + $0x80c] sm:$0xf]
      %v844 = vld [vmem:[%s185 + $0x810] sm:$0xf]
      %v845 = vld [vmem:[%s185 + $0x814] sm:$0xf]
      %v846 = vld [vmem:[%s185 + $0x818] sm:$0xf]
      %v847 = vld [vmem:[%s185 + $0x81c] sm:$0x3]
      %v848 = vld [vmem:[%s185 + $0x820] sm:$0xf]
      %v849 = vld [vmem:[%s185 + $0x824] sm:$0xf]
      %v850 = vld [vmem:[%s185 + $0x828] sm:$0xf]
      %v851 = vld [vmem:[%s185 + $0x82c] sm:$0xf]
      %v852 = vld [vmem:[%s185 + $0x830] sm:$0x3]
      %v853 = vld [vmem:[%s185 + $0x834] sm:$0xf]
      %v854 = vld [vmem:[%s185 + $0x838] sm:$0xf]
      %v855 = vld [vmem:[%s185 + $0x83c] sm:$0xf]
      %v856 = vld [vmem:[%s185 + $0x840] sm:$0xf]
      %v857 = vld [vmem:[%s185 + $0x844] sm:$0x3]
      %v858 = vld [vmem:[%s185 + $0x848] sm:$0xf]
      %v859 = vld [vmem:[%s185 + $0x84c] sm:$0xf]
      %v860 = vld [vmem:[%s185 + $0x850] sm:$0xf]
      %v861 = vld [vmem:[%s185 + $0x854] sm:$0xf]
      %v862 = vld [vmem:[%s185 + $0x858] sm:$0x3]
      %v863 = vld [vmem:[%s185 + $0x85c] sm:$0xf]
      %v864 = vld [vmem:[%s185 + $0x860] sm:$0xf]
      %v865 = vld [vmem:[%s185 + $0x864] sm:$0xf]
      %v866 = vld [vmem:[%s185 + $0x868] sm:$0xf]
      %v867 = vld [vmem:[%s185 + $0x86c] sm:$0x3]
      %v868 = vld [vmem:[%s185 + $0x870] sm:$0xf]
      %v869 = vld [vmem:[%s185 + $0x874] sm:$0xf]
      %v870 = vld [vmem:[%s185 + $0x878] sm:$0xf]
      %v871 = vld [vmem:[%s185 + $0x87c] sm:$0xf]
      %v872 = vld [vmem:[%s185 + $0x880] sm:$0x3]
      %v873 = vld [vmem:[%s185 + $0x884] sm:$0xf]
      %v874 = vld [vmem:[%s185 + $0x888] sm:$0xf]
      %v875 = vld [vmem:[%s185 + $0x88c] sm:$0xf]
      %v876 = vld [vmem:[%s185 + $0x890] sm:$0xf]
      %v877 = vld [vmem:[%s185 + $0x894] sm:$0x3]
      %v878 = vld [vmem:[%s185 + $0x898] sm:$0xf]
      %v879 = vld [vmem:[%s185 + $0x89c] sm:$0xf]
      %v880 = vld [vmem:[%s185 + $0x8a0] sm:$0xf]
      %v881 = vld [vmem:[%s185 + $0x8a4] sm:$0xf]
      %v882 = vld [vmem:[%s185 + $0x8a8] sm:$0x3]
      %v883 = vld [vmem:[%s185 + $0x8ac] sm:$0xf]
      %v884 = vld [vmem:[%s185 + $0x8b0] sm:$0xf]
      %v885 = vld [vmem:[%s185 + $0x8b4] sm:$0xf]
      %v886 = vld [vmem:[%s185 + $0x8b8] sm:$0xf]
      %v887 = vld [vmem:[%s185 + $0x8bc] sm:$0x3]
      %v888 = vld [vmem:[%s185 + $0x8c0] sm:$0xf]
      %v889 = vld [vmem:[%s185 + $0x8c4] sm:$0xf]
      %v890 = vld [vmem:[%s185 + $0x8c8] sm:$0xf]
      %v891 = vld [vmem:[%s185 + $0x8cc] sm:$0xf]
      %v892 = vld [vmem:[%s185 + $0x8d0] sm:$0x3]
      %v893 = vld [vmem:[%s185 + $0x8d4] sm:$0xf]
      %v894 = vld [vmem:[%s185 + $0x8d8] sm:$0xf]
      %v895 = vld [vmem:[%s185 + $0x8dc] sm:$0xf]
      %v896 = vld [vmem:[%s185 + $0x8e0] sm:$0xf]
      %v897 = vld [vmem:[%s185 + $0x8e4] sm:$0x3]
      %v898 = vld [vmem:[%s185 + $0x8e8] sm:$0xf]
      %v899 = vld [vmem:[%s185 + $0x8ec] sm:$0xf]
      %v900 = vld [vmem:[%s185 + $0x8f0] sm:$0xf]
      %v901 = vld [vmem:[%s185 + $0x8f4] sm:$0xf]
      %v902 = vld [vmem:[%s185 + $0x8f8] sm:$0x3]
      %v903 = vld [vmem:[%s185 + $0x8fc] sm:$0xf]
      %v904 = vld [vmem:[%s185 + $0x900] sm:$0xf]
      %v905 = vld [vmem:[%s185 + $0x904] sm:$0xf]
      %v906 = vld [vmem:[%s185 + $0x908] sm:$0xf]
      %v907 = vld [vmem:[%s185 + $0x90c] sm:$0x3]
      %v908 = vld [vmem:[%s185 + $0x910] sm:$0xf]
      %v909 = vld [vmem:[%s185 + $0x914] sm:$0xf]
      %v910 = vld [vmem:[%s185 + $0x918] sm:$0xf]
      %v911 = vld [vmem:[%s185 + $0x91c] sm:$0xf]
      %v912 = vld [vmem:[%s185 + $0x920] sm:$0x3]
      %v913 = vld [vmem:[%s185 + $0x924] sm:$0xf]
      %v914 = vld [vmem:[%s185 + $0x928] sm:$0xf]
      %v915 = vld [vmem:[%s185 + $0x92c] sm:$0xf]
      %v916 = vld [vmem:[%s185 + $0x930] sm:$0xf]
      %v917 = vld [vmem:[%s185 + $0x934] sm:$0x3]
      %v918 = vld [vmem:[%s185 + $0x938] sm:$0xf]
      %v919 = vld [vmem:[%s185 + $0x93c] sm:$0xf]
      %v920 = vld [vmem:[%s185 + $0x940] sm:$0xf]
      %v921 = vld [vmem:[%s185 + $0x944] sm:$0xf]
      %v922 = vld [vmem:[%s185 + $0x948] sm:$0x3]
      %v923 = vld [vmem:[%s185 + $0x94c] sm:$0xf]
      %v924 = vld [vmem:[%s185 + $0x950] sm:$0xf]
      %v925 = vld [vmem:[%s185 + $0x954] sm:$0xf]
      %v926 = vld [vmem:[%s185 + $0x958] sm:$0xf]
      %v927 = vld [vmem:[%s185 + $0x95c] sm:$0x3]
      %v928 = vld [vmem:[%s185 + $0x960] sm:$0xf]
      %v929 = vld [vmem:[%s185 + $0x964] sm:$0xf]
      %v930 = vld [vmem:[%s185 + $0x968] sm:$0xf]
      %v931 = vld [vmem:[%s185 + $0x96c] sm:$0xf]
      %v932 = vld [vmem:[%s185 + $0x970] sm:$0x3]
      %v933 = vld [vmem:[%s185 + $0x974] sm:$0xf]
      %v934 = vld [vmem:[%s185 + $0x978] sm:$0xf]
      %v935 = vld [vmem:[%s185 + $0x97c] sm:$0xf]
      %v936 = vld [vmem:[%s185 + $0x980] sm:$0xf]
      %v937 = vld [vmem:[%s185 + $0x984] sm:$0x3]
      %v938 = vld [vmem:[%s185 + $0x988] sm:$0xf]
      %v939 = vld [vmem:[%s185 + $0x98c] sm:$0xf]
      %v940 = vld [vmem:[%s185 + $0x990] sm:$0xf]
      %v941 = vld [vmem:[%s185 + $0x994] sm:$0xf]
      %v942 = vld [vmem:[%s185 + $0x998] sm:$0x3]
      %v943 = vld [vmem:[%s185 + $0x99c] sm:$0xf]
      %v944 = vld [vmem:[%s185 + $0x9a0] sm:$0xf]
      %v945 = vld [vmem:[%s185 + $0x9a4] sm:$0xf]
      %v946 = vld [vmem:[%s185 + $0x9a8] sm:$0xf]
      %v947 = vld [vmem:[%s185 + $0x9ac] sm:$0x3]
      %v948 = vld [vmem:[%s185 + $0x9b0] sm:$0xf]
      %v949 = vld [vmem:[%s185 + $0x9b4] sm:$0xf]
      %v950 = vld [vmem:[%s185 + $0x9b8] sm:$0xf]
      %v951 = vld [vmem:[%s185 + $0x9bc] sm:$0xf]
      %v952 = vld [vmem:[%s185 + $0x9c0] sm:$0x3]
      %v953 = vld [vmem:[%s185 + $0x9c4] sm:$0xf]
      %v954 = vld [vmem:[%s185 + $0x9c8] sm:$0xf]
      %v955 = vld [vmem:[%s185 + $0x9cc] sm:$0xf]
      %v956 = vld [vmem:[%s185 + $0x9d0] sm:$0xf]
      %v957 = vld [vmem:[%s185 + $0x9d4] sm:$0x3]
      %v958 = vld [vmem:[%s185 + $0x9d8] sm:$0xf]
      %v959 = vld [vmem:[%s185 + $0x9dc] sm:$0xf]
      %v960 = vld [vmem:[%s185 + $0x9e0] sm:$0xf]
      %v961 = vld [vmem:[%s185 + $0x9e4] sm:$0xf]
      %v962 = vld [vmem:[%s185 + $0x9e8] sm:$0x3]
      %v963 = vld [vmem:[%s185 + $0x9ec] sm:$0xf]
      %v964 = vld [vmem:[%s185 + $0x9f0] sm:$0xf]
      %v965 = vld [vmem:[%s185 + $0x9f4] sm:$0xf]
      %v966 = vld [vmem:[%s185 + $0x9f8] sm:$0xf]
      %v967 = vld [vmem:[%s185 + $0x9fc] sm:$0x3]
      %v968 = vld [vmem:[%s2] sm:$0xff]
      %970 = vset.pattern.permute.xlu0 0
      %971 = vperm.xlu0 %970, %v968
      %v972 = vpop.permute.xlu0 %971
      %v979 = vunpack.c.l.b16 %v328
      %v980 = vunpack.c.l.b16 %v329
      %v981 = vunpack.c.l.b16 %v330
      %v982 = vunpack.c.l.b16 %v331
      %v983 = vunpack.c.l.b16 %v332
      %v984 = vpack.c.b16 %v980, %v979
      %v985 = vpack.c.b16 %v982, %v981
      %v986 = vpack.c.b16 %v983, %v983
      %vm989 = vcmask 293888
      %v991 = vsel %vm989, %v200, 0
      %vm993 = vcmask 1041408
      %v995 = vsel %vm993, %v986, 0
      %997 = vmatprep.subr.bf16.mxu0 0
      %998 = vmatpush1.bf16.msra.mxu0 0
      %999 = vmatprep.subr.bf16.mxu0 0
      %1000 = vmatpush1.bf16.msra.mxu0 0
      %1001 = vmatprep.subr.bf16.mxu0 0
      %1002 = vmatpush1.bf16.msra.mxu0 0
      %1003 = vmatprep.subr.bf16.mxu0 0
      %1004 = vmatpush1.bf16.msra.mxu0 0
      %1005 = vmatprep.subr.bf16.mxu0 0
      %1006 = vmatpush1.bf16.msra.mxu0 0
      %1007 = vmatprep.subr.bf16.mxu0 0
      %1008 = vmatpush1.bf16.msra.mxu0 %v995
      %1009 = vmatprep.subr.bf16.mxu0 0
      %1010 = vmatpush1.bf16.msra.mxu0 %v985
      %1011 = vmatprep.subr.bf16.mxu0 0
      %1012 = vmatpush1.bf16.msra.mxu0 %v984
      %1013 = vmatprep.subr.bf16.mxu0 0
      %1014 = vmatpush2.bf16.msra.mxu0 0
      %1015 = vmatprep.subr.bf16.mxu0 0
      %1016 = vmatpush2.bf16.msra.mxu0 0
      %1017 = vmatprep.subr.bf16.mxu0 0
      %1018 = vmatpush2.bf16.msra.mxu0 0
      %1019 = vmatprep.subr.bf16.mxu0 0
      %1020 = vmatpush2.bf16.msra.mxu0 0
      %1021 = vmatprep.subr.bf16.mxu0 0
      %1022 = vmatpush2.bf16.msra.mxu0 0
      %1023 = vmatprep.subr.bf16.mxu0 0
      %1024 = vmatpush2.bf16.msra.mxu0 0
      %1025 = vmatprep.subr.bf16.mxu0 0
      %1026 = vmatpush2.bf16.msra.mxu0 0
      %1027 = vmatprep.subr.bf16.mxu0 0
      %1028 = vmatpush2.bf16.msra.mxu0 0
      %1029 = vmatprep.mubr.bf16.mxu0 0
      %1030 = vmatmul.mubr.bf16.gmra.mxu0 %v991
      %v1031 = vpop.f32.mrf.mxu0
      %v1032 = vadd.f32 %v972, %v1031
      %v1033 = vpop.f32.mrf.mxu0
      %v1034 = vpop.f32.mrf.mxu0
      %v1035 = vpop.f32.mrf.mxu0
      %1036 = vdwg.mxu0
      %v1042 = vunpack.c.l.b16 %v333
      %v1043 = vunpack.c.l.b16 %v334
      %v1044 = vunpack.c.l.b16 %v335
      %v1045 = vunpack.c.l.b16 %v336
      %v1046 = vunpack.c.l.b16 %v337
      %v1047 = vpack.c.b16 %v1043, %v1042
      %v1048 = vpack.c.b16 %v1045, %v1044
      %v1049 = vpack.c.b16 %v1046, %v1046
      %v1053 = vsel %vm989, %v201, 0
      %v1056 = vsel %vm993, %v1049, 0
      %1058 = vmatprep.subr.bf16.mxu0 0
      %1059 = vmatpush1.bf16.msra.mxu0 0
      %1060 = vmatprep.subr.bf16.mxu0 0
      %1061 = vmatpush1.bf16.msra.mxu0 0
      %1062 = vmatprep.subr.bf16.mxu0 0
      %1063 = vmatpush1.bf16.msra.mxu0 0
      %1064 = vmatprep.subr.bf16.mxu0 0
      %1065 = vmatpush1.bf16.msra.mxu0 0
      %1066 = vmatprep.subr.bf16.mxu0 0
      %1067 = vmatpush1.bf16.msra.mxu0 0
      %1068 = vmatprep.subr.bf16.mxu0 0
      %1069 = vmatpush1.bf16.msra.mxu0 %v1056
      %1070 = vmatprep.subr.bf16.mxu0 0
      %1071 = vmatpush1.bf16.msra.mxu0 %v1048
      %1072 = vmatprep.subr.bf16.mxu0 0
      %1073 = vmatpush1.bf16.msra.mxu0 %v1047
      %1074 = vmatprep.subr.bf16.mxu0 0
      %1075 = vmatpush2.bf16.msra.mxu0 0
      %1076 = vmatprep.subr.bf16.mxu0 0
      %1077 = vmatpush2.bf16.msra.mxu0 0
      %1078 = vmatprep.subr.bf16.mxu0 0
      %1079 = vmatpush2.bf16.msra.mxu0 0
      %1080 = vmatprep.subr.bf16.mxu0 0
      %1081 = vmatpush2.bf16.msra.mxu0 0
      %1082 = vmatprep.subr.bf16.mxu0 0
      %1083 = vmatpush2.bf16.msra.mxu0 0
      %1084 = vmatprep.subr.bf16.mxu0 0
      %1085 = vmatpush2.bf16.msra.mxu0 0
      %1086 = vmatprep.subr.bf16.mxu0 0
      %1087 = vmatpush2.bf16.msra.mxu0 0
      %1088 = vmatprep.subr.bf16.mxu0 0
      %1089 = vmatpush2.bf16.msra.mxu0 0
      %1090 = vmatprep.mubr.bf16.mxu0 0
      %1091 = vmatmul.mubr.bf16.gmra.mxu0 %v1053
      %v1092 = vpop.f32.mrf.mxu0
      %v1093 = vadd.f32 %v972, %v1092
      %v1094 = vpop.f32.mrf.mxu0
      %v1095 = vpop.f32.mrf.mxu0
      %v1096 = vpop.f32.mrf.mxu0
      %1097 = vdwg.mxu0
      %v1103 = vunpack.c.l.b16 %v338
      %v1104 = vunpack.c.l.b16 %v339
      %v1105 = vunpack.c.l.b16 %v340
      %v1106 = vunpack.c.l.b16 %v341
      %v1107 = vunpack.c.l.b16 %v342
      %v1108 = vpack.c.b16 %v1104, %v1103
      %v1109 = vpack.c.b16 %v1106, %v1105
      %v1110 = vpack.c.b16 %v1107, %v1107
      %v1114 = vsel %vm989, %v202, 0
      %v1117 = vsel %vm993, %v1110, 0
      %1119 = vmatprep.subr.bf16.mxu0 0
      %1120 = vmatpush1.bf16.msra.mxu0 0
      %1121 = vmatprep.subr.bf16.mxu0 0
      %1122 = vmatpush1.bf16.msra.mxu0 0
      %1123 = vmatprep.subr.bf16.mxu0 0
      %1124 = vmatpush1.bf16.msra.mxu0 0
      %1125 = vmatprep.subr.bf16.mxu0 0
      %1126 = vmatpush1.bf16.msra.mxu0 0
      %1127 = vmatprep.subr.bf16.mxu0 0
      %1128 = vmatpush1.bf16.msra.mxu0 0
      %1129 = vmatprep.subr.bf16.mxu0 0
      %1130 = vmatpush1.bf16.msra.mxu0 %v1117
      %1131 = vmatprep.subr.bf16.mxu0 0
      %1132 = vmatpush1.bf16.msra.mxu0 %v1109
      %1133 = vmatprep.subr.bf16.mxu0 0
      %1134 = vmatpush1.bf16.msra.mxu0 %v1108
      %1135 = vmatprep.subr.bf16.mxu0 0
      %1136 = vmatpush2.bf16.msra.mxu0 0
      %1137 = vmatprep.subr.bf16.mxu0 0
      %1138 = vmatpush2.bf16.msra.mxu0 0
      %1139 = vmatprep.subr.bf16.mxu0 0
      %1140 = vmatpush2.bf16.msra.mxu0 0
      %1141 = vmatprep.subr.bf16.mxu0 0
      %1142 = vmatpush2.bf16.msra.mxu0 0
      %1143 = vmatprep.subr.bf16.mxu0 0
      %1144 = vmatpush2.bf16.msra.mxu0 0
      %1145 = vmatprep.subr.bf16.mxu0 0
      %1146 = vmatpush2.bf16.msra.mxu0 0
      %1147 = vmatprep.subr.bf16.mxu0 0
      %1148 = vmatpush2.bf16.msra.mxu0 0
      %1149 = vmatprep.subr.bf16.mxu0 0
      %1150 = vmatpush2.bf16.msra.mxu0 0
      %1151 = vmatprep.mubr.bf16.mxu0 0
      %1152 = vmatmul.mubr.bf16.gmra.mxu0 %v1114
      %v1153 = vpop.f32.mrf.mxu0
      %v1154 = vadd.f32 %v972, %v1153
      %v1155 = vpop.f32.mrf.mxu0
      %v1156 = vpop.f32.mrf.mxu0
      %v1157 = vpop.f32.mrf.mxu0
      %1158 = vdwg.mxu0
      %v1164 = vunpack.c.l.b16 %v343
      %v1165 = vunpack.c.l.b16 %v344
      %v1166 = vunpack.c.l.b16 %v345
      %v1167 = vunpack.c.l.b16 %v346
      %v1168 = vunpack.c.l.b16 %v347
      %v1169 = vpack.c.b16 %v1165, %v1164
      %v1170 = vpack.c.b16 %v1167, %v1166
      %v1171 = vpack.c.b16 %v1168, %v1168
      %v1175 = vsel %vm989, %v203, 0
      %v1178 = vsel %vm993, %v1171, 0
      %1180 = vmatprep.subr.bf16.mxu0 0
      %1181 = vmatpush1.bf16.msra.mxu0 0
      %1182 = vmatprep.subr.bf16.mxu0 0
      %1183 = vmatpush1.bf16.msra.mxu0 0
      %1184 = vmatprep.subr.bf16.mxu0 0
      %1185 = vmatpush1.bf16.msra.mxu0 0
      %1186 = vmatprep.subr.bf16.mxu0 0
      %1187 = vmatpush1.bf16.msra.mxu0 0
      %1188 = vmatprep.subr.bf16.mxu0 0
      %1189 = vmatpush1.bf16.msra.mxu0 0
      %1190 = vmatprep.subr.bf16.mxu0 0
      %1191 = vmatpush1.bf16.msra.mxu0 %v1178
      %1192 = vmatprep.subr.bf16.mxu0 0
      %1193 = vmatpush1.bf16.msra.mxu0 %v1170
      %1194 = vmatprep.subr.bf16.mxu0 0
      %1195 = vmatpush1.bf16.msra.mxu0 %v1169
      %1196 = vmatprep.subr.bf16.mxu0 0
      %1197 = vmatpush2.bf16.msra.mxu0 0
      %1198 = vmatprep.subr.bf16.mxu0 0
      %1199 = vmatpush2.bf16.msra.mxu0 0
      %1200 = vmatprep.subr.bf16.mxu0 0
      %1201 = vmatpush2.bf16.msra.mxu0 0
      %1202 = vmatprep.subr.bf16.mxu0 0
      %1203 = vmatpush2.bf16.msra.mxu0 0
      %1204 = vmatprep.subr.bf16.mxu0 0
      %1205 = vmatpush2.bf16.msra.mxu0 0
      %1206 = vmatprep.subr.bf16.mxu0 0
      %1207 = vmatpush2.bf16.msra.mxu0 0
      %1208 = vmatprep.subr.bf16.mxu0 0
      %1209 = vmatpush2.bf16.msra.mxu0 0
      %1210 = vmatprep.subr.bf16.mxu0 0
      %1211 = vmatpush2.bf16.msra.mxu0 0
      %1212 = vmatprep.mubr.bf16.mxu0 0
      %1213 = vmatmul.mubr.bf16.gmra.mxu0 %v1175
      %v1214 = vpop.f32.mrf.mxu0
      %v1215 = vadd.f32 %v972, %v1214
      %v1216 = vpop.f32.mrf.mxu0
      %v1217 = vpop.f32.mrf.mxu0
      %v1218 = vpop.f32.mrf.mxu0
      %1219 = vdwg.mxu0
      %v1225 = vunpack.c.l.b16 %v348
      %v1226 = vunpack.c.l.b16 %v349
      %v1227 = vunpack.c.l.b16 %v350
      %v1228 = vunpack.c.l.b16 %v351
      %v1229 = vunpack.c.l.b16 %v352
      %v1230 = vpack.c.b16 %v1226, %v1225
      %v1231 = vpack.c.b16 %v1228, %v1227
      %v1232 = vpack.c.b16 %v1229, %v1229
      %v1236 = vsel %vm989, %v204, 0
      %v1239 = vsel %vm993, %v1232, 0
      %1241 = vmatprep.subr.bf16.mxu0 0
      %1242 = vmatpush1.bf16.msra.mxu0 0
      %1243 = vmatprep.subr.bf16.mxu0 0
      %1244 = vmatpush1.bf16.msra.mxu0 0
      %1245 = vmatprep.subr.bf16.mxu0 0
      %1246 = vmatpush1.bf16.msra.mxu0 0
      %1247 = vmatprep.subr.bf16.mxu0 0
      %1248 = vmatpush1.bf16.msra.mxu0 0
      %1249 = vmatprep.subr.bf16.mxu0 0
      %1250 = vmatpush1.bf16.msra.mxu0 0
      %1251 = vmatprep.subr.bf16.mxu0 0
      %1252 = vmatpush1.bf16.msra.mxu0 %v1239
      %1253 = vmatprep.subr.bf16.mxu0 0
      %1254 = vmatpush1.bf16.msra.mxu0 %v1231
      %1255 = vmatprep.subr.bf16.mxu0 0
      %1256 = vmatpush1.bf16.msra.mxu0 %v1230
      %1257 = vmatprep.subr.bf16.mxu0 0
      %1258 = vmatpush2.bf16.msra.mxu0 0
      %1259 = vmatprep.subr.bf16.mxu0 0
      %1260 = vmatpush2.bf16.msra.mxu0 0
      %1261 = vmatprep.subr.bf16.mxu0 0
      %1262 = vmatpush2.bf16.msra.mxu0 0
      %1263 = vmatprep.subr.bf16.mxu0 0
      %1264 = vmatpush2.bf16.msra.mxu0 0
      %1265 = vmatprep.subr.bf16.mxu0 0
      %1266 = vmatpush2.bf16.msra.mxu0 0
      %1267 = vmatprep.subr.bf16.mxu0 0
      %1268 = vmatpush2.bf16.msra.mxu0 0
      %1269 = vmatprep.subr.bf16.mxu0 0
      %1270 = vmatpush2.bf16.msra.mxu0 0
      %1271 = vmatprep.subr.bf16.mxu0 0
      %1272 = vmatpush2.bf16.msra.mxu0 0
      %1273 = vmatprep.mubr.bf16.mxu0 0
      %1274 = vmatmul.mubr.bf16.gmra.mxu0 %v1236
      %v1275 = vpop.f32.mrf.mxu0
      %v1276 = vadd.f32 %v972, %v1275
      %v1277 = vpop.f32.mrf.mxu0
      %v1278 = vpop.f32.mrf.mxu0
      %v1279 = vpop.f32.mrf.mxu0
      %1280 = vdwg.mxu0
      %v1286 = vunpack.c.l.b16 %v353
      %v1287 = vunpack.c.l.b16 %v354
      %v1288 = vunpack.c.l.b16 %v355
      %v1289 = vunpack.c.l.b16 %v356
      %v1290 = vunpack.c.l.b16 %v357
      %v1291 = vpack.c.b16 %v1287, %v1286
      %v1292 = vpack.c.b16 %v1289, %v1288
      %v1293 = vpack.c.b16 %v1290, %v1290
      %v1297 = vsel %vm989, %v205, 0
      %v1300 = vsel %vm993, %v1293, 0
      %1302 = vmatprep.subr.bf16.mxu0 0
      %1303 = vmatpush1.bf16.msra.mxu0 0
      %1304 = vmatprep.subr.bf16.mxu0 0
      %1305 = vmatpush1.bf16.msra.mxu0 0
      %1306 = vmatprep.subr.bf16.mxu0 0
      %1307 = vmatpush1.bf16.msra.mxu0 0
      %1308 = vmatprep.subr.bf16.mxu0 0
      %1309 = vmatpush1.bf16.msra.mxu0 0
      %1310 = vmatprep.subr.bf16.mxu0 0
      %1311 = vmatpush1.bf16.msra.mxu0 0
      %1312 = vmatprep.subr.bf16.mxu0 0
      %1313 = vmatpush1.bf16.msra.mxu0 %v1300
      %1314 = vmatprep.subr.bf16.mxu0 0
      %1315 = vmatpush1.bf16.msra.mxu0 %v1292
      %1316 = vmatprep.subr.bf16.mxu0 0
      %1317 = vmatpush1.bf16.msra.mxu0 %v1291
      %1318 = vmatprep.subr.bf16.mxu0 0
      %1319 = vmatpush2.bf16.msra.mxu0 0
      %1320 = vmatprep.subr.bf16.mxu0 0
      %1321 = vmatpush2.bf16.msra.mxu0 0
      %1322 = vmatprep.subr.bf16.mxu0 0
      %1323 = vmatpush2.bf16.msra.mxu0 0
      %1324 = vmatprep.subr.bf16.mxu0 0
      %1325 = vmatpush2.bf16.msra.mxu0 0
      %1326 = vmatprep.subr.bf16.mxu0 0
      %1327 = vmatpush2.bf16.msra.mxu0 0
      %1328 = vmatprep.subr.bf16.mxu0 0
      %1329 = vmatpush2.bf16.msra.mxu0 0
      %1330 = vmatprep.subr.bf16.mxu0 0
      %1331 = vmatpush2.bf16.msra.mxu0 0
      %1332 = vmatprep.subr.bf16.mxu0 0
      %1333 = vmatpush2.bf16.msra.mxu0 0
      %1334 = vmatprep.mubr.bf16.mxu0 0
      %1335 = vmatmul.mubr.bf16.gmra.mxu0 %v1297
      %v1336 = vpop.f32.mrf.mxu0
      %v1337 = vadd.f32 %v972, %v1336
      %v1338 = vpop.f32.mrf.mxu0
      %v1339 = vpop.f32.mrf.mxu0
      %v1340 = vpop.f32.mrf.mxu0
      %1341 = vdwg.mxu0
      %v1347 = vunpack.c.l.b16 %v358
      %v1348 = vunpack.c.l.b16 %v359
      %v1349 = vunpack.c.l.b16 %v360
      %v1350 = vunpack.c.l.b16 %v361
      %v1351 = vunpack.c.l.b16 %v362
      %v1352 = vpack.c.b16 %v1348, %v1347
      %v1353 = vpack.c.b16 %v1350, %v1349
      %v1354 = vpack.c.b16 %v1351, %v1351
      %v1358 = vsel %vm989, %v206, 0
      %v1361 = vsel %vm993, %v1354, 0
      %1363 = vmatprep.subr.bf16.mxu0 0
      %1364 = vmatpush1.bf16.msra.mxu0 0
      %1365 = vmatprep.subr.bf16.mxu0 0
      %1366 = vmatpush1.bf16.msra.mxu0 0
      %1367 = vmatprep.subr.bf16.mxu0 0
      %1368 = vmatpush1.bf16.msra.mxu0 0
      %1369 = vmatprep.subr.bf16.mxu0 0
      %1370 = vmatpush1.bf16.msra.mxu0 0
      %1371 = vmatprep.subr.bf16.mxu0 0
      %1372 = vmatpush1.bf16.msra.mxu0 0
      %1373 = vmatprep.subr.bf16.mxu0 0
      %1374 = vmatpush1.bf16.msra.mxu0 %v1361
      %1375 = vmatprep.subr.bf16.mxu0 0
      %1376 = vmatpush1.bf16.msra.mxu0 %v1353
      %1377 = vmatprep.subr.bf16.mxu0 0
      %1378 = vmatpush1.bf16.msra.mxu0 %v1352
      %1379 = vmatprep.subr.bf16.mxu0 0
      %1380 = vmatpush2.bf16.msra.mxu0 0
      %1381 = vmatprep.subr.bf16.mxu0 0
      %1382 = vmatpush2.bf16.msra.mxu0 0
      %1383 = vmatprep.subr.bf16.mxu0 0
      %1384 = vmatpush2.bf16.msra.mxu0 0
      %1385 = vmatprep.subr.bf16.mxu0 0
      %1386 = vmatpush2.bf16.msra.mxu0 0
      %1387 = vmatprep.subr.bf16.mxu0 0
      %1388 = vmatpush2.bf16.msra.mxu0 0
      %1389 = vmatprep.subr.bf16.mxu0 0
      %1390 = vmatpush2.bf16.msra.mxu0 0
      %1391 = vmatprep.subr.bf16.mxu0 0
      %1392 = vmatpush2.bf16.msra.mxu0 0
      %1393 = vmatprep.subr.bf16.mxu0 0
      %1394 = vmatpush2.bf16.msra.mxu0 0
      %1395 = vmatprep.mubr.bf16.mxu0 0
      %1396 = vmatmul.mubr.bf16.gmra.mxu0 %v1358
      %v1397 = vpop.f32.mrf.mxu0
      %v1398 = vadd.f32 %v972, %v1397
      %v1399 = vpop.f32.mrf.mxu0
      %v1400 = vpop.f32.mrf.mxu0
      %v1401 = vpop.f32.mrf.mxu0
      %1402 = vdwg.mxu0
      %v1408 = vunpack.c.l.b16 %v363
      %v1409 = vunpack.c.l.b16 %v364
      %v1410 = vunpack.c.l.b16 %v365
      %v1411 = vunpack.c.l.b16 %v366
      %v1412 = vunpack.c.l.b16 %v367
      %v1413 = vpack.c.b16 %v1409, %v1408
      %v1414 = vpack.c.b16 %v1411, %v1410
      %v1415 = vpack.c.b16 %v1412, %v1412
      %v1419 = vsel %vm989, %v207, 0
      %v1422 = vsel %vm993, %v1415, 0
      %1424 = vmatprep.subr.bf16.mxu0 0
      %1425 = vmatpush1.bf16.msra.mxu0 0
      %1426 = vmatprep.subr.bf16.mxu0 0
      %1427 = vmatpush1.bf16.msra.mxu0 0
      %1428 = vmatprep.subr.bf16.mxu0 0
      %1429 = vmatpush1.bf16.msra.mxu0 0
      %1430 = vmatprep.subr.bf16.mxu0 0
      %1431 = vmatpush1.bf16.msra.mxu0 0
      %1432 = vmatprep.subr.bf16.mxu0 0
      %1433 = vmatpush1.bf16.msra.mxu0 0
      %1434 = vmatprep.subr.bf16.mxu0 0
      %1435 = vmatpush1.bf16.msra.mxu0 %v1422
      %1436 = vmatprep.subr.bf16.mxu0 0
      %1437 = vmatpush1.bf16.msra.mxu0 %v1414
      %1438 = vmatprep.subr.bf16.mxu0 0
      %1439 = vmatpush1.bf16.msra.mxu0 %v1413
      %1440 = vmatprep.subr.bf16.mxu0 0
      %1441 = vmatpush2.bf16.msra.mxu0 0
      %1442 = vmatprep.subr.bf16.mxu0 0
      %1443 = vmatpush2.bf16.msra.mxu0 0
      %1444 = vmatprep.subr.bf16.mxu0 0
      %1445 = vmatpush2.bf16.msra.mxu0 0
      %1446 = vmatprep.subr.bf16.mxu0 0
      %1447 = vmatpush2.bf16.msra.mxu0 0
      %1448 = vmatprep.subr.bf16.mxu0 0
      %1449 = vmatpush2.bf16.msra.mxu0 0
      %1450 = vmatprep.subr.bf16.mxu0 0
      %1451 = vmatpush2.bf16.msra.mxu0 0
      %1452 = vmatprep.subr.bf16.mxu0 0
      %1453 = vmatpush2.bf16.msra.mxu0 0
      %1454 = vmatprep.subr.bf16.mxu0 0
      %1455 = vmatpush2.bf16.msra.mxu0 0
      %1456 = vmatprep.mubr.bf16.mxu0 0
      %1457 = vmatmul.mubr.bf16.gmra.mxu0 %v1419
      %v1458 = vpop.f32.mrf.mxu0
      %v1459 = vadd.f32 %v972, %v1458
      %v1460 = vpop.f32.mrf.mxu0
      %v1461 = vpop.f32.mrf.mxu0
      %v1462 = vpop.f32.mrf.mxu0
      %1463 = vdwg.mxu0
      %v1469 = vunpack.c.l.b16 %v368
      %v1470 = vunpack.c.l.b16 %v369
      %v1471 = vunpack.c.l.b16 %v370
      %v1472 = vunpack.c.l.b16 %v371
      %v1473 = vunpack.c.l.b16 %v372
      %v1474 = vpack.c.b16 %v1470, %v1469
      %v1475 = vpack.c.b16 %v1472, %v1471
      %v1476 = vpack.c.b16 %v1473, %v1473
      %v1480 = vsel %vm989, %v208, 0
      %v1483 = vsel %vm993, %v1476, 0
      %1485 = vmatprep.subr.bf16.mxu0 0
      %1486 = vmatpush1.bf16.msra.mxu0 0
      %1487 = vmatprep.subr.bf16.mxu0 0
      %1488 = vmatpush1.bf16.msra.mxu0 0
      %1489 = vmatprep.subr.bf16.mxu0 0
      %1490 = vmatpush1.bf16.msra.mxu0 0
      %1491 = vmatprep.subr.bf16.mxu0 0
      %1492 = vmatpush1.bf16.msra.mxu0 0
      %1493 = vmatprep.subr.bf16.mxu0 0
      %1494 = vmatpush1.bf16.msra.mxu0 0
      %1495 = vmatprep.subr.bf16.mxu0 0
      %1496 = vmatpush1.bf16.msra.mxu0 %v1483
      %1497 = vmatprep.subr.bf16.mxu0 0
      %1498 = vmatpush1.bf16.msra.mxu0 %v1475
      %1499 = vmatprep.subr.bf16.mxu0 0
      %1500 = vmatpush1.bf16.msra.mxu0 %v1474
      %1501 = vmatprep.subr.bf16.mxu0 0
      %1502 = vmatpush2.bf16.msra.mxu0 0
      %1503 = vmatprep.subr.bf16.mxu0 0
      %1504 = vmatpush2.bf16.msra.mxu0 0
      %1505 = vmatprep.subr.bf16.mxu0 0
      %1506 = vmatpush2.bf16.msra.mxu0 0
      %1507 = vmatprep.subr.bf16.mxu0 0
      %1508 = vmatpush2.bf16.msra.mxu0 0
      %1509 = vmatprep.subr.bf16.mxu0 0
      %1510 = vmatpush2.bf16.msra.mxu0 0
      %1511 = vmatprep.subr.bf16.mxu0 0
      %1512 = vmatpush2.bf16.msra.mxu0 0
      %1513 = vmatprep.subr.bf16.mxu0 0
      %1514 = vmatpush2.bf16.msra.mxu0 0
      %1515 = vmatprep.subr.bf16.mxu0 0
      %1516 = vmatpush2.bf16.msra.mxu0 0
      %1517 = vmatprep.mubr.bf16.mxu0 0
      %1518 = vmatmul.mubr.bf16.gmra.mxu0 %v1480
      %v1519 = vpop.f32.mrf.mxu0
      %v1520 = vadd.f32 %v972, %v1519
      %v1521 = vpop.f32.mrf.mxu0
      %v1522 = vpop.f32.mrf.mxu0
      %v1523 = vpop.f32.mrf.mxu0
      %1524 = vdwg.mxu0
      %v1530 = vunpack.c.l.b16 %v373
      %v1531 = vunpack.c.l.b16 %v374
      %v1532 = vunpack.c.l.b16 %v375
      %v1533 = vunpack.c.l.b16 %v376
      %v1534 = vunpack.c.l.b16 %v377
      %v1535 = vpack.c.b16 %v1531, %v1530
      %v1536 = vpack.c.b16 %v1533, %v1532
      %v1537 = vpack.c.b16 %v1534, %v1534
      %v1541 = vsel %vm989, %v209, 0
      %v1544 = vsel %vm993, %v1537, 0
      %1546 = vmatprep.subr.bf16.mxu0 0
      %1547 = vmatpush1.bf16.msra.mxu0 0
      %1548 = vmatprep.subr.bf16.mxu0 0
      %1549 = vmatpush1.bf16.msra.mxu0 0
      %1550 = vmatprep.subr.bf16.mxu0 0
      %1551 = vmatpush1.bf16.msra.mxu0 0
      %1552 = vmatprep.subr.bf16.mxu0 0
      %1553 = vmatpush1.bf16.msra.mxu0 0
      %1554 = vmatprep.subr.bf16.mxu0 0
      %1555 = vmatpush1.bf16.msra.mxu0 0
      %1556 = vmatprep.subr.bf16.mxu0 0
      %1557 = vmatpush1.bf16.msra.mxu0 %v1544
      %1558 = vmatprep.subr.bf16.mxu0 0
      %1559 = vmatpush1.bf16.msra.mxu0 %v1536
      %1560 = vmatprep.subr.bf16.mxu0 0
      %1561 = vmatpush1.bf16.msra.mxu0 %v1535
      %1562 = vmatprep.subr.bf16.mxu0 0
      %1563 = vmatpush2.bf16.msra.mxu0 0
      %1564 = vmatprep.subr.bf16.mxu0 0
      %1565 = vmatpush2.bf16.msra.mxu0 0
      %1566 = vmatprep.subr.bf16.mxu0 0
      %1567 = vmatpush2.bf16.msra.mxu0 0
      %1568 = vmatprep.subr.bf16.mxu0 0
      %1569 = vmatpush2.bf16.msra.mxu0 0
      %1570 = vmatprep.subr.bf16.mxu0 0
      %1571 = vmatpush2.bf16.msra.mxu0 0
      %1572 = vmatprep.subr.bf16.mxu0 0
      %1573 = vmatpush2.bf16.msra.mxu0 0
      %1574 = vmatprep.subr.bf16.mxu0 0
      %1575 = vmatpush2.bf16.msra.mxu0 0
      %1576 = vmatprep.subr.bf16.mxu0 0
      %1577 = vmatpush2.bf16.msra.mxu0 0
      %1578 = vmatprep.mubr.bf16.mxu0 0
      %1579 = vmatmul.mubr.bf16.gmra.mxu0 %v1541
      %v1580 = vpop.f32.mrf.mxu0
      %v1581 = vadd.f32 %v972, %v1580
      %v1582 = vpop.f32.mrf.mxu0
      %v1583 = vpop.f32.mrf.mxu0
      %v1584 = vpop.f32.mrf.mxu0
      %1585 = vdwg.mxu0
      %v1591 = vunpack.c.l.b16 %v378
      %v1592 = vunpack.c.l.b16 %v379
      %v1593 = vunpack.c.l.b16 %v380
      %v1594 = vunpack.c.l.b16 %v381
      %v1595 = vunpack.c.l.b16 %v382
      %v1596 = vpack.c.b16 %v1592, %v1591
      %v1597 = vpack.c.b16 %v1594, %v1593
      %v1598 = vpack.c.b16 %v1595, %v1595
      %v1602 = vsel %vm989, %v210, 0
      %v1605 = vsel %vm993, %v1598, 0
      %1607 = vmatprep.subr.bf16.mxu0 0
      %1608 = vmatpush1.bf16.msra.mxu0 0
      %1609 = vmatprep.subr.bf16.mxu0 0
      %1610 = vmatpush1.bf16.msra.mxu0 0
      %1611 = vmatprep.subr.bf16.mxu0 0
      %1612 = vmatpush1.bf16.msra.mxu0 0
      %1613 = vmatprep.subr.bf16.mxu0 0
      %1614 = vmatpush1.bf16.msra.mxu0 0
      %1615 = vmatprep.subr.bf16.mxu0 0
      %1616 = vmatpush1.bf16.msra.mxu0 0
      %1617 = vmatprep.subr.bf16.mxu0 0
      %1618 = vmatpush1.bf16.msra.mxu0 %v1605
      %1619 = vmatprep.subr.bf16.mxu0 0
      %1620 = vmatpush1.bf16.msra.mxu0 %v1597
      %1621 = vmatprep.subr.bf16.mxu0 0
      %1622 = vmatpush1.bf16.msra.mxu0 %v1596
      %1623 = vmatprep.subr.bf16.mxu0 0
      %1624 = vmatpush2.bf16.msra.mxu0 0
      %1625 = vmatprep.subr.bf16.mxu0 0
      %1626 = vmatpush2.bf16.msra.mxu0 0
      %1627 = vmatprep.subr.bf16.mxu0 0
      %1628 = vmatpush2.bf16.msra.mxu0 0
      %1629 = vmatprep.subr.bf16.mxu0 0
      %1630 = vmatpush2.bf16.msra.mxu0 0
      %1631 = vmatprep.subr.bf16.mxu0 0
      %1632 = vmatpush2.bf16.msra.mxu0 0
      %1633 = vmatprep.subr.bf16.mxu0 0
      %1634 = vmatpush2.bf16.msra.mxu0 0
      %1635 = vmatprep.subr.bf16.mxu0 0
      %1636 = vmatpush2.bf16.msra.mxu0 0
      %1637 = vmatprep.subr.bf16.mxu0 0
      %1638 = vmatpush2.bf16.msra.mxu0 0
      %1639 = vmatprep.mubr.bf16.mxu0 0
      %1640 = vmatmul.mubr.bf16.gmra.mxu0 %v1602
      %v1641 = vpop.f32.mrf.mxu0
      %v1642 = vadd.f32 %v972, %v1641
      %v1643 = vpop.f32.mrf.mxu0
      %v1644 = vpop.f32.mrf.mxu0
      %v1645 = vpop.f32.mrf.mxu0
      %1646 = vdwg.mxu0
      %v1652 = vunpack.c.l.b16 %v383
      %v1653 = vunpack.c.l.b16 %v384
      %v1654 = vunpack.c.l.b16 %v385
      %v1655 = vunpack.c.l.b16 %v386
      %v1656 = vunpack.c.l.b16 %v387
      %v1657 = vpack.c.b16 %v1653, %v1652
      %v1658 = vpack.c.b16 %v1655, %v1654
      %v1659 = vpack.c.b16 %v1656, %v1656
      %v1663 = vsel %vm989, %v211, 0
      %v1666 = vsel %vm993, %v1659, 0
      %1668 = vmatprep.subr.bf16.mxu0 0
      %1669 = vmatpush1.bf16.msra.mxu0 0
      %1670 = vmatprep.subr.bf16.mxu0 0
      %1671 = vmatpush1.bf16.msra.mxu0 0
      %1672 = vmatprep.subr.bf16.mxu0 0
      %1673 = vmatpush1.bf16.msra.mxu0 0
      %1674 = vmatprep.subr.bf16.mxu0 0
      %1675 = vmatpush1.bf16.msra.mxu0 0
      %1676 = vmatprep.subr.bf16.mxu0 0
      %1677 = vmatpush1.bf16.msra.mxu0 0
      %1678 = vmatprep.subr.bf16.mxu0 0
      %1679 = vmatpush1.bf16.msra.mxu0 %v1666
      %1680 = vmatprep.subr.bf16.mxu0 0
      %1681 = vmatpush1.bf16.msra.mxu0 %v1658
      %1682 = vmatprep.subr.bf16.mxu0 0
      %1683 = vmatpush1.bf16.msra.mxu0 %v1657
      %1684 = vmatprep.subr.bf16.mxu0 0
      %1685 = vmatpush2.bf16.msra.mxu0 0
      %1686 = vmatprep.subr.bf16.mxu0 0
      %1687 = vmatpush2.bf16.msra.mxu0 0
      %1688 = vmatprep.subr.bf16.mxu0 0
      %1689 = vmatpush2.bf16.msra.mxu0 0
      %1690 = vmatprep.subr.bf16.mxu0 0
      %1691 = vmatpush2.bf16.msra.mxu0 0
      %1692 = vmatprep.subr.bf16.mxu0 0
      %1693 = vmatpush2.bf16.msra.mxu0 0
      %1694 = vmatprep.subr.bf16.mxu0 0
      %1695 = vmatpush2.bf16.msra.mxu0 0
      %1696 = vmatprep.subr.bf16.mxu0 0
      %1697 = vmatpush2.bf16.msra.mxu0 0
      %1698 = vmatprep.subr.bf16.mxu0 0
      %1699 = vmatpush2.bf16.msra.mxu0 0
      %1700 = vmatprep.mubr.bf16.mxu0 0
      %1701 = vmatmul.mubr.bf16.gmra.mxu0 %v1663
      %v1702 = vpop.f32.mrf.mxu0
      %v1703 = vadd.f32 %v972, %v1702
      %v1704 = vpop.f32.mrf.mxu0
      %v1705 = vpop.f32.mrf.mxu0
      %v1706 = vpop.f32.mrf.mxu0
      %1707 = vdwg.mxu0
      %v1713 = vunpack.c.l.b16 %v388
      %v1714 = vunpack.c.l.b16 %v389
      %v1715 = vunpack.c.l.b16 %v390
      %v1716 = vunpack.c.l.b16 %v391
      %v1717 = vunpack.c.l.b16 %v392
      %v1718 = vpack.c.b16 %v1714, %v1713
      %v1719 = vpack.c.b16 %v1716, %v1715
      %v1720 = vpack.c.b16 %v1717, %v1717
      %v1724 = vsel %vm989, %v212, 0
      %v1727 = vsel %vm993, %v1720, 0
      %1729 = vmatprep.subr.bf16.mxu0 0
      %1730 = vmatpush1.bf16.msra.mxu0 0
      %1731 = vmatprep.subr.bf16.mxu0 0
      %1732 = vmatpush1.bf16.msra.mxu0 0
      %1733 = vmatprep.subr.bf16.mxu0 0
      %1734 = vmatpush1.bf16.msra.mxu0 0
      %1735 = vmatprep.subr.bf16.mxu0 0
      %1736 = vmatpush1.bf16.msra.mxu0 0
      %1737 = vmatprep.subr.bf16.mxu0 0
      %1738 = vmatpush1.bf16.msra.mxu0 0
      %1739 = vmatprep.subr.bf16.mxu0 0
      %1740 = vmatpush1.bf16.msra.mxu0 %v1727
      %1741 = vmatprep.subr.bf16.mxu0 0
      %1742 = vmatpush1.bf16.msra.mxu0 %v1719
      %1743 = vmatprep.subr.bf16.mxu0 0
      %1744 = vmatpush1.bf16.msra.mxu0 %v1718
      %1745 = vmatprep.subr.bf16.mxu0 0
      %1746 = vmatpush2.bf16.msra.mxu0 0
      %1747 = vmatprep.subr.bf16.mxu0 0
      %1748 = vmatpush2.bf16.msra.mxu0 0
      %1749 = vmatprep.subr.bf16.mxu0 0
      %1750 = vmatpush2.bf16.msra.mxu0 0
      %1751 = vmatprep.subr.bf16.mxu0 0
      %1752 = vmatpush2.bf16.msra.mxu0 0
      %1753 = vmatprep.subr.bf16.mxu0 0
      %1754 = vmatpush2.bf16.msra.mxu0 0
      %1755 = vmatprep.subr.bf16.mxu0 0
      %1756 = vmatpush2.bf16.msra.mxu0 0
      %1757 = vmatprep.subr.bf16.mxu0 0
      %1758 = vmatpush2.bf16.msra.mxu0 0
      %1759 = vmatprep.subr.bf16.mxu0 0
      %1760 = vmatpush2.bf16.msra.mxu0 0
      %1761 = vmatprep.mubr.bf16.mxu0 0
      %1762 = vmatmul.mubr.bf16.gmra.mxu0 %v1724
      %v1763 = vpop.f32.mrf.mxu0
      %v1764 = vadd.f32 %v972, %v1763
      %v1765 = vpop.f32.mrf.mxu0
      %v1766 = vpop.f32.mrf.mxu0
      %v1767 = vpop.f32.mrf.mxu0
      %1768 = vdwg.mxu0
      %v1774 = vunpack.c.l.b16 %v393
      %v1775 = vunpack.c.l.b16 %v394
      %v1776 = vunpack.c.l.b16 %v395
      %v1777 = vunpack.c.l.b16 %v396
      %v1778 = vunpack.c.l.b16 %v397
      %v1779 = vpack.c.b16 %v1775, %v1774
      %v1780 = vpack.c.b16 %v1777, %v1776
      %v1781 = vpack.c.b16 %v1778, %v1778
      %v1785 = vsel %vm989, %v213, 0
      %v1788 = vsel %vm993, %v1781, 0
      %1790 = vmatprep.subr.bf16.mxu0 0
      %1791 = vmatpush1.bf16.msra.mxu0 0
      %1792 = vmatprep.subr.bf16.mxu0 0
      %1793 = vmatpush1.bf16.msra.mxu0 0
      %1794 = vmatprep.subr.bf16.mxu0 0
      %1795 = vmatpush1.bf16.msra.mxu0 0
      %1796 = vmatprep.subr.bf16.mxu0 0
      %1797 = vmatpush1.bf16.msra.mxu0 0
      %1798 = vmatprep.subr.bf16.mxu0 0
      %1799 = vmatpush1.bf16.msra.mxu0 0
      %1800 = vmatprep.subr.bf16.mxu0 0
      %1801 = vmatpush1.bf16.msra.mxu0 %v1788
      %1802 = vmatprep.subr.bf16.mxu0 0
      %1803 = vmatpush1.bf16.msra.mxu0 %v1780
      %1804 = vmatprep.subr.bf16.mxu0 0
      %1805 = vmatpush1.bf16.msra.mxu0 %v1779
      %1806 = vmatprep.subr.bf16.mxu0 0
      %1807 = vmatpush2.bf16.msra.mxu0 0
      %1808 = vmatprep.subr.bf16.mxu0 0
      %1809 = vmatpush2.bf16.msra.mxu0 0
      %1810 = vmatprep.subr.bf16.mxu0 0
      %1811 = vmatpush2.bf16.msra.mxu0 0
      %1812 = vmatprep.subr.bf16.mxu0 0
      %1813 = vmatpush2.bf16.msra.mxu0 0
      %1814 = vmatprep.subr.bf16.mxu0 0
      %1815 = vmatpush2.bf16.msra.mxu0 0
      %1816 = vmatprep.subr.bf16.mxu0 0
      %1817 = vmatpush2.bf16.msra.mxu0 0
      %1818 = vmatprep.subr.bf16.mxu0 0
      %1819 = vmatpush2.bf16.msra.mxu0 0
      %1820 = vmatprep.subr.bf16.mxu0 0
      %1821 = vmatpush2.bf16.msra.mxu0 0
      %1822 = vmatprep.mubr.bf16.mxu0 0
      %1823 = vmatmul.mubr.bf16.gmra.mxu0 %v1785
      %v1824 = vpop.f32.mrf.mxu0
      %v1825 = vadd.f32 %v972, %v1824
      %v1826 = vpop.f32.mrf.mxu0
      %v1827 = vpop.f32.mrf.mxu0
      %v1828 = vpop.f32.mrf.mxu0
      %1829 = vdwg.mxu0
      %v1835 = vunpack.c.l.b16 %v398
      %v1836 = vunpack.c.l.b16 %v399
      %v1837 = vunpack.c.l.b16 %v400
      %v1838 = vunpack.c.l.b16 %v401
      %v1839 = vunpack.c.l.b16 %v402
      %v1840 = vpack.c.b16 %v1836, %v1835
      %v1841 = vpack.c.b16 %v1838, %v1837
      %v1842 = vpack.c.b16 %v1839, %v1839
      %v1846 = vsel %vm989, %v214, 0
      %v1849 = vsel %vm993, %v1842, 0
      %1851 = vmatprep.subr.bf16.mxu0 0
      %1852 = vmatpush1.bf16.msra.mxu0 0
      %1853 = vmatprep.subr.bf16.mxu0 0
      %1854 = vmatpush1.bf16.msra.mxu0 0
      %1855 = vmatprep.subr.bf16.mxu0 0
      %1856 = vmatpush1.bf16.msra.mxu0 0
      %1857 = vmatprep.subr.bf16.mxu0 0
      %1858 = vmatpush1.bf16.msra.mxu0 0
      %1859 = vmatprep.subr.bf16.mxu0 0
      %1860 = vmatpush1.bf16.msra.mxu0 0
      %1861 = vmatprep.subr.bf16.mxu0 0
      %1862 = vmatpush1.bf16.msra.mxu0 %v1849
      %1863 = vmatprep.subr.bf16.mxu0 0
      %1864 = vmatpush1.bf16.msra.mxu0 %v1841
      %1865 = vmatprep.subr.bf16.mxu0 0
      %1866 = vmatpush1.bf16.msra.mxu0 %v1840
      %1867 = vmatprep.subr.bf16.mxu0 0
      %1868 = vmatpush2.bf16.msra.mxu0 0
      %1869 = vmatprep.subr.bf16.mxu0 0
      %1870 = vmatpush2.bf16.msra.mxu0 0
      %1871 = vmatprep.subr.bf16.mxu0 0
      %1872 = vmatpush2.bf16.msra.mxu0 0
      %1873 = vmatprep.subr.bf16.mxu0 0
      %1874 = vmatpush2.bf16.msra.mxu0 0
      %1875 = vmatprep.subr.bf16.mxu0 0
      %1876 = vmatpush2.bf16.msra.mxu0 0
      %1877 = vmatprep.subr.bf16.mxu0 0
      %1878 = vmatpush2.bf16.msra.mxu0 0
      %1879 = vmatprep.subr.bf16.mxu0 0
      %1880 = vmatpush2.bf16.msra.mxu0 0
      %1881 = vmatprep.subr.bf16.mxu0 0
      %1882 = vmatpush2.bf16.msra.mxu0 0
      %1883 = vmatprep.mubr.bf16.mxu0 0
      %1884 = vmatmul.mubr.bf16.gmra.mxu0 %v1846
      %v1885 = vpop.f32.mrf.mxu0
      %v1886 = vadd.f32 %v972, %v1885
      %v1887 = vpop.f32.mrf.mxu0
      %v1888 = vpop.f32.mrf.mxu0
      %v1889 = vpop.f32.mrf.mxu0
      %1890 = vdwg.mxu0
      %v1896 = vunpack.c.l.b16 %v403
      %v1897 = vunpack.c.l.b16 %v404
      %v1898 = vunpack.c.l.b16 %v405
      %v1899 = vunpack.c.l.b16 %v406
      %v1900 = vunpack.c.l.b16 %v407
      %v1901 = vpack.c.b16 %v1897, %v1896
      %v1902 = vpack.c.b16 %v1899, %v1898
      %v1903 = vpack.c.b16 %v1900, %v1900
      %v1907 = vsel %vm989, %v215, 0
      %v1910 = vsel %vm993, %v1903, 0
      %1912 = vmatprep.subr.bf16.mxu0 0
      %1913 = vmatpush1.bf16.msra.mxu0 0
      %1914 = vmatprep.subr.bf16.mxu0 0
      %1915 = vmatpush1.bf16.msra.mxu0 0
      %1916 = vmatprep.subr.bf16.mxu0 0
      %1917 = vmatpush1.bf16.msra.mxu0 0
      %1918 = vmatprep.subr.bf16.mxu0 0
      %1919 = vmatpush1.bf16.msra.mxu0 0
      %1920 = vmatprep.subr.bf16.mxu0 0
      %1921 = vmatpush1.bf16.msra.mxu0 0
      %1922 = vmatprep.subr.bf16.mxu0 0
      %1923 = vmatpush1.bf16.msra.mxu0 %v1910
      %1924 = vmatprep.subr.bf16.mxu0 0
      %1925 = vmatpush1.bf16.msra.mxu0 %v1902
      %1926 = vmatprep.subr.bf16.mxu0 0
      %1927 = vmatpush1.bf16.msra.mxu0 %v1901
      %1928 = vmatprep.subr.bf16.mxu0 0
      %1929 = vmatpush2.bf16.msra.mxu0 0
      %1930 = vmatprep.subr.bf16.mxu0 0
      %1931 = vmatpush2.bf16.msra.mxu0 0
      %1932 = vmatprep.subr.bf16.mxu0 0
      %1933 = vmatpush2.bf16.msra.mxu0 0
      %1934 = vmatprep.subr.bf16.mxu0 0
      %1935 = vmatpush2.bf16.msra.mxu0 0
      %1936 = vmatprep.subr.bf16.mxu0 0
      %1937 = vmatpush2.bf16.msra.mxu0 0
      %1938 = vmatprep.subr.bf16.mxu0 0
      %1939 = vmatpush2.bf16.msra.mxu0 0
      %1940 = vmatprep.subr.bf16.mxu0 0
      %1941 = vmatpush2.bf16.msra.mxu0 0
      %1942 = vmatprep.subr.bf16.mxu0 0
      %1943 = vmatpush2.bf16.msra.mxu0 0
      %1944 = vmatprep.mubr.bf16.mxu0 0
      %1945 = vmatmul.mubr.bf16.gmra.mxu0 %v1907
      %v1946 = vpop.f32.mrf.mxu0
      %v1947 = vadd.f32 %v972, %v1946
      %v1948 = vpop.f32.mrf.mxu0
      %v1949 = vpop.f32.mrf.mxu0
      %v1950 = vpop.f32.mrf.mxu0
      %1951 = vdwg.mxu0
      %v1957 = vunpack.c.l.b16 %v408
      %v1958 = vunpack.c.l.b16 %v409
      %v1959 = vunpack.c.l.b16 %v410
      %v1960 = vunpack.c.l.b16 %v411
      %v1961 = vunpack.c.l.b16 %v412
      %v1962 = vpack.c.b16 %v1958, %v1957
      %v1963 = vpack.c.b16 %v1960, %v1959
      %v1964 = vpack.c.b16 %v1961, %v1961
      %v1968 = vsel %vm989, %v216, 0
      %v1971 = vsel %vm993, %v1964, 0
      %1973 = vmatprep.subr.bf16.mxu0 0
      %1974 = vmatpush1.bf16.msra.mxu0 0
      %1975 = vmatprep.subr.bf16.mxu0 0
      %1976 = vmatpush1.bf16.msra.mxu0 0
      %1977 = vmatprep.subr.bf16.mxu0 0
      %1978 = vmatpush1.bf16.msra.mxu0 0
      %1979 = vmatprep.subr.bf16.mxu0 0
      %1980 = vmatpush1.bf16.msra.mxu0 0
      %1981 = vmatprep.subr.bf16.mxu0 0
      %1982 = vmatpush1.bf16.msra.mxu0 0
      %1983 = vmatprep.subr.bf16.mxu0 0
      %1984 = vmatpush1.bf16.msra.mxu0 %v1971
      %1985 = vmatprep.subr.bf16.mxu0 0
      %1986 = vmatpush1.bf16.msra.mxu0 %v1963
      %1987 = vmatprep.subr.bf16.mxu0 0
      %1988 = vmatpush1.bf16.msra.mxu0 %v1962
      %1989 = vmatprep.subr.bf16.mxu0 0
      %1990 = vmatpush2.bf16.msra.mxu0 0
      %1991 = vmatprep.subr.bf16.mxu0 0
      %1992 = vmatpush2.bf16.msra.mxu0 0
      %1993 = vmatprep.subr.bf16.mxu0 0
      %1994 = vmatpush2.bf16.msra.mxu0 0
      %1995 = vmatprep.subr.bf16.mxu0 0
      %1996 = vmatpush2.bf16.msra.mxu0 0
      %1997 = vmatprep.subr.bf16.mxu0 0
      %1998 = vmatpush2.bf16.msra.mxu0 0
      %1999 = vmatprep.subr.bf16.mxu0 0
      %2000 = vmatpush2.bf16.msra.mxu0 0
      %2001 = vmatprep.subr.bf16.mxu0 0
      %2002 = vmatpush2.bf16.msra.mxu0 0
      %2003 = vmatprep.subr.bf16.mxu0 0
      %2004 = vmatpush2.bf16.msra.mxu0 0
      %2005 = vmatprep.mubr.bf16.mxu0 0
      %2006 = vmatmul.mubr.bf16.gmra.mxu0 %v1968
      %v2007 = vpop.f32.mrf.mxu0
      %v2008 = vadd.f32 %v972, %v2007
      %v2009 = vpop.f32.mrf.mxu0
      %v2010 = vpop.f32.mrf.mxu0
      %v2011 = vpop.f32.mrf.mxu0
      %2012 = vdwg.mxu0
      %v2018 = vunpack.c.l.b16 %v413
      %v2019 = vunpack.c.l.b16 %v414
      %v2020 = vunpack.c.l.b16 %v415
      %v2021 = vunpack.c.l.b16 %v416
      %v2022 = vunpack.c.l.b16 %v417
      %v2023 = vpack.c.b16 %v2019, %v2018
      %v2024 = vpack.c.b16 %v2021, %v2020
      %v2025 = vpack.c.b16 %v2022, %v2022
      %v2029 = vsel %vm989, %v217, 0
      %v2032 = vsel %vm993, %v2025, 0
      %2034 = vmatprep.subr.bf16.mxu0 0
      %2035 = vmatpush1.bf16.msra.mxu0 0
      %2036 = vmatprep.subr.bf16.mxu0 0
      %2037 = vmatpush1.bf16.msra.mxu0 0
      %2038 = vmatprep.subr.bf16.mxu0 0
      %2039 = vmatpush1.bf16.msra.mxu0 0
      %2040 = vmatprep.subr.bf16.mxu0 0
      %2041 = vmatpush1.bf16.msra.mxu0 0
      %2042 = vmatprep.subr.bf16.mxu0 0
      %2043 = vmatpush1.bf16.msra.mxu0 0
      %2044 = vmatprep.subr.bf16.mxu0 0
      %2045 = vmatpush1.bf16.msra.mxu0 %v2032
      %2046 = vmatprep.subr.bf16.mxu0 0
      %2047 = vmatpush1.bf16.msra.mxu0 %v2024
      %2048 = vmatprep.subr.bf16.mxu0 0
      %2049 = vmatpush1.bf16.msra.mxu0 %v2023
      %2050 = vmatprep.subr.bf16.mxu0 0
      %2051 = vmatpush2.bf16.msra.mxu0 0
      %2052 = vmatprep.subr.bf16.mxu0 0
      %2053 = vmatpush2.bf16.msra.mxu0 0
      %2054 = vmatprep.subr.bf16.mxu0 0
      %2055 = vmatpush2.bf16.msra.mxu0 0
      %2056 = vmatprep.subr.bf16.mxu0 0
      %2057 = vmatpush2.bf16.msra.mxu0 0
      %2058 = vmatprep.subr.bf16.mxu0 0
      %2059 = vmatpush2.bf16.msra.mxu0 0
      %2060 = vmatprep.subr.bf16.mxu0 0
      %2061 = vmatpush2.bf16.msra.mxu0 0
      %2062 = vmatprep.subr.bf16.mxu0 0
      %2063 = vmatpush2.bf16.msra.mxu0 0
      %2064 = vmatprep.subr.bf16.mxu0 0
      %2065 = vmatpush2.bf16.msra.mxu0 0
      %2066 = vmatprep.mubr.bf16.mxu0 0
      %2067 = vmatmul.mubr.bf16.gmra.mxu0 %v2029
      %v2068 = vpop.f32.mrf.mxu0
      %v2069 = vadd.f32 %v972, %v2068
      %v2070 = vpop.f32.mrf.mxu0
      %v2071 = vpop.f32.mrf.mxu0
      %v2072 = vpop.f32.mrf.mxu0
      %2073 = vdwg.mxu0
      %v2079 = vunpack.c.l.b16 %v418
      %v2080 = vunpack.c.l.b16 %v419
      %v2081 = vunpack.c.l.b16 %v420
      %v2082 = vunpack.c.l.b16 %v421
      %v2083 = vunpack.c.l.b16 %v422
      %v2084 = vpack.c.b16 %v2080, %v2079
      %v2085 = vpack.c.b16 %v2082, %v2081
      %v2086 = vpack.c.b16 %v2083, %v2083
      %v2090 = vsel %vm989, %v218, 0
      %v2093 = vsel %vm993, %v2086, 0
      %2095 = vmatprep.subr.bf16.mxu0 0
      %2096 = vmatpush1.bf16.msra.mxu0 0
      %2097 = vmatprep.subr.bf16.mxu0 0
      %2098 = vmatpush1.bf16.msra.mxu0 0
      %2099 = vmatprep.subr.bf16.mxu0 0
      %2100 = vmatpush1.bf16.msra.mxu0 0
      %2101 = vmatprep.subr.bf16.mxu0 0
      %2102 = vmatpush1.bf16.msra.mxu0 0
      %2103 = vmatprep.subr.bf16.mxu0 0
      %2104 = vmatpush1.bf16.msra.mxu0 0
      %2105 = vmatprep.subr.bf16.mxu0 0
      %2106 = vmatpush1.bf16.msra.mxu0 %v2093
      %2107 = vmatprep.subr.bf16.mxu0 0
      %2108 = vmatpush1.bf16.msra.mxu0 %v2085
      %2109 = vmatprep.subr.bf16.mxu0 0
      %2110 = vmatpush1.bf16.msra.mxu0 %v2084
      %2111 = vmatprep.subr.bf16.mxu0 0
      %2112 = vmatpush2.bf16.msra.mxu0 0
      %2113 = vmatprep.subr.bf16.mxu0 0
      %2114 = vmatpush2.bf16.msra.mxu0 0
      %2115 = vmatprep.subr.bf16.mxu0 0
      %2116 = vmatpush2.bf16.msra.mxu0 0
      %2117 = vmatprep.subr.bf16.mxu0 0
      %2118 = vmatpush2.bf16.msra.mxu0 0
      %2119 = vmatprep.subr.bf16.mxu0 0
      %2120 = vmatpush2.bf16.msra.mxu0 0
      %2121 = vmatprep.subr.bf16.mxu0 0
      %2122 = vmatpush2.bf16.msra.mxu0 0
      %2123 = vmatprep.subr.bf16.mxu0 0
      %2124 = vmatpush2.bf16.msra.mxu0 0
      %2125 = vmatprep.subr.bf16.mxu0 0
      %2126 = vmatpush2.bf16.msra.mxu0 0
      %2127 = vmatprep.mubr.bf16.mxu0 0
      %2128 = vmatmul.mubr.bf16.gmra.mxu0 %v2090
      %v2129 = vpop.f32.mrf.mxu0
      %v2130 = vadd.f32 %v972, %v2129
      %v2131 = vpop.f32.mrf.mxu0
      %v2132 = vpop.f32.mrf.mxu0
      %v2133 = vpop.f32.mrf.mxu0
      %2134 = vdwg.mxu0
      %v2140 = vunpack.c.l.b16 %v423
      %v2141 = vunpack.c.l.b16 %v424
      %v2142 = vunpack.c.l.b16 %v425
      %v2143 = vunpack.c.l.b16 %v426
      %v2144 = vunpack.c.l.b16 %v427
      %v2145 = vpack.c.b16 %v2141, %v2140
      %v2146 = vpack.c.b16 %v2143, %v2142
      %v2147 = vpack.c.b16 %v2144, %v2144
      %v2151 = vsel %vm989, %v219, 0
      %v2154 = vsel %vm993, %v2147, 0
      %2156 = vmatprep.subr.bf16.mxu0 0
      %2157 = vmatpush1.bf16.msra.mxu0 0
      %2158 = vmatprep.subr.bf16.mxu0 0
      %2159 = vmatpush1.bf16.msra.mxu0 0
      %2160 = vmatprep.subr.bf16.mxu0 0
      %2161 = vmatpush1.bf16.msra.mxu0 0
      %2162 = vmatprep.subr.bf16.mxu0 0
      %2163 = vmatpush1.bf16.msra.mxu0 0
      %2164 = vmatprep.subr.bf16.mxu0 0
      %2165 = vmatpush1.bf16.msra.mxu0 0
      %2166 = vmatprep.subr.bf16.mxu0 0
      %2167 = vmatpush1.bf16.msra.mxu0 %v2154
      %2168 = vmatprep.subr.bf16.mxu0 0
      %2169 = vmatpush1.bf16.msra.mxu0 %v2146
      %2170 = vmatprep.subr.bf16.mxu0 0
      %2171 = vmatpush1.bf16.msra.mxu0 %v2145
      %2172 = vmatprep.subr.bf16.mxu0 0
      %2173 = vmatpush2.bf16.msra.mxu0 0
      %2174 = vmatprep.subr.bf16.mxu0 0
      %2175 = vmatpush2.bf16.msra.mxu0 0
      %2176 = vmatprep.subr.bf16.mxu0 0
      %2177 = vmatpush2.bf16.msra.mxu0 0
      %2178 = vmatprep.subr.bf16.mxu0 0
      %2179 = vmatpush2.bf16.msra.mxu0 0
      %2180 = vmatprep.subr.bf16.mxu0 0
      %2181 = vmatpush2.bf16.msra.mxu0 0
      %2182 = vmatprep.subr.bf16.mxu0 0
      %2183 = vmatpush2.bf16.msra.mxu0 0
      %2184 = vmatprep.subr.bf16.mxu0 0
      %2185 = vmatpush2.bf16.msra.mxu0 0
      %2186 = vmatprep.subr.bf16.mxu0 0
      %2187 = vmatpush2.bf16.msra.mxu0 0
      %2188 = vmatprep.mubr.bf16.mxu0 0
      %2189 = vmatmul.mubr.bf16.gmra.mxu0 %v2151
      %v2190 = vpop.f32.mrf.mxu0
      %v2191 = vadd.f32 %v972, %v2190
      %v2192 = vpop.f32.mrf.mxu0
      %v2193 = vpop.f32.mrf.mxu0
      %v2194 = vpop.f32.mrf.mxu0
      %2195 = vdwg.mxu0
      %v2201 = vunpack.c.l.b16 %v428
      %v2202 = vunpack.c.l.b16 %v429
      %v2203 = vunpack.c.l.b16 %v430
      %v2204 = vunpack.c.l.b16 %v431
      %v2205 = vunpack.c.l.b16 %v432
      %v2206 = vpack.c.b16 %v2202, %v2201
      %v2207 = vpack.c.b16 %v2204, %v2203
      %v2208 = vpack.c.b16 %v2205, %v2205
      %v2212 = vsel %vm989, %v220, 0
      %v2215 = vsel %vm993, %v2208, 0
      %2217 = vmatprep.subr.bf16.mxu0 0
      %2218 = vmatpush1.bf16.msra.mxu0 0
      %2219 = vmatprep.subr.bf16.mxu0 0
      %2220 = vmatpush1.bf16.msra.mxu0 0
      %2221 = vmatprep.subr.bf16.mxu0 0
      %2222 = vmatpush1.bf16.msra.mxu0 0
      %2223 = vmatprep.subr.bf16.mxu0 0
      %2224 = vmatpush1.bf16.msra.mxu0 0
      %2225 = vmatprep.subr.bf16.mxu0 0
      %2226 = vmatpush1.bf16.msra.mxu0 0
      %2227 = vmatprep.subr.bf16.mxu0 0
      %2228 = vmatpush1.bf16.msra.mxu0 %v2215
      %2229 = vmatprep.subr.bf16.mxu0 0
      %2230 = vmatpush1.bf16.msra.mxu0 %v2207
      %2231 = vmatprep.subr.bf16.mxu0 0
      %2232 = vmatpush1.bf16.msra.mxu0 %v2206
      %2233 = vmatprep.subr.bf16.mxu0 0
      %2234 = vmatpush2.bf16.msra.mxu0 0
      %2235 = vmatprep.subr.bf16.mxu0 0
      %2236 = vmatpush2.bf16.msra.mxu0 0
      %2237 = vmatprep.subr.bf16.mxu0 0
      %2238 = vmatpush2.bf16.msra.mxu0 0
      %2239 = vmatprep.subr.bf16.mxu0 0
      %2240 = vmatpush2.bf16.msra.mxu0 0
      %2241 = vmatprep.subr.bf16.mxu0 0
      %2242 = vmatpush2.bf16.msra.mxu0 0
      %2243 = vmatprep.subr.bf16.mxu0 0
      %2244 = vmatpush2.bf16.msra.mxu0 0
      %2245 = vmatprep.subr.bf16.mxu0 0
      %2246 = vmatpush2.bf16.msra.mxu0 0
      %2247 = vmatprep.subr.bf16.mxu0 0
      %2248 = vmatpush2.bf16.msra.mxu0 0
      %2249 = vmatprep.mubr.bf16.mxu0 0
      %2250 = vmatmul.mubr.bf16.gmra.mxu0 %v2212
      %v2251 = vpop.f32.mrf.mxu0
      %v2252 = vadd.f32 %v972, %v2251
      %v2253 = vpop.f32.mrf.mxu0
      %v2254 = vpop.f32.mrf.mxu0
      %v2255 = vpop.f32.mrf.mxu0
      %2256 = vdwg.mxu0
      %v2262 = vunpack.c.l.b16 %v433
      %v2263 = vunpack.c.l.b16 %v434
      %v2264 = vunpack.c.l.b16 %v435
      %v2265 = vunpack.c.l.b16 %v436
      %v2266 = vunpack.c.l.b16 %v437
      %v2267 = vpack.c.b16 %v2263, %v2262
      %v2268 = vpack.c.b16 %v2265, %v2264
      %v2269 = vpack.c.b16 %v2266, %v2266
      %v2273 = vsel %vm989, %v221, 0
      %v2276 = vsel %vm993, %v2269, 0
      %2278 = vmatprep.subr.bf16.mxu0 0
      %2279 = vmatpush1.bf16.msra.mxu0 0
      %2280 = vmatprep.subr.bf16.mxu0 0
      %2281 = vmatpush1.bf16.msra.mxu0 0
      %2282 = vmatprep.subr.bf16.mxu0 0
      %2283 = vmatpush1.bf16.msra.mxu0 0
      %2284 = vmatprep.subr.bf16.mxu0 0
      %2285 = vmatpush1.bf16.msra.mxu0 0
      %2286 = vmatprep.subr.bf16.mxu0 0
      %2287 = vmatpush1.bf16.msra.mxu0 0
      %2288 = vmatprep.subr.bf16.mxu0 0
      %2289 = vmatpush1.bf16.msra.mxu0 %v2276
      %2290 = vmatprep.subr.bf16.mxu0 0
      %2291 = vmatpush1.bf16.msra.mxu0 %v2268
      %2292 = vmatprep.subr.bf16.mxu0 0
      %2293 = vmatpush1.bf16.msra.mxu0 %v2267
      %2294 = vmatprep.subr.bf16.mxu0 0
      %2295 = vmatpush2.bf16.msra.mxu0 0
      %2296 = vmatprep.subr.bf16.mxu0 0
      %2297 = vmatpush2.bf16.msra.mxu0 0
      %2298 = vmatprep.subr.bf16.mxu0 0
      %2299 = vmatpush2.bf16.msra.mxu0 0
      %2300 = vmatprep.subr.bf16.mxu0 0
      %2301 = vmatpush2.bf16.msra.mxu0 0
      %2302 = vmatprep.subr.bf16.mxu0 0
      %2303 = vmatpush2.bf16.msra.mxu0 0
      %2304 = vmatprep.subr.bf16.mxu0 0
      %2305 = vmatpush2.bf16.msra.mxu0 0
      %2306 = vmatprep.subr.bf16.mxu0 0
      %2307 = vmatpush2.bf16.msra.mxu0 0
      %2308 = vmatprep.subr.bf16.mxu0 0
      %2309 = vmatpush2.bf16.msra.mxu0 0
      %2310 = vmatprep.mubr.bf16.mxu0 0
      %2311 = vmatmul.mubr.bf16.gmra.mxu0 %v2273
      %v2312 = vpop.f32.mrf.mxu0
      %v2313 = vadd.f32 %v972, %v2312
      %v2314 = vpop.f32.mrf.mxu0
      %v2315 = vpop.f32.mrf.mxu0
      %v2316 = vpop.f32.mrf.mxu0
      %2317 = vdwg.mxu0
      %v2323 = vunpack.c.l.b16 %v438
      %v2324 = vunpack.c.l.b16 %v439
      %v2325 = vunpack.c.l.b16 %v440
      %v2326 = vunpack.c.l.b16 %v441
      %v2327 = vunpack.c.l.b16 %v442
      %v2328 = vpack.c.b16 %v2324, %v2323
      %v2329 = vpack.c.b16 %v2326, %v2325
      %v2330 = vpack.c.b16 %v2327, %v2327
      %v2334 = vsel %vm989, %v222, 0
      %v2337 = vsel %vm993, %v2330, 0
      %2339 = vmatprep.subr.bf16.mxu0 0
      %2340 = vmatpush1.bf16.msra.mxu0 0
      %2341 = vmatprep.subr.bf16.mxu0 0
      %2342 = vmatpush1.bf16.msra.mxu0 0
      %2343 = vmatprep.subr.bf16.mxu0 0
      %2344 = vmatpush1.bf16.msra.mxu0 0
      %2345 = vmatprep.subr.bf16.mxu0 0
      %2346 = vmatpush1.bf16.msra.mxu0 0
      %2347 = vmatprep.subr.bf16.mxu0 0
      %2348 = vmatpush1.bf16.msra.mxu0 0
      %2349 = vmatprep.subr.bf16.mxu0 0
      %2350 = vmatpush1.bf16.msra.mxu0 %v2337
      %2351 = vmatprep.subr.bf16.mxu0 0
      %2352 = vmatpush1.bf16.msra.mxu0 %v2329
      %2353 = vmatprep.subr.bf16.mxu0 0
      %2354 = vmatpush1.bf16.msra.mxu0 %v2328
      %2355 = vmatprep.subr.bf16.mxu0 0
      %2356 = vmatpush2.bf16.msra.mxu0 0
      %2357 = vmatprep.subr.bf16.mxu0 0
      %2358 = vmatpush2.bf16.msra.mxu0 0
      %2359 = vmatprep.subr.bf16.mxu0 0
      %2360 = vmatpush2.bf16.msra.mxu0 0
      %2361 = vmatprep.subr.bf16.mxu0 0
      %2362 = vmatpush2.bf16.msra.mxu0 0
      %2363 = vmatprep.subr.bf16.mxu0 0
      %2364 = vmatpush2.bf16.msra.mxu0 0
      %2365 = vmatprep.subr.bf16.mxu0 0
      %2366 = vmatpush2.bf16.msra.mxu0 0
      %2367 = vmatprep.subr.bf16.mxu0 0
      %2368 = vmatpush2.bf16.msra.mxu0 0
      %2369 = vmatprep.subr.bf16.mxu0 0
      %2370 = vmatpush2.bf16.msra.mxu0 0
      %2371 = vmatprep.mubr.bf16.mxu0 0
      %2372 = vmatmul.mubr.bf16.gmra.mxu0 %v2334
      %v2373 = vpop.f32.mrf.mxu0
      %v2374 = vadd.f32 %v972, %v2373
      %v2375 = vpop.f32.mrf.mxu0
      %v2376 = vpop.f32.mrf.mxu0
      %v2377 = vpop.f32.mrf.mxu0
      %2378 = vdwg.mxu0
      %v2384 = vunpack.c.l.b16 %v443
      %v2385 = vunpack.c.l.b16 %v444
      %v2386 = vunpack.c.l.b16 %v445
      %v2387 = vunpack.c.l.b16 %v446
      %v2388 = vunpack.c.l.b16 %v447
      %v2389 = vpack.c.b16 %v2385, %v2384
      %v2390 = vpack.c.b16 %v2387, %v2386
      %v2391 = vpack.c.b16 %v2388, %v2388
      %v2395 = vsel %vm989, %v223, 0
      %v2398 = vsel %vm993, %v2391, 0
      %2400 = vmatprep.subr.bf16.mxu0 0
      %2401 = vmatpush1.bf16.msra.mxu0 0
      %2402 = vmatprep.subr.bf16.mxu0 0
      %2403 = vmatpush1.bf16.msra.mxu0 0
      %2404 = vmatprep.subr.bf16.mxu0 0
      %2405 = vmatpush1.bf16.msra.mxu0 0
      %2406 = vmatprep.subr.bf16.mxu0 0
      %2407 = vmatpush1.bf16.msra.mxu0 0
      %2408 = vmatprep.subr.bf16.mxu0 0
      %2409 = vmatpush1.bf16.msra.mxu0 0
      %2410 = vmatprep.subr.bf16.mxu0 0
      %2411 = vmatpush1.bf16.msra.mxu0 %v2398
      %2412 = vmatprep.subr.bf16.mxu0 0
      %2413 = vmatpush1.bf16.msra.mxu0 %v2390
      %2414 = vmatprep.subr.bf16.mxu0 0
      %2415 = vmatpush1.bf16.msra.mxu0 %v2389
      %2416 = vmatprep.subr.bf16.mxu0 0
      %2417 = vmatpush2.bf16.msra.mxu0 0
      %2418 = vmatprep.subr.bf16.mxu0 0
      %2419 = vmatpush2.bf16.msra.mxu0 0
      %2420 = vmatprep.subr.bf16.mxu0 0
      %2421 = vmatpush2.bf16.msra.mxu0 0
      %2422 = vmatprep.subr.bf16.mxu0 0
      %2423 = vmatpush2.bf16.msra.mxu0 0
      %2424 = vmatprep.subr.bf16.mxu0 0
      %2425 = vmatpush2.bf16.msra.mxu0 0
      %2426 = vmatprep.subr.bf16.mxu0 0
      %2427 = vmatpush2.bf16.msra.mxu0 0
      %2428 = vmatprep.subr.bf16.mxu0 0
      %2429 = vmatpush2.bf16.msra.mxu0 0
      %2430 = vmatprep.subr.bf16.mxu0 0
      %2431 = vmatpush2.bf16.msra.mxu0 0
      %2432 = vmatprep.mubr.bf16.mxu0 0
      %2433 = vmatmul.mubr.bf16.gmra.mxu0 %v2395
      %v2434 = vpop.f32.mrf.mxu0
      %v2435 = vadd.f32 %v972, %v2434
      %v2436 = vpop.f32.mrf.mxu0
      %v2437 = vpop.f32.mrf.mxu0
      %v2438 = vpop.f32.mrf.mxu0
      %2439 = vdwg.mxu0
      %v2445 = vunpack.c.l.b16 %v448
      %v2446 = vunpack.c.l.b16 %v449
      %v2447 = vunpack.c.l.b16 %v450
      %v2448 = vunpack.c.l.b16 %v451
      %v2449 = vunpack.c.l.b16 %v452
      %v2450 = vpack.c.b16 %v2446, %v2445
      %v2451 = vpack.c.b16 %v2448, %v2447
      %v2452 = vpack.c.b16 %v2449, %v2449
      %v2456 = vsel %vm989, %v224, 0
      %v2459 = vsel %vm993, %v2452, 0
      %2461 = vmatprep.subr.bf16.mxu0 0
      %2462 = vmatpush1.bf16.msra.mxu0 0
      %2463 = vmatprep.subr.bf16.mxu0 0
      %2464 = vmatpush1.bf16.msra.mxu0 0
      %2465 = vmatprep.subr.bf16.mxu0 0
      %2466 = vmatpush1.bf16.msra.mxu0 0
      %2467 = vmatprep.subr.bf16.mxu0 0
      %2468 = vmatpush1.bf16.msra.mxu0 0
      %2469 = vmatprep.subr.bf16.mxu0 0
      %2470 = vmatpush1.bf16.msra.mxu0 0
      %2471 = vmatprep.subr.bf16.mxu0 0
      %2472 = vmatpush1.bf16.msra.mxu0 %v2459
      %2473 = vmatprep.subr.bf16.mxu0 0
      %2474 = vmatpush1.bf16.msra.mxu0 %v2451
      %2475 = vmatprep.subr.bf16.mxu0 0
      %2476 = vmatpush1.bf16.msra.mxu0 %v2450
      %2477 = vmatprep.subr.bf16.mxu0 0
      %2478 = vmatpush2.bf16.msra.mxu0 0
      %2479 = vmatprep.subr.bf16.mxu0 0
      %2480 = vmatpush2.bf16.msra.mxu0 0
      %2481 = vmatprep.subr.bf16.mxu0 0
      %2482 = vmatpush2.bf16.msra.mxu0 0
      %2483 = vmatprep.subr.bf16.mxu0 0
      %2484 = vmatpush2.bf16.msra.mxu0 0
      %2485 = vmatprep.subr.bf16.mxu0 0
      %2486 = vmatpush2.bf16.msra.mxu0 0
      %2487 = vmatprep.subr.bf16.mxu0 0
      %2488 = vmatpush2.bf16.msra.mxu0 0
      %2489 = vmatprep.subr.bf16.mxu0 0
      %2490 = vmatpush2.bf16.msra.mxu0 0
      %2491 = vmatprep.subr.bf16.mxu0 0
      %2492 = vmatpush2.bf16.msra.mxu0 0
      %2493 = vmatprep.mubr.bf16.mxu0 0
      %2494 = vmatmul.mubr.bf16.gmra.mxu0 %v2456
      %v2495 = vpop.f32.mrf.mxu0
      %v2496 = vadd.f32 %v972, %v2495
      %v2497 = vpop.f32.mrf.mxu0
      %v2498 = vpop.f32.mrf.mxu0
      %v2499 = vpop.f32.mrf.mxu0
      %2500 = vdwg.mxu0
      %v2506 = vunpack.c.l.b16 %v453
      %v2507 = vunpack.c.l.b16 %v454
      %v2508 = vunpack.c.l.b16 %v455
      %v2509 = vunpack.c.l.b16 %v456
      %v2510 = vunpack.c.l.b16 %v457
      %v2511 = vpack.c.b16 %v2507, %v2506
      %v2512 = vpack.c.b16 %v2509, %v2508
      %v2513 = vpack.c.b16 %v2510, %v2510
      %v2517 = vsel %vm989, %v225, 0
      %v2520 = vsel %vm993, %v2513, 0
      %2522 = vmatprep.subr.bf16.mxu0 0
      %2523 = vmatpush1.bf16.msra.mxu0 0
      %2524 = vmatprep.subr.bf16.mxu0 0
      %2525 = vmatpush1.bf16.msra.mxu0 0
      %2526 = vmatprep.subr.bf16.mxu0 0
      %2527 = vmatpush1.bf16.msra.mxu0 0
      %2528 = vmatprep.subr.bf16.mxu0 0
      %2529 = vmatpush1.bf16.msra.mxu0 0
      %2530 = vmatprep.subr.bf16.mxu0 0
      %2531 = vmatpush1.bf16.msra.mxu0 0
      %2532 = vmatprep.subr.bf16.mxu0 0
      %2533 = vmatpush1.bf16.msra.mxu0 %v2520
      %2534 = vmatprep.subr.bf16.mxu0 0
      %2535 = vmatpush1.bf16.msra.mxu0 %v2512
      %2536 = vmatprep.subr.bf16.mxu0 0
      %2537 = vmatpush1.bf16.msra.mxu0 %v2511
      %2538 = vmatprep.subr.bf16.mxu0 0
      %2539 = vmatpush2.bf16.msra.mxu0 0
      %2540 = vmatprep.subr.bf16.mxu0 0
      %2541 = vmatpush2.bf16.msra.mxu0 0
      %2542 = vmatprep.subr.bf16.mxu0 0
      %2543 = vmatpush2.bf16.msra.mxu0 0
      %2544 = vmatprep.subr.bf16.mxu0 0
      %2545 = vmatpush2.bf16.msra.mxu0 0
      %2546 = vmatprep.subr.bf16.mxu0 0
      %2547 = vmatpush2.bf16.msra.mxu0 0
      %2548 = vmatprep.subr.bf16.mxu0 0
      %2549 = vmatpush2.bf16.msra.mxu0 0
      %2550 = vmatprep.subr.bf16.mxu0 0
      %2551 = vmatpush2.bf16.msra.mxu0 0
      %2552 = vmatprep.subr.bf16.mxu0 0
      %2553 = vmatpush2.bf16.msra.mxu0 0
      %2554 = vmatprep.mubr.bf16.mxu0 0
      %2555 = vmatmul.mubr.bf16.gmra.mxu0 %v2517
      %v2556 = vpop.f32.mrf.mxu0
      %v2557 = vadd.f32 %v972, %v2556
      %v2558 = vpop.f32.mrf.mxu0
      %v2559 = vpop.f32.mrf.mxu0
      %v2560 = vpop.f32.mrf.mxu0
      %2561 = vdwg.mxu0
      %v2567 = vunpack.c.l.b16 %v458
      %v2568 = vunpack.c.l.b16 %v459
      %v2569 = vunpack.c.l.b16 %v460
      %v2570 = vunpack.c.l.b16 %v461
      %v2571 = vunpack.c.l.b16 %v462
      %v2572 = vpack.c.b16 %v2568, %v2567
      %v2573 = vpack.c.b16 %v2570, %v2569
      %v2574 = vpack.c.b16 %v2571, %v2571
      %v2578 = vsel %vm989, %v226, 0
      %v2581 = vsel %vm993, %v2574, 0
      %2583 = vmatprep.subr.bf16.mxu0 0
      %2584 = vmatpush1.bf16.msra.mxu0 0
      %2585 = vmatprep.subr.bf16.mxu0 0
      %2586 = vmatpush1.bf16.msra.mxu0 0
      %2587 = vmatprep.subr.bf16.mxu0 0
      %2588 = vmatpush1.bf16.msra.mxu0 0
      %2589 = vmatprep.subr.bf16.mxu0 0
      %2590 = vmatpush1.bf16.msra.mxu0 0
      %2591 = vmatprep.subr.bf16.mxu0 0
      %2592 = vmatpush1.bf16.msra.mxu0 0
      %2593 = vmatprep.subr.bf16.mxu0 0
      %2594 = vmatpush1.bf16.msra.mxu0 %v2581
      %2595 = vmatprep.subr.bf16.mxu0 0
      %2596 = vmatpush1.bf16.msra.mxu0 %v2573
      %2597 = vmatprep.subr.bf16.mxu0 0
      %2598 = vmatpush1.bf16.msra.mxu0 %v2572
      %2599 = vmatprep.subr.bf16.mxu0 0
      %2600 = vmatpush2.bf16.msra.mxu0 0
      %2601 = vmatprep.subr.bf16.mxu0 0
      %2602 = vmatpush2.bf16.msra.mxu0 0
      %2603 = vmatprep.subr.bf16.mxu0 0
      %2604 = vmatpush2.bf16.msra.mxu0 0
      %2605 = vmatprep.subr.bf16.mxu0 0
      %2606 = vmatpush2.bf16.msra.mxu0 0
      %2607 = vmatprep.subr.bf16.mxu0 0
      %2608 = vmatpush2.bf16.msra.mxu0 0
      %2609 = vmatprep.subr.bf16.mxu0 0
      %2610 = vmatpush2.bf16.msra.mxu0 0
      %2611 = vmatprep.subr.bf16.mxu0 0
      %2612 = vmatpush2.bf16.msra.mxu0 0
      %2613 = vmatprep.subr.bf16.mxu0 0
      %2614 = vmatpush2.bf16.msra.mxu0 0
      %2615 = vmatprep.mubr.bf16.mxu0 0
      %2616 = vmatmul.mubr.bf16.gmra.mxu0 %v2578
      %v2617 = vpop.f32.mrf.mxu0
      %v2618 = vadd.f32 %v972, %v2617
      %v2619 = vpop.f32.mrf.mxu0
      %v2620 = vpop.f32.mrf.mxu0
      %v2621 = vpop.f32.mrf.mxu0
      %2622 = vdwg.mxu0
      %v2628 = vunpack.c.l.b16 %v463
      %v2629 = vunpack.c.l.b16 %v464
      %v2630 = vunpack.c.l.b16 %v465
      %v2631 = vunpack.c.l.b16 %v466
      %v2632 = vunpack.c.l.b16 %v467
      %v2633 = vpack.c.b16 %v2629, %v2628
      %v2634 = vpack.c.b16 %v2631, %v2630
      %v2635 = vpack.c.b16 %v2632, %v2632
      %v2639 = vsel %vm989, %v227, 0
      %v2642 = vsel %vm993, %v2635, 0
      %2644 = vmatprep.subr.bf16.mxu0 0
      %2645 = vmatpush1.bf16.msra.mxu0 0
      %2646 = vmatprep.subr.bf16.mxu0 0
      %2647 = vmatpush1.bf16.msra.mxu0 0
      %2648 = vmatprep.subr.bf16.mxu0 0
      %2649 = vmatpush1.bf16.msra.mxu0 0
      %2650 = vmatprep.subr.bf16.mxu0 0
      %2651 = vmatpush1.bf16.msra.mxu0 0
      %2652 = vmatprep.subr.bf16.mxu0 0
      %2653 = vmatpush1.bf16.msra.mxu0 0
      %2654 = vmatprep.subr.bf16.mxu0 0
      %2655 = vmatpush1.bf16.msra.mxu0 %v2642
      %2656 = vmatprep.subr.bf16.mxu0 0
      %2657 = vmatpush1.bf16.msra.mxu0 %v2634
      %2658 = vmatprep.subr.bf16.mxu0 0
      %2659 = vmatpush1.bf16.msra.mxu0 %v2633
      %2660 = vmatprep.subr.bf16.mxu0 0
      %2661 = vmatpush2.bf16.msra.mxu0 0
      %2662 = vmatprep.subr.bf16.mxu0 0
      %2663 = vmatpush2.bf16.msra.mxu0 0
      %2664 = vmatprep.subr.bf16.mxu0 0
      %2665 = vmatpush2.bf16.msra.mxu0 0
      %2666 = vmatprep.subr.bf16.mxu0 0
      %2667 = vmatpush2.bf16.msra.mxu0 0
      %2668 = vmatprep.subr.bf16.mxu0 0
      %2669 = vmatpush2.bf16.msra.mxu0 0
      %2670 = vmatprep.subr.bf16.mxu0 0
      %2671 = vmatpush2.bf16.msra.mxu0 0
      %2672 = vmatprep.subr.bf16.mxu0 0
      %2673 = vmatpush2.bf16.msra.mxu0 0
      %2674 = vmatprep.subr.bf16.mxu0 0
      %2675 = vmatpush2.bf16.msra.mxu0 0
      %2676 = vmatprep.mubr.bf16.mxu0 0
      %2677 = vmatmul.mubr.bf16.gmra.mxu0 %v2639
      %v2678 = vpop.f32.mrf.mxu0
      %v2679 = vadd.f32 %v972, %v2678
      %v2680 = vpop.f32.mrf.mxu0
      %v2681 = vpop.f32.mrf.mxu0
      %v2682 = vpop.f32.mrf.mxu0
      %2683 = vdwg.mxu0
      %v2689 = vunpack.c.l.b16 %v468
      %v2690 = vunpack.c.l.b16 %v469
      %v2691 = vunpack.c.l.b16 %v470
      %v2692 = vunpack.c.l.b16 %v471
      %v2693 = vunpack.c.l.b16 %v472
      %v2694 = vpack.c.b16 %v2690, %v2689
      %v2695 = vpack.c.b16 %v2692, %v2691
      %v2696 = vpack.c.b16 %v2693, %v2693
      %v2700 = vsel %vm989, %v228, 0
      %v2703 = vsel %vm993, %v2696, 0
      %2705 = vmatprep.subr.bf16.mxu0 0
      %2706 = vmatpush1.bf16.msra.mxu0 0
      %2707 = vmatprep.subr.bf16.mxu0 0
      %2708 = vmatpush1.bf16.msra.mxu0 0
      %2709 = vmatprep.subr.bf16.mxu0 0
      %2710 = vmatpush1.bf16.msra.mxu0 0
      %2711 = vmatprep.subr.bf16.mxu0 0
      %2712 = vmatpush1.bf16.msra.mxu0 0
      %2713 = vmatprep.subr.bf16.mxu0 0
      %2714 = vmatpush1.bf16.msra.mxu0 0
      %2715 = vmatprep.subr.bf16.mxu0 0
      %2716 = vmatpush1.bf16.msra.mxu0 %v2703
      %2717 = vmatprep.subr.bf16.mxu0 0
      %2718 = vmatpush1.bf16.msra.mxu0 %v2695
      %2719 = vmatprep.subr.bf16.mxu0 0
      %2720 = vmatpush1.bf16.msra.mxu0 %v2694
      %2721 = vmatprep.subr.bf16.mxu0 0
      %2722 = vmatpush2.bf16.msra.mxu0 0
      %2723 = vmatprep.subr.bf16.mxu0 0
      %2724 = vmatpush2.bf16.msra.mxu0 0
      %2725 = vmatprep.subr.bf16.mxu0 0
      %2726 = vmatpush2.bf16.msra.mxu0 0
      %2727 = vmatprep.subr.bf16.mxu0 0
      %2728 = vmatpush2.bf16.msra.mxu0 0
      %2729 = vmatprep.subr.bf16.mxu0 0
      %2730 = vmatpush2.bf16.msra.mxu0 0
      %2731 = vmatprep.subr.bf16.mxu0 0
      %2732 = vmatpush2.bf16.msra.mxu0 0
      %2733 = vmatprep.subr.bf16.mxu0 0
      %2734 = vmatpush2.bf16.msra.mxu0 0
      %2735 = vmatprep.subr.bf16.mxu0 0
      %2736 = vmatpush2.bf16.msra.mxu0 0
      %2737 = vmatprep.mubr.bf16.mxu0 0
      %2738 = vmatmul.mubr.bf16.gmra.mxu0 %v2700
      %v2739 = vpop.f32.mrf.mxu0
      %v2740 = vadd.f32 %v972, %v2739
      %v2741 = vpop.f32.mrf.mxu0
      %v2742 = vpop.f32.mrf.mxu0
      %v2743 = vpop.f32.mrf.mxu0
      %2744 = vdwg.mxu0
      %v2750 = vunpack.c.l.b16 %v473
      %v2751 = vunpack.c.l.b16 %v474
      %v2752 = vunpack.c.l.b16 %v475
      %v2753 = vunpack.c.l.b16 %v476
      %v2754 = vunpack.c.l.b16 %v477
      %v2755 = vpack.c.b16 %v2751, %v2750
      %v2756 = vpack.c.b16 %v2753, %v2752
      %v2757 = vpack.c.b16 %v2754, %v2754
      %v2761 = vsel %vm989, %v229, 0
      %v2764 = vsel %vm993, %v2757, 0
      %2766 = vmatprep.subr.bf16.mxu0 0
      %2767 = vmatpush1.bf16.msra.mxu0 0
      %2768 = vmatprep.subr.bf16.mxu0 0
      %2769 = vmatpush1.bf16.msra.mxu0 0
      %2770 = vmatprep.subr.bf16.mxu0 0
      %2771 = vmatpush1.bf16.msra.mxu0 0
      %2772 = vmatprep.subr.bf16.mxu0 0
      %2773 = vmatpush1.bf16.msra.mxu0 0
      %2774 = vmatprep.subr.bf16.mxu0 0
      %2775 = vmatpush1.bf16.msra.mxu0 0
      %2776 = vmatprep.subr.bf16.mxu0 0
      %2777 = vmatpush1.bf16.msra.mxu0 %v2764
      %2778 = vmatprep.subr.bf16.mxu0 0
      %2779 = vmatpush1.bf16.msra.mxu0 %v2756
      %2780 = vmatprep.subr.bf16.mxu0 0
      %2781 = vmatpush1.bf16.msra.mxu0 %v2755
      %2782 = vmatprep.subr.bf16.mxu0 0
      %2783 = vmatpush2.bf16.msra.mxu0 0
      %2784 = vmatprep.subr.bf16.mxu0 0
      %2785 = vmatpush2.bf16.msra.mxu0 0
      %2786 = vmatprep.subr.bf16.mxu0 0
      %2787 = vmatpush2.bf16.msra.mxu0 0
      %2788 = vmatprep.subr.bf16.mxu0 0
      %2789 = vmatpush2.bf16.msra.mxu0 0
      %2790 = vmatprep.subr.bf16.mxu0 0
      %2791 = vmatpush2.bf16.msra.mxu0 0
      %2792 = vmatprep.subr.bf16.mxu0 0
      %2793 = vmatpush2.bf16.msra.mxu0 0
      %2794 = vmatprep.subr.bf16.mxu0 0
      %2795 = vmatpush2.bf16.msra.mxu0 0
      %2796 = vmatprep.subr.bf16.mxu0 0
      %2797 = vmatpush2.bf16.msra.mxu0 0
      %2798 = vmatprep.mubr.bf16.mxu0 0
      %2799 = vmatmul.mubr.bf16.gmra.mxu0 %v2761
      %v2800 = vpop.f32.mrf.mxu0
      %v2801 = vadd.f32 %v972, %v2800
      %v2802 = vpop.f32.mrf.mxu0
      %v2803 = vpop.f32.mrf.mxu0
      %v2804 = vpop.f32.mrf.mxu0
      %2805 = vdwg.mxu0
      %v2811 = vunpack.c.l.b16 %v478
      %v2812 = vunpack.c.l.b16 %v479
      %v2813 = vunpack.c.l.b16 %v480
      %v2814 = vunpack.c.l.b16 %v481
      %v2815 = vunpack.c.l.b16 %v482
      %v2816 = vpack.c.b16 %v2812, %v2811
      %v2817 = vpack.c.b16 %v2814, %v2813
      %v2818 = vpack.c.b16 %v2815, %v2815
      %v2822 = vsel %vm989, %v230, 0
      %v2825 = vsel %vm993, %v2818, 0
      %2827 = vmatprep.subr.bf16.mxu0 0
      %2828 = vmatpush1.bf16.msra.mxu0 0
      %2829 = vmatprep.subr.bf16.mxu0 0
      %2830 = vmatpush1.bf16.msra.mxu0 0
      %2831 = vmatprep.subr.bf16.mxu0 0
      %2832 = vmatpush1.bf16.msra.mxu0 0
      %2833 = vmatprep.subr.bf16.mxu0 0
      %2834 = vmatpush1.bf16.msra.mxu0 0
      %2835 = vmatprep.subr.bf16.mxu0 0
      %2836 = vmatpush1.bf16.msra.mxu0 0
      %2837 = vmatprep.subr.bf16.mxu0 0
      %2838 = vmatpush1.bf16.msra.mxu0 %v2825
      %2839 = vmatprep.subr.bf16.mxu0 0
      %2840 = vmatpush1.bf16.msra.mxu0 %v2817
      %2841 = vmatprep.subr.bf16.mxu0 0
      %2842 = vmatpush1.bf16.msra.mxu0 %v2816
      %2843 = vmatprep.subr.bf16.mxu0 0
      %2844 = vmatpush2.bf16.msra.mxu0 0
      %2845 = vmatprep.subr.bf16.mxu0 0
      %2846 = vmatpush2.bf16.msra.mxu0 0
      %2847 = vmatprep.subr.bf16.mxu0 0
      %2848 = vmatpush2.bf16.msra.mxu0 0
      %2849 = vmatprep.subr.bf16.mxu0 0
      %2850 = vmatpush2.bf16.msra.mxu0 0
      %2851 = vmatprep.subr.bf16.mxu0 0
      %2852 = vmatpush2.bf16.msra.mxu0 0
      %2853 = vmatprep.subr.bf16.mxu0 0
      %2854 = vmatpush2.bf16.msra.mxu0 0
      %2855 = vmatprep.subr.bf16.mxu0 0
      %2856 = vmatpush2.bf16.msra.mxu0 0
      %2857 = vmatprep.subr.bf16.mxu0 0
      %2858 = vmatpush2.bf16.msra.mxu0 0
      %2859 = vmatprep.mubr.bf16.mxu0 0
      %2860 = vmatmul.mubr.bf16.gmra.mxu0 %v2822
      %v2861 = vpop.f32.mrf.mxu0
      %v2862 = vadd.f32 %v972, %v2861
      %v2863 = vpop.f32.mrf.mxu0
      %v2864 = vpop.f32.mrf.mxu0
      %v2865 = vpop.f32.mrf.mxu0
      %2866 = vdwg.mxu0
      %v2872 = vunpack.c.l.b16 %v483
      %v2873 = vunpack.c.l.b16 %v484
      %v2874 = vunpack.c.l.b16 %v485
      %v2875 = vunpack.c.l.b16 %v486
      %v2876 = vunpack.c.l.b16 %v487
      %v2877 = vpack.c.b16 %v2873, %v2872
      %v2878 = vpack.c.b16 %v2875, %v2874
      %v2879 = vpack.c.b16 %v2876, %v2876
      %v2883 = vsel %vm989, %v231, 0
      %v2886 = vsel %vm993, %v2879, 0
      %2888 = vmatprep.subr.bf16.mxu0 0
      %2889 = vmatpush1.bf16.msra.mxu0 0
      %2890 = vmatprep.subr.bf16.mxu0 0
      %2891 = vmatpush1.bf16.msra.mxu0 0
      %2892 = vmatprep.subr.bf16.mxu0 0
      %2893 = vmatpush1.bf16.msra.mxu0 0
      %2894 = vmatprep.subr.bf16.mxu0 0
      %2895 = vmatpush1.bf16.msra.mxu0 0
      %2896 = vmatprep.subr.bf16.mxu0 0
      %2897 = vmatpush1.bf16.msra.mxu0 0
      %2898 = vmatprep.subr.bf16.mxu0 0
      %2899 = vmatpush1.bf16.msra.mxu0 %v2886
      %2900 = vmatprep.subr.bf16.mxu0 0
      %2901 = vmatpush1.bf16.msra.mxu0 %v2878
      %2902 = vmatprep.subr.bf16.mxu0 0
      %2903 = vmatpush1.bf16.msra.mxu0 %v2877
      %2904 = vmatprep.subr.bf16.mxu0 0
      %2905 = vmatpush2.bf16.msra.mxu0 0
      %2906 = vmatprep.subr.bf16.mxu0 0
      %2907 = vmatpush2.bf16.msra.mxu0 0
      %2908 = vmatprep.subr.bf16.mxu0 0
      %2909 = vmatpush2.bf16.msra.mxu0 0
      %2910 = vmatprep.subr.bf16.mxu0 0
      %2911 = vmatpush2.bf16.msra.mxu0 0
      %2912 = vmatprep.subr.bf16.mxu0 0
      %2913 = vmatpush2.bf16.msra.mxu0 0
      %2914 = vmatprep.subr.bf16.mxu0 0
      %2915 = vmatpush2.bf16.msra.mxu0 0
      %2916 = vmatprep.subr.bf16.mxu0 0
      %2917 = vmatpush2.bf16.msra.mxu0 0
      %2918 = vmatprep.subr.bf16.mxu0 0
      %2919 = vmatpush2.bf16.msra.mxu0 0
      %2920 = vmatprep.mubr.bf16.mxu0 0
      %2921 = vmatmul.mubr.bf16.gmra.mxu0 %v2883
      %v2922 = vpop.f32.mrf.mxu0
      %v2923 = vadd.f32 %v972, %v2922
      %v2924 = vpop.f32.mrf.mxu0
      %v2925 = vpop.f32.mrf.mxu0
      %v2926 = vpop.f32.mrf.mxu0
      %2927 = vdwg.mxu0
      %v2933 = vunpack.c.l.b16 %v488
      %v2934 = vunpack.c.l.b16 %v489
      %v2935 = vunpack.c.l.b16 %v490
      %v2936 = vunpack.c.l.b16 %v491
      %v2937 = vunpack.c.l.b16 %v492
      %v2938 = vpack.c.b16 %v2934, %v2933
      %v2939 = vpack.c.b16 %v2936, %v2935
      %v2940 = vpack.c.b16 %v2937, %v2937
      %v2944 = vsel %vm989, %v232, 0
      %v2947 = vsel %vm993, %v2940, 0
      %2949 = vmatprep.subr.bf16.mxu0 0
      %2950 = vmatpush1.bf16.msra.mxu0 0
      %2951 = vmatprep.subr.bf16.mxu0 0
      %2952 = vmatpush1.bf16.msra.mxu0 0
      %2953 = vmatprep.subr.bf16.mxu0 0
      %2954 = vmatpush1.bf16.msra.mxu0 0
      %2955 = vmatprep.subr.bf16.mxu0 0
      %2956 = vmatpush1.bf16.msra.mxu0 0
      %2957 = vmatprep.subr.bf16.mxu0 0
      %2958 = vmatpush1.bf16.msra.mxu0 0
      %2959 = vmatprep.subr.bf16.mxu0 0
      %2960 = vmatpush1.bf16.msra.mxu0 %v2947
      %2961 = vmatprep.subr.bf16.mxu0 0
      %2962 = vmatpush1.bf16.msra.mxu0 %v2939
      %2963 = vmatprep.subr.bf16.mxu0 0
      %2964 = vmatpush1.bf16.msra.mxu0 %v2938
      %2965 = vmatprep.subr.bf16.mxu0 0
      %2966 = vmatpush2.bf16.msra.mxu0 0
      %2967 = vmatprep.subr.bf16.mxu0 0
      %2968 = vmatpush2.bf16.msra.mxu0 0
      %2969 = vmatprep.subr.bf16.mxu0 0
      %2970 = vmatpush2.bf16.msra.mxu0 0
      %2971 = vmatprep.subr.bf16.mxu0 0
      %2972 = vmatpush2.bf16.msra.mxu0 0
      %2973 = vmatprep.subr.bf16.mxu0 0
      %2974 = vmatpush2.bf16.msra.mxu0 0
      %2975 = vmatprep.subr.bf16.mxu0 0
      %2976 = vmatpush2.bf16.msra.mxu0 0
      %2977 = vmatprep.subr.bf16.mxu0 0
      %2978 = vmatpush2.bf16.msra.mxu0 0
      %2979 = vmatprep.subr.bf16.mxu0 0
      %2980 = vmatpush2.bf16.msra.mxu0 0
      %2981 = vmatprep.mubr.bf16.mxu0 0
      %2982 = vmatmul.mubr.bf16.gmra.mxu0 %v2944
      %v2983 = vpop.f32.mrf.mxu0
      %v2984 = vadd.f32 %v972, %v2983
      %v2985 = vpop.f32.mrf.mxu0
      %v2986 = vpop.f32.mrf.mxu0
      %v2987 = vpop.f32.mrf.mxu0
      %2988 = vdwg.mxu0
      %v2994 = vunpack.c.l.b16 %v493
      %v2995 = vunpack.c.l.b16 %v494
      %v2996 = vunpack.c.l.b16 %v495
      %v2997 = vunpack.c.l.b16 %v496
      %v2998 = vunpack.c.l.b16 %v497
      %v2999 = vpack.c.b16 %v2995, %v2994
      %v3000 = vpack.c.b16 %v2997, %v2996
      %v3001 = vpack.c.b16 %v2998, %v2998
      %v3005 = vsel %vm989, %v233, 0
      %v3008 = vsel %vm993, %v3001, 0
      %3010 = vmatprep.subr.bf16.mxu0 0
      %3011 = vmatpush1.bf16.msra.mxu0 0
      %3012 = vmatprep.subr.bf16.mxu0 0
      %3013 = vmatpush1.bf16.msra.mxu0 0
      %3014 = vmatprep.subr.bf16.mxu0 0
      %3015 = vmatpush1.bf16.msra.mxu0 0
      %3016 = vmatprep.subr.bf16.mxu0 0
      %3017 = vmatpush1.bf16.msra.mxu0 0
      %3018 = vmatprep.subr.bf16.mxu0 0
      %3019 = vmatpush1.bf16.msra.mxu0 0
      %3020 = vmatprep.subr.bf16.mxu0 0
      %3021 = vmatpush1.bf16.msra.mxu0 %v3008
      %3022 = vmatprep.subr.bf16.mxu0 0
      %3023 = vmatpush1.bf16.msra.mxu0 %v3000
      %3024 = vmatprep.subr.bf16.mxu0 0
      %3025 = vmatpush1.bf16.msra.mxu0 %v2999
      %3026 = vmatprep.subr.bf16.mxu0 0
      %3027 = vmatpush2.bf16.msra.mxu0 0
      %3028 = vmatprep.subr.bf16.mxu0 0
      %3029 = vmatpush2.bf16.msra.mxu0 0
      %3030 = vmatprep.subr.bf16.mxu0 0
      %3031 = vmatpush2.bf16.msra.mxu0 0
      %3032 = vmatprep.subr.bf16.mxu0 0
      %3033 = vmatpush2.bf16.msra.mxu0 0
      %3034 = vmatprep.subr.bf16.mxu0 0
      %3035 = vmatpush2.bf16.msra.mxu0 0
      %3036 = vmatprep.subr.bf16.mxu0 0
      %3037 = vmatpush2.bf16.msra.mxu0 0
      %3038 = vmatprep.subr.bf16.mxu0 0
      %3039 = vmatpush2.bf16.msra.mxu0 0
      %3040 = vmatprep.subr.bf16.mxu0 0
      %3041 = vmatpush2.bf16.msra.mxu0 0
      %3042 = vmatprep.mubr.bf16.mxu0 0
      %3043 = vmatmul.mubr.bf16.gmra.mxu0 %v3005
      %v3044 = vpop.f32.mrf.mxu0
      %v3045 = vadd.f32 %v972, %v3044
      %v3046 = vpop.f32.mrf.mxu0
      %v3047 = vpop.f32.mrf.mxu0
      %v3048 = vpop.f32.mrf.mxu0
      %3049 = vdwg.mxu0
      %v3055 = vunpack.c.l.b16 %v498
      %v3056 = vunpack.c.l.b16 %v499
      %v3057 = vunpack.c.l.b16 %v500
      %v3058 = vunpack.c.l.b16 %v501
      %v3059 = vunpack.c.l.b16 %v502
      %v3060 = vpack.c.b16 %v3056, %v3055
      %v3061 = vpack.c.b16 %v3058, %v3057
      %v3062 = vpack.c.b16 %v3059, %v3059
      %v3066 = vsel %vm989, %v234, 0
      %v3069 = vsel %vm993, %v3062, 0
      %3071 = vmatprep.subr.bf16.mxu0 0
      %3072 = vmatpush1.bf16.msra.mxu0 0
      %3073 = vmatprep.subr.bf16.mxu0 0
      %3074 = vmatpush1.bf16.msra.mxu0 0
      %3075 = vmatprep.subr.bf16.mxu0 0
      %3076 = vmatpush1.bf16.msra.mxu0 0
      %3077 = vmatprep.subr.bf16.mxu0 0
      %3078 = vmatpush1.bf16.msra.mxu0 0
      %3079 = vmatprep.subr.bf16.mxu0 0
      %3080 = vmatpush1.bf16.msra.mxu0 0
      %3081 = vmatprep.subr.bf16.mxu0 0
      %3082 = vmatpush1.bf16.msra.mxu0 %v3069
      %3083 = vmatprep.subr.bf16.mxu0 0
      %3084 = vmatpush1.bf16.msra.mxu0 %v3061
      %3085 = vmatprep.subr.bf16.mxu0 0
      %3086 = vmatpush1.bf16.msra.mxu0 %v3060
      %3087 = vmatprep.subr.bf16.mxu0 0
      %3088 = vmatpush2.bf16.msra.mxu0 0
      %3089 = vmatprep.subr.bf16.mxu0 0
      %3090 = vmatpush2.bf16.msra.mxu0 0
      %3091 = vmatprep.subr.bf16.mxu0 0
      %3092 = vmatpush2.bf16.msra.mxu0 0
      %3093 = vmatprep.subr.bf16.mxu0 0
      %3094 = vmatpush2.bf16.msra.mxu0 0
      %3095 = vmatprep.subr.bf16.mxu0 0
      %3096 = vmatpush2.bf16.msra.mxu0 0
      %3097 = vmatprep.subr.bf16.mxu0 0
      %3098 = vmatpush2.bf16.msra.mxu0 0
      %3099 = vmatprep.subr.bf16.mxu0 0
      %3100 = vmatpush2.bf16.msra.mxu0 0
      %3101 = vmatprep.subr.bf16.mxu0 0
      %3102 = vmatpush2.bf16.msra.mxu0 0
      %3103 = vmatprep.mubr.bf16.mxu0 0
      %3104 = vmatmul.mubr.bf16.gmra.mxu0 %v3066
      %v3105 = vpop.f32.mrf.mxu0
      %v3106 = vadd.f32 %v972, %v3105
      %v3107 = vpop.f32.mrf.mxu0
      %v3108 = vpop.f32.mrf.mxu0
      %v3109 = vpop.f32.mrf.mxu0
      %3110 = vdwg.mxu0
      %v3116 = vunpack.c.l.b16 %v503
      %v3117 = vunpack.c.l.b16 %v504
      %v3118 = vunpack.c.l.b16 %v505
      %v3119 = vunpack.c.l.b16 %v506
      %v3120 = vunpack.c.l.b16 %v507
      %v3121 = vpack.c.b16 %v3117, %v3116
      %v3122 = vpack.c.b16 %v3119, %v3118
      %v3123 = vpack.c.b16 %v3120, %v3120
      %v3127 = vsel %vm989, %v235, 0
      %v3130 = vsel %vm993, %v3123, 0
      %3132 = vmatprep.subr.bf16.mxu0 0
      %3133 = vmatpush1.bf16.msra.mxu0 0
      %3134 = vmatprep.subr.bf16.mxu0 0
      %3135 = vmatpush1.bf16.msra.mxu0 0
      %3136 = vmatprep.subr.bf16.mxu0 0
      %3137 = vmatpush1.bf16.msra.mxu0 0
      %3138 = vmatprep.subr.bf16.mxu0 0
      %3139 = vmatpush1.bf16.msra.mxu0 0
      %3140 = vmatprep.subr.bf16.mxu0 0
      %3141 = vmatpush1.bf16.msra.mxu0 0
      %3142 = vmatprep.subr.bf16.mxu0 0
      %3143 = vmatpush1.bf16.msra.mxu0 %v3130
      %3144 = vmatprep.subr.bf16.mxu0 0
      %3145 = vmatpush1.bf16.msra.mxu0 %v3122
      %3146 = vmatprep.subr.bf16.mxu0 0
      %3147 = vmatpush1.bf16.msra.mxu0 %v3121
      %3148 = vmatprep.subr.bf16.mxu0 0
      %3149 = vmatpush2.bf16.msra.mxu0 0
      %3150 = vmatprep.subr.bf16.mxu0 0
      %3151 = vmatpush2.bf16.msra.mxu0 0
      %3152 = vmatprep.subr.bf16.mxu0 0
      %3153 = vmatpush2.bf16.msra.mxu0 0
      %3154 = vmatprep.subr.bf16.mxu0 0
      %3155 = vmatpush2.bf16.msra.mxu0 0
      %3156 = vmatprep.subr.bf16.mxu0 0
      %3157 = vmatpush2.bf16.msra.mxu0 0
      %3158 = vmatprep.subr.bf16.mxu0 0
      %3159 = vmatpush2.bf16.msra.mxu0 0
      %3160 = vmatprep.subr.bf16.mxu0 0
      %3161 = vmatpush2.bf16.msra.mxu0 0
      %3162 = vmatprep.subr.bf16.mxu0 0
      %3163 = vmatpush2.bf16.msra.mxu0 0
      %3164 = vmatprep.mubr.bf16.mxu0 0
      %3165 = vmatmul.mubr.bf16.gmra.mxu0 %v3127
      %v3166 = vpop.f32.mrf.mxu0
      %v3167 = vadd.f32 %v972, %v3166
      %v3168 = vpop.f32.mrf.mxu0
      %v3169 = vpop.f32.mrf.mxu0
      %v3170 = vpop.f32.mrf.mxu0
      %3171 = vdwg.mxu0
      %v3177 = vunpack.c.l.b16 %v508
      %v3178 = vunpack.c.l.b16 %v509
      %v3179 = vunpack.c.l.b16 %v510
      %v3180 = vunpack.c.l.b16 %v511
      %v3181 = vunpack.c.l.b16 %v512
      %v3182 = vpack.c.b16 %v3178, %v3177
      %v3183 = vpack.c.b16 %v3180, %v3179
      %v3184 = vpack.c.b16 %v3181, %v3181
      %v3188 = vsel %vm989, %v236, 0
      %v3191 = vsel %vm993, %v3184, 0
      %3193 = vmatprep.subr.bf16.mxu0 0
      %3194 = vmatpush1.bf16.msra.mxu0 0
      %3195 = vmatprep.subr.bf16.mxu0 0
      %3196 = vmatpush1.bf16.msra.mxu0 0
      %3197 = vmatprep.subr.bf16.mxu0 0
      %3198 = vmatpush1.bf16.msra.mxu0 0
      %3199 = vmatprep.subr.bf16.mxu0 0
      %3200 = vmatpush1.bf16.msra.mxu0 0
      %3201 = vmatprep.subr.bf16.mxu0 0
      %3202 = vmatpush1.bf16.msra.mxu0 0
      %3203 = vmatprep.subr.bf16.mxu0 0
      %3204 = vmatpush1.bf16.msra.mxu0 %v3191
      %3205 = vmatprep.subr.bf16.mxu0 0
      %3206 = vmatpush1.bf16.msra.mxu0 %v3183
      %3207 = vmatprep.subr.bf16.mxu0 0
      %3208 = vmatpush1.bf16.msra.mxu0 %v3182
      %3209 = vmatprep.subr.bf16.mxu0 0
      %3210 = vmatpush2.bf16.msra.mxu0 0
      %3211 = vmatprep.subr.bf16.mxu0 0
      %3212 = vmatpush2.bf16.msra.mxu0 0
      %3213 = vmatprep.subr.bf16.mxu0 0
      %3214 = vmatpush2.bf16.msra.mxu0 0
      %3215 = vmatprep.subr.bf16.mxu0 0
      %3216 = vmatpush2.bf16.msra.mxu0 0
      %3217 = vmatprep.subr.bf16.mxu0 0
      %3218 = vmatpush2.bf16.msra.mxu0 0
      %3219 = vmatprep.subr.bf16.mxu0 0
      %3220 = vmatpush2.bf16.msra.mxu0 0
      %3221 = vmatprep.subr.bf16.mxu0 0
      %3222 = vmatpush2.bf16.msra.mxu0 0
      %3223 = vmatprep.subr.bf16.mxu0 0
      %3224 = vmatpush2.bf16.msra.mxu0 0
      %3225 = vmatprep.mubr.bf16.mxu0 0
      %3226 = vmatmul.mubr.bf16.gmra.mxu0 %v3188
      %v3227 = vpop.f32.mrf.mxu0
      %v3228 = vadd.f32 %v972, %v3227
      %v3229 = vpop.f32.mrf.mxu0
      %v3230 = vpop.f32.mrf.mxu0
      %v3231 = vpop.f32.mrf.mxu0
      %3232 = vdwg.mxu0
      %v3238 = vunpack.c.l.b16 %v513
      %v3239 = vunpack.c.l.b16 %v514
      %v3240 = vunpack.c.l.b16 %v515
      %v3241 = vunpack.c.l.b16 %v516
      %v3242 = vunpack.c.l.b16 %v517
      %v3243 = vpack.c.b16 %v3239, %v3238
      %v3244 = vpack.c.b16 %v3241, %v3240
      %v3245 = vpack.c.b16 %v3242, %v3242
      %v3249 = vsel %vm989, %v237, 0
      %v3252 = vsel %vm993, %v3245, 0
      %3254 = vmatprep.subr.bf16.mxu0 0
      %3255 = vmatpush1.bf16.msra.mxu0 0
      %3256 = vmatprep.subr.bf16.mxu0 0
      %3257 = vmatpush1.bf16.msra.mxu0 0
      %3258 = vmatprep.subr.bf16.mxu0 0
      %3259 = vmatpush1.bf16.msra.mxu0 0
      %3260 = vmatprep.subr.bf16.mxu0 0
      %3261 = vmatpush1.bf16.msra.mxu0 0
      %3262 = vmatprep.subr.bf16.mxu0 0
      %3263 = vmatpush1.bf16.msra.mxu0 0
      %3264 = vmatprep.subr.bf16.mxu0 0
      %3265 = vmatpush1.bf16.msra.mxu0 %v3252
      %3266 = vmatprep.subr.bf16.mxu0 0
      %3267 = vmatpush1.bf16.msra.mxu0 %v3244
      %3268 = vmatprep.subr.bf16.mxu0 0
      %3269 = vmatpush1.bf16.msra.mxu0 %v3243
      %3270 = vmatprep.subr.bf16.mxu0 0
      %3271 = vmatpush2.bf16.msra.mxu0 0
      %3272 = vmatprep.subr.bf16.mxu0 0
      %3273 = vmatpush2.bf16.msra.mxu0 0
      %3274 = vmatprep.subr.bf16.mxu0 0
      %3275 = vmatpush2.bf16.msra.mxu0 0
      %3276 = vmatprep.subr.bf16.mxu0 0
      %3277 = vmatpush2.bf16.msra.mxu0 0
      %3278 = vmatprep.subr.bf16.mxu0 0
      %3279 = vmatpush2.bf16.msra.mxu0 0
      %3280 = vmatprep.subr.bf16.mxu0 0
      %3281 = vmatpush2.bf16.msra.mxu0 0
      %3282 = vmatprep.subr.bf16.mxu0 0
      %3283 = vmatpush2.bf16.msra.mxu0 0
      %3284 = vmatprep.subr.bf16.mxu0 0
      %3285 = vmatpush2.bf16.msra.mxu0 0
      %3286 = vmatprep.mubr.bf16.mxu0 0
      %3287 = vmatmul.mubr.bf16.gmra.mxu0 %v3249
      %v3288 = vpop.f32.mrf.mxu0
      %v3289 = vadd.f32 %v972, %v3288
      %v3290 = vpop.f32.mrf.mxu0
      %v3291 = vpop.f32.mrf.mxu0
      %v3292 = vpop.f32.mrf.mxu0
      %3293 = vdwg.mxu0
      %v3299 = vunpack.c.l.b16 %v518
      %v3300 = vunpack.c.l.b16 %v519
      %v3301 = vunpack.c.l.b16 %v520
      %v3302 = vunpack.c.l.b16 %v521
      %v3303 = vunpack.c.l.b16 %v522
      %v3304 = vpack.c.b16 %v3300, %v3299
      %v3305 = vpack.c.b16 %v3302, %v3301
      %v3306 = vpack.c.b16 %v3303, %v3303
      %v3310 = vsel %vm989, %v238, 0
      %v3313 = vsel %vm993, %v3306, 0
      %3315 = vmatprep.subr.bf16.mxu0 0
      %3316 = vmatpush1.bf16.msra.mxu0 0
      %3317 = vmatprep.subr.bf16.mxu0 0
      %3318 = vmatpush1.bf16.msra.mxu0 0
      %3319 = vmatprep.subr.bf16.mxu0 0
      %3320 = vmatpush1.bf16.msra.mxu0 0
      %3321 = vmatprep.subr.bf16.mxu0 0
      %3322 = vmatpush1.bf16.msra.mxu0 0
      %3323 = vmatprep.subr.bf16.mxu0 0
      %3324 = vmatpush1.bf16.msra.mxu0 0
      %3325 = vmatprep.subr.bf16.mxu0 0
      %3326 = vmatpush1.bf16.msra.mxu0 %v3313
      %3327 = vmatprep.subr.bf16.mxu0 0
      %3328 = vmatpush1.bf16.msra.mxu0 %v3305
      %3329 = vmatprep.subr.bf16.mxu0 0
      %3330 = vmatpush1.bf16.msra.mxu0 %v3304
      %3331 = vmatprep.subr.bf16.mxu0 0
      %3332 = vmatpush2.bf16.msra.mxu0 0
      %3333 = vmatprep.subr.bf16.mxu0 0
      %3334 = vmatpush2.bf16.msra.mxu0 0
      %3335 = vmatprep.subr.bf16.mxu0 0
      %3336 = vmatpush2.bf16.msra.mxu0 0
      %3337 = vmatprep.subr.bf16.mxu0 0
      %3338 = vmatpush2.bf16.msra.mxu0 0
      %3339 = vmatprep.subr.bf16.mxu0 0
      %3340 = vmatpush2.bf16.msra.mxu0 0
      %3341 = vmatprep.subr.bf16.mxu0 0
      %3342 = vmatpush2.bf16.msra.mxu0 0
      %3343 = vmatprep.subr.bf16.mxu0 0
      %3344 = vmatpush2.bf16.msra.mxu0 0
      %3345 = vmatprep.subr.bf16.mxu0 0
      %3346 = vmatpush2.bf16.msra.mxu0 0
      %3347 = vmatprep.mubr.bf16.mxu0 0
      %3348 = vmatmul.mubr.bf16.gmra.mxu0 %v3310
      %v3349 = vpop.f32.mrf.mxu0
      %v3350 = vadd.f32 %v972, %v3349
      %v3351 = vpop.f32.mrf.mxu0
      %v3352 = vpop.f32.mrf.mxu0
      %v3353 = vpop.f32.mrf.mxu0
      %3354 = vdwg.mxu0
      %v3360 = vunpack.c.l.b16 %v523
      %v3361 = vunpack.c.l.b16 %v524
      %v3362 = vunpack.c.l.b16 %v525
      %v3363 = vunpack.c.l.b16 %v526
      %v3364 = vunpack.c.l.b16 %v527
      %v3365 = vpack.c.b16 %v3361, %v3360
      %v3366 = vpack.c.b16 %v3363, %v3362
      %v3367 = vpack.c.b16 %v3364, %v3364
      %v3371 = vsel %vm989, %v239, 0
      %v3374 = vsel %vm993, %v3367, 0
      %3376 = vmatprep.subr.bf16.mxu0 0
      %3377 = vmatpush1.bf16.msra.mxu0 0
      %3378 = vmatprep.subr.bf16.mxu0 0
      %3379 = vmatpush1.bf16.msra.mxu0 0
      %3380 = vmatprep.subr.bf16.mxu0 0
      %3381 = vmatpush1.bf16.msra.mxu0 0
      %3382 = vmatprep.subr.bf16.mxu0 0
      %3383 = vmatpush1.bf16.msra.mxu0 0
      %3384 = vmatprep.subr.bf16.mxu0 0
      %3385 = vmatpush1.bf16.msra.mxu0 0
      %3386 = vmatprep.subr.bf16.mxu0 0
      %3387 = vmatpush1.bf16.msra.mxu0 %v3374
      %3388 = vmatprep.subr.bf16.mxu0 0
      %3389 = vmatpush1.bf16.msra.mxu0 %v3366
      %3390 = vmatprep.subr.bf16.mxu0 0
      %3391 = vmatpush1.bf16.msra.mxu0 %v3365
      %3392 = vmatprep.subr.bf16.mxu0 0
      %3393 = vmatpush2.bf16.msra.mxu0 0
      %3394 = vmatprep.subr.bf16.mxu0 0
      %3395 = vmatpush2.bf16.msra.mxu0 0
      %3396 = vmatprep.subr.bf16.mxu0 0
      %3397 = vmatpush2.bf16.msra.mxu0 0
      %3398 = vmatprep.subr.bf16.mxu0 0
      %3399 = vmatpush2.bf16.msra.mxu0 0
      %3400 = vmatprep.subr.bf16.mxu0 0
      %3401 = vmatpush2.bf16.msra.mxu0 0
      %3402 = vmatprep.subr.bf16.mxu0 0
      %3403 = vmatpush2.bf16.msra.mxu0 0
      %3404 = vmatprep.subr.bf16.mxu0 0
      %3405 = vmatpush2.bf16.msra.mxu0 0
      %3406 = vmatprep.subr.bf16.mxu0 0
      %3407 = vmatpush2.bf16.msra.mxu0 0
      %3408 = vmatprep.mubr.bf16.mxu0 0
      %3409 = vmatmul.mubr.bf16.gmra.mxu0 %v3371
      %v3410 = vpop.f32.mrf.mxu0
      %v3411 = vadd.f32 %v972, %v3410
      %v3412 = vpop.f32.mrf.mxu0
      %v3413 = vpop.f32.mrf.mxu0
      %v3414 = vpop.f32.mrf.mxu0
      %3415 = vdwg.mxu0
      %v3421 = vunpack.c.l.b16 %v528
      %v3422 = vunpack.c.l.b16 %v529
      %v3423 = vunpack.c.l.b16 %v530
      %v3424 = vunpack.c.l.b16 %v531
      %v3425 = vunpack.c.l.b16 %v532
      %v3426 = vpack.c.b16 %v3422, %v3421
      %v3427 = vpack.c.b16 %v3424, %v3423
      %v3428 = vpack.c.b16 %v3425, %v3425
      %v3432 = vsel %vm989, %v240, 0
      %v3435 = vsel %vm993, %v3428, 0
      %3437 = vmatprep.subr.bf16.mxu0 0
      %3438 = vmatpush1.bf16.msra.mxu0 0
      %3439 = vmatprep.subr.bf16.mxu0 0
      %3440 = vmatpush1.bf16.msra.mxu0 0
      %3441 = vmatprep.subr.bf16.mxu0 0
      %3442 = vmatpush1.bf16.msra.mxu0 0
      %3443 = vmatprep.subr.bf16.mxu0 0
      %3444 = vmatpush1.bf16.msra.mxu0 0
      %3445 = vmatprep.subr.bf16.mxu0 0
      %3446 = vmatpush1.bf16.msra.mxu0 0
      %3447 = vmatprep.subr.bf16.mxu0 0
      %3448 = vmatpush1.bf16.msra.mxu0 %v3435
      %3449 = vmatprep.subr.bf16.mxu0 0
      %3450 = vmatpush1.bf16.msra.mxu0 %v3427
      %3451 = vmatprep.subr.bf16.mxu0 0
      %3452 = vmatpush1.bf16.msra.mxu0 %v3426
      %3453 = vmatprep.subr.bf16.mxu0 0
      %3454 = vmatpush2.bf16.msra.mxu0 0
      %3455 = vmatprep.subr.bf16.mxu0 0
      %3456 = vmatpush2.bf16.msra.mxu0 0
      %3457 = vmatprep.subr.bf16.mxu0 0
      %3458 = vmatpush2.bf16.msra.mxu0 0
      %3459 = vmatprep.subr.bf16.mxu0 0
      %3460 = vmatpush2.bf16.msra.mxu0 0
      %3461 = vmatprep.subr.bf16.mxu0 0
      %3462 = vmatpush2.bf16.msra.mxu0 0
      %3463 = vmatprep.subr.bf16.mxu0 0
      %3464 = vmatpush2.bf16.msra.mxu0 0
      %3465 = vmatprep.subr.bf16.mxu0 0
      %3466 = vmatpush2.bf16.msra.mxu0 0
      %3467 = vmatprep.subr.bf16.mxu0 0
      %3468 = vmatpush2.bf16.msra.mxu0 0
      %3469 = vmatprep.mubr.bf16.mxu0 0
      %3470 = vmatmul.mubr.bf16.gmra.mxu0 %v3432
      %v3471 = vpop.f32.mrf.mxu0
      %v3472 = vadd.f32 %v972, %v3471
      %v3473 = vpop.f32.mrf.mxu0
      %v3474 = vpop.f32.mrf.mxu0
      %v3475 = vpop.f32.mrf.mxu0
      %3476 = vdwg.mxu0
      %v3482 = vunpack.c.l.b16 %v533
      %v3483 = vunpack.c.l.b16 %v534
      %v3484 = vunpack.c.l.b16 %v535
      %v3485 = vunpack.c.l.b16 %v536
      %v3486 = vunpack.c.l.b16 %v537
      %v3487 = vpack.c.b16 %v3483, %v3482
      %v3488 = vpack.c.b16 %v3485, %v3484
      %v3489 = vpack.c.b16 %v3486, %v3486
      %v3493 = vsel %vm989, %v241, 0
      %v3496 = vsel %vm993, %v3489, 0
      %3498 = vmatprep.subr.bf16.mxu0 0
      %3499 = vmatpush1.bf16.msra.mxu0 0
      %3500 = vmatprep.subr.bf16.mxu0 0
      %3501 = vmatpush1.bf16.msra.mxu0 0
      %3502 = vmatprep.subr.bf16.mxu0 0
      %3503 = vmatpush1.bf16.msra.mxu0 0
      %3504 = vmatprep.subr.bf16.mxu0 0
      %3505 = vmatpush1.bf16.msra.mxu0 0
      %3506 = vmatprep.subr.bf16.mxu0 0
      %3507 = vmatpush1.bf16.msra.mxu0 0
      %3508 = vmatprep.subr.bf16.mxu0 0
      %3509 = vmatpush1.bf16.msra.mxu0 %v3496
      %3510 = vmatprep.subr.bf16.mxu0 0
      %3511 = vmatpush1.bf16.msra.mxu0 %v3488
      %3512 = vmatprep.subr.bf16.mxu0 0
      %3513 = vmatpush1.bf16.msra.mxu0 %v3487
      %3514 = vmatprep.subr.bf16.mxu0 0
      %3515 = vmatpush2.bf16.msra.mxu0 0
      %3516 = vmatprep.subr.bf16.mxu0 0
      %3517 = vmatpush2.bf16.msra.mxu0 0
      %3518 = vmatprep.subr.bf16.mxu0 0
      %3519 = vmatpush2.bf16.msra.mxu0 0
      %3520 = vmatprep.subr.bf16.mxu0 0
      %3521 = vmatpush2.bf16.msra.mxu0 0
      %3522 = vmatprep.subr.bf16.mxu0 0
      %3523 = vmatpush2.bf16.msra.mxu0 0
      %3524 = vmatprep.subr.bf16.mxu0 0
      %3525 = vmatpush2.bf16.msra.mxu0 0
      %3526 = vmatprep.subr.bf16.mxu0 0
      %3527 = vmatpush2.bf16.msra.mxu0 0
      %3528 = vmatprep.subr.bf16.mxu0 0
      %3529 = vmatpush2.bf16.msra.mxu0 0
      %3530 = vmatprep.mubr.bf16.mxu0 0
      %3531 = vmatmul.mubr.bf16.gmra.mxu0 %v3493
      %v3532 = vpop.f32.mrf.mxu0
      %v3533 = vadd.f32 %v972, %v3532
      %v3534 = vpop.f32.mrf.mxu0
      %v3535 = vpop.f32.mrf.mxu0
      %v3536 = vpop.f32.mrf.mxu0
      %3537 = vdwg.mxu0
      %v3543 = vunpack.c.l.b16 %v538
      %v3544 = vunpack.c.l.b16 %v539
      %v3545 = vunpack.c.l.b16 %v540
      %v3546 = vunpack.c.l.b16 %v541
      %v3547 = vunpack.c.l.b16 %v542
      %v3548 = vpack.c.b16 %v3544, %v3543
      %v3549 = vpack.c.b16 %v3546, %v3545
      %v3550 = vpack.c.b16 %v3547, %v3547
      %v3554 = vsel %vm989, %v242, 0
      %v3557 = vsel %vm993, %v3550, 0
      %3559 = vmatprep.subr.bf16.mxu0 0
      %3560 = vmatpush1.bf16.msra.mxu0 0
      %3561 = vmatprep.subr.bf16.mxu0 0
      %3562 = vmatpush1.bf16.msra.mxu0 0
      %3563 = vmatprep.subr.bf16.mxu0 0
      %3564 = vmatpush1.bf16.msra.mxu0 0
      %3565 = vmatprep.subr.bf16.mxu0 0
      %3566 = vmatpush1.bf16.msra.mxu0 0
      %3567 = vmatprep.subr.bf16.mxu0 0
      %3568 = vmatpush1.bf16.msra.mxu0 0
      %3569 = vmatprep.subr.bf16.mxu0 0
      %3570 = vmatpush1.bf16.msra.mxu0 %v3557
      %3571 = vmatprep.subr.bf16.mxu0 0
      %3572 = vmatpush1.bf16.msra.mxu0 %v3549
      %3573 = vmatprep.subr.bf16.mxu0 0
      %3574 = vmatpush1.bf16.msra.mxu0 %v3548
      %3575 = vmatprep.subr.bf16.mxu0 0
      %3576 = vmatpush2.bf16.msra.mxu0 0
      %3577 = vmatprep.subr.bf16.mxu0 0
      %3578 = vmatpush2.bf16.msra.mxu0 0
      %3579 = vmatprep.subr.bf16.mxu0 0
      %3580 = vmatpush2.bf16.msra.mxu0 0
      %3581 = vmatprep.subr.bf16.mxu0 0
      %3582 = vmatpush2.bf16.msra.mxu0 0
      %3583 = vmatprep.subr.bf16.mxu0 0
      %3584 = vmatpush2.bf16.msra.mxu0 0
      %3585 = vmatprep.subr.bf16.mxu0 0
      %3586 = vmatpush2.bf16.msra.mxu0 0
      %3587 = vmatprep.subr.bf16.mxu0 0
      %3588 = vmatpush2.bf16.msra.mxu0 0
      %3589 = vmatprep.subr.bf16.mxu0 0
      %3590 = vmatpush2.bf16.msra.mxu0 0
      %3591 = vmatprep.mubr.bf16.mxu0 0
      %3592 = vmatmul.mubr.bf16.gmra.mxu0 %v3554
      %v3593 = vpop.f32.mrf.mxu0
      %v3594 = vadd.f32 %v972, %v3593
      %v3595 = vpop.f32.mrf.mxu0
      %v3596 = vpop.f32.mrf.mxu0
      %v3597 = vpop.f32.mrf.mxu0
      %3598 = vdwg.mxu0
      %v3604 = vunpack.c.l.b16 %v543
      %v3605 = vunpack.c.l.b16 %v544
      %v3606 = vunpack.c.l.b16 %v545
      %v3607 = vunpack.c.l.b16 %v546
      %v3608 = vunpack.c.l.b16 %v547
      %v3609 = vpack.c.b16 %v3605, %v3604
      %v3610 = vpack.c.b16 %v3607, %v3606
      %v3611 = vpack.c.b16 %v3608, %v3608
      %v3615 = vsel %vm989, %v243, 0
      %v3618 = vsel %vm993, %v3611, 0
      %3620 = vmatprep.subr.bf16.mxu0 0
      %3621 = vmatpush1.bf16.msra.mxu0 0
      %3622 = vmatprep.subr.bf16.mxu0 0
      %3623 = vmatpush1.bf16.msra.mxu0 0
      %3624 = vmatprep.subr.bf16.mxu0 0
      %3625 = vmatpush1.bf16.msra.mxu0 0
      %3626 = vmatprep.subr.bf16.mxu0 0
      %3627 = vmatpush1.bf16.msra.mxu0 0
      %3628 = vmatprep.subr.bf16.mxu0 0
      %3629 = vmatpush1.bf16.msra.mxu0 0
      %3630 = vmatprep.subr.bf16.mxu0 0
      %3631 = vmatpush1.bf16.msra.mxu0 %v3618
      %3632 = vmatprep.subr.bf16.mxu0 0
      %3633 = vmatpush1.bf16.msra.mxu0 %v3610
      %3634 = vmatprep.subr.bf16.mxu0 0
      %3635 = vmatpush1.bf16.msra.mxu0 %v3609
      %3636 = vmatprep.subr.bf16.mxu0 0
      %3637 = vmatpush2.bf16.msra.mxu0 0
      %3638 = vmatprep.subr.bf16.mxu0 0
      %3639 = vmatpush2.bf16.msra.mxu0 0
      %3640 = vmatprep.subr.bf16.mxu0 0
      %3641 = vmatpush2.bf16.msra.mxu0 0
      %3642 = vmatprep.subr.bf16.mxu0 0
      %3643 = vmatpush2.bf16.msra.mxu0 0
      %3644 = vmatprep.subr.bf16.mxu0 0
      %3645 = vmatpush2.bf16.msra.mxu0 0
      %3646 = vmatprep.subr.bf16.mxu0 0
      %3647 = vmatpush2.bf16.msra.mxu0 0
      %3648 = vmatprep.subr.bf16.mxu0 0
      %3649 = vmatpush2.bf16.msra.mxu0 0
      %3650 = vmatprep.subr.bf16.mxu0 0
      %3651 = vmatpush2.bf16.msra.mxu0 0
      %3652 = vmatprep.mubr.bf16.mxu0 0
      %3653 = vmatmul.mubr.bf16.gmra.mxu0 %v3615
      %v3654 = vpop.f32.mrf.mxu0
      %v3655 = vadd.f32 %v972, %v3654
      %v3656 = vpop.f32.mrf.mxu0
      %v3657 = vpop.f32.mrf.mxu0
      %v3658 = vpop.f32.mrf.mxu0
      %3659 = vdwg.mxu0
      %v3665 = vunpack.c.l.b16 %v548
      %v3666 = vunpack.c.l.b16 %v549
      %v3667 = vunpack.c.l.b16 %v550
      %v3668 = vunpack.c.l.b16 %v551
      %v3669 = vunpack.c.l.b16 %v552
      %v3670 = vpack.c.b16 %v3666, %v3665
      %v3671 = vpack.c.b16 %v3668, %v3667
      %v3672 = vpack.c.b16 %v3669, %v3669
      %v3676 = vsel %vm989, %v244, 0
      %v3679 = vsel %vm993, %v3672, 0
      %3681 = vmatprep.subr.bf16.mxu0 0
      %3682 = vmatpush1.bf16.msra.mxu0 0
      %3683 = vmatprep.subr.bf16.mxu0 0
      %3684 = vmatpush1.bf16.msra.mxu0 0
      %3685 = vmatprep.subr.bf16.mxu0 0
      %3686 = vmatpush1.bf16.msra.mxu0 0
      %3687 = vmatprep.subr.bf16.mxu0 0
      %3688 = vmatpush1.bf16.msra.mxu0 0
      %3689 = vmatprep.subr.bf16.mxu0 0
      %3690 = vmatpush1.bf16.msra.mxu0 0
      %3691 = vmatprep.subr.bf16.mxu0 0
      %3692 = vmatpush1.bf16.msra.mxu0 %v3679
      %3693 = vmatprep.subr.bf16.mxu0 0
      %3694 = vmatpush1.bf16.msra.mxu0 %v3671
      %3695 = vmatprep.subr.bf16.mxu0 0
      %3696 = vmatpush1.bf16.msra.mxu0 %v3670
      %3697 = vmatprep.subr.bf16.mxu0 0
      %3698 = vmatpush2.bf16.msra.mxu0 0
      %3699 = vmatprep.subr.bf16.mxu0 0
      %3700 = vmatpush2.bf16.msra.mxu0 0
      %3701 = vmatprep.subr.bf16.mxu0 0
      %3702 = vmatpush2.bf16.msra.mxu0 0
      %3703 = vmatprep.subr.bf16.mxu0 0
      %3704 = vmatpush2.bf16.msra.mxu0 0
      %3705 = vmatprep.subr.bf16.mxu0 0
      %3706 = vmatpush2.bf16.msra.mxu0 0
      %3707 = vmatprep.subr.bf16.mxu0 0
      %3708 = vmatpush2.bf16.msra.mxu0 0
      %3709 = vmatprep.subr.bf16.mxu0 0
      %3710 = vmatpush2.bf16.msra.mxu0 0
      %3711 = vmatprep.subr.bf16.mxu0 0
      %3712 = vmatpush2.bf16.msra.mxu0 0
      %3713 = vmatprep.mubr.bf16.mxu0 0
      %3714 = vmatmul.mubr.bf16.gmra.mxu0 %v3676
      %v3715 = vpop.f32.mrf.mxu0
      %v3716 = vadd.f32 %v972, %v3715
      %v3717 = vpop.f32.mrf.mxu0
      %v3718 = vpop.f32.mrf.mxu0
      %v3719 = vpop.f32.mrf.mxu0
      %3720 = vdwg.mxu0
      %v3726 = vunpack.c.l.b16 %v553
      %v3727 = vunpack.c.l.b16 %v554
      %v3728 = vunpack.c.l.b16 %v555
      %v3729 = vunpack.c.l.b16 %v556
      %v3730 = vunpack.c.l.b16 %v557
      %v3731 = vpack.c.b16 %v3727, %v3726
      %v3732 = vpack.c.b16 %v3729, %v3728
      %v3733 = vpack.c.b16 %v3730, %v3730
      %v3737 = vsel %vm989, %v245, 0
      %v3740 = vsel %vm993, %v3733, 0
      %3742 = vmatprep.subr.bf16.mxu0 0
      %3743 = vmatpush1.bf16.msra.mxu0 0
      %3744 = vmatprep.subr.bf16.mxu0 0
      %3745 = vmatpush1.bf16.msra.mxu0 0
      %3746 = vmatprep.subr.bf16.mxu0 0
      %3747 = vmatpush1.bf16.msra.mxu0 0
      %3748 = vmatprep.subr.bf16.mxu0 0
      %3749 = vmatpush1.bf16.msra.mxu0 0
      %3750 = vmatprep.subr.bf16.mxu0 0
      %3751 = vmatpush1.bf16.msra.mxu0 0
      %3752 = vmatprep.subr.bf16.mxu0 0
      %3753 = vmatpush1.bf16.msra.mxu0 %v3740
      %3754 = vmatprep.subr.bf16.mxu0 0
      %3755 = vmatpush1.bf16.msra.mxu0 %v3732
      %3756 = vmatprep.subr.bf16.mxu0 0
      %3757 = vmatpush1.bf16.msra.mxu0 %v3731
      %3758 = vmatprep.subr.bf16.mxu0 0
      %3759 = vmatpush2.bf16.msra.mxu0 0
      %3760 = vmatprep.subr.bf16.mxu0 0
      %3761 = vmatpush2.bf16.msra.mxu0 0
      %3762 = vmatprep.subr.bf16.mxu0 0
      %3763 = vmatpush2.bf16.msra.mxu0 0
      %3764 = vmatprep.subr.bf16.mxu0 0
      %3765 = vmatpush2.bf16.msra.mxu0 0
      %3766 = vmatprep.subr.bf16.mxu0 0
      %3767 = vmatpush2.bf16.msra.mxu0 0
      %3768 = vmatprep.subr.bf16.mxu0 0
      %3769 = vmatpush2.bf16.msra.mxu0 0
      %3770 = vmatprep.subr.bf16.mxu0 0
      %3771 = vmatpush2.bf16.msra.mxu0 0
      %3772 = vmatprep.subr.bf16.mxu0 0
      %3773 = vmatpush2.bf16.msra.mxu0 0
      %3774 = vmatprep.mubr.bf16.mxu0 0
      %3775 = vmatmul.mubr.bf16.gmra.mxu0 %v3737
      %v3776 = vpop.f32.mrf.mxu0
      %v3777 = vadd.f32 %v972, %v3776
      %v3778 = vpop.f32.mrf.mxu0
      %v3779 = vpop.f32.mrf.mxu0
      %v3780 = vpop.f32.mrf.mxu0
      %3781 = vdwg.mxu0
      %v3787 = vunpack.c.l.b16 %v558
      %v3788 = vunpack.c.l.b16 %v559
      %v3789 = vunpack.c.l.b16 %v560
      %v3790 = vunpack.c.l.b16 %v561
      %v3791 = vunpack.c.l.b16 %v562
      %v3792 = vpack.c.b16 %v3788, %v3787
      %v3793 = vpack.c.b16 %v3790, %v3789
      %v3794 = vpack.c.b16 %v3791, %v3791
      %v3798 = vsel %vm989, %v246, 0
      %v3801 = vsel %vm993, %v3794, 0
      %3803 = vmatprep.subr.bf16.mxu0 0
      %3804 = vmatpush1.bf16.msra.mxu0 0
      %3805 = vmatprep.subr.bf16.mxu0 0
      %3806 = vmatpush1.bf16.msra.mxu0 0
      %3807 = vmatprep.subr.bf16.mxu0 0
      %3808 = vmatpush1.bf16.msra.mxu0 0
      %3809 = vmatprep.subr.bf16.mxu0 0
      %3810 = vmatpush1.bf16.msra.mxu0 0
      %3811 = vmatprep.subr.bf16.mxu0 0
      %3812 = vmatpush1.bf16.msra.mxu0 0
      %3813 = vmatprep.subr.bf16.mxu0 0
      %3814 = vmatpush1.bf16.msra.mxu0 %v3801
      %3815 = vmatprep.subr.bf16.mxu0 0
      %3816 = vmatpush1.bf16.msra.mxu0 %v3793
      %3817 = vmatprep.subr.bf16.mxu0 0
      %3818 = vmatpush1.bf16.msra.mxu0 %v3792
      %3819 = vmatprep.subr.bf16.mxu0 0
      %3820 = vmatpush2.bf16.msra.mxu0 0
      %3821 = vmatprep.subr.bf16.mxu0 0
      %3822 = vmatpush2.bf16.msra.mxu0 0
      %3823 = vmatprep.subr.bf16.mxu0 0
      %3824 = vmatpush2.bf16.msra.mxu0 0
      %3825 = vmatprep.subr.bf16.mxu0 0
      %3826 = vmatpush2.bf16.msra.mxu0 0
      %3827 = vmatprep.subr.bf16.mxu0 0
      %3828 = vmatpush2.bf16.msra.mxu0 0
      %3829 = vmatprep.subr.bf16.mxu0 0
      %3830 = vmatpush2.bf16.msra.mxu0 0
      %3831 = vmatprep.subr.bf16.mxu0 0
      %3832 = vmatpush2.bf16.msra.mxu0 0
      %3833 = vmatprep.subr.bf16.mxu0 0
      %3834 = vmatpush2.bf16.msra.mxu0 0
      %3835 = vmatprep.mubr.bf16.mxu0 0
      %3836 = vmatmul.mubr.bf16.gmra.mxu0 %v3798
      %v3837 = vpop.f32.mrf.mxu0
      %v3838 = vadd.f32 %v972, %v3837
      %v3839 = vpop.f32.mrf.mxu0
      %v3840 = vpop.f32.mrf.mxu0
      %v3841 = vpop.f32.mrf.mxu0
      %3842 = vdwg.mxu0
      %v3848 = vunpack.c.l.b16 %v563
      %v3849 = vunpack.c.l.b16 %v564
      %v3850 = vunpack.c.l.b16 %v565
      %v3851 = vunpack.c.l.b16 %v566
      %v3852 = vunpack.c.l.b16 %v567
      %v3853 = vpack.c.b16 %v3849, %v3848
      %v3854 = vpack.c.b16 %v3851, %v3850
      %v3855 = vpack.c.b16 %v3852, %v3852
      %v3859 = vsel %vm989, %v247, 0
      %v3862 = vsel %vm993, %v3855, 0
      %3864 = vmatprep.subr.bf16.mxu0 0
      %3865 = vmatpush1.bf16.msra.mxu0 0
      %3866 = vmatprep.subr.bf16.mxu0 0
      %3867 = vmatpush1.bf16.msra.mxu0 0
      %3868 = vmatprep.subr.bf16.mxu0 0
      %3869 = vmatpush1.bf16.msra.mxu0 0
      %3870 = vmatprep.subr.bf16.mxu0 0
      %3871 = vmatpush1.bf16.msra.mxu0 0
      %3872 = vmatprep.subr.bf16.mxu0 0
      %3873 = vmatpush1.bf16.msra.mxu0 0
      %3874 = vmatprep.subr.bf16.mxu0 0
      %3875 = vmatpush1.bf16.msra.mxu0 %v3862
      %3876 = vmatprep.subr.bf16.mxu0 0
      %3877 = vmatpush1.bf16.msra.mxu0 %v3854
      %3878 = vmatprep.subr.bf16.mxu0 0
      %3879 = vmatpush1.bf16.msra.mxu0 %v3853
      %3880 = vmatprep.subr.bf16.mxu0 0
      %3881 = vmatpush2.bf16.msra.mxu0 0
      %3882 = vmatprep.subr.bf16.mxu0 0
      %3883 = vmatpush2.bf16.msra.mxu0 0
      %3884 = vmatprep.subr.bf16.mxu0 0
      %3885 = vmatpush2.bf16.msra.mxu0 0
      %3886 = vmatprep.subr.bf16.mxu0 0
      %3887 = vmatpush2.bf16.msra.mxu0 0
      %3888 = vmatprep.subr.bf16.mxu0 0
      %3889 = vmatpush2.bf16.msra.mxu0 0
      %3890 = vmatprep.subr.bf16.mxu0 0
      %3891 = vmatpush2.bf16.msra.mxu0 0
      %3892 = vmatprep.subr.bf16.mxu0 0
      %3893 = vmatpush2.bf16.msra.mxu0 0
      %3894 = vmatprep.subr.bf16.mxu0 0
      %3895 = vmatpush2.bf16.msra.mxu0 0
      %3896 = vmatprep.mubr.bf16.mxu0 0
      %3897 = vmatmul.mubr.bf16.gmra.mxu0 %v3859
      %v3898 = vpop.f32.mrf.mxu0
      %v3899 = vadd.f32 %v972, %v3898
      %v3900 = vpop.f32.mrf.mxu0
      %v3901 = vpop.f32.mrf.mxu0
      %v3902 = vpop.f32.mrf.mxu0
      %3903 = vdwg.mxu0
      %v3909 = vunpack.c.l.b16 %v568
      %v3910 = vunpack.c.l.b16 %v569
      %v3911 = vunpack.c.l.b16 %v570
      %v3912 = vunpack.c.l.b16 %v571
      %v3913 = vunpack.c.l.b16 %v572
      %v3914 = vpack.c.b16 %v3910, %v3909
      %v3915 = vpack.c.b16 %v3912, %v3911
      %v3916 = vpack.c.b16 %v3913, %v3913
      %v3920 = vsel %vm989, %v248, 0
      %v3923 = vsel %vm993, %v3916, 0
      %3925 = vmatprep.subr.bf16.mxu0 0
      %3926 = vmatpush1.bf16.msra.mxu0 0
      %3927 = vmatprep.subr.bf16.mxu0 0
      %3928 = vmatpush1.bf16.msra.mxu0 0
      %3929 = vmatprep.subr.bf16.mxu0 0
      %3930 = vmatpush1.bf16.msra.mxu0 0
      %3931 = vmatprep.subr.bf16.mxu0 0
      %3932 = vmatpush1.bf16.msra.mxu0 0
      %3933 = vmatprep.subr.bf16.mxu0 0
      %3934 = vmatpush1.bf16.msra.mxu0 0
      %3935 = vmatprep.subr.bf16.mxu0 0
      %3936 = vmatpush1.bf16.msra.mxu0 %v3923
      %3937 = vmatprep.subr.bf16.mxu0 0
      %3938 = vmatpush1.bf16.msra.mxu0 %v3915
      %3939 = vmatprep.subr.bf16.mxu0 0
      %3940 = vmatpush1.bf16.msra.mxu0 %v3914
      %3941 = vmatprep.subr.bf16.mxu0 0
      %3942 = vmatpush2.bf16.msra.mxu0 0
      %3943 = vmatprep.subr.bf16.mxu0 0
      %3944 = vmatpush2.bf16.msra.mxu0 0
      %3945 = vmatprep.subr.bf16.mxu0 0
      %3946 = vmatpush2.bf16.msra.mxu0 0
      %3947 = vmatprep.subr.bf16.mxu0 0
      %3948 = vmatpush2.bf16.msra.mxu0 0
      %3949 = vmatprep.subr.bf16.mxu0 0
      %3950 = vmatpush2.bf16.msra.mxu0 0
      %3951 = vmatprep.subr.bf16.mxu0 0
      %3952 = vmatpush2.bf16.msra.mxu0 0
      %3953 = vmatprep.subr.bf16.mxu0 0
      %3954 = vmatpush2.bf16.msra.mxu0 0
      %3955 = vmatprep.subr.bf16.mxu0 0
      %3956 = vmatpush2.bf16.msra.mxu0 0
      %3957 = vmatprep.mubr.bf16.mxu0 0
      %3958 = vmatmul.mubr.bf16.gmra.mxu0 %v3920
      %v3959 = vpop.f32.mrf.mxu0
      %v3960 = vadd.f32 %v972, %v3959
      %v3961 = vpop.f32.mrf.mxu0
      %v3962 = vpop.f32.mrf.mxu0
      %v3963 = vpop.f32.mrf.mxu0
      %3964 = vdwg.mxu0
      %v3970 = vunpack.c.l.b16 %v573
      %v3971 = vunpack.c.l.b16 %v574
      %v3972 = vunpack.c.l.b16 %v575
      %v3973 = vunpack.c.l.b16 %v576
      %v3974 = vunpack.c.l.b16 %v577
      %v3975 = vpack.c.b16 %v3971, %v3970
      %v3976 = vpack.c.b16 %v3973, %v3972
      %v3977 = vpack.c.b16 %v3974, %v3974
      %v3981 = vsel %vm989, %v249, 0
      %v3984 = vsel %vm993, %v3977, 0
      %3986 = vmatprep.subr.bf16.mxu0 0
      %3987 = vmatpush1.bf16.msra.mxu0 0
      %3988 = vmatprep.subr.bf16.mxu0 0
      %3989 = vmatpush1.bf16.msra.mxu0 0
      %3990 = vmatprep.subr.bf16.mxu0 0
      %3991 = vmatpush1.bf16.msra.mxu0 0
      %3992 = vmatprep.subr.bf16.mxu0 0
      %3993 = vmatpush1.bf16.msra.mxu0 0
      %3994 = vmatprep.subr.bf16.mxu0 0
      %3995 = vmatpush1.bf16.msra.mxu0 0
      %3996 = vmatprep.subr.bf16.mxu0 0
      %3997 = vmatpush1.bf16.msra.mxu0 %v3984
      %3998 = vmatprep.subr.bf16.mxu0 0
      %3999 = vmatpush1.bf16.msra.mxu0 %v3976
      %4000 = vmatprep.subr.bf16.mxu0 0
      %4001 = vmatpush1.bf16.msra.mxu0 %v3975
      %4002 = vmatprep.subr.bf16.mxu0 0
      %4003 = vmatpush2.bf16.msra.mxu0 0
      %4004 = vmatprep.subr.bf16.mxu0 0
      %4005 = vmatpush2.bf16.msra.mxu0 0
      %4006 = vmatprep.subr.bf16.mxu0 0
      %4007 = vmatpush2.bf16.msra.mxu0 0
      %4008 = vmatprep.subr.bf16.mxu0 0
      %4009 = vmatpush2.bf16.msra.mxu0 0
      %4010 = vmatprep.subr.bf16.mxu0 0
      %4011 = vmatpush2.bf16.msra.mxu0 0
      %4012 = vmatprep.subr.bf16.mxu0 0
      %4013 = vmatpush2.bf16.msra.mxu0 0
      %4014 = vmatprep.subr.bf16.mxu0 0
      %4015 = vmatpush2.bf16.msra.mxu0 0
      %4016 = vmatprep.subr.bf16.mxu0 0
      %4017 = vmatpush2.bf16.msra.mxu0 0
      %4018 = vmatprep.mubr.bf16.mxu0 0
      %4019 = vmatmul.mubr.bf16.gmra.mxu0 %v3981
      %v4020 = vpop.f32.mrf.mxu0
      %v4021 = vadd.f32 %v972, %v4020
      %v4022 = vpop.f32.mrf.mxu0
      %v4023 = vpop.f32.mrf.mxu0
      %v4024 = vpop.f32.mrf.mxu0
      %4025 = vdwg.mxu0
      %v4031 = vunpack.c.l.b16 %v578
      %v4032 = vunpack.c.l.b16 %v579
      %v4033 = vunpack.c.l.b16 %v580
      %v4034 = vunpack.c.l.b16 %v581
      %v4035 = vunpack.c.l.b16 %v582
      %v4036 = vpack.c.b16 %v4032, %v4031
      %v4037 = vpack.c.b16 %v4034, %v4033
      %v4038 = vpack.c.b16 %v4035, %v4035
      %v4042 = vsel %vm989, %v250, 0
      %v4045 = vsel %vm993, %v4038, 0
      %4047 = vmatprep.subr.bf16.mxu0 0
      %4048 = vmatpush1.bf16.msra.mxu0 0
      %4049 = vmatprep.subr.bf16.mxu0 0
      %4050 = vmatpush1.bf16.msra.mxu0 0
      %4051 = vmatprep.subr.bf16.mxu0 0
      %4052 = vmatpush1.bf16.msra.mxu0 0
      %4053 = vmatprep.subr.bf16.mxu0 0
      %4054 = vmatpush1.bf16.msra.mxu0 0
      %4055 = vmatprep.subr.bf16.mxu0 0
      %4056 = vmatpush1.bf16.msra.mxu0 0
      %4057 = vmatprep.subr.bf16.mxu0 0
      %4058 = vmatpush1.bf16.msra.mxu0 %v4045
      %4059 = vmatprep.subr.bf16.mxu0 0
      %4060 = vmatpush1.bf16.msra.mxu0 %v4037
      %4061 = vmatprep.subr.bf16.mxu0 0
      %4062 = vmatpush1.bf16.msra.mxu0 %v4036
      %4063 = vmatprep.subr.bf16.mxu0 0
      %4064 = vmatpush2.bf16.msra.mxu0 0
      %4065 = vmatprep.subr.bf16.mxu0 0
      %4066 = vmatpush2.bf16.msra.mxu0 0
      %4067 = vmatprep.subr.bf16.mxu0 0
      %4068 = vmatpush2.bf16.msra.mxu0 0
      %4069 = vmatprep.subr.bf16.mxu0 0
      %4070 = vmatpush2.bf16.msra.mxu0 0
      %4071 = vmatprep.subr.bf16.mxu0 0
      %4072 = vmatpush2.bf16.msra.mxu0 0
      %4073 = vmatprep.subr.bf16.mxu0 0
      %4074 = vmatpush2.bf16.msra.mxu0 0
      %4075 = vmatprep.subr.bf16.mxu0 0
      %4076 = vmatpush2.bf16.msra.mxu0 0
      %4077 = vmatprep.subr.bf16.mxu0 0
      %4078 = vmatpush2.bf16.msra.mxu0 0
      %4079 = vmatprep.mubr.bf16.mxu0 0
      %4080 = vmatmul.mubr.bf16.gmra.mxu0 %v4042
      %v4081 = vpop.f32.mrf.mxu0
      %v4082 = vadd.f32 %v972, %v4081
      %v4083 = vpop.f32.mrf.mxu0
      %v4084 = vpop.f32.mrf.mxu0
      %v4085 = vpop.f32.mrf.mxu0
      %4086 = vdwg.mxu0
      %v4092 = vunpack.c.l.b16 %v583
      %v4093 = vunpack.c.l.b16 %v584
      %v4094 = vunpack.c.l.b16 %v585
      %v4095 = vunpack.c.l.b16 %v586
      %v4096 = vunpack.c.l.b16 %v587
      %v4097 = vpack.c.b16 %v4093, %v4092
      %v4098 = vpack.c.b16 %v4095, %v4094
      %v4099 = vpack.c.b16 %v4096, %v4096
      %v4103 = vsel %vm989, %v251, 0
      %v4106 = vsel %vm993, %v4099, 0
      %4108 = vmatprep.subr.bf16.mxu0 0
      %4109 = vmatpush1.bf16.msra.mxu0 0
      %4110 = vmatprep.subr.bf16.mxu0 0
      %4111 = vmatpush1.bf16.msra.mxu0 0
      %4112 = vmatprep.subr.bf16.mxu0 0
      %4113 = vmatpush1.bf16.msra.mxu0 0
      %4114 = vmatprep.subr.bf16.mxu0 0
      %4115 = vmatpush1.bf16.msra.mxu0 0
      %4116 = vmatprep.subr.bf16.mxu0 0
      %4117 = vmatpush1.bf16.msra.mxu0 0
      %4118 = vmatprep.subr.bf16.mxu0 0
      %4119 = vmatpush1.bf16.msra.mxu0 %v4106
      %4120 = vmatprep.subr.bf16.mxu0 0
      %4121 = vmatpush1.bf16.msra.mxu0 %v4098
      %4122 = vmatprep.subr.bf16.mxu0 0
      %4123 = vmatpush1.bf16.msra.mxu0 %v4097
      %4124 = vmatprep.subr.bf16.mxu0 0
      %4125 = vmatpush2.bf16.msra.mxu0 0
      %4126 = vmatprep.subr.bf16.mxu0 0
      %4127 = vmatpush2.bf16.msra.mxu0 0
      %4128 = vmatprep.subr.bf16.mxu0 0
      %4129 = vmatpush2.bf16.msra.mxu0 0
      %4130 = vmatprep.subr.bf16.mxu0 0
      %4131 = vmatpush2.bf16.msra.mxu0 0
      %4132 = vmatprep.subr.bf16.mxu0 0
      %4133 = vmatpush2.bf16.msra.mxu0 0
      %4134 = vmatprep.subr.bf16.mxu0 0
      %4135 = vmatpush2.bf16.msra.mxu0 0
      %4136 = vmatprep.subr.bf16.mxu0 0
      %4137 = vmatpush2.bf16.msra.mxu0 0
      %4138 = vmatprep.subr.bf16.mxu0 0
      %4139 = vmatpush2.bf16.msra.mxu0 0
      %4140 = vmatprep.mubr.bf16.mxu0 0
      %4141 = vmatmul.mubr.bf16.gmra.mxu0 %v4103
      %v4142 = vpop.f32.mrf.mxu0
      %v4143 = vadd.f32 %v972, %v4142
      %v4144 = vpop.f32.mrf.mxu0
      %v4145 = vpop.f32.mrf.mxu0
      %v4146 = vpop.f32.mrf.mxu0
      %4147 = vdwg.mxu0
      %v4153 = vunpack.c.l.b16 %v588
      %v4154 = vunpack.c.l.b16 %v589
      %v4155 = vunpack.c.l.b16 %v590
      %v4156 = vunpack.c.l.b16 %v591
      %v4157 = vunpack.c.l.b16 %v592
      %v4158 = vpack.c.b16 %v4154, %v4153
      %v4159 = vpack.c.b16 %v4156, %v4155
      %v4160 = vpack.c.b16 %v4157, %v4157
      %v4164 = vsel %vm989, %v252, 0
      %v4167 = vsel %vm993, %v4160, 0
      %4169 = vmatprep.subr.bf16.mxu0 0
      %4170 = vmatpush1.bf16.msra.mxu0 0
      %4171 = vmatprep.subr.bf16.mxu0 0
      %4172 = vmatpush1.bf16.msra.mxu0 0
      %4173 = vmatprep.subr.bf16.mxu0 0
      %4174 = vmatpush1.bf16.msra.mxu0 0
      %4175 = vmatprep.subr.bf16.mxu0 0
      %4176 = vmatpush1.bf16.msra.mxu0 0
      %4177 = vmatprep.subr.bf16.mxu0 0
      %4178 = vmatpush1.bf16.msra.mxu0 0
      %4179 = vmatprep.subr.bf16.mxu0 0
      %4180 = vmatpush1.bf16.msra.mxu0 %v4167
      %4181 = vmatprep.subr.bf16.mxu0 0
      %4182 = vmatpush1.bf16.msra.mxu0 %v4159
      %4183 = vmatprep.subr.bf16.mxu0 0
      %4184 = vmatpush1.bf16.msra.mxu0 %v4158
      %4185 = vmatprep.subr.bf16.mxu0 0
      %4186 = vmatpush2.bf16.msra.mxu0 0
      %4187 = vmatprep.subr.bf16.mxu0 0
      %4188 = vmatpush2.bf16.msra.mxu0 0
      %4189 = vmatprep.subr.bf16.mxu0 0
      %4190 = vmatpush2.bf16.msra.mxu0 0
      %4191 = vmatprep.subr.bf16.mxu0 0
      %4192 = vmatpush2.bf16.msra.mxu0 0
      %4193 = vmatprep.subr.bf16.mxu0 0
      %4194 = vmatpush2.bf16.msra.mxu0 0
      %4195 = vmatprep.subr.bf16.mxu0 0
      %4196 = vmatpush2.bf16.msra.mxu0 0
      %4197 = vmatprep.subr.bf16.mxu0 0
      %4198 = vmatpush2.bf16.msra.mxu0 0
      %4199 = vmatprep.subr.bf16.mxu0 0
      %4200 = vmatpush2.bf16.msra.mxu0 0
      %4201 = vmatprep.mubr.bf16.mxu0 0
      %4202 = vmatmul.mubr.bf16.gmra.mxu0 %v4164
      %v4203 = vpop.f32.mrf.mxu0
      %v4204 = vadd.f32 %v972, %v4203
      %v4205 = vpop.f32.mrf.mxu0
      %v4206 = vpop.f32.mrf.mxu0
      %v4207 = vpop.f32.mrf.mxu0
      %4208 = vdwg.mxu0
      %v4214 = vunpack.c.l.b16 %v593
      %v4215 = vunpack.c.l.b16 %v594
      %v4216 = vunpack.c.l.b16 %v595
      %v4217 = vunpack.c.l.b16 %v596
      %v4218 = vunpack.c.l.b16 %v597
      %v4219 = vpack.c.b16 %v4215, %v4214
      %v4220 = vpack.c.b16 %v4217, %v4216
      %v4221 = vpack.c.b16 %v4218, %v4218
      %v4225 = vsel %vm989, %v253, 0
      %v4228 = vsel %vm993, %v4221, 0
      %4230 = vmatprep.subr.bf16.mxu0 0
      %4231 = vmatpush1.bf16.msra.mxu0 0
      %4232 = vmatprep.subr.bf16.mxu0 0
      %4233 = vmatpush1.bf16.msra.mxu0 0
      %4234 = vmatprep.subr.bf16.mxu0 0
      %4235 = vmatpush1.bf16.msra.mxu0 0
      %4236 = vmatprep.subr.bf16.mxu0 0
      %4237 = vmatpush1.bf16.msra.mxu0 0
      %4238 = vmatprep.subr.bf16.mxu0 0
      %4239 = vmatpush1.bf16.msra.mxu0 0
      %4240 = vmatprep.subr.bf16.mxu0 0
      %4241 = vmatpush1.bf16.msra.mxu0 %v4228
      %4242 = vmatprep.subr.bf16.mxu0 0
      %4243 = vmatpush1.bf16.msra.mxu0 %v4220
      %4244 = vmatprep.subr.bf16.mxu0 0
      %4245 = vmatpush1.bf16.msra.mxu0 %v4219
      %4246 = vmatprep.subr.bf16.mxu0 0
      %4247 = vmatpush2.bf16.msra.mxu0 0
      %4248 = vmatprep.subr.bf16.mxu0 0
      %4249 = vmatpush2.bf16.msra.mxu0 0
      %4250 = vmatprep.subr.bf16.mxu0 0
      %4251 = vmatpush2.bf16.msra.mxu0 0
      %4252 = vmatprep.subr.bf16.mxu0 0
      %4253 = vmatpush2.bf16.msra.mxu0 0
      %4254 = vmatprep.subr.bf16.mxu0 0
      %4255 = vmatpush2.bf16.msra.mxu0 0
      %4256 = vmatprep.subr.bf16.mxu0 0
      %4257 = vmatpush2.bf16.msra.mxu0 0
      %4258 = vmatprep.subr.bf16.mxu0 0
      %4259 = vmatpush2.bf16.msra.mxu0 0
      %4260 = vmatprep.subr.bf16.mxu0 0
      %4261 = vmatpush2.bf16.msra.mxu0 0
      %4262 = vmatprep.mubr.bf16.mxu0 0
      %4263 = vmatmul.mubr.bf16.gmra.mxu0 %v4225
      %v4264 = vpop.f32.mrf.mxu0
      %v4265 = vadd.f32 %v972, %v4264
      %v4266 = vpop.f32.mrf.mxu0
      %v4267 = vpop.f32.mrf.mxu0
      %v4268 = vpop.f32.mrf.mxu0
      %4269 = vdwg.mxu0
      %v4275 = vunpack.c.l.b16 %v598
      %v4276 = vunpack.c.l.b16 %v599
      %v4277 = vunpack.c.l.b16 %v600
      %v4278 = vunpack.c.l.b16 %v601
      %v4279 = vunpack.c.l.b16 %v602
      %v4280 = vpack.c.b16 %v4276, %v4275
      %v4281 = vpack.c.b16 %v4278, %v4277
      %v4282 = vpack.c.b16 %v4279, %v4279
      %v4286 = vsel %vm989, %v254, 0
      %v4289 = vsel %vm993, %v4282, 0
      %4291 = vmatprep.subr.bf16.mxu0 0
      %4292 = vmatpush1.bf16.msra.mxu0 0
      %4293 = vmatprep.subr.bf16.mxu0 0
      %4294 = vmatpush1.bf16.msra.mxu0 0
      %4295 = vmatprep.subr.bf16.mxu0 0
      %4296 = vmatpush1.bf16.msra.mxu0 0
      %4297 = vmatprep.subr.bf16.mxu0 0
      %4298 = vmatpush1.bf16.msra.mxu0 0
      %4299 = vmatprep.subr.bf16.mxu0 0
      %4300 = vmatpush1.bf16.msra.mxu0 0
      %4301 = vmatprep.subr.bf16.mxu0 0
      %4302 = vmatpush1.bf16.msra.mxu0 %v4289
      %4303 = vmatprep.subr.bf16.mxu0 0
      %4304 = vmatpush1.bf16.msra.mxu0 %v4281
      %4305 = vmatprep.subr.bf16.mxu0 0
      %4306 = vmatpush1.bf16.msra.mxu0 %v4280
      %4307 = vmatprep.subr.bf16.mxu0 0
      %4308 = vmatpush2.bf16.msra.mxu0 0
      %4309 = vmatprep.subr.bf16.mxu0 0
      %4310 = vmatpush2.bf16.msra.mxu0 0
      %4311 = vmatprep.subr.bf16.mxu0 0
      %4312 = vmatpush2.bf16.msra.mxu0 0
      %4313 = vmatprep.subr.bf16.mxu0 0
      %4314 = vmatpush2.bf16.msra.mxu0 0
      %4315 = vmatprep.subr.bf16.mxu0 0
      %4316 = vmatpush2.bf16.msra.mxu0 0
      %4317 = vmatprep.subr.bf16.mxu0 0
      %4318 = vmatpush2.bf16.msra.mxu0 0
      %4319 = vmatprep.subr.bf16.mxu0 0
      %4320 = vmatpush2.bf16.msra.mxu0 0
      %4321 = vmatprep.subr.bf16.mxu0 0
      %4322 = vmatpush2.bf16.msra.mxu0 0
      %4323 = vmatprep.mubr.bf16.mxu0 0
      %4324 = vmatmul.mubr.bf16.gmra.mxu0 %v4286
      %v4325 = vpop.f32.mrf.mxu0
      %v4326 = vadd.f32 %v972, %v4325
      %v4327 = vpop.f32.mrf.mxu0
      %v4328 = vpop.f32.mrf.mxu0
      %v4329 = vpop.f32.mrf.mxu0
      %4330 = vdwg.mxu0
      %v4336 = vunpack.c.l.b16 %v603
      %v4337 = vunpack.c.l.b16 %v604
      %v4338 = vunpack.c.l.b16 %v605
      %v4339 = vunpack.c.l.b16 %v606
      %v4340 = vunpack.c.l.b16 %v607
      %v4341 = vpack.c.b16 %v4337, %v4336
      %v4342 = vpack.c.b16 %v4339, %v4338
      %v4343 = vpack.c.b16 %v4340, %v4340
      %v4347 = vsel %vm989, %v255, 0
      %v4350 = vsel %vm993, %v4343, 0
      %4352 = vmatprep.subr.bf16.mxu0 0
      %4353 = vmatpush1.bf16.msra.mxu0 0
      %4354 = vmatprep.subr.bf16.mxu0 0
      %4355 = vmatpush1.bf16.msra.mxu0 0
      %4356 = vmatprep.subr.bf16.mxu0 0
      %4357 = vmatpush1.bf16.msra.mxu0 0
      %4358 = vmatprep.subr.bf16.mxu0 0
      %4359 = vmatpush1.bf16.msra.mxu0 0
      %4360 = vmatprep.subr.bf16.mxu0 0
      %4361 = vmatpush1.bf16.msra.mxu0 0
      %4362 = vmatprep.subr.bf16.mxu0 0
      %4363 = vmatpush1.bf16.msra.mxu0 %v4350
      %4364 = vmatprep.subr.bf16.mxu0 0
      %4365 = vmatpush1.bf16.msra.mxu0 %v4342
      %4366 = vmatprep.subr.bf16.mxu0 0
      %4367 = vmatpush1.bf16.msra.mxu0 %v4341
      %4368 = vmatprep.subr.bf16.mxu0 0
      %4369 = vmatpush2.bf16.msra.mxu0 0
      %4370 = vmatprep.subr.bf16.mxu0 0
      %4371 = vmatpush2.bf16.msra.mxu0 0
      %4372 = vmatprep.subr.bf16.mxu0 0
      %4373 = vmatpush2.bf16.msra.mxu0 0
      %4374 = vmatprep.subr.bf16.mxu0 0
      %4375 = vmatpush2.bf16.msra.mxu0 0
      %4376 = vmatprep.subr.bf16.mxu0 0
      %4377 = vmatpush2.bf16.msra.mxu0 0
      %4378 = vmatprep.subr.bf16.mxu0 0
      %4379 = vmatpush2.bf16.msra.mxu0 0
      %4380 = vmatprep.subr.bf16.mxu0 0
      %4381 = vmatpush2.bf16.msra.mxu0 0
      %4382 = vmatprep.subr.bf16.mxu0 0
      %4383 = vmatpush2.bf16.msra.mxu0 0
      %4384 = vmatprep.mubr.bf16.mxu0 0
      %4385 = vmatmul.mubr.bf16.gmra.mxu0 %v4347
      %v4386 = vpop.f32.mrf.mxu0
      %v4387 = vadd.f32 %v972, %v4386
      %v4388 = vpop.f32.mrf.mxu0
      %v4389 = vpop.f32.mrf.mxu0
      %v4390 = vpop.f32.mrf.mxu0
      %4391 = vdwg.mxu0
      %v4397 = vunpack.c.l.b16 %v608
      %v4398 = vunpack.c.l.b16 %v609
      %v4399 = vunpack.c.l.b16 %v610
      %v4400 = vunpack.c.l.b16 %v611
      %v4401 = vunpack.c.l.b16 %v612
      %v4402 = vpack.c.b16 %v4398, %v4397
      %v4403 = vpack.c.b16 %v4400, %v4399
      %v4404 = vpack.c.b16 %v4401, %v4401
      %v4408 = vsel %vm989, %v256, 0
      %v4411 = vsel %vm993, %v4404, 0
      %4413 = vmatprep.subr.bf16.mxu0 0
      %4414 = vmatpush1.bf16.msra.mxu0 0
      %4415 = vmatprep.subr.bf16.mxu0 0
      %4416 = vmatpush1.bf16.msra.mxu0 0
      %4417 = vmatprep.subr.bf16.mxu0 0
      %4418 = vmatpush1.bf16.msra.mxu0 0
      %4419 = vmatprep.subr.bf16.mxu0 0
      %4420 = vmatpush1.bf16.msra.mxu0 0
      %4421 = vmatprep.subr.bf16.mxu0 0
      %4422 = vmatpush1.bf16.msra.mxu0 0
      %4423 = vmatprep.subr.bf16.mxu0 0
      %4424 = vmatpush1.bf16.msra.mxu0 %v4411
      %4425 = vmatprep.subr.bf16.mxu0 0
      %4426 = vmatpush1.bf16.msra.mxu0 %v4403
      %4427 = vmatprep.subr.bf16.mxu0 0
      %4428 = vmatpush1.bf16.msra.mxu0 %v4402
      %4429 = vmatprep.subr.bf16.mxu0 0
      %4430 = vmatpush2.bf16.msra.mxu0 0
      %4431 = vmatprep.subr.bf16.mxu0 0
      %4432 = vmatpush2.bf16.msra.mxu0 0
      %4433 = vmatprep.subr.bf16.mxu0 0
      %4434 = vmatpush2.bf16.msra.mxu0 0
      %4435 = vmatprep.subr.bf16.mxu0 0
      %4436 = vmatpush2.bf16.msra.mxu0 0
      %4437 = vmatprep.subr.bf16.mxu0 0
      %4438 = vmatpush2.bf16.msra.mxu0 0
      %4439 = vmatprep.subr.bf16.mxu0 0
      %4440 = vmatpush2.bf16.msra.mxu0 0
      %4441 = vmatprep.subr.bf16.mxu0 0
      %4442 = vmatpush2.bf16.msra.mxu0 0
      %4443 = vmatprep.subr.bf16.mxu0 0
      %4444 = vmatpush2.bf16.msra.mxu0 0
      %4445 = vmatprep.mubr.bf16.mxu0 0
      %4446 = vmatmul.mubr.bf16.gmra.mxu0 %v4408
      %v4447 = vpop.f32.mrf.mxu0
      %v4448 = vadd.f32 %v972, %v4447
      %v4449 = vpop.f32.mrf.mxu0
      %v4450 = vpop.f32.mrf.mxu0
      %v4451 = vpop.f32.mrf.mxu0
      %4452 = vdwg.mxu0
      %v4458 = vunpack.c.l.b16 %v613
      %v4459 = vunpack.c.l.b16 %v614
      %v4460 = vunpack.c.l.b16 %v615
      %v4461 = vunpack.c.l.b16 %v616
      %v4462 = vunpack.c.l.b16 %v617
      %v4463 = vpack.c.b16 %v4459, %v4458
      %v4464 = vpack.c.b16 %v4461, %v4460
      %v4465 = vpack.c.b16 %v4462, %v4462
      %v4469 = vsel %vm989, %v257, 0
      %v4472 = vsel %vm993, %v4465, 0
      %4474 = vmatprep.subr.bf16.mxu0 0
      %4475 = vmatpush1.bf16.msra.mxu0 0
      %4476 = vmatprep.subr.bf16.mxu0 0
      %4477 = vmatpush1.bf16.msra.mxu0 0
      %4478 = vmatprep.subr.bf16.mxu0 0
      %4479 = vmatpush1.bf16.msra.mxu0 0
      %4480 = vmatprep.subr.bf16.mxu0 0
      %4481 = vmatpush1.bf16.msra.mxu0 0
      %4482 = vmatprep.subr.bf16.mxu0 0
      %4483 = vmatpush1.bf16.msra.mxu0 0
      %4484 = vmatprep.subr.bf16.mxu0 0
      %4485 = vmatpush1.bf16.msra.mxu0 %v4472
      %4486 = vmatprep.subr.bf16.mxu0 0
      %4487 = vmatpush1.bf16.msra.mxu0 %v4464
      %4488 = vmatprep.subr.bf16.mxu0 0
      %4489 = vmatpush1.bf16.msra.mxu0 %v4463
      %4490 = vmatprep.subr.bf16.mxu0 0
      %4491 = vmatpush2.bf16.msra.mxu0 0
      %4492 = vmatprep.subr.bf16.mxu0 0
      %4493 = vmatpush2.bf16.msra.mxu0 0
      %4494 = vmatprep.subr.bf16.mxu0 0
      %4495 = vmatpush2.bf16.msra.mxu0 0
      %4496 = vmatprep.subr.bf16.mxu0 0
      %4497 = vmatpush2.bf16.msra.mxu0 0
      %4498 = vmatprep.subr.bf16.mxu0 0
      %4499 = vmatpush2.bf16.msra.mxu0 0
      %4500 = vmatprep.subr.bf16.mxu0 0
      %4501 = vmatpush2.bf16.msra.mxu0 0
      %4502 = vmatprep.subr.bf16.mxu0 0
      %4503 = vmatpush2.bf16.msra.mxu0 0
      %4504 = vmatprep.subr.bf16.mxu0 0
      %4505 = vmatpush2.bf16.msra.mxu0 0
      %4506 = vmatprep.mubr.bf16.mxu0 0
      %4507 = vmatmul.mubr.bf16.gmra.mxu0 %v4469
      %v4508 = vpop.f32.mrf.mxu0
      %v4509 = vadd.f32 %v972, %v4508
      %v4510 = vpop.f32.mrf.mxu0
      %v4511 = vpop.f32.mrf.mxu0
      %v4512 = vpop.f32.mrf.mxu0
      %4513 = vdwg.mxu0
      %v4519 = vunpack.c.l.b16 %v618
      %v4520 = vunpack.c.l.b16 %v619
      %v4521 = vunpack.c.l.b16 %v620
      %v4522 = vunpack.c.l.b16 %v621
      %v4523 = vunpack.c.l.b16 %v622
      %v4524 = vpack.c.b16 %v4520, %v4519
      %v4525 = vpack.c.b16 %v4522, %v4521
      %v4526 = vpack.c.b16 %v4523, %v4523
      %v4530 = vsel %vm989, %v258, 0
      %v4533 = vsel %vm993, %v4526, 0
      %4535 = vmatprep.subr.bf16.mxu0 0
      %4536 = vmatpush1.bf16.msra.mxu0 0
      %4537 = vmatprep.subr.bf16.mxu0 0
      %4538 = vmatpush1.bf16.msra.mxu0 0
      %4539 = vmatprep.subr.bf16.mxu0 0
      %4540 = vmatpush1.bf16.msra.mxu0 0
      %4541 = vmatprep.subr.bf16.mxu0 0
      %4542 = vmatpush1.bf16.msra.mxu0 0
      %4543 = vmatprep.subr.bf16.mxu0 0
      %4544 = vmatpush1.bf16.msra.mxu0 0
      %4545 = vmatprep.subr.bf16.mxu0 0
      %4546 = vmatpush1.bf16.msra.mxu0 %v4533
      %4547 = vmatprep.subr.bf16.mxu0 0
      %4548 = vmatpush1.bf16.msra.mxu0 %v4525
      %4549 = vmatprep.subr.bf16.mxu0 0
      %4550 = vmatpush1.bf16.msra.mxu0 %v4524
      %4551 = vmatprep.subr.bf16.mxu0 0
      %4552 = vmatpush2.bf16.msra.mxu0 0
      %4553 = vmatprep.subr.bf16.mxu0 0
      %4554 = vmatpush2.bf16.msra.mxu0 0
      %4555 = vmatprep.subr.bf16.mxu0 0
      %4556 = vmatpush2.bf16.msra.mxu0 0
      %4557 = vmatprep.subr.bf16.mxu0 0
      %4558 = vmatpush2.bf16.msra.mxu0 0
      %4559 = vmatprep.subr.bf16.mxu0 0
      %4560 = vmatpush2.bf16.msra.mxu0 0
      %4561 = vmatprep.subr.bf16.mxu0 0
      %4562 = vmatpush2.bf16.msra.mxu0 0
      %4563 = vmatprep.subr.bf16.mxu0 0
      %4564 = vmatpush2.bf16.msra.mxu0 0
      %4565 = vmatprep.subr.bf16.mxu0 0
      %4566 = vmatpush2.bf16.msra.mxu0 0
      %4567 = vmatprep.mubr.bf16.mxu0 0
      %4568 = vmatmul.mubr.bf16.gmra.mxu0 %v4530
      %v4569 = vpop.f32.mrf.mxu0
      %v4570 = vadd.f32 %v972, %v4569
      %v4571 = vpop.f32.mrf.mxu0
      %v4572 = vpop.f32.mrf.mxu0
      %v4573 = vpop.f32.mrf.mxu0
      %4574 = vdwg.mxu0
      %v4580 = vunpack.c.l.b16 %v623
      %v4581 = vunpack.c.l.b16 %v624
      %v4582 = vunpack.c.l.b16 %v625
      %v4583 = vunpack.c.l.b16 %v626
      %v4584 = vunpack.c.l.b16 %v627
      %v4585 = vpack.c.b16 %v4581, %v4580
      %v4586 = vpack.c.b16 %v4583, %v4582
      %v4587 = vpack.c.b16 %v4584, %v4584
      %v4591 = vsel %vm989, %v259, 0
      %v4594 = vsel %vm993, %v4587, 0
      %4596 = vmatprep.subr.bf16.mxu0 0
      %4597 = vmatpush1.bf16.msra.mxu0 0
      %4598 = vmatprep.subr.bf16.mxu0 0
      %4599 = vmatpush1.bf16.msra.mxu0 0
      %4600 = vmatprep.subr.bf16.mxu0 0
      %4601 = vmatpush1.bf16.msra.mxu0 0
      %4602 = vmatprep.subr.bf16.mxu0 0
      %4603 = vmatpush1.bf16.msra.mxu0 0
      %4604 = vmatprep.subr.bf16.mxu0 0
      %4605 = vmatpush1.bf16.msra.mxu0 0
      %4606 = vmatprep.subr.bf16.mxu0 0
      %4607 = vmatpush1.bf16.msra.mxu0 %v4594
      %4608 = vmatprep.subr.bf16.mxu0 0
      %4609 = vmatpush1.bf16.msra.mxu0 %v4586
      %4610 = vmatprep.subr.bf16.mxu0 0
      %4611 = vmatpush1.bf16.msra.mxu0 %v4585
      %4612 = vmatprep.subr.bf16.mxu0 0
      %4613 = vmatpush2.bf16.msra.mxu0 0
      %4614 = vmatprep.subr.bf16.mxu0 0
      %4615 = vmatpush2.bf16.msra.mxu0 0
      %4616 = vmatprep.subr.bf16.mxu0 0
      %4617 = vmatpush2.bf16.msra.mxu0 0
      %4618 = vmatprep.subr.bf16.mxu0 0
      %4619 = vmatpush2.bf16.msra.mxu0 0
      %4620 = vmatprep.subr.bf16.mxu0 0
      %4621 = vmatpush2.bf16.msra.mxu0 0
      %4622 = vmatprep.subr.bf16.mxu0 0
      %4623 = vmatpush2.bf16.msra.mxu0 0
      %4624 = vmatprep.subr.bf16.mxu0 0
      %4625 = vmatpush2.bf16.msra.mxu0 0
      %4626 = vmatprep.subr.bf16.mxu0 0
      %4627 = vmatpush2.bf16.msra.mxu0 0
      %4628 = vmatprep.mubr.bf16.mxu0 0
      %4629 = vmatmul.mubr.bf16.gmra.mxu0 %v4591
      %v4630 = vpop.f32.mrf.mxu0
      %v4631 = vadd.f32 %v972, %v4630
      %v4632 = vpop.f32.mrf.mxu0
      %v4633 = vpop.f32.mrf.mxu0
      %v4634 = vpop.f32.mrf.mxu0
      %4635 = vdwg.mxu0
      %v4641 = vunpack.c.l.b16 %v628
      %v4642 = vunpack.c.l.b16 %v629
      %v4643 = vunpack.c.l.b16 %v630
      %v4644 = vunpack.c.l.b16 %v631
      %v4645 = vunpack.c.l.b16 %v632
      %v4646 = vpack.c.b16 %v4642, %v4641
      %v4647 = vpack.c.b16 %v4644, %v4643
      %v4648 = vpack.c.b16 %v4645, %v4645
      %v4652 = vsel %vm989, %v260, 0
      %v4655 = vsel %vm993, %v4648, 0
      %4657 = vmatprep.subr.bf16.mxu0 0
      %4658 = vmatpush1.bf16.msra.mxu0 0
      %4659 = vmatprep.subr.bf16.mxu0 0
      %4660 = vmatpush1.bf16.msra.mxu0 0
      %4661 = vmatprep.subr.bf16.mxu0 0
      %4662 = vmatpush1.bf16.msra.mxu0 0
      %4663 = vmatprep.subr.bf16.mxu0 0
      %4664 = vmatpush1.bf16.msra.mxu0 0
      %4665 = vmatprep.subr.bf16.mxu0 0
      %4666 = vmatpush1.bf16.msra.mxu0 0
      %4667 = vmatprep.subr.bf16.mxu0 0
      %4668 = vmatpush1.bf16.msra.mxu0 %v4655
      %4669 = vmatprep.subr.bf16.mxu0 0
      %4670 = vmatpush1.bf16.msra.mxu0 %v4647
      %4671 = vmatprep.subr.bf16.mxu0 0
      %4672 = vmatpush1.bf16.msra.mxu0 %v4646
      %4673 = vmatprep.subr.bf16.mxu0 0
      %4674 = vmatpush2.bf16.msra.mxu0 0
      %4675 = vmatprep.subr.bf16.mxu0 0
      %4676 = vmatpush2.bf16.msra.mxu0 0
      %4677 = vmatprep.subr.bf16.mxu0 0
      %4678 = vmatpush2.bf16.msra.mxu0 0
      %4679 = vmatprep.subr.bf16.mxu0 0
      %4680 = vmatpush2.bf16.msra.mxu0 0
      %4681 = vmatprep.subr.bf16.mxu0 0
      %4682 = vmatpush2.bf16.msra.mxu0 0
      %4683 = vmatprep.subr.bf16.mxu0 0
      %4684 = vmatpush2.bf16.msra.mxu0 0
      %4685 = vmatprep.subr.bf16.mxu0 0
      %4686 = vmatpush2.bf16.msra.mxu0 0
      %4687 = vmatprep.subr.bf16.mxu0 0
      %4688 = vmatpush2.bf16.msra.mxu0 0
      %4689 = vmatprep.mubr.bf16.mxu0 0
      %4690 = vmatmul.mubr.bf16.gmra.mxu0 %v4652
      %v4691 = vpop.f32.mrf.mxu0
      %v4692 = vadd.f32 %v972, %v4691
      %v4693 = vpop.f32.mrf.mxu0
      %v4694 = vpop.f32.mrf.mxu0
      %v4695 = vpop.f32.mrf.mxu0
      %4696 = vdwg.mxu0
      %v4702 = vunpack.c.l.b16 %v633
      %v4703 = vunpack.c.l.b16 %v634
      %v4704 = vunpack.c.l.b16 %v635
      %v4705 = vunpack.c.l.b16 %v636
      %v4706 = vunpack.c.l.b16 %v637
      %v4707 = vpack.c.b16 %v4703, %v4702
      %v4708 = vpack.c.b16 %v4705, %v4704
      %v4709 = vpack.c.b16 %v4706, %v4706
      %v4713 = vsel %vm989, %v261, 0
      %v4716 = vsel %vm993, %v4709, 0
      %4718 = vmatprep.subr.bf16.mxu0 0
      %4719 = vmatpush1.bf16.msra.mxu0 0
      %4720 = vmatprep.subr.bf16.mxu0 0
      %4721 = vmatpush1.bf16.msra.mxu0 0
      %4722 = vmatprep.subr.bf16.mxu0 0
      %4723 = vmatpush1.bf16.msra.mxu0 0
      %4724 = vmatprep.subr.bf16.mxu0 0
      %4725 = vmatpush1.bf16.msra.mxu0 0
      %4726 = vmatprep.subr.bf16.mxu0 0
      %4727 = vmatpush1.bf16.msra.mxu0 0
      %4728 = vmatprep.subr.bf16.mxu0 0
      %4729 = vmatpush1.bf16.msra.mxu0 %v4716
      %4730 = vmatprep.subr.bf16.mxu0 0
      %4731 = vmatpush1.bf16.msra.mxu0 %v4708
      %4732 = vmatprep.subr.bf16.mxu0 0
      %4733 = vmatpush1.bf16.msra.mxu0 %v4707
      %4734 = vmatprep.subr.bf16.mxu0 0
      %4735 = vmatpush2.bf16.msra.mxu0 0
      %4736 = vmatprep.subr.bf16.mxu0 0
      %4737 = vmatpush2.bf16.msra.mxu0 0
      %4738 = vmatprep.subr.bf16.mxu0 0
      %4739 = vmatpush2.bf16.msra.mxu0 0
      %4740 = vmatprep.subr.bf16.mxu0 0
      %4741 = vmatpush2.bf16.msra.mxu0 0
      %4742 = vmatprep.subr.bf16.mxu0 0
      %4743 = vmatpush2.bf16.msra.mxu0 0
      %4744 = vmatprep.subr.bf16.mxu0 0
      %4745 = vmatpush2.bf16.msra.mxu0 0
      %4746 = vmatprep.subr.bf16.mxu0 0
      %4747 = vmatpush2.bf16.msra.mxu0 0
      %4748 = vmatprep.subr.bf16.mxu0 0
      %4749 = vmatpush2.bf16.msra.mxu0 0
      %4750 = vmatprep.mubr.bf16.mxu0 0
      %4751 = vmatmul.mubr.bf16.gmra.mxu0 %v4713
      %v4752 = vpop.f32.mrf.mxu0
      %v4753 = vadd.f32 %v972, %v4752
      %v4754 = vpop.f32.mrf.mxu0
      %v4755 = vpop.f32.mrf.mxu0
      %v4756 = vpop.f32.mrf.mxu0
      %4757 = vdwg.mxu0
      %v4763 = vunpack.c.l.b16 %v638
      %v4764 = vunpack.c.l.b16 %v639
      %v4765 = vunpack.c.l.b16 %v640
      %v4766 = vunpack.c.l.b16 %v641
      %v4767 = vunpack.c.l.b16 %v642
      %v4768 = vpack.c.b16 %v4764, %v4763
      %v4769 = vpack.c.b16 %v4766, %v4765
      %v4770 = vpack.c.b16 %v4767, %v4767
      %v4774 = vsel %vm989, %v262, 0
      %v4777 = vsel %vm993, %v4770, 0
      %4779 = vmatprep.subr.bf16.mxu0 0
      %4780 = vmatpush1.bf16.msra.mxu0 0
      %4781 = vmatprep.subr.bf16.mxu0 0
      %4782 = vmatpush1.bf16.msra.mxu0 0
      %4783 = vmatprep.subr.bf16.mxu0 0
      %4784 = vmatpush1.bf16.msra.mxu0 0
      %4785 = vmatprep.subr.bf16.mxu0 0
      %4786 = vmatpush1.bf16.msra.mxu0 0
      %4787 = vmatprep.subr.bf16.mxu0 0
      %4788 = vmatpush1.bf16.msra.mxu0 0
      %4789 = vmatprep.subr.bf16.mxu0 0
      %4790 = vmatpush1.bf16.msra.mxu0 %v4777
      %4791 = vmatprep.subr.bf16.mxu0 0
      %4792 = vmatpush1.bf16.msra.mxu0 %v4769
      %4793 = vmatprep.subr.bf16.mxu0 0
      %4794 = vmatpush1.bf16.msra.mxu0 %v4768
      %4795 = vmatprep.subr.bf16.mxu0 0
      %4796 = vmatpush2.bf16.msra.mxu0 0
      %4797 = vmatprep.subr.bf16.mxu0 0
      %4798 = vmatpush2.bf16.msra.mxu0 0
      %4799 = vmatprep.subr.bf16.mxu0 0
      %4800 = vmatpush2.bf16.msra.mxu0 0
      %4801 = vmatprep.subr.bf16.mxu0 0
      %4802 = vmatpush2.bf16.msra.mxu0 0
      %4803 = vmatprep.subr.bf16.mxu0 0
      %4804 = vmatpush2.bf16.msra.mxu0 0
      %4805 = vmatprep.subr.bf16.mxu0 0
      %4806 = vmatpush2.bf16.msra.mxu0 0
      %4807 = vmatprep.subr.bf16.mxu0 0
      %4808 = vmatpush2.bf16.msra.mxu0 0
      %4809 = vmatprep.subr.bf16.mxu0 0
      %4810 = vmatpush2.bf16.msra.mxu0 0
      %4811 = vmatprep.mubr.bf16.mxu0 0
      %4812 = vmatmul.mubr.bf16.gmra.mxu0 %v4774
      %v4813 = vpop.f32.mrf.mxu0
      %v4814 = vadd.f32 %v972, %v4813
      %v4815 = vpop.f32.mrf.mxu0
      %v4816 = vpop.f32.mrf.mxu0
      %v4817 = vpop.f32.mrf.mxu0
      %4818 = vdwg.mxu0
      %v4824 = vunpack.c.l.b16 %v643
      %v4825 = vunpack.c.l.b16 %v644
      %v4826 = vunpack.c.l.b16 %v645
      %v4827 = vunpack.c.l.b16 %v646
      %v4828 = vunpack.c.l.b16 %v647
      %v4829 = vpack.c.b16 %v4825, %v4824
      %v4830 = vpack.c.b16 %v4827, %v4826
      %v4831 = vpack.c.b16 %v4828, %v4828
      %v4835 = vsel %vm989, %v263, 0
      %v4838 = vsel %vm993, %v4831, 0
      %4840 = vmatprep.subr.bf16.mxu0 0
      %4841 = vmatpush1.bf16.msra.mxu0 0
      %4842 = vmatprep.subr.bf16.mxu0 0
      %4843 = vmatpush1.bf16.msra.mxu0 0
      %4844 = vmatprep.subr.bf16.mxu0 0
      %4845 = vmatpush1.bf16.msra.mxu0 0
      %4846 = vmatprep.subr.bf16.mxu0 0
      %4847 = vmatpush1.bf16.msra.mxu0 0
      %4848 = vmatprep.subr.bf16.mxu0 0
      %4849 = vmatpush1.bf16.msra.mxu0 0
      %4850 = vmatprep.subr.bf16.mxu0 0
      %4851 = vmatpush1.bf16.msra.mxu0 %v4838
      %4852 = vmatprep.subr.bf16.mxu0 0
      %4853 = vmatpush1.bf16.msra.mxu0 %v4830
      %4854 = vmatprep.subr.bf16.mxu0 0
      %4855 = vmatpush1.bf16.msra.mxu0 %v4829
      %4856 = vmatprep.subr.bf16.mxu0 0
      %4857 = vmatpush2.bf16.msra.mxu0 0
      %4858 = vmatprep.subr.bf16.mxu0 0
      %4859 = vmatpush2.bf16.msra.mxu0 0
      %4860 = vmatprep.subr.bf16.mxu0 0
      %4861 = vmatpush2.bf16.msra.mxu0 0
      %4862 = vmatprep.subr.bf16.mxu0 0
      %4863 = vmatpush2.bf16.msra.mxu0 0
      %4864 = vmatprep.subr.bf16.mxu0 0
      %4865 = vmatpush2.bf16.msra.mxu0 0
      %4866 = vmatprep.subr.bf16.mxu0 0
      %4867 = vmatpush2.bf16.msra.mxu0 0
      %4868 = vmatprep.subr.bf16.mxu0 0
      %4869 = vmatpush2.bf16.msra.mxu0 0
      %4870 = vmatprep.subr.bf16.mxu0 0
      %4871 = vmatpush2.bf16.msra.mxu0 0
      %4872 = vmatprep.mubr.bf16.mxu0 0
      %4873 = vmatmul.mubr.bf16.gmra.mxu0 %v4835
      %v4874 = vpop.f32.mrf.mxu0
      %v4875 = vadd.f32 %v972, %v4874
      %v4876 = vpop.f32.mrf.mxu0
      %v4877 = vpop.f32.mrf.mxu0
      %v4878 = vpop.f32.mrf.mxu0
      %4879 = vdwg.mxu0
      %v4885 = vunpack.c.l.b16 %v648
      %v4886 = vunpack.c.l.b16 %v649
      %v4887 = vunpack.c.l.b16 %v650
      %v4888 = vunpack.c.l.b16 %v651
      %v4889 = vunpack.c.l.b16 %v652
      %v4890 = vpack.c.b16 %v4886, %v4885
      %v4891 = vpack.c.b16 %v4888, %v4887
      %v4892 = vpack.c.b16 %v4889, %v4889
      %v4896 = vsel %vm989, %v264, 0
      %v4899 = vsel %vm993, %v4892, 0
      %4901 = vmatprep.subr.bf16.mxu0 0
      %4902 = vmatpush1.bf16.msra.mxu0 0
      %4903 = vmatprep.subr.bf16.mxu0 0
      %4904 = vmatpush1.bf16.msra.mxu0 0
      %4905 = vmatprep.subr.bf16.mxu0 0
      %4906 = vmatpush1.bf16.msra.mxu0 0
      %4907 = vmatprep.subr.bf16.mxu0 0
      %4908 = vmatpush1.bf16.msra.mxu0 0
      %4909 = vmatprep.subr.bf16.mxu0 0
      %4910 = vmatpush1.bf16.msra.mxu0 0
      %4911 = vmatprep.subr.bf16.mxu0 0
      %4912 = vmatpush1.bf16.msra.mxu0 %v4899
      %4913 = vmatprep.subr.bf16.mxu0 0
      %4914 = vmatpush1.bf16.msra.mxu0 %v4891
      %4915 = vmatprep.subr.bf16.mxu0 0
      %4916 = vmatpush1.bf16.msra.mxu0 %v4890
      %4917 = vmatprep.subr.bf16.mxu0 0
      %4918 = vmatpush2.bf16.msra.mxu0 0
      %4919 = vmatprep.subr.bf16.mxu0 0
      %4920 = vmatpush2.bf16.msra.mxu0 0
      %4921 = vmatprep.subr.bf16.mxu0 0
      %4922 = vmatpush2.bf16.msra.mxu0 0
      %4923 = vmatprep.subr.bf16.mxu0 0
      %4924 = vmatpush2.bf16.msra.mxu0 0
      %4925 = vmatprep.subr.bf16.mxu0 0
      %4926 = vmatpush2.bf16.msra.mxu0 0
      %4927 = vmatprep.subr.bf16.mxu0 0
      %4928 = vmatpush2.bf16.msra.mxu0 0
      %4929 = vmatprep.subr.bf16.mxu0 0
      %4930 = vmatpush2.bf16.msra.mxu0 0
      %4931 = vmatprep.subr.bf16.mxu0 0
      %4932 = vmatpush2.bf16.msra.mxu0 0
      %4933 = vmatprep.mubr.bf16.mxu0 0
      %4934 = vmatmul.mubr.bf16.gmra.mxu0 %v4896
      %v4935 = vpop.f32.mrf.mxu0
      %v4936 = vadd.f32 %v972, %v4935
      %v4937 = vpop.f32.mrf.mxu0
      %v4938 = vpop.f32.mrf.mxu0
      %v4939 = vpop.f32.mrf.mxu0
      %4940 = vdwg.mxu0
      %v4946 = vunpack.c.l.b16 %v653
      %v4947 = vunpack.c.l.b16 %v654
      %v4948 = vunpack.c.l.b16 %v655
      %v4949 = vunpack.c.l.b16 %v656
      %v4950 = vunpack.c.l.b16 %v657
      %v4951 = vpack.c.b16 %v4947, %v4946
      %v4952 = vpack.c.b16 %v4949, %v4948
      %v4953 = vpack.c.b16 %v4950, %v4950
      %v4957 = vsel %vm989, %v265, 0
      %v4960 = vsel %vm993, %v4953, 0
      %4962 = vmatprep.subr.bf16.mxu0 0
      %4963 = vmatpush1.bf16.msra.mxu0 0
      %4964 = vmatprep.subr.bf16.mxu0 0
      %4965 = vmatpush1.bf16.msra.mxu0 0
      %4966 = vmatprep.subr.bf16.mxu0 0
      %4967 = vmatpush1.bf16.msra.mxu0 0
      %4968 = vmatprep.subr.bf16.mxu0 0
      %4969 = vmatpush1.bf16.msra.mxu0 0
      %4970 = vmatprep.subr.bf16.mxu0 0
      %4971 = vmatpush1.bf16.msra.mxu0 0
      %4972 = vmatprep.subr.bf16.mxu0 0
      %4973 = vmatpush1.bf16.msra.mxu0 %v4960
      %4974 = vmatprep.subr.bf16.mxu0 0
      %4975 = vmatpush1.bf16.msra.mxu0 %v4952
      %4976 = vmatprep.subr.bf16.mxu0 0
      %4977 = vmatpush1.bf16.msra.mxu0 %v4951
      %4978 = vmatprep.subr.bf16.mxu0 0
      %4979 = vmatpush2.bf16.msra.mxu0 0
      %4980 = vmatprep.subr.bf16.mxu0 0
      %4981 = vmatpush2.bf16.msra.mxu0 0
      %4982 = vmatprep.subr.bf16.mxu0 0
      %4983 = vmatpush2.bf16.msra.mxu0 0
      %4984 = vmatprep.subr.bf16.mxu0 0
      %4985 = vmatpush2.bf16.msra.mxu0 0
      %4986 = vmatprep.subr.bf16.mxu0 0
      %4987 = vmatpush2.bf16.msra.mxu0 0
      %4988 = vmatprep.subr.bf16.mxu0 0
      %4989 = vmatpush2.bf16.msra.mxu0 0
      %4990 = vmatprep.subr.bf16.mxu0 0
      %4991 = vmatpush2.bf16.msra.mxu0 0
      %4992 = vmatprep.subr.bf16.mxu0 0
      %4993 = vmatpush2.bf16.msra.mxu0 0
      %4994 = vmatprep.mubr.bf16.mxu0 0
      %4995 = vmatmul.mubr.bf16.gmra.mxu0 %v4957
      %v4996 = vpop.f32.mrf.mxu0
      %v4997 = vadd.f32 %v972, %v4996
      %v4998 = vpop.f32.mrf.mxu0
      %v4999 = vpop.f32.mrf.mxu0
      %v5000 = vpop.f32.mrf.mxu0
      %5001 = vdwg.mxu0
      %v5007 = vunpack.c.l.b16 %v658
      %v5008 = vunpack.c.l.b16 %v659
      %v5009 = vunpack.c.l.b16 %v660
      %v5010 = vunpack.c.l.b16 %v661
      %v5011 = vunpack.c.l.b16 %v662
      %v5012 = vpack.c.b16 %v5008, %v5007
      %v5013 = vpack.c.b16 %v5010, %v5009
      %v5014 = vpack.c.b16 %v5011, %v5011
      %v5018 = vsel %vm989, %v266, 0
      %v5021 = vsel %vm993, %v5014, 0
      %5023 = vmatprep.subr.bf16.mxu0 0
      %5024 = vmatpush1.bf16.msra.mxu0 0
      %5025 = vmatprep.subr.bf16.mxu0 0
      %5026 = vmatpush1.bf16.msra.mxu0 0
      %5027 = vmatprep.subr.bf16.mxu0 0
      %5028 = vmatpush1.bf16.msra.mxu0 0
      %5029 = vmatprep.subr.bf16.mxu0 0
      %5030 = vmatpush1.bf16.msra.mxu0 0
      %5031 = vmatprep.subr.bf16.mxu0 0
      %5032 = vmatpush1.bf16.msra.mxu0 0
      %5033 = vmatprep.subr.bf16.mxu0 0
      %5034 = vmatpush1.bf16.msra.mxu0 %v5021
      %5035 = vmatprep.subr.bf16.mxu0 0
      %5036 = vmatpush1.bf16.msra.mxu0 %v5013
      %5037 = vmatprep.subr.bf16.mxu0 0
      %5038 = vmatpush1.bf16.msra.mxu0 %v5012
      %5039 = vmatprep.subr.bf16.mxu0 0
      %5040 = vmatpush2.bf16.msra.mxu0 0
      %5041 = vmatprep.subr.bf16.mxu0 0
      %5042 = vmatpush2.bf16.msra.mxu0 0
      %5043 = vmatprep.subr.bf16.mxu0 0
      %5044 = vmatpush2.bf16.msra.mxu0 0
      %5045 = vmatprep.subr.bf16.mxu0 0
      %5046 = vmatpush2.bf16.msra.mxu0 0
      %5047 = vmatprep.subr.bf16.mxu0 0
      %5048 = vmatpush2.bf16.msra.mxu0 0
      %5049 = vmatprep.subr.bf16.mxu0 0
      %5050 = vmatpush2.bf16.msra.mxu0 0
      %5051 = vmatprep.subr.bf16.mxu0 0
      %5052 = vmatpush2.bf16.msra.mxu0 0
      %5053 = vmatprep.subr.bf16.mxu0 0
      %5054 = vmatpush2.bf16.msra.mxu0 0
      %5055 = vmatprep.mubr.bf16.mxu0 0
      %5056 = vmatmul.mubr.bf16.gmra.mxu0 %v5018
      %v5057 = vpop.f32.mrf.mxu0
      %v5058 = vadd.f32 %v972, %v5057
      %v5059 = vpop.f32.mrf.mxu0
      %v5060 = vpop.f32.mrf.mxu0
      %v5061 = vpop.f32.mrf.mxu0
      %5062 = vdwg.mxu0
      %v5068 = vunpack.c.l.b16 %v663
      %v5069 = vunpack.c.l.b16 %v664
      %v5070 = vunpack.c.l.b16 %v665
      %v5071 = vunpack.c.l.b16 %v666
      %v5072 = vunpack.c.l.b16 %v667
      %v5073 = vpack.c.b16 %v5069, %v5068
      %v5074 = vpack.c.b16 %v5071, %v5070
      %v5075 = vpack.c.b16 %v5072, %v5072
      %v5079 = vsel %vm989, %v267, 0
      %v5082 = vsel %vm993, %v5075, 0
      %5084 = vmatprep.subr.bf16.mxu0 0
      %5085 = vmatpush1.bf16.msra.mxu0 0
      %5086 = vmatprep.subr.bf16.mxu0 0
      %5087 = vmatpush1.bf16.msra.mxu0 0
      %5088 = vmatprep.subr.bf16.mxu0 0
      %5089 = vmatpush1.bf16.msra.mxu0 0
      %5090 = vmatprep.subr.bf16.mxu0 0
      %5091 = vmatpush1.bf16.msra.mxu0 0
      %5092 = vmatprep.subr.bf16.mxu0 0
      %5093 = vmatpush1.bf16.msra.mxu0 0
      %5094 = vmatprep.subr.bf16.mxu0 0
      %5095 = vmatpush1.bf16.msra.mxu0 %v5082
      %5096 = vmatprep.subr.bf16.mxu0 0
      %5097 = vmatpush1.bf16.msra.mxu0 %v5074
      %5098 = vmatprep.subr.bf16.mxu0 0
      %5099 = vmatpush1.bf16.msra.mxu0 %v5073
      %5100 = vmatprep.subr.bf16.mxu0 0
      %5101 = vmatpush2.bf16.msra.mxu0 0
      %5102 = vmatprep.subr.bf16.mxu0 0
      %5103 = vmatpush2.bf16.msra.mxu0 0
      %5104 = vmatprep.subr.bf16.mxu0 0
      %5105 = vmatpush2.bf16.msra.mxu0 0
      %5106 = vmatprep.subr.bf16.mxu0 0
      %5107 = vmatpush2.bf16.msra.mxu0 0
      %5108 = vmatprep.subr.bf16.mxu0 0
      %5109 = vmatpush2.bf16.msra.mxu0 0
      %5110 = vmatprep.subr.bf16.mxu0 0
      %5111 = vmatpush2.bf16.msra.mxu0 0
      %5112 = vmatprep.subr.bf16.mxu0 0
      %5113 = vmatpush2.bf16.msra.mxu0 0
      %5114 = vmatprep.subr.bf16.mxu0 0
      %5115 = vmatpush2.bf16.msra.mxu0 0
      %5116 = vmatprep.mubr.bf16.mxu0 0
      %5117 = vmatmul.mubr.bf16.gmra.mxu0 %v5079
      %v5118 = vpop.f32.mrf.mxu0
      %v5119 = vadd.f32 %v972, %v5118
      %v5120 = vpop.f32.mrf.mxu0
      %v5121 = vpop.f32.mrf.mxu0
      %v5122 = vpop.f32.mrf.mxu0
      %5123 = vdwg.mxu0
      %v5129 = vunpack.c.l.b16 %v668
      %v5130 = vunpack.c.l.b16 %v669
      %v5131 = vunpack.c.l.b16 %v670
      %v5132 = vunpack.c.l.b16 %v671
      %v5133 = vunpack.c.l.b16 %v672
      %v5134 = vpack.c.b16 %v5130, %v5129
      %v5135 = vpack.c.b16 %v5132, %v5131
      %v5136 = vpack.c.b16 %v5133, %v5133
      %v5140 = vsel %vm989, %v268, 0
      %v5143 = vsel %vm993, %v5136, 0
      %5145 = vmatprep.subr.bf16.mxu0 0
      %5146 = vmatpush1.bf16.msra.mxu0 0
      %5147 = vmatprep.subr.bf16.mxu0 0
      %5148 = vmatpush1.bf16.msra.mxu0 0
      %5149 = vmatprep.subr.bf16.mxu0 0
      %5150 = vmatpush1.bf16.msra.mxu0 0
      %5151 = vmatprep.subr.bf16.mxu0 0
      %5152 = vmatpush1.bf16.msra.mxu0 0
      %5153 = vmatprep.subr.bf16.mxu0 0
      %5154 = vmatpush1.bf16.msra.mxu0 0
      %5155 = vmatprep.subr.bf16.mxu0 0
      %5156 = vmatpush1.bf16.msra.mxu0 %v5143
      %5157 = vmatprep.subr.bf16.mxu0 0
      %5158 = vmatpush1.bf16.msra.mxu0 %v5135
      %5159 = vmatprep.subr.bf16.mxu0 0
      %5160 = vmatpush1.bf16.msra.mxu0 %v5134
      %5161 = vmatprep.subr.bf16.mxu0 0
      %5162 = vmatpush2.bf16.msra.mxu0 0
      %5163 = vmatprep.subr.bf16.mxu0 0
      %5164 = vmatpush2.bf16.msra.mxu0 0
      %5165 = vmatprep.subr.bf16.mxu0 0
      %5166 = vmatpush2.bf16.msra.mxu0 0
      %5167 = vmatprep.subr.bf16.mxu0 0
      %5168 = vmatpush2.bf16.msra.mxu0 0
      %5169 = vmatprep.subr.bf16.mxu0 0
      %5170 = vmatpush2.bf16.msra.mxu0 0
      %5171 = vmatprep.subr.bf16.mxu0 0
      %5172 = vmatpush2.bf16.msra.mxu0 0
      %5173 = vmatprep.subr.bf16.mxu0 0
      %5174 = vmatpush2.bf16.msra.mxu0 0
      %5175 = vmatprep.subr.bf16.mxu0 0
      %5176 = vmatpush2.bf16.msra.mxu0 0
      %5177 = vmatprep.mubr.bf16.mxu0 0
      %5178 = vmatmul.mubr.bf16.gmra.mxu0 %v5140
      %v5179 = vpop.f32.mrf.mxu0
      %v5180 = vadd.f32 %v972, %v5179
      %v5181 = vpop.f32.mrf.mxu0
      %v5182 = vpop.f32.mrf.mxu0
      %v5183 = vpop.f32.mrf.mxu0
      %5184 = vdwg.mxu0
      %v5190 = vunpack.c.l.b16 %v673
      %v5191 = vunpack.c.l.b16 %v674
      %v5192 = vunpack.c.l.b16 %v675
      %v5193 = vunpack.c.l.b16 %v676
      %v5194 = vunpack.c.l.b16 %v677
      %v5195 = vpack.c.b16 %v5191, %v5190
      %v5196 = vpack.c.b16 %v5193, %v5192
      %v5197 = vpack.c.b16 %v5194, %v5194
      %v5201 = vsel %vm989, %v269, 0
      %v5204 = vsel %vm993, %v5197, 0
      %5206 = vmatprep.subr.bf16.mxu0 0
      %5207 = vmatpush1.bf16.msra.mxu0 0
      %5208 = vmatprep.subr.bf16.mxu0 0
      %5209 = vmatpush1.bf16.msra.mxu0 0
      %5210 = vmatprep.subr.bf16.mxu0 0
      %5211 = vmatpush1.bf16.msra.mxu0 0
      %5212 = vmatprep.subr.bf16.mxu0 0
      %5213 = vmatpush1.bf16.msra.mxu0 0
      %5214 = vmatprep.subr.bf16.mxu0 0
      %5215 = vmatpush1.bf16.msra.mxu0 0
      %5216 = vmatprep.subr.bf16.mxu0 0
      %5217 = vmatpush1.bf16.msra.mxu0 %v5204
      %5218 = vmatprep.subr.bf16.mxu0 0
      %5219 = vmatpush1.bf16.msra.mxu0 %v5196
      %5220 = vmatprep.subr.bf16.mxu0 0
      %5221 = vmatpush1.bf16.msra.mxu0 %v5195
      %5222 = vmatprep.subr.bf16.mxu0 0
      %5223 = vmatpush2.bf16.msra.mxu0 0
      %5224 = vmatprep.subr.bf16.mxu0 0
      %5225 = vmatpush2.bf16.msra.mxu0 0
      %5226 = vmatprep.subr.bf16.mxu0 0
      %5227 = vmatpush2.bf16.msra.mxu0 0
      %5228 = vmatprep.subr.bf16.mxu0 0
      %5229 = vmatpush2.bf16.msra.mxu0 0
      %5230 = vmatprep.subr.bf16.mxu0 0
      %5231 = vmatpush2.bf16.msra.mxu0 0
      %5232 = vmatprep.subr.bf16.mxu0 0
      %5233 = vmatpush2.bf16.msra.mxu0 0
      %5234 = vmatprep.subr.bf16.mxu0 0
      %5235 = vmatpush2.bf16.msra.mxu0 0
      %5236 = vmatprep.subr.bf16.mxu0 0
      %5237 = vmatpush2.bf16.msra.mxu0 0
      %5238 = vmatprep.mubr.bf16.mxu0 0
      %5239 = vmatmul.mubr.bf16.gmra.mxu0 %v5201
      %v5240 = vpop.f32.mrf.mxu0
      %v5241 = vadd.f32 %v972, %v5240
      %v5242 = vpop.f32.mrf.mxu0
      %v5243 = vpop.f32.mrf.mxu0
      %v5244 = vpop.f32.mrf.mxu0
      %5245 = vdwg.mxu0
      %v5251 = vunpack.c.l.b16 %v678
      %v5252 = vunpack.c.l.b16 %v679
      %v5253 = vunpack.c.l.b16 %v680
      %v5254 = vunpack.c.l.b16 %v681
      %v5255 = vunpack.c.l.b16 %v682
      %v5256 = vpack.c.b16 %v5252, %v5251
      %v5257 = vpack.c.b16 %v5254, %v5253
      %v5258 = vpack.c.b16 %v5255, %v5255
      %v5262 = vsel %vm989, %v270, 0
      %v5265 = vsel %vm993, %v5258, 0
      %5267 = vmatprep.subr.bf16.mxu0 0
      %5268 = vmatpush1.bf16.msra.mxu0 0
      %5269 = vmatprep.subr.bf16.mxu0 0
      %5270 = vmatpush1.bf16.msra.mxu0 0
      %5271 = vmatprep.subr.bf16.mxu0 0
      %5272 = vmatpush1.bf16.msra.mxu0 0
      %5273 = vmatprep.subr.bf16.mxu0 0
      %5274 = vmatpush1.bf16.msra.mxu0 0
      %5275 = vmatprep.subr.bf16.mxu0 0
      %5276 = vmatpush1.bf16.msra.mxu0 0
      %5277 = vmatprep.subr.bf16.mxu0 0
      %5278 = vmatpush1.bf16.msra.mxu0 %v5265
      %5279 = vmatprep.subr.bf16.mxu0 0
      %5280 = vmatpush1.bf16.msra.mxu0 %v5257
      %5281 = vmatprep.subr.bf16.mxu0 0
      %5282 = vmatpush1.bf16.msra.mxu0 %v5256
      %5283 = vmatprep.subr.bf16.mxu0 0
      %5284 = vmatpush2.bf16.msra.mxu0 0
      %5285 = vmatprep.subr.bf16.mxu0 0
      %5286 = vmatpush2.bf16.msra.mxu0 0
      %5287 = vmatprep.subr.bf16.mxu0 0
      %5288 = vmatpush2.bf16.msra.mxu0 0
      %5289 = vmatprep.subr.bf16.mxu0 0
      %5290 = vmatpush2.bf16.msra.mxu0 0
      %5291 = vmatprep.subr.bf16.mxu0 0
      %5292 = vmatpush2.bf16.msra.mxu0 0
      %5293 = vmatprep.subr.bf16.mxu0 0
      %5294 = vmatpush2.bf16.msra.mxu0 0
      %5295 = vmatprep.subr.bf16.mxu0 0
      %5296 = vmatpush2.bf16.msra.mxu0 0
      %5297 = vmatprep.subr.bf16.mxu0 0
      %5298 = vmatpush2.bf16.msra.mxu0 0
      %5299 = vmatprep.mubr.bf16.mxu0 0
      %5300 = vmatmul.mubr.bf16.gmra.mxu0 %v5262
      %v5301 = vpop.f32.mrf.mxu0
      %v5302 = vadd.f32 %v972, %v5301
      %v5303 = vpop.f32.mrf.mxu0
      %v5304 = vpop.f32.mrf.mxu0
      %v5305 = vpop.f32.mrf.mxu0
      %5306 = vdwg.mxu0
      %v5312 = vunpack.c.l.b16 %v683
      %v5313 = vunpack.c.l.b16 %v684
      %v5314 = vunpack.c.l.b16 %v685
      %v5315 = vunpack.c.l.b16 %v686
      %v5316 = vunpack.c.l.b16 %v687
      %v5317 = vpack.c.b16 %v5313, %v5312
      %v5318 = vpack.c.b16 %v5315, %v5314
      %v5319 = vpack.c.b16 %v5316, %v5316
      %v5323 = vsel %vm989, %v271, 0
      %v5326 = vsel %vm993, %v5319, 0
      %5328 = vmatprep.subr.bf16.mxu0 0
      %5329 = vmatpush1.bf16.msra.mxu0 0
      %5330 = vmatprep.subr.bf16.mxu0 0
      %5331 = vmatpush1.bf16.msra.mxu0 0
      %5332 = vmatprep.subr.bf16.mxu0 0
      %5333 = vmatpush1.bf16.msra.mxu0 0
      %5334 = vmatprep.subr.bf16.mxu0 0
      %5335 = vmatpush1.bf16.msra.mxu0 0
      %5336 = vmatprep.subr.bf16.mxu0 0
      %5337 = vmatpush1.bf16.msra.mxu0 0
      %5338 = vmatprep.subr.bf16.mxu0 0
      %5339 = vmatpush1.bf16.msra.mxu0 %v5326
      %5340 = vmatprep.subr.bf16.mxu0 0
      %5341 = vmatpush1.bf16.msra.mxu0 %v5318
      %5342 = vmatprep.subr.bf16.mxu0 0
      %5343 = vmatpush1.bf16.msra.mxu0 %v5317
      %5344 = vmatprep.subr.bf16.mxu0 0
      %5345 = vmatpush2.bf16.msra.mxu0 0
      %5346 = vmatprep.subr.bf16.mxu0 0
      %5347 = vmatpush2.bf16.msra.mxu0 0
      %5348 = vmatprep.subr.bf16.mxu0 0
      %5349 = vmatpush2.bf16.msra.mxu0 0
      %5350 = vmatprep.subr.bf16.mxu0 0
      %5351 = vmatpush2.bf16.msra.mxu0 0
      %5352 = vmatprep.subr.bf16.mxu0 0
      %5353 = vmatpush2.bf16.msra.mxu0 0
      %5354 = vmatprep.subr.bf16.mxu0 0
      %5355 = vmatpush2.bf16.msra.mxu0 0
      %5356 = vmatprep.subr.bf16.mxu0 0
      %5357 = vmatpush2.bf16.msra.mxu0 0
      %5358 = vmatprep.subr.bf16.mxu0 0
      %5359 = vmatpush2.bf16.msra.mxu0 0
      %5360 = vmatprep.mubr.bf16.mxu0 0
      %5361 = vmatmul.mubr.bf16.gmra.mxu0 %v5323
      %v5362 = vpop.f32.mrf.mxu0
      %v5363 = vadd.f32 %v972, %v5362
      %v5364 = vpop.f32.mrf.mxu0
      %v5365 = vpop.f32.mrf.mxu0
      %v5366 = vpop.f32.mrf.mxu0
      %5367 = vdwg.mxu0
      %v5373 = vunpack.c.l.b16 %v688
      %v5374 = vunpack.c.l.b16 %v689
      %v5375 = vunpack.c.l.b16 %v690
      %v5376 = vunpack.c.l.b16 %v691
      %v5377 = vunpack.c.l.b16 %v692
      %v5378 = vpack.c.b16 %v5374, %v5373
      %v5379 = vpack.c.b16 %v5376, %v5375
      %v5380 = vpack.c.b16 %v5377, %v5377
      %v5384 = vsel %vm989, %v272, 0
      %v5387 = vsel %vm993, %v5380, 0
      %5389 = vmatprep.subr.bf16.mxu0 0
      %5390 = vmatpush1.bf16.msra.mxu0 0
      %5391 = vmatprep.subr.bf16.mxu0 0
      %5392 = vmatpush1.bf16.msra.mxu0 0
      %5393 = vmatprep.subr.bf16.mxu0 0
      %5394 = vmatpush1.bf16.msra.mxu0 0
      %5395 = vmatprep.subr.bf16.mxu0 0
      %5396 = vmatpush1.bf16.msra.mxu0 0
      %5397 = vmatprep.subr.bf16.mxu0 0
      %5398 = vmatpush1.bf16.msra.mxu0 0
      %5399 = vmatprep.subr.bf16.mxu0 0
      %5400 = vmatpush1.bf16.msra.mxu0 %v5387
      %5401 = vmatprep.subr.bf16.mxu0 0
      %5402 = vmatpush1.bf16.msra.mxu0 %v5379
      %5403 = vmatprep.subr.bf16.mxu0 0
      %5404 = vmatpush1.bf16.msra.mxu0 %v5378
      %5405 = vmatprep.subr.bf16.mxu0 0
      %5406 = vmatpush2.bf16.msra.mxu0 0
      %5407 = vmatprep.subr.bf16.mxu0 0
      %5408 = vmatpush2.bf16.msra.mxu0 0
      %5409 = vmatprep.subr.bf16.mxu0 0
      %5410 = vmatpush2.bf16.msra.mxu0 0
      %5411 = vmatprep.subr.bf16.mxu0 0
      %5412 = vmatpush2.bf16.msra.mxu0 0
      %5413 = vmatprep.subr.bf16.mxu0 0
      %5414 = vmatpush2.bf16.msra.mxu0 0
      %5415 = vmatprep.subr.bf16.mxu0 0
      %5416 = vmatpush2.bf16.msra.mxu0 0
      %5417 = vmatprep.subr.bf16.mxu0 0
      %5418 = vmatpush2.bf16.msra.mxu0 0
      %5419 = vmatprep.subr.bf16.mxu0 0
      %5420 = vmatpush2.bf16.msra.mxu0 0
      %5421 = vmatprep.mubr.bf16.mxu0 0
      %5422 = vmatmul.mubr.bf16.gmra.mxu0 %v5384
      %v5423 = vpop.f32.mrf.mxu0
      %v5424 = vadd.f32 %v972, %v5423
      %v5425 = vpop.f32.mrf.mxu0
      %v5426 = vpop.f32.mrf.mxu0
      %v5427 = vpop.f32.mrf.mxu0
      %5428 = vdwg.mxu0
      %v5434 = vunpack.c.l.b16 %v693
      %v5435 = vunpack.c.l.b16 %v694
      %v5436 = vunpack.c.l.b16 %v695
      %v5437 = vunpack.c.l.b16 %v696
      %v5438 = vunpack.c.l.b16 %v697
      %v5439 = vpack.c.b16 %v5435, %v5434
      %v5440 = vpack.c.b16 %v5437, %v5436
      %v5441 = vpack.c.b16 %v5438, %v5438
      %v5445 = vsel %vm989, %v273, 0
      %v5448 = vsel %vm993, %v5441, 0
      %5450 = vmatprep.subr.bf16.mxu0 0
      %5451 = vmatpush1.bf16.msra.mxu0 0
      %5452 = vmatprep.subr.bf16.mxu0 0
      %5453 = vmatpush1.bf16.msra.mxu0 0
      %5454 = vmatprep.subr.bf16.mxu0 0
      %5455 = vmatpush1.bf16.msra.mxu0 0
      %5456 = vmatprep.subr.bf16.mxu0 0
      %5457 = vmatpush1.bf16.msra.mxu0 0
      %5458 = vmatprep.subr.bf16.mxu0 0
      %5459 = vmatpush1.bf16.msra.mxu0 0
      %5460 = vmatprep.subr.bf16.mxu0 0
      %5461 = vmatpush1.bf16.msra.mxu0 %v5448
      %5462 = vmatprep.subr.bf16.mxu0 0
      %5463 = vmatpush1.bf16.msra.mxu0 %v5440
      %5464 = vmatprep.subr.bf16.mxu0 0
      %5465 = vmatpush1.bf16.msra.mxu0 %v5439
      %5466 = vmatprep.subr.bf16.mxu0 0
      %5467 = vmatpush2.bf16.msra.mxu0 0
      %5468 = vmatprep.subr.bf16.mxu0 0
      %5469 = vmatpush2.bf16.msra.mxu0 0
      %5470 = vmatprep.subr.bf16.mxu0 0
      %5471 = vmatpush2.bf16.msra.mxu0 0
      %5472 = vmatprep.subr.bf16.mxu0 0
      %5473 = vmatpush2.bf16.msra.mxu0 0
      %5474 = vmatprep.subr.bf16.mxu0 0
      %5475 = vmatpush2.bf16.msra.mxu0 0
      %5476 = vmatprep.subr.bf16.mxu0 0
      %5477 = vmatpush2.bf16.msra.mxu0 0
      %5478 = vmatprep.subr.bf16.mxu0 0
      %5479 = vmatpush2.bf16.msra.mxu0 0
      %5480 = vmatprep.subr.bf16.mxu0 0
      %5481 = vmatpush2.bf16.msra.mxu0 0
      %5482 = vmatprep.mubr.bf16.mxu0 0
      %5483 = vmatmul.mubr.bf16.gmra.mxu0 %v5445
      %v5484 = vpop.f32.mrf.mxu0
      %v5485 = vadd.f32 %v972, %v5484
      %v5486 = vpop.f32.mrf.mxu0
      %v5487 = vpop.f32.mrf.mxu0
      %v5488 = vpop.f32.mrf.mxu0
      %5489 = vdwg.mxu0
      %v5495 = vunpack.c.l.b16 %v698
      %v5496 = vunpack.c.l.b16 %v699
      %v5497 = vunpack.c.l.b16 %v700
      %v5498 = vunpack.c.l.b16 %v701
      %v5499 = vunpack.c.l.b16 %v702
      %v5500 = vpack.c.b16 %v5496, %v5495
      %v5501 = vpack.c.b16 %v5498, %v5497
      %v5502 = vpack.c.b16 %v5499, %v5499
      %v5506 = vsel %vm989, %v274, 0
      %v5509 = vsel %vm993, %v5502, 0
      %5511 = vmatprep.subr.bf16.mxu0 0
      %5512 = vmatpush1.bf16.msra.mxu0 0
      %5513 = vmatprep.subr.bf16.mxu0 0
      %5514 = vmatpush1.bf16.msra.mxu0 0
      %5515 = vmatprep.subr.bf16.mxu0 0
      %5516 = vmatpush1.bf16.msra.mxu0 0
      %5517 = vmatprep.subr.bf16.mxu0 0
      %5518 = vmatpush1.bf16.msra.mxu0 0
      %5519 = vmatprep.subr.bf16.mxu0 0
      %5520 = vmatpush1.bf16.msra.mxu0 0
      %5521 = vmatprep.subr.bf16.mxu0 0
      %5522 = vmatpush1.bf16.msra.mxu0 %v5509
      %5523 = vmatprep.subr.bf16.mxu0 0
      %5524 = vmatpush1.bf16.msra.mxu0 %v5501
      %5525 = vmatprep.subr.bf16.mxu0 0
      %5526 = vmatpush1.bf16.msra.mxu0 %v5500
      %5527 = vmatprep.subr.bf16.mxu0 0
      %5528 = vmatpush2.bf16.msra.mxu0 0
      %5529 = vmatprep.subr.bf16.mxu0 0
      %5530 = vmatpush2.bf16.msra.mxu0 0
      %5531 = vmatprep.subr.bf16.mxu0 0
      %5532 = vmatpush2.bf16.msra.mxu0 0
      %5533 = vmatprep.subr.bf16.mxu0 0
      %5534 = vmatpush2.bf16.msra.mxu0 0
      %5535 = vmatprep.subr.bf16.mxu0 0
      %5536 = vmatpush2.bf16.msra.mxu0 0
      %5537 = vmatprep.subr.bf16.mxu0 0
      %5538 = vmatpush2.bf16.msra.mxu0 0
      %5539 = vmatprep.subr.bf16.mxu0 0
      %5540 = vmatpush2.bf16.msra.mxu0 0
      %5541 = vmatprep.subr.bf16.mxu0 0
      %5542 = vmatpush2.bf16.msra.mxu0 0
      %5543 = vmatprep.mubr.bf16.mxu0 0
      %5544 = vmatmul.mubr.bf16.gmra.mxu0 %v5506
      %v5545 = vpop.f32.mrf.mxu0
      %v5546 = vadd.f32 %v972, %v5545
      %v5547 = vpop.f32.mrf.mxu0
      %v5548 = vpop.f32.mrf.mxu0
      %v5549 = vpop.f32.mrf.mxu0
      %5550 = vdwg.mxu0
      %v5556 = vunpack.c.l.b16 %v703
      %v5557 = vunpack.c.l.b16 %v704
      %v5558 = vunpack.c.l.b16 %v705
      %v5559 = vunpack.c.l.b16 %v706
      %v5560 = vunpack.c.l.b16 %v707
      %v5561 = vpack.c.b16 %v5557, %v5556
      %v5562 = vpack.c.b16 %v5559, %v5558
      %v5563 = vpack.c.b16 %v5560, %v5560
      %v5567 = vsel %vm989, %v275, 0
      %v5570 = vsel %vm993, %v5563, 0
      %5572 = vmatprep.subr.bf16.mxu0 0
      %5573 = vmatpush1.bf16.msra.mxu0 0
      %5574 = vmatprep.subr.bf16.mxu0 0
      %5575 = vmatpush1.bf16.msra.mxu0 0
      %5576 = vmatprep.subr.bf16.mxu0 0
      %5577 = vmatpush1.bf16.msra.mxu0 0
      %5578 = vmatprep.subr.bf16.mxu0 0
      %5579 = vmatpush1.bf16.msra.mxu0 0
      %5580 = vmatprep.subr.bf16.mxu0 0
      %5581 = vmatpush1.bf16.msra.mxu0 0
      %5582 = vmatprep.subr.bf16.mxu0 0
      %5583 = vmatpush1.bf16.msra.mxu0 %v5570
      %5584 = vmatprep.subr.bf16.mxu0 0
      %5585 = vmatpush1.bf16.msra.mxu0 %v5562
      %5586 = vmatprep.subr.bf16.mxu0 0
      %5587 = vmatpush1.bf16.msra.mxu0 %v5561
      %5588 = vmatprep.subr.bf16.mxu0 0
      %5589 = vmatpush2.bf16.msra.mxu0 0
      %5590 = vmatprep.subr.bf16.mxu0 0
      %5591 = vmatpush2.bf16.msra.mxu0 0
      %5592 = vmatprep.subr.bf16.mxu0 0
      %5593 = vmatpush2.bf16.msra.mxu0 0
      %5594 = vmatprep.subr.bf16.mxu0 0
      %5595 = vmatpush2.bf16.msra.mxu0 0
      %5596 = vmatprep.subr.bf16.mxu0 0
      %5597 = vmatpush2.bf16.msra.mxu0 0
      %5598 = vmatprep.subr.bf16.mxu0 0
      %5599 = vmatpush2.bf16.msra.mxu0 0
      %5600 = vmatprep.subr.bf16.mxu0 0
      %5601 = vmatpush2.bf16.msra.mxu0 0
      %5602 = vmatprep.subr.bf16.mxu0 0
      %5603 = vmatpush2.bf16.msra.mxu0 0
      %5604 = vmatprep.mubr.bf16.mxu0 0
      %5605 = vmatmul.mubr.bf16.gmra.mxu0 %v5567
      %v5606 = vpop.f32.mrf.mxu0
      %v5607 = vadd.f32 %v972, %v5606
      %v5608 = vpop.f32.mrf.mxu0
      %v5609 = vpop.f32.mrf.mxu0
      %v5610 = vpop.f32.mrf.mxu0
      %5611 = vdwg.mxu0
      %v5617 = vunpack.c.l.b16 %v708
      %v5618 = vunpack.c.l.b16 %v709
      %v5619 = vunpack.c.l.b16 %v710
      %v5620 = vunpack.c.l.b16 %v711
      %v5621 = vunpack.c.l.b16 %v712
      %v5622 = vpack.c.b16 %v5618, %v5617
      %v5623 = vpack.c.b16 %v5620, %v5619
      %v5624 = vpack.c.b16 %v5621, %v5621
      %v5628 = vsel %vm989, %v276, 0
      %v5631 = vsel %vm993, %v5624, 0
      %5633 = vmatprep.subr.bf16.mxu0 0
      %5634 = vmatpush1.bf16.msra.mxu0 0
      %5635 = vmatprep.subr.bf16.mxu0 0
      %5636 = vmatpush1.bf16.msra.mxu0 0
      %5637 = vmatprep.subr.bf16.mxu0 0
      %5638 = vmatpush1.bf16.msra.mxu0 0
      %5639 = vmatprep.subr.bf16.mxu0 0
      %5640 = vmatpush1.bf16.msra.mxu0 0
      %5641 = vmatprep.subr.bf16.mxu0 0
      %5642 = vmatpush1.bf16.msra.mxu0 0
      %5643 = vmatprep.subr.bf16.mxu0 0
      %5644 = vmatpush1.bf16.msra.mxu0 %v5631
      %5645 = vmatprep.subr.bf16.mxu0 0
      %5646 = vmatpush1.bf16.msra.mxu0 %v5623
      %5647 = vmatprep.subr.bf16.mxu0 0
      %5648 = vmatpush1.bf16.msra.mxu0 %v5622
      %5649 = vmatprep.subr.bf16.mxu0 0
      %5650 = vmatpush2.bf16.msra.mxu0 0
      %5651 = vmatprep.subr.bf16.mxu0 0
      %5652 = vmatpush2.bf16.msra.mxu0 0
      %5653 = vmatprep.subr.bf16.mxu0 0
      %5654 = vmatpush2.bf16.msra.mxu0 0
      %5655 = vmatprep.subr.bf16.mxu0 0
      %5656 = vmatpush2.bf16.msra.mxu0 0
      %5657 = vmatprep.subr.bf16.mxu0 0
      %5658 = vmatpush2.bf16.msra.mxu0 0
      %5659 = vmatprep.subr.bf16.mxu0 0
      %5660 = vmatpush2.bf16.msra.mxu0 0
      %5661 = vmatprep.subr.bf16.mxu0 0
      %5662 = vmatpush2.bf16.msra.mxu0 0
      %5663 = vmatprep.subr.bf16.mxu0 0
      %5664 = vmatpush2.bf16.msra.mxu0 0
      %5665 = vmatprep.mubr.bf16.mxu0 0
      %5666 = vmatmul.mubr.bf16.gmra.mxu0 %v5628
      %v5667 = vpop.f32.mrf.mxu0
      %v5668 = vadd.f32 %v972, %v5667
      %v5669 = vpop.f32.mrf.mxu0
      %v5670 = vpop.f32.mrf.mxu0
      %v5671 = vpop.f32.mrf.mxu0
      %5672 = vdwg.mxu0
      %v5678 = vunpack.c.l.b16 %v713
      %v5679 = vunpack.c.l.b16 %v714
      %v5680 = vunpack.c.l.b16 %v715
      %v5681 = vunpack.c.l.b16 %v716
      %v5682 = vunpack.c.l.b16 %v717
      %v5683 = vpack.c.b16 %v5679, %v5678
      %v5684 = vpack.c.b16 %v5681, %v5680
      %v5685 = vpack.c.b16 %v5682, %v5682
      %v5689 = vsel %vm989, %v277, 0
      %v5692 = vsel %vm993, %v5685, 0
      %5694 = vmatprep.subr.bf16.mxu0 0
      %5695 = vmatpush1.bf16.msra.mxu0 0
      %5696 = vmatprep.subr.bf16.mxu0 0
      %5697 = vmatpush1.bf16.msra.mxu0 0
      %5698 = vmatprep.subr.bf16.mxu0 0
      %5699 = vmatpush1.bf16.msra.mxu0 0
      %5700 = vmatprep.subr.bf16.mxu0 0
      %5701 = vmatpush1.bf16.msra.mxu0 0
      %5702 = vmatprep.subr.bf16.mxu0 0
      %5703 = vmatpush1.bf16.msra.mxu0 0
      %5704 = vmatprep.subr.bf16.mxu0 0
      %5705 = vmatpush1.bf16.msra.mxu0 %v5692
      %5706 = vmatprep.subr.bf16.mxu0 0
      %5707 = vmatpush1.bf16.msra.mxu0 %v5684
      %5708 = vmatprep.subr.bf16.mxu0 0
      %5709 = vmatpush1.bf16.msra.mxu0 %v5683
      %5710 = vmatprep.subr.bf16.mxu0 0
      %5711 = vmatpush2.bf16.msra.mxu0 0
      %5712 = vmatprep.subr.bf16.mxu0 0
      %5713 = vmatpush2.bf16.msra.mxu0 0
      %5714 = vmatprep.subr.bf16.mxu0 0
      %5715 = vmatpush2.bf16.msra.mxu0 0
      %5716 = vmatprep.subr.bf16.mxu0 0
      %5717 = vmatpush2.bf16.msra.mxu0 0
      %5718 = vmatprep.subr.bf16.mxu0 0
      %5719 = vmatpush2.bf16.msra.mxu0 0
      %5720 = vmatprep.subr.bf16.mxu0 0
      %5721 = vmatpush2.bf16.msra.mxu0 0
      %5722 = vmatprep.subr.bf16.mxu0 0
      %5723 = vmatpush2.bf16.msra.mxu0 0
      %5724 = vmatprep.subr.bf16.mxu0 0
      %5725 = vmatpush2.bf16.msra.mxu0 0
      %5726 = vmatprep.mubr.bf16.mxu0 0
      %5727 = vmatmul.mubr.bf16.gmra.mxu0 %v5689
      %v5728 = vpop.f32.mrf.mxu0
      %v5729 = vadd.f32 %v972, %v5728
      %v5730 = vpop.f32.mrf.mxu0
      %v5731 = vpop.f32.mrf.mxu0
      %v5732 = vpop.f32.mrf.mxu0
      %5733 = vdwg.mxu0
      %v5739 = vunpack.c.l.b16 %v718
      %v5740 = vunpack.c.l.b16 %v719
      %v5741 = vunpack.c.l.b16 %v720
      %v5742 = vunpack.c.l.b16 %v721
      %v5743 = vunpack.c.l.b16 %v722
      %v5744 = vpack.c.b16 %v5740, %v5739
      %v5745 = vpack.c.b16 %v5742, %v5741
      %v5746 = vpack.c.b16 %v5743, %v5743
      %v5750 = vsel %vm989, %v278, 0
      %v5753 = vsel %vm993, %v5746, 0
      %5755 = vmatprep.subr.bf16.mxu0 0
      %5756 = vmatpush1.bf16.msra.mxu0 0
      %5757 = vmatprep.subr.bf16.mxu0 0
      %5758 = vmatpush1.bf16.msra.mxu0 0
      %5759 = vmatprep.subr.bf16.mxu0 0
      %5760 = vmatpush1.bf16.msra.mxu0 0
      %5761 = vmatprep.subr.bf16.mxu0 0
      %5762 = vmatpush1.bf16.msra.mxu0 0
      %5763 = vmatprep.subr.bf16.mxu0 0
      %5764 = vmatpush1.bf16.msra.mxu0 0
      %5765 = vmatprep.subr.bf16.mxu0 0
      %5766 = vmatpush1.bf16.msra.mxu0 %v5753
      %5767 = vmatprep.subr.bf16.mxu0 0
      %5768 = vmatpush1.bf16.msra.mxu0 %v5745
      %5769 = vmatprep.subr.bf16.mxu0 0
      %5770 = vmatpush1.bf16.msra.mxu0 %v5744
      %5771 = vmatprep.subr.bf16.mxu0 0
      %5772 = vmatpush2.bf16.msra.mxu0 0
      %5773 = vmatprep.subr.bf16.mxu0 0
      %5774 = vmatpush2.bf16.msra.mxu0 0
      %5775 = vmatprep.subr.bf16.mxu0 0
      %5776 = vmatpush2.bf16.msra.mxu0 0
      %5777 = vmatprep.subr.bf16.mxu0 0
      %5778 = vmatpush2.bf16.msra.mxu0 0
      %5779 = vmatprep.subr.bf16.mxu0 0
      %5780 = vmatpush2.bf16.msra.mxu0 0
      %5781 = vmatprep.subr.bf16.mxu0 0
      %5782 = vmatpush2.bf16.msra.mxu0 0
      %5783 = vmatprep.subr.bf16.mxu0 0
      %5784 = vmatpush2.bf16.msra.mxu0 0
      %5785 = vmatprep.subr.bf16.mxu0 0
      %5786 = vmatpush2.bf16.msra.mxu0 0
      %5787 = vmatprep.mubr.bf16.mxu0 0
      %5788 = vmatmul.mubr.bf16.gmra.mxu0 %v5750
      %v5789 = vpop.f32.mrf.mxu0
      %v5790 = vadd.f32 %v972, %v5789
      %v5791 = vpop.f32.mrf.mxu0
      %v5792 = vpop.f32.mrf.mxu0
      %v5793 = vpop.f32.mrf.mxu0
      %5794 = vdwg.mxu0
      %v5800 = vunpack.c.l.b16 %v723
      %v5801 = vunpack.c.l.b16 %v724
      %v5802 = vunpack.c.l.b16 %v725
      %v5803 = vunpack.c.l.b16 %v726
      %v5804 = vunpack.c.l.b16 %v727
      %v5805 = vpack.c.b16 %v5801, %v5800
      %v5806 = vpack.c.b16 %v5803, %v5802
      %v5807 = vpack.c.b16 %v5804, %v5804
      %v5811 = vsel %vm989, %v279, 0
      %v5814 = vsel %vm993, %v5807, 0
      %5816 = vmatprep.subr.bf16.mxu0 0
      %5817 = vmatpush1.bf16.msra.mxu0 0
      %5818 = vmatprep.subr.bf16.mxu0 0
      %5819 = vmatpush1.bf16.msra.mxu0 0
      %5820 = vmatprep.subr.bf16.mxu0 0
      %5821 = vmatpush1.bf16.msra.mxu0 0
      %5822 = vmatprep.subr.bf16.mxu0 0
      %5823 = vmatpush1.bf16.msra.mxu0 0
      %5824 = vmatprep.subr.bf16.mxu0 0
      %5825 = vmatpush1.bf16.msra.mxu0 0
      %5826 = vmatprep.subr.bf16.mxu0 0
      %5827 = vmatpush1.bf16.msra.mxu0 %v5814
      %5828 = vmatprep.subr.bf16.mxu0 0
      %5829 = vmatpush1.bf16.msra.mxu0 %v5806
      %5830 = vmatprep.subr.bf16.mxu0 0
      %5831 = vmatpush1.bf16.msra.mxu0 %v5805
      %5832 = vmatprep.subr.bf16.mxu0 0
      %5833 = vmatpush2.bf16.msra.mxu0 0
      %5834 = vmatprep.subr.bf16.mxu0 0
      %5835 = vmatpush2.bf16.msra.mxu0 0
      %5836 = vmatprep.subr.bf16.mxu0 0
      %5837 = vmatpush2.bf16.msra.mxu0 0
      %5838 = vmatprep.subr.bf16.mxu0 0
      %5839 = vmatpush2.bf16.msra.mxu0 0
      %5840 = vmatprep.subr.bf16.mxu0 0
      %5841 = vmatpush2.bf16.msra.mxu0 0
      %5842 = vmatprep.subr.bf16.mxu0 0
      %5843 = vmatpush2.bf16.msra.mxu0 0
      %5844 = vmatprep.subr.bf16.mxu0 0
      %5845 = vmatpush2.bf16.msra.mxu0 0
      %5846 = vmatprep.subr.bf16.mxu0 0
      %5847 = vmatpush2.bf16.msra.mxu0 0
      %5848 = vmatprep.mubr.bf16.mxu0 0
      %5849 = vmatmul.mubr.bf16.gmra.mxu0 %v5811
      %v5850 = vpop.f32.mrf.mxu0
      %v5851 = vadd.f32 %v972, %v5850
      %v5852 = vpop.f32.mrf.mxu0
      %v5853 = vpop.f32.mrf.mxu0
      %v5854 = vpop.f32.mrf.mxu0
      %5855 = vdwg.mxu0
      %v5861 = vunpack.c.l.b16 %v728
      %v5862 = vunpack.c.l.b16 %v729
      %v5863 = vunpack.c.l.b16 %v730
      %v5864 = vunpack.c.l.b16 %v731
      %v5865 = vunpack.c.l.b16 %v732
      %v5866 = vpack.c.b16 %v5862, %v5861
      %v5867 = vpack.c.b16 %v5864, %v5863
      %v5868 = vpack.c.b16 %v5865, %v5865
      %v5872 = vsel %vm989, %v280, 0
      %v5875 = vsel %vm993, %v5868, 0
      %5877 = vmatprep.subr.bf16.mxu0 0
      %5878 = vmatpush1.bf16.msra.mxu0 0
      %5879 = vmatprep.subr.bf16.mxu0 0
      %5880 = vmatpush1.bf16.msra.mxu0 0
      %5881 = vmatprep.subr.bf16.mxu0 0
      %5882 = vmatpush1.bf16.msra.mxu0 0
      %5883 = vmatprep.subr.bf16.mxu0 0
      %5884 = vmatpush1.bf16.msra.mxu0 0
      %5885 = vmatprep.subr.bf16.mxu0 0
      %5886 = vmatpush1.bf16.msra.mxu0 0
      %5887 = vmatprep.subr.bf16.mxu0 0
      %5888 = vmatpush1.bf16.msra.mxu0 %v5875
      %5889 = vmatprep.subr.bf16.mxu0 0
      %5890 = vmatpush1.bf16.msra.mxu0 %v5867
      %5891 = vmatprep.subr.bf16.mxu0 0
      %5892 = vmatpush1.bf16.msra.mxu0 %v5866
      %5893 = vmatprep.subr.bf16.mxu0 0
      %5894 = vmatpush2.bf16.msra.mxu0 0
      %5895 = vmatprep.subr.bf16.mxu0 0
      %5896 = vmatpush2.bf16.msra.mxu0 0
      %5897 = vmatprep.subr.bf16.mxu0 0
      %5898 = vmatpush2.bf16.msra.mxu0 0
      %5899 = vmatprep.subr.bf16.mxu0 0
      %5900 = vmatpush2.bf16.msra.mxu0 0
      %5901 = vmatprep.subr.bf16.mxu0 0
      %5902 = vmatpush2.bf16.msra.mxu0 0
      %5903 = vmatprep.subr.bf16.mxu0 0
      %5904 = vmatpush2.bf16.msra.mxu0 0
      %5905 = vmatprep.subr.bf16.mxu0 0
      %5906 = vmatpush2.bf16.msra.mxu0 0
      %5907 = vmatprep.subr.bf16.mxu0 0
      %5908 = vmatpush2.bf16.msra.mxu0 0
      %5909 = vmatprep.mubr.bf16.mxu0 0
      %5910 = vmatmul.mubr.bf16.gmra.mxu0 %v5872
      %v5911 = vpop.f32.mrf.mxu0
      %v5912 = vadd.f32 %v972, %v5911
      %v5913 = vpop.f32.mrf.mxu0
      %v5914 = vpop.f32.mrf.mxu0
      %v5915 = vpop.f32.mrf.mxu0
      %5916 = vdwg.mxu0
      %v5922 = vunpack.c.l.b16 %v733
      %v5923 = vunpack.c.l.b16 %v734
      %v5924 = vunpack.c.l.b16 %v735
      %v5925 = vunpack.c.l.b16 %v736
      %v5926 = vunpack.c.l.b16 %v737
      %v5927 = vpack.c.b16 %v5923, %v5922
      %v5928 = vpack.c.b16 %v5925, %v5924
      %v5929 = vpack.c.b16 %v5926, %v5926
      %v5933 = vsel %vm989, %v281, 0
      %v5936 = vsel %vm993, %v5929, 0
      %5938 = vmatprep.subr.bf16.mxu0 0
      %5939 = vmatpush1.bf16.msra.mxu0 0
      %5940 = vmatprep.subr.bf16.mxu0 0
      %5941 = vmatpush1.bf16.msra.mxu0 0
      %5942 = vmatprep.subr.bf16.mxu0 0
      %5943 = vmatpush1.bf16.msra.mxu0 0
      %5944 = vmatprep.subr.bf16.mxu0 0
      %5945 = vmatpush1.bf16.msra.mxu0 0
      %5946 = vmatprep.subr.bf16.mxu0 0
      %5947 = vmatpush1.bf16.msra.mxu0 0
      %5948 = vmatprep.subr.bf16.mxu0 0
      %5949 = vmatpush1.bf16.msra.mxu0 %v5936
      %5950 = vmatprep.subr.bf16.mxu0 0
      %5951 = vmatpush1.bf16.msra.mxu0 %v5928
      %5952 = vmatprep.subr.bf16.mxu0 0
      %5953 = vmatpush1.bf16.msra.mxu0 %v5927
      %5954 = vmatprep.subr.bf16.mxu0 0
      %5955 = vmatpush2.bf16.msra.mxu0 0
      %5956 = vmatprep.subr.bf16.mxu0 0
      %5957 = vmatpush2.bf16.msra.mxu0 0
      %5958 = vmatprep.subr.bf16.mxu0 0
      %5959 = vmatpush2.bf16.msra.mxu0 0
      %5960 = vmatprep.subr.bf16.mxu0 0
      %5961 = vmatpush2.bf16.msra.mxu0 0
      %5962 = vmatprep.subr.bf16.mxu0 0
      %5963 = vmatpush2.bf16.msra.mxu0 0
      %5964 = vmatprep.subr.bf16.mxu0 0
      %5965 = vmatpush2.bf16.msra.mxu0 0
      %5966 = vmatprep.subr.bf16.mxu0 0
      %5967 = vmatpush2.bf16.msra.mxu0 0
      %5968 = vmatprep.subr.bf16.mxu0 0
      %5969 = vmatpush2.bf16.msra.mxu0 0
      %5970 = vmatprep.mubr.bf16.mxu0 0
      %5971 = vmatmul.mubr.bf16.gmra.mxu0 %v5933
      %v5972 = vpop.f32.mrf.mxu0
      %v5973 = vadd.f32 %v972, %v5972
      %v5974 = vpop.f32.mrf.mxu0
      %v5975 = vpop.f32.mrf.mxu0
      %v5976 = vpop.f32.mrf.mxu0
      %5977 = vdwg.mxu0
      %v5983 = vunpack.c.l.b16 %v738
      %v5984 = vunpack.c.l.b16 %v739
      %v5985 = vunpack.c.l.b16 %v740
      %v5986 = vunpack.c.l.b16 %v741
      %v5987 = vunpack.c.l.b16 %v742
      %v5988 = vpack.c.b16 %v5984, %v5983
      %v5989 = vpack.c.b16 %v5986, %v5985
      %v5990 = vpack.c.b16 %v5987, %v5987
      %v5994 = vsel %vm989, %v282, 0
      %v5997 = vsel %vm993, %v5990, 0
      %5999 = vmatprep.subr.bf16.mxu0 0
      %6000 = vmatpush1.bf16.msra.mxu0 0
      %6001 = vmatprep.subr.bf16.mxu0 0
      %6002 = vmatpush1.bf16.msra.mxu0 0
      %6003 = vmatprep.subr.bf16.mxu0 0
      %6004 = vmatpush1.bf16.msra.mxu0 0
      %6005 = vmatprep.subr.bf16.mxu0 0
      %6006 = vmatpush1.bf16.msra.mxu0 0
      %6007 = vmatprep.subr.bf16.mxu0 0
      %6008 = vmatpush1.bf16.msra.mxu0 0
      %6009 = vmatprep.subr.bf16.mxu0 0
      %6010 = vmatpush1.bf16.msra.mxu0 %v5997
      %6011 = vmatprep.subr.bf16.mxu0 0
      %6012 = vmatpush1.bf16.msra.mxu0 %v5989
      %6013 = vmatprep.subr.bf16.mxu0 0
      %6014 = vmatpush1.bf16.msra.mxu0 %v5988
      %6015 = vmatprep.subr.bf16.mxu0 0
      %6016 = vmatpush2.bf16.msra.mxu0 0
      %6017 = vmatprep.subr.bf16.mxu0 0
      %6018 = vmatpush2.bf16.msra.mxu0 0
      %6019 = vmatprep.subr.bf16.mxu0 0
      %6020 = vmatpush2.bf16.msra.mxu0 0
      %6021 = vmatprep.subr.bf16.mxu0 0
      %6022 = vmatpush2.bf16.msra.mxu0 0
      %6023 = vmatprep.subr.bf16.mxu0 0
      %6024 = vmatpush2.bf16.msra.mxu0 0
      %6025 = vmatprep.subr.bf16.mxu0 0
      %6026 = vmatpush2.bf16.msra.mxu0 0
      %6027 = vmatprep.subr.bf16.mxu0 0
      %6028 = vmatpush2.bf16.msra.mxu0 0
      %6029 = vmatprep.subr.bf16.mxu0 0
      %6030 = vmatpush2.bf16.msra.mxu0 0
      %6031 = vmatprep.mubr.bf16.mxu0 0
      %6032 = vmatmul.mubr.bf16.gmra.mxu0 %v5994
      %v6033 = vpop.f32.mrf.mxu0
      %v6034 = vadd.f32 %v972, %v6033
      %v6035 = vpop.f32.mrf.mxu0
      %v6036 = vpop.f32.mrf.mxu0
      %v6037 = vpop.f32.mrf.mxu0
      %6038 = vdwg.mxu0
      %v6044 = vunpack.c.l.b16 %v743
      %v6045 = vunpack.c.l.b16 %v744
      %v6046 = vunpack.c.l.b16 %v745
      %v6047 = vunpack.c.l.b16 %v746
      %v6048 = vunpack.c.l.b16 %v747
      %v6049 = vpack.c.b16 %v6045, %v6044
      %v6050 = vpack.c.b16 %v6047, %v6046
      %v6051 = vpack.c.b16 %v6048, %v6048
      %v6055 = vsel %vm989, %v283, 0
      %v6058 = vsel %vm993, %v6051, 0
      %6060 = vmatprep.subr.bf16.mxu0 0
      %6061 = vmatpush1.bf16.msra.mxu0 0
      %6062 = vmatprep.subr.bf16.mxu0 0
      %6063 = vmatpush1.bf16.msra.mxu0 0
      %6064 = vmatprep.subr.bf16.mxu0 0
      %6065 = vmatpush1.bf16.msra.mxu0 0
      %6066 = vmatprep.subr.bf16.mxu0 0
      %6067 = vmatpush1.bf16.msra.mxu0 0
      %6068 = vmatprep.subr.bf16.mxu0 0
      %6069 = vmatpush1.bf16.msra.mxu0 0
      %6070 = vmatprep.subr.bf16.mxu0 0
      %6071 = vmatpush1.bf16.msra.mxu0 %v6058
      %6072 = vmatprep.subr.bf16.mxu0 0
      %6073 = vmatpush1.bf16.msra.mxu0 %v6050
      %6074 = vmatprep.subr.bf16.mxu0 0
      %6075 = vmatpush1.bf16.msra.mxu0 %v6049
      %6076 = vmatprep.subr.bf16.mxu0 0
      %6077 = vmatpush2.bf16.msra.mxu0 0
      %6078 = vmatprep.subr.bf16.mxu0 0
      %6079 = vmatpush2.bf16.msra.mxu0 0
      %6080 = vmatprep.subr.bf16.mxu0 0
      %6081 = vmatpush2.bf16.msra.mxu0 0
      %6082 = vmatprep.subr.bf16.mxu0 0
      %6083 = vmatpush2.bf16.msra.mxu0 0
      %6084 = vmatprep.subr.bf16.mxu0 0
      %6085 = vmatpush2.bf16.msra.mxu0 0
      %6086 = vmatprep.subr.bf16.mxu0 0
      %6087 = vmatpush2.bf16.msra.mxu0 0
      %6088 = vmatprep.subr.bf16.mxu0 0
      %6089 = vmatpush2.bf16.msra.mxu0 0
      %6090 = vmatprep.subr.bf16.mxu0 0
      %6091 = vmatpush2.bf16.msra.mxu0 0
      %6092 = vmatprep.mubr.bf16.mxu0 0
      %6093 = vmatmul.mubr.bf16.gmra.mxu0 %v6055
      %v6094 = vpop.f32.mrf.mxu0
      %v6095 = vadd.f32 %v972, %v6094
      %v6096 = vpop.f32.mrf.mxu0
      %v6097 = vpop.f32.mrf.mxu0
      %v6098 = vpop.f32.mrf.mxu0
      %6099 = vdwg.mxu0
      %v6105 = vunpack.c.l.b16 %v748
      %v6106 = vunpack.c.l.b16 %v749
      %v6107 = vunpack.c.l.b16 %v750
      %v6108 = vunpack.c.l.b16 %v751
      %v6109 = vunpack.c.l.b16 %v752
      %v6110 = vpack.c.b16 %v6106, %v6105
      %v6111 = vpack.c.b16 %v6108, %v6107
      %v6112 = vpack.c.b16 %v6109, %v6109
      %v6116 = vsel %vm989, %v284, 0
      %v6119 = vsel %vm993, %v6112, 0
      %6121 = vmatprep.subr.bf16.mxu0 0
      %6122 = vmatpush1.bf16.msra.mxu0 0
      %6123 = vmatprep.subr.bf16.mxu0 0
      %6124 = vmatpush1.bf16.msra.mxu0 0
      %6125 = vmatprep.subr.bf16.mxu0 0
      %6126 = vmatpush1.bf16.msra.mxu0 0
      %6127 = vmatprep.subr.bf16.mxu0 0
      %6128 = vmatpush1.bf16.msra.mxu0 0
      %6129 = vmatprep.subr.bf16.mxu0 0
      %6130 = vmatpush1.bf16.msra.mxu0 0
      %6131 = vmatprep.subr.bf16.mxu0 0
      %6132 = vmatpush1.bf16.msra.mxu0 %v6119
      %6133 = vmatprep.subr.bf16.mxu0 0
      %6134 = vmatpush1.bf16.msra.mxu0 %v6111
      %6135 = vmatprep.subr.bf16.mxu0 0
      %6136 = vmatpush1.bf16.msra.mxu0 %v6110
      %6137 = vmatprep.subr.bf16.mxu0 0
      %6138 = vmatpush2.bf16.msra.mxu0 0
      %6139 = vmatprep.subr.bf16.mxu0 0
      %6140 = vmatpush2.bf16.msra.mxu0 0
      %6141 = vmatprep.subr.bf16.mxu0 0
      %6142 = vmatpush2.bf16.msra.mxu0 0
      %6143 = vmatprep.subr.bf16.mxu0 0
      %6144 = vmatpush2.bf16.msra.mxu0 0
      %6145 = vmatprep.subr.bf16.mxu0 0
      %6146 = vmatpush2.bf16.msra.mxu0 0
      %6147 = vmatprep.subr.bf16.mxu0 0
      %6148 = vmatpush2.bf16.msra.mxu0 0
      %6149 = vmatprep.subr.bf16.mxu0 0
      %6150 = vmatpush2.bf16.msra.mxu0 0
      %6151 = vmatprep.subr.bf16.mxu0 0
      %6152 = vmatpush2.bf16.msra.mxu0 0
      %6153 = vmatprep.mubr.bf16.mxu0 0
      %6154 = vmatmul.mubr.bf16.gmra.mxu0 %v6116
      %v6155 = vpop.f32.mrf.mxu0
      %v6156 = vadd.f32 %v972, %v6155
      %v6157 = vpop.f32.mrf.mxu0
      %v6158 = vpop.f32.mrf.mxu0
      %v6159 = vpop.f32.mrf.mxu0
      %6160 = vdwg.mxu0
      %v6166 = vunpack.c.l.b16 %v753
      %v6167 = vunpack.c.l.b16 %v754
      %v6168 = vunpack.c.l.b16 %v755
      %v6169 = vunpack.c.l.b16 %v756
      %v6170 = vunpack.c.l.b16 %v757
      %v6171 = vpack.c.b16 %v6167, %v6166
      %v6172 = vpack.c.b16 %v6169, %v6168
      %v6173 = vpack.c.b16 %v6170, %v6170
      %v6177 = vsel %vm989, %v285, 0
      %v6180 = vsel %vm993, %v6173, 0
      %6182 = vmatprep.subr.bf16.mxu0 0
      %6183 = vmatpush1.bf16.msra.mxu0 0
      %6184 = vmatprep.subr.bf16.mxu0 0
      %6185 = vmatpush1.bf16.msra.mxu0 0
      %6186 = vmatprep.subr.bf16.mxu0 0
      %6187 = vmatpush1.bf16.msra.mxu0 0
      %6188 = vmatprep.subr.bf16.mxu0 0
      %6189 = vmatpush1.bf16.msra.mxu0 0
      %6190 = vmatprep.subr.bf16.mxu0 0
      %6191 = vmatpush1.bf16.msra.mxu0 0
      %6192 = vmatprep.subr.bf16.mxu0 0
      %6193 = vmatpush1.bf16.msra.mxu0 %v6180
      %6194 = vmatprep.subr.bf16.mxu0 0
      %6195 = vmatpush1.bf16.msra.mxu0 %v6172
      %6196 = vmatprep.subr.bf16.mxu0 0
      %6197 = vmatpush1.bf16.msra.mxu0 %v6171
      %6198 = vmatprep.subr.bf16.mxu0 0
      %6199 = vmatpush2.bf16.msra.mxu0 0
      %6200 = vmatprep.subr.bf16.mxu0 0
      %6201 = vmatpush2.bf16.msra.mxu0 0
      %6202 = vmatprep.subr.bf16.mxu0 0
      %6203 = vmatpush2.bf16.msra.mxu0 0
      %6204 = vmatprep.subr.bf16.mxu0 0
      %6205 = vmatpush2.bf16.msra.mxu0 0
      %6206 = vmatprep.subr.bf16.mxu0 0
      %6207 = vmatpush2.bf16.msra.mxu0 0
      %6208 = vmatprep.subr.bf16.mxu0 0
      %6209 = vmatpush2.bf16.msra.mxu0 0
      %6210 = vmatprep.subr.bf16.mxu0 0
      %6211 = vmatpush2.bf16.msra.mxu0 0
      %6212 = vmatprep.subr.bf16.mxu0 0
      %6213 = vmatpush2.bf16.msra.mxu0 0
      %6214 = vmatprep.mubr.bf16.mxu0 0
      %6215 = vmatmul.mubr.bf16.gmra.mxu0 %v6177
      %v6216 = vpop.f32.mrf.mxu0
      %v6217 = vadd.f32 %v972, %v6216
      %v6218 = vpop.f32.mrf.mxu0
      %v6219 = vpop.f32.mrf.mxu0
      %v6220 = vpop.f32.mrf.mxu0
      %6221 = vdwg.mxu0
      %v6227 = vunpack.c.l.b16 %v758
      %v6228 = vunpack.c.l.b16 %v759
      %v6229 = vunpack.c.l.b16 %v760
      %v6230 = vunpack.c.l.b16 %v761
      %v6231 = vunpack.c.l.b16 %v762
      %v6232 = vpack.c.b16 %v6228, %v6227
      %v6233 = vpack.c.b16 %v6230, %v6229
      %v6234 = vpack.c.b16 %v6231, %v6231
      %v6238 = vsel %vm989, %v286, 0
      %v6241 = vsel %vm993, %v6234, 0
      %6243 = vmatprep.subr.bf16.mxu0 0
      %6244 = vmatpush1.bf16.msra.mxu0 0
      %6245 = vmatprep.subr.bf16.mxu0 0
      %6246 = vmatpush1.bf16.msra.mxu0 0
      %6247 = vmatprep.subr.bf16.mxu0 0
      %6248 = vmatpush1.bf16.msra.mxu0 0
      %6249 = vmatprep.subr.bf16.mxu0 0
      %6250 = vmatpush1.bf16.msra.mxu0 0
      %6251 = vmatprep.subr.bf16.mxu0 0
      %6252 = vmatpush1.bf16.msra.mxu0 0
      %6253 = vmatprep.subr.bf16.mxu0 0
      %6254 = vmatpush1.bf16.msra.mxu0 %v6241
      %6255 = vmatprep.subr.bf16.mxu0 0
      %6256 = vmatpush1.bf16.msra.mxu0 %v6233
      %6257 = vmatprep.subr.bf16.mxu0 0
      %6258 = vmatpush1.bf16.msra.mxu0 %v6232
      %6259 = vmatprep.subr.bf16.mxu0 0
      %6260 = vmatpush2.bf16.msra.mxu0 0
      %6261 = vmatprep.subr.bf16.mxu0 0
      %6262 = vmatpush2.bf16.msra.mxu0 0
      %6263 = vmatprep.subr.bf16.mxu0 0
      %6264 = vmatpush2.bf16.msra.mxu0 0
      %6265 = vmatprep.subr.bf16.mxu0 0
      %6266 = vmatpush2.bf16.msra.mxu0 0
      %6267 = vmatprep.subr.bf16.mxu0 0
      %6268 = vmatpush2.bf16.msra.mxu0 0
      %6269 = vmatprep.subr.bf16.mxu0 0
      %6270 = vmatpush2.bf16.msra.mxu0 0
      %6271 = vmatprep.subr.bf16.mxu0 0
      %6272 = vmatpush2.bf16.msra.mxu0 0
      %6273 = vmatprep.subr.bf16.mxu0 0
      %6274 = vmatpush2.bf16.msra.mxu0 0
      %6275 = vmatprep.mubr.bf16.mxu0 0
      %6276 = vmatmul.mubr.bf16.gmra.mxu0 %v6238
      %v6277 = vpop.f32.mrf.mxu0
      %v6278 = vadd.f32 %v972, %v6277
      %v6279 = vpop.f32.mrf.mxu0
      %v6280 = vpop.f32.mrf.mxu0
      %v6281 = vpop.f32.mrf.mxu0
      %6282 = vdwg.mxu0
      %v6288 = vunpack.c.l.b16 %v763
      %v6289 = vunpack.c.l.b16 %v764
      %v6290 = vunpack.c.l.b16 %v765
      %v6291 = vunpack.c.l.b16 %v766
      %v6292 = vunpack.c.l.b16 %v767
      %v6293 = vpack.c.b16 %v6289, %v6288
      %v6294 = vpack.c.b16 %v6291, %v6290
      %v6295 = vpack.c.b16 %v6292, %v6292
      %v6299 = vsel %vm989, %v287, 0
      %v6302 = vsel %vm993, %v6295, 0
      %6304 = vmatprep.subr.bf16.mxu0 0
      %6305 = vmatpush1.bf16.msra.mxu0 0
      %6306 = vmatprep.subr.bf16.mxu0 0
      %6307 = vmatpush1.bf16.msra.mxu0 0
      %6308 = vmatprep.subr.bf16.mxu0 0
      %6309 = vmatpush1.bf16.msra.mxu0 0
      %6310 = vmatprep.subr.bf16.mxu0 0
      %6311 = vmatpush1.bf16.msra.mxu0 0
      %6312 = vmatprep.subr.bf16.mxu0 0
      %6313 = vmatpush1.bf16.msra.mxu0 0
      %6314 = vmatprep.subr.bf16.mxu0 0
      %6315 = vmatpush1.bf16.msra.mxu0 %v6302
      %6316 = vmatprep.subr.bf16.mxu0 0
      %6317 = vmatpush1.bf16.msra.mxu0 %v6294
      %6318 = vmatprep.subr.bf16.mxu0 0
      %6319 = vmatpush1.bf16.msra.mxu0 %v6293
      %6320 = vmatprep.subr.bf16.mxu0 0
      %6321 = vmatpush2.bf16.msra.mxu0 0
      %6322 = vmatprep.subr.bf16.mxu0 0
      %6323 = vmatpush2.bf16.msra.mxu0 0
      %6324 = vmatprep.subr.bf16.mxu0 0
      %6325 = vmatpush2.bf16.msra.mxu0 0
      %6326 = vmatprep.subr.bf16.mxu0 0
      %6327 = vmatpush2.bf16.msra.mxu0 0
      %6328 = vmatprep.subr.bf16.mxu0 0
      %6329 = vmatpush2.bf16.msra.mxu0 0
      %6330 = vmatprep.subr.bf16.mxu0 0
      %6331 = vmatpush2.bf16.msra.mxu0 0
      %6332 = vmatprep.subr.bf16.mxu0 0
      %6333 = vmatpush2.bf16.msra.mxu0 0
      %6334 = vmatprep.subr.bf16.mxu0 0
      %6335 = vmatpush2.bf16.msra.mxu0 0
      %6336 = vmatprep.mubr.bf16.mxu0 0
      %6337 = vmatmul.mubr.bf16.gmra.mxu0 %v6299
      %v6338 = vpop.f32.mrf.mxu0
      %v6339 = vadd.f32 %v972, %v6338
      %v6340 = vpop.f32.mrf.mxu0
      %v6341 = vpop.f32.mrf.mxu0
      %v6342 = vpop.f32.mrf.mxu0
      %6343 = vdwg.mxu0
      %v6349 = vunpack.c.l.b16 %v768
      %v6350 = vunpack.c.l.b16 %v769
      %v6351 = vunpack.c.l.b16 %v770
      %v6352 = vunpack.c.l.b16 %v771
      %v6353 = vunpack.c.l.b16 %v772
      %v6354 = vpack.c.b16 %v6350, %v6349
      %v6355 = vpack.c.b16 %v6352, %v6351
      %v6356 = vpack.c.b16 %v6353, %v6353
      %v6360 = vsel %vm989, %v288, 0
      %v6363 = vsel %vm993, %v6356, 0
      %6365 = vmatprep.subr.bf16.mxu0 0
      %6366 = vmatpush1.bf16.msra.mxu0 0
      %6367 = vmatprep.subr.bf16.mxu0 0
      %6368 = vmatpush1.bf16.msra.mxu0 0
      %6369 = vmatprep.subr.bf16.mxu0 0
      %6370 = vmatpush1.bf16.msra.mxu0 0
      %6371 = vmatprep.subr.bf16.mxu0 0
      %6372 = vmatpush1.bf16.msra.mxu0 0
      %6373 = vmatprep.subr.bf16.mxu0 0
      %6374 = vmatpush1.bf16.msra.mxu0 0
      %6375 = vmatprep.subr.bf16.mxu0 0
      %6376 = vmatpush1.bf16.msra.mxu0 %v6363
      %6377 = vmatprep.subr.bf16.mxu0 0
      %6378 = vmatpush1.bf16.msra.mxu0 %v6355
      %6379 = vmatprep.subr.bf16.mxu0 0
      %6380 = vmatpush1.bf16.msra.mxu0 %v6354
      %6381 = vmatprep.subr.bf16.mxu0 0
      %6382 = vmatpush2.bf16.msra.mxu0 0
      %6383 = vmatprep.subr.bf16.mxu0 0
      %6384 = vmatpush2.bf16.msra.mxu0 0
      %6385 = vmatprep.subr.bf16.mxu0 0
      %6386 = vmatpush2.bf16.msra.mxu0 0
      %6387 = vmatprep.subr.bf16.mxu0 0
      %6388 = vmatpush2.bf16.msra.mxu0 0
      %6389 = vmatprep.subr.bf16.mxu0 0
      %6390 = vmatpush2.bf16.msra.mxu0 0
      %6391 = vmatprep.subr.bf16.mxu0 0
      %6392 = vmatpush2.bf16.msra.mxu0 0
      %6393 = vmatprep.subr.bf16.mxu0 0
      %6394 = vmatpush2.bf16.msra.mxu0 0
      %6395 = vmatprep.subr.bf16.mxu0 0
      %6396 = vmatpush2.bf16.msra.mxu0 0
      %6397 = vmatprep.mubr.bf16.mxu0 0
      %6398 = vmatmul.mubr.bf16.gmra.mxu0 %v6360
      %v6399 = vpop.f32.mrf.mxu0
      %v6400 = vadd.f32 %v972, %v6399
      %v6401 = vpop.f32.mrf.mxu0
      %v6402 = vpop.f32.mrf.mxu0
      %v6403 = vpop.f32.mrf.mxu0
      %6404 = vdwg.mxu0
      %v6410 = vunpack.c.l.b16 %v773
      %v6411 = vunpack.c.l.b16 %v774
      %v6412 = vunpack.c.l.b16 %v775
      %v6413 = vunpack.c.l.b16 %v776
      %v6414 = vunpack.c.l.b16 %v777
      %v6415 = vpack.c.b16 %v6411, %v6410
      %v6416 = vpack.c.b16 %v6413, %v6412
      %v6417 = vpack.c.b16 %v6414, %v6414
      %v6421 = vsel %vm989, %v289, 0
      %v6424 = vsel %vm993, %v6417, 0
      %6426 = vmatprep.subr.bf16.mxu0 0
      %6427 = vmatpush1.bf16.msra.mxu0 0
      %6428 = vmatprep.subr.bf16.mxu0 0
      %6429 = vmatpush1.bf16.msra.mxu0 0
      %6430 = vmatprep.subr.bf16.mxu0 0
      %6431 = vmatpush1.bf16.msra.mxu0 0
      %6432 = vmatprep.subr.bf16.mxu0 0
      %6433 = vmatpush1.bf16.msra.mxu0 0
      %6434 = vmatprep.subr.bf16.mxu0 0
      %6435 = vmatpush1.bf16.msra.mxu0 0
      %6436 = vmatprep.subr.bf16.mxu0 0
      %6437 = vmatpush1.bf16.msra.mxu0 %v6424
      %6438 = vmatprep.subr.bf16.mxu0 0
      %6439 = vmatpush1.bf16.msra.mxu0 %v6416
      %6440 = vmatprep.subr.bf16.mxu0 0
      %6441 = vmatpush1.bf16.msra.mxu0 %v6415
      %6442 = vmatprep.subr.bf16.mxu0 0
      %6443 = vmatpush2.bf16.msra.mxu0 0
      %6444 = vmatprep.subr.bf16.mxu0 0
      %6445 = vmatpush2.bf16.msra.mxu0 0
      %6446 = vmatprep.subr.bf16.mxu0 0
      %6447 = vmatpush2.bf16.msra.mxu0 0
      %6448 = vmatprep.subr.bf16.mxu0 0
      %6449 = vmatpush2.bf16.msra.mxu0 0
      %6450 = vmatprep.subr.bf16.mxu0 0
      %6451 = vmatpush2.bf16.msra.mxu0 0
      %6452 = vmatprep.subr.bf16.mxu0 0
      %6453 = vmatpush2.bf16.msra.mxu0 0
      %6454 = vmatprep.subr.bf16.mxu0 0
      %6455 = vmatpush2.bf16.msra.mxu0 0
      %6456 = vmatprep.subr.bf16.mxu0 0
      %6457 = vmatpush2.bf16.msra.mxu0 0
      %6458 = vmatprep.mubr.bf16.mxu0 0
      %6459 = vmatmul.mubr.bf16.gmra.mxu0 %v6421
      %v6460 = vpop.f32.mrf.mxu0
      %v6461 = vadd.f32 %v972, %v6460
      %v6462 = vpop.f32.mrf.mxu0
      %v6463 = vpop.f32.mrf.mxu0
      %v6464 = vpop.f32.mrf.mxu0
      %6465 = vdwg.mxu0
      %v6471 = vunpack.c.l.b16 %v778
      %v6472 = vunpack.c.l.b16 %v779
      %v6473 = vunpack.c.l.b16 %v780
      %v6474 = vunpack.c.l.b16 %v781
      %v6475 = vunpack.c.l.b16 %v782
      %v6476 = vpack.c.b16 %v6472, %v6471
      %v6477 = vpack.c.b16 %v6474, %v6473
      %v6478 = vpack.c.b16 %v6475, %v6475
      %v6482 = vsel %vm989, %v290, 0
      %v6485 = vsel %vm993, %v6478, 0
      %6487 = vmatprep.subr.bf16.mxu0 0
      %6488 = vmatpush1.bf16.msra.mxu0 0
      %6489 = vmatprep.subr.bf16.mxu0 0
      %6490 = vmatpush1.bf16.msra.mxu0 0
      %6491 = vmatprep.subr.bf16.mxu0 0
      %6492 = vmatpush1.bf16.msra.mxu0 0
      %6493 = vmatprep.subr.bf16.mxu0 0
      %6494 = vmatpush1.bf16.msra.mxu0 0
      %6495 = vmatprep.subr.bf16.mxu0 0
      %6496 = vmatpush1.bf16.msra.mxu0 0
      %6497 = vmatprep.subr.bf16.mxu0 0
      %6498 = vmatpush1.bf16.msra.mxu0 %v6485
      %6499 = vmatprep.subr.bf16.mxu0 0
      %6500 = vmatpush1.bf16.msra.mxu0 %v6477
      %6501 = vmatprep.subr.bf16.mxu0 0
      %6502 = vmatpush1.bf16.msra.mxu0 %v6476
      %6503 = vmatprep.subr.bf16.mxu0 0
      %6504 = vmatpush2.bf16.msra.mxu0 0
      %6505 = vmatprep.subr.bf16.mxu0 0
      %6506 = vmatpush2.bf16.msra.mxu0 0
      %6507 = vmatprep.subr.bf16.mxu0 0
      %6508 = vmatpush2.bf16.msra.mxu0 0
      %6509 = vmatprep.subr.bf16.mxu0 0
      %6510 = vmatpush2.bf16.msra.mxu0 0
      %6511 = vmatprep.subr.bf16.mxu0 0
      %6512 = vmatpush2.bf16.msra.mxu0 0
      %6513 = vmatprep.subr.bf16.mxu0 0
      %6514 = vmatpush2.bf16.msra.mxu0 0
      %6515 = vmatprep.subr.bf16.mxu0 0
      %6516 = vmatpush2.bf16.msra.mxu0 0
      %6517 = vmatprep.subr.bf16.mxu0 0
      %6518 = vmatpush2.bf16.msra.mxu0 0
      %6519 = vmatprep.mubr.bf16.mxu0 0
      %6520 = vmatmul.mubr.bf16.gmra.mxu0 %v6482
      %v6521 = vpop.f32.mrf.mxu0
      %v6522 = vadd.f32 %v972, %v6521
      %v6523 = vpop.f32.mrf.mxu0
      %v6524 = vpop.f32.mrf.mxu0
      %v6525 = vpop.f32.mrf.mxu0
      %6526 = vdwg.mxu0
      %v6532 = vunpack.c.l.b16 %v783
      %v6533 = vunpack.c.l.b16 %v784
      %v6534 = vunpack.c.l.b16 %v785
      %v6535 = vunpack.c.l.b16 %v786
      %v6536 = vunpack.c.l.b16 %v787
      %v6537 = vpack.c.b16 %v6533, %v6532
      %v6538 = vpack.c.b16 %v6535, %v6534
      %v6539 = vpack.c.b16 %v6536, %v6536
      %v6543 = vsel %vm989, %v291, 0
      %v6546 = vsel %vm993, %v6539, 0
      %6548 = vmatprep.subr.bf16.mxu0 0
      %6549 = vmatpush1.bf16.msra.mxu0 0
      %6550 = vmatprep.subr.bf16.mxu0 0
      %6551 = vmatpush1.bf16.msra.mxu0 0
      %6552 = vmatprep.subr.bf16.mxu0 0
      %6553 = vmatpush1.bf16.msra.mxu0 0
      %6554 = vmatprep.subr.bf16.mxu0 0
      %6555 = vmatpush1.bf16.msra.mxu0 0
      %6556 = vmatprep.subr.bf16.mxu0 0
      %6557 = vmatpush1.bf16.msra.mxu0 0
      %6558 = vmatprep.subr.bf16.mxu0 0
      %6559 = vmatpush1.bf16.msra.mxu0 %v6546
      %6560 = vmatprep.subr.bf16.mxu0 0
      %6561 = vmatpush1.bf16.msra.mxu0 %v6538
      %6562 = vmatprep.subr.bf16.mxu0 0
      %6563 = vmatpush1.bf16.msra.mxu0 %v6537
      %6564 = vmatprep.subr.bf16.mxu0 0
      %6565 = vmatpush2.bf16.msra.mxu0 0
      %6566 = vmatprep.subr.bf16.mxu0 0
      %6567 = vmatpush2.bf16.msra.mxu0 0
      %6568 = vmatprep.subr.bf16.mxu0 0
      %6569 = vmatpush2.bf16.msra.mxu0 0
      %6570 = vmatprep.subr.bf16.mxu0 0
      %6571 = vmatpush2.bf16.msra.mxu0 0
      %6572 = vmatprep.subr.bf16.mxu0 0
      %6573 = vmatpush2.bf16.msra.mxu0 0
      %6574 = vmatprep.subr.bf16.mxu0 0
      %6575 = vmatpush2.bf16.msra.mxu0 0
      %6576 = vmatprep.subr.bf16.mxu0 0
      %6577 = vmatpush2.bf16.msra.mxu0 0
      %6578 = vmatprep.subr.bf16.mxu0 0
      %6579 = vmatpush2.bf16.msra.mxu0 0
      %6580 = vmatprep.mubr.bf16.mxu0 0
      %6581 = vmatmul.mubr.bf16.gmra.mxu0 %v6543
      %v6582 = vpop.f32.mrf.mxu0
      %v6583 = vadd.f32 %v972, %v6582
      %v6584 = vpop.f32.mrf.mxu0
      %v6585 = vpop.f32.mrf.mxu0
      %v6586 = vpop.f32.mrf.mxu0
      %6587 = vdwg.mxu0
      %v6593 = vunpack.c.l.b16 %v788
      %v6594 = vunpack.c.l.b16 %v789
      %v6595 = vunpack.c.l.b16 %v790
      %v6596 = vunpack.c.l.b16 %v791
      %v6597 = vunpack.c.l.b16 %v792
      %v6598 = vpack.c.b16 %v6594, %v6593
      %v6599 = vpack.c.b16 %v6596, %v6595
      %v6600 = vpack.c.b16 %v6597, %v6597
      %v6604 = vsel %vm989, %v292, 0
      %v6607 = vsel %vm993, %v6600, 0
      %6609 = vmatprep.subr.bf16.mxu0 0
      %6610 = vmatpush1.bf16.msra.mxu0 0
      %6611 = vmatprep.subr.bf16.mxu0 0
      %6612 = vmatpush1.bf16.msra.mxu0 0
      %6613 = vmatprep.subr.bf16.mxu0 0
      %6614 = vmatpush1.bf16.msra.mxu0 0
      %6615 = vmatprep.subr.bf16.mxu0 0
      %6616 = vmatpush1.bf16.msra.mxu0 0
      %6617 = vmatprep.subr.bf16.mxu0 0
      %6618 = vmatpush1.bf16.msra.mxu0 0
      %6619 = vmatprep.subr.bf16.mxu0 0
      %6620 = vmatpush1.bf16.msra.mxu0 %v6607
      %6621 = vmatprep.subr.bf16.mxu0 0
      %6622 = vmatpush1.bf16.msra.mxu0 %v6599
      %6623 = vmatprep.subr.bf16.mxu0 0
      %6624 = vmatpush1.bf16.msra.mxu0 %v6598
      %6625 = vmatprep.subr.bf16.mxu0 0
      %6626 = vmatpush2.bf16.msra.mxu0 0
      %6627 = vmatprep.subr.bf16.mxu0 0
      %6628 = vmatpush2.bf16.msra.mxu0 0
      %6629 = vmatprep.subr.bf16.mxu0 0
      %6630 = vmatpush2.bf16.msra.mxu0 0
      %6631 = vmatprep.subr.bf16.mxu0 0
      %6632 = vmatpush2.bf16.msra.mxu0 0
      %6633 = vmatprep.subr.bf16.mxu0 0
      %6634 = vmatpush2.bf16.msra.mxu0 0
      %6635 = vmatprep.subr.bf16.mxu0 0
      %6636 = vmatpush2.bf16.msra.mxu0 0
      %6637 = vmatprep.subr.bf16.mxu0 0
      %6638 = vmatpush2.bf16.msra.mxu0 0
      %6639 = vmatprep.subr.bf16.mxu0 0
      %6640 = vmatpush2.bf16.msra.mxu0 0
      %6641 = vmatprep.mubr.bf16.mxu0 0
      %6642 = vmatmul.mubr.bf16.gmra.mxu0 %v6604
      %v6643 = vpop.f32.mrf.mxu0
      %v6644 = vadd.f32 %v972, %v6643
      %v6645 = vpop.f32.mrf.mxu0
      %v6646 = vpop.f32.mrf.mxu0
      %v6647 = vpop.f32.mrf.mxu0
      %6648 = vdwg.mxu0
      %v6654 = vunpack.c.l.b16 %v793
      %v6655 = vunpack.c.l.b16 %v794
      %v6656 = vunpack.c.l.b16 %v795
      %v6657 = vunpack.c.l.b16 %v796
      %v6658 = vunpack.c.l.b16 %v797
      %v6659 = vpack.c.b16 %v6655, %v6654
      %v6660 = vpack.c.b16 %v6657, %v6656
      %v6661 = vpack.c.b16 %v6658, %v6658
      %v6665 = vsel %vm989, %v293, 0
      %v6668 = vsel %vm993, %v6661, 0
      %6670 = vmatprep.subr.bf16.mxu0 0
      %6671 = vmatpush1.bf16.msra.mxu0 0
      %6672 = vmatprep.subr.bf16.mxu0 0
      %6673 = vmatpush1.bf16.msra.mxu0 0
      %6674 = vmatprep.subr.bf16.mxu0 0
      %6675 = vmatpush1.bf16.msra.mxu0 0
      %6676 = vmatprep.subr.bf16.mxu0 0
      %6677 = vmatpush1.bf16.msra.mxu0 0
      %6678 = vmatprep.subr.bf16.mxu0 0
      %6679 = vmatpush1.bf16.msra.mxu0 0
      %6680 = vmatprep.subr.bf16.mxu0 0
      %6681 = vmatpush1.bf16.msra.mxu0 %v6668
      %6682 = vmatprep.subr.bf16.mxu0 0
      %6683 = vmatpush1.bf16.msra.mxu0 %v6660
      %6684 = vmatprep.subr.bf16.mxu0 0
      %6685 = vmatpush1.bf16.msra.mxu0 %v6659
      %6686 = vmatprep.subr.bf16.mxu0 0
      %6687 = vmatpush2.bf16.msra.mxu0 0
      %6688 = vmatprep.subr.bf16.mxu0 0
      %6689 = vmatpush2.bf16.msra.mxu0 0
      %6690 = vmatprep.subr.bf16.mxu0 0
      %6691 = vmatpush2.bf16.msra.mxu0 0
      %6692 = vmatprep.subr.bf16.mxu0 0
      %6693 = vmatpush2.bf16.msra.mxu0 0
      %6694 = vmatprep.subr.bf16.mxu0 0
      %6695 = vmatpush2.bf16.msra.mxu0 0
      %6696 = vmatprep.subr.bf16.mxu0 0
      %6697 = vmatpush2.bf16.msra.mxu0 0
      %6698 = vmatprep.subr.bf16.mxu0 0
      %6699 = vmatpush2.bf16.msra.mxu0 0
      %6700 = vmatprep.subr.bf16.mxu0 0
      %6701 = vmatpush2.bf16.msra.mxu0 0
      %6702 = vmatprep.mubr.bf16.mxu0 0
      %6703 = vmatmul.mubr.bf16.gmra.mxu0 %v6665
      %v6704 = vpop.f32.mrf.mxu0
      %v6705 = vadd.f32 %v972, %v6704
      %v6706 = vpop.f32.mrf.mxu0
      %v6707 = vpop.f32.mrf.mxu0
      %v6708 = vpop.f32.mrf.mxu0
      %6709 = vdwg.mxu0
      %v6715 = vunpack.c.l.b16 %v798
      %v6716 = vunpack.c.l.b16 %v799
      %v6717 = vunpack.c.l.b16 %v800
      %v6718 = vunpack.c.l.b16 %v801
      %v6719 = vunpack.c.l.b16 %v802
      %v6720 = vpack.c.b16 %v6716, %v6715
      %v6721 = vpack.c.b16 %v6718, %v6717
      %v6722 = vpack.c.b16 %v6719, %v6719
      %v6726 = vsel %vm989, %v294, 0
      %v6729 = vsel %vm993, %v6722, 0
      %6731 = vmatprep.subr.bf16.mxu0 0
      %6732 = vmatpush1.bf16.msra.mxu0 0
      %6733 = vmatprep.subr.bf16.mxu0 0
      %6734 = vmatpush1.bf16.msra.mxu0 0
      %6735 = vmatprep.subr.bf16.mxu0 0
      %6736 = vmatpush1.bf16.msra.mxu0 0
      %6737 = vmatprep.subr.bf16.mxu0 0
      %6738 = vmatpush1.bf16.msra.mxu0 0
      %6739 = vmatprep.subr.bf16.mxu0 0
      %6740 = vmatpush1.bf16.msra.mxu0 0
      %6741 = vmatprep.subr.bf16.mxu0 0
      %6742 = vmatpush1.bf16.msra.mxu0 %v6729
      %6743 = vmatprep.subr.bf16.mxu0 0
      %6744 = vmatpush1.bf16.msra.mxu0 %v6721
      %6745 = vmatprep.subr.bf16.mxu0 0
      %6746 = vmatpush1.bf16.msra.mxu0 %v6720
      %6747 = vmatprep.subr.bf16.mxu0 0
      %6748 = vmatpush2.bf16.msra.mxu0 0
      %6749 = vmatprep.subr.bf16.mxu0 0
      %6750 = vmatpush2.bf16.msra.mxu0 0
      %6751 = vmatprep.subr.bf16.mxu0 0
      %6752 = vmatpush2.bf16.msra.mxu0 0
      %6753 = vmatprep.subr.bf16.mxu0 0
      %6754 = vmatpush2.bf16.msra.mxu0 0
      %6755 = vmatprep.subr.bf16.mxu0 0
      %6756 = vmatpush2.bf16.msra.mxu0 0
      %6757 = vmatprep.subr.bf16.mxu0 0
      %6758 = vmatpush2.bf16.msra.mxu0 0
      %6759 = vmatprep.subr.bf16.mxu0 0
      %6760 = vmatpush2.bf16.msra.mxu0 0
      %6761 = vmatprep.subr.bf16.mxu0 0
      %6762 = vmatpush2.bf16.msra.mxu0 0
      %6763 = vmatprep.mubr.bf16.mxu0 0
      %6764 = vmatmul.mubr.bf16.gmra.mxu0 %v6726
      %v6765 = vpop.f32.mrf.mxu0
      %v6766 = vadd.f32 %v972, %v6765
      %v6767 = vpop.f32.mrf.mxu0
      %v6768 = vpop.f32.mrf.mxu0
      %v6769 = vpop.f32.mrf.mxu0
      %6770 = vdwg.mxu0
      %v6776 = vunpack.c.l.b16 %v803
      %v6777 = vunpack.c.l.b16 %v804
      %v6778 = vunpack.c.l.b16 %v805
      %v6779 = vunpack.c.l.b16 %v806
      %v6780 = vunpack.c.l.b16 %v807
      %v6781 = vpack.c.b16 %v6777, %v6776
      %v6782 = vpack.c.b16 %v6779, %v6778
      %v6783 = vpack.c.b16 %v6780, %v6780
      %v6787 = vsel %vm989, %v295, 0
      %v6790 = vsel %vm993, %v6783, 0
      %6792 = vmatprep.subr.bf16.mxu0 0
      %6793 = vmatpush1.bf16.msra.mxu0 0
      %6794 = vmatprep.subr.bf16.mxu0 0
      %6795 = vmatpush1.bf16.msra.mxu0 0
      %6796 = vmatprep.subr.bf16.mxu0 0
      %6797 = vmatpush1.bf16.msra.mxu0 0
      %6798 = vmatprep.subr.bf16.mxu0 0
      %6799 = vmatpush1.bf16.msra.mxu0 0
      %6800 = vmatprep.subr.bf16.mxu0 0
      %6801 = vmatpush1.bf16.msra.mxu0 0
      %6802 = vmatprep.subr.bf16.mxu0 0
      %6803 = vmatpush1.bf16.msra.mxu0 %v6790
      %6804 = vmatprep.subr.bf16.mxu0 0
      %6805 = vmatpush1.bf16.msra.mxu0 %v6782
      %6806 = vmatprep.subr.bf16.mxu0 0
      %6807 = vmatpush1.bf16.msra.mxu0 %v6781
      %6808 = vmatprep.subr.bf16.mxu0 0
      %6809 = vmatpush2.bf16.msra.mxu0 0
      %6810 = vmatprep.subr.bf16.mxu0 0
      %6811 = vmatpush2.bf16.msra.mxu0 0
      %6812 = vmatprep.subr.bf16.mxu0 0
      %6813 = vmatpush2.bf16.msra.mxu0 0
      %6814 = vmatprep.subr.bf16.mxu0 0
      %6815 = vmatpush2.bf16.msra.mxu0 0
      %6816 = vmatprep.subr.bf16.mxu0 0
      %6817 = vmatpush2.bf16.msra.mxu0 0
      %6818 = vmatprep.subr.bf16.mxu0 0
      %6819 = vmatpush2.bf16.msra.mxu0 0
      %6820 = vmatprep.subr.bf16.mxu0 0
      %6821 = vmatpush2.bf16.msra.mxu0 0
      %6822 = vmatprep.subr.bf16.mxu0 0
      %6823 = vmatpush2.bf16.msra.mxu0 0
      %6824 = vmatprep.mubr.bf16.mxu0 0
      %6825 = vmatmul.mubr.bf16.gmra.mxu0 %v6787
      %v6826 = vpop.f32.mrf.mxu0
      %v6827 = vadd.f32 %v972, %v6826
      %v6828 = vpop.f32.mrf.mxu0
      %v6829 = vpop.f32.mrf.mxu0
      %v6830 = vpop.f32.mrf.mxu0
      %6831 = vdwg.mxu0
      %v6837 = vunpack.c.l.b16 %v808
      %v6838 = vunpack.c.l.b16 %v809
      %v6839 = vunpack.c.l.b16 %v810
      %v6840 = vunpack.c.l.b16 %v811
      %v6841 = vunpack.c.l.b16 %v812
      %v6842 = vpack.c.b16 %v6838, %v6837
      %v6843 = vpack.c.b16 %v6840, %v6839
      %v6844 = vpack.c.b16 %v6841, %v6841
      %v6848 = vsel %vm989, %v296, 0
      %v6851 = vsel %vm993, %v6844, 0
      %6853 = vmatprep.subr.bf16.mxu0 0
      %6854 = vmatpush1.bf16.msra.mxu0 0
      %6855 = vmatprep.subr.bf16.mxu0 0
      %6856 = vmatpush1.bf16.msra.mxu0 0
      %6857 = vmatprep.subr.bf16.mxu0 0
      %6858 = vmatpush1.bf16.msra.mxu0 0
      %6859 = vmatprep.subr.bf16.mxu0 0
      %6860 = vmatpush1.bf16.msra.mxu0 0
      %6861 = vmatprep.subr.bf16.mxu0 0
      %6862 = vmatpush1.bf16.msra.mxu0 0
      %6863 = vmatprep.subr.bf16.mxu0 0
      %6864 = vmatpush1.bf16.msra.mxu0 %v6851
      %6865 = vmatprep.subr.bf16.mxu0 0
      %6866 = vmatpush1.bf16.msra.mxu0 %v6843
      %6867 = vmatprep.subr.bf16.mxu0 0
      %6868 = vmatpush1.bf16.msra.mxu0 %v6842
      %6869 = vmatprep.subr.bf16.mxu0 0
      %6870 = vmatpush2.bf16.msra.mxu0 0
      %6871 = vmatprep.subr.bf16.mxu0 0
      %6872 = vmatpush2.bf16.msra.mxu0 0
      %6873 = vmatprep.subr.bf16.mxu0 0
      %6874 = vmatpush2.bf16.msra.mxu0 0
      %6875 = vmatprep.subr.bf16.mxu0 0
      %6876 = vmatpush2.bf16.msra.mxu0 0
      %6877 = vmatprep.subr.bf16.mxu0 0
      %6878 = vmatpush2.bf16.msra.mxu0 0
      %6879 = vmatprep.subr.bf16.mxu0 0
      %6880 = vmatpush2.bf16.msra.mxu0 0
      %6881 = vmatprep.subr.bf16.mxu0 0
      %6882 = vmatpush2.bf16.msra.mxu0 0
      %6883 = vmatprep.subr.bf16.mxu0 0
      %6884 = vmatpush2.bf16.msra.mxu0 0
      %6885 = vmatprep.mubr.bf16.mxu0 0
      %6886 = vmatmul.mubr.bf16.gmra.mxu0 %v6848
      %v6887 = vpop.f32.mrf.mxu0
      %v6888 = vadd.f32 %v972, %v6887
      %v6889 = vpop.f32.mrf.mxu0
      %v6890 = vpop.f32.mrf.mxu0
      %v6891 = vpop.f32.mrf.mxu0
      %6892 = vdwg.mxu0
      %v6898 = vunpack.c.l.b16 %v813
      %v6899 = vunpack.c.l.b16 %v814
      %v6900 = vunpack.c.l.b16 %v815
      %v6901 = vunpack.c.l.b16 %v816
      %v6902 = vunpack.c.l.b16 %v817
      %v6903 = vpack.c.b16 %v6899, %v6898
      %v6904 = vpack.c.b16 %v6901, %v6900
      %v6905 = vpack.c.b16 %v6902, %v6902
      %v6909 = vsel %vm989, %v297, 0
      %v6912 = vsel %vm993, %v6905, 0
      %6914 = vmatprep.subr.bf16.mxu0 0
      %6915 = vmatpush1.bf16.msra.mxu0 0
      %6916 = vmatprep.subr.bf16.mxu0 0
      %6917 = vmatpush1.bf16.msra.mxu0 0
      %6918 = vmatprep.subr.bf16.mxu0 0
      %6919 = vmatpush1.bf16.msra.mxu0 0
      %6920 = vmatprep.subr.bf16.mxu0 0
      %6921 = vmatpush1.bf16.msra.mxu0 0
      %6922 = vmatprep.subr.bf16.mxu0 0
      %6923 = vmatpush1.bf16.msra.mxu0 0
      %6924 = vmatprep.subr.bf16.mxu0 0
      %6925 = vmatpush1.bf16.msra.mxu0 %v6912
      %6926 = vmatprep.subr.bf16.mxu0 0
      %6927 = vmatpush1.bf16.msra.mxu0 %v6904
      %6928 = vmatprep.subr.bf16.mxu0 0
      %6929 = vmatpush1.bf16.msra.mxu0 %v6903
      %6930 = vmatprep.subr.bf16.mxu0 0
      %6931 = vmatpush2.bf16.msra.mxu0 0
      %6932 = vmatprep.subr.bf16.mxu0 0
      %6933 = vmatpush2.bf16.msra.mxu0 0
      %6934 = vmatprep.subr.bf16.mxu0 0
      %6935 = vmatpush2.bf16.msra.mxu0 0
      %6936 = vmatprep.subr.bf16.mxu0 0
      %6937 = vmatpush2.bf16.msra.mxu0 0
      %6938 = vmatprep.subr.bf16.mxu0 0
      %6939 = vmatpush2.bf16.msra.mxu0 0
      %6940 = vmatprep.subr.bf16.mxu0 0
      %6941 = vmatpush2.bf16.msra.mxu0 0
      %6942 = vmatprep.subr.bf16.mxu0 0
      %6943 = vmatpush2.bf16.msra.mxu0 0
      %6944 = vmatprep.subr.bf16.mxu0 0
      %6945 = vmatpush2.bf16.msra.mxu0 0
      %6946 = vmatprep.mubr.bf16.mxu0 0
      %6947 = vmatmul.mubr.bf16.gmra.mxu0 %v6909
      %v6948 = vpop.f32.mrf.mxu0
      %v6949 = vadd.f32 %v972, %v6948
      %v6950 = vpop.f32.mrf.mxu0
      %v6951 = vpop.f32.mrf.mxu0
      %v6952 = vpop.f32.mrf.mxu0
      %6953 = vdwg.mxu0
      %v6959 = vunpack.c.l.b16 %v818
      %v6960 = vunpack.c.l.b16 %v819
      %v6961 = vunpack.c.l.b16 %v820
      %v6962 = vunpack.c.l.b16 %v821
      %v6963 = vunpack.c.l.b16 %v822
      %v6964 = vpack.c.b16 %v6960, %v6959
      %v6965 = vpack.c.b16 %v6962, %v6961
      %v6966 = vpack.c.b16 %v6963, %v6963
      %v6970 = vsel %vm989, %v298, 0
      %v6973 = vsel %vm993, %v6966, 0
      %6975 = vmatprep.subr.bf16.mxu0 0
      %6976 = vmatpush1.bf16.msra.mxu0 0
      %6977 = vmatprep.subr.bf16.mxu0 0
      %6978 = vmatpush1.bf16.msra.mxu0 0
      %6979 = vmatprep.subr.bf16.mxu0 0
      %6980 = vmatpush1.bf16.msra.mxu0 0
      %6981 = vmatprep.subr.bf16.mxu0 0
      %6982 = vmatpush1.bf16.msra.mxu0 0
      %6983 = vmatprep.subr.bf16.mxu0 0
      %6984 = vmatpush1.bf16.msra.mxu0 0
      %6985 = vmatprep.subr.bf16.mxu0 0
      %6986 = vmatpush1.bf16.msra.mxu0 %v6973
      %6987 = vmatprep.subr.bf16.mxu0 0
      %6988 = vmatpush1.bf16.msra.mxu0 %v6965
      %6989 = vmatprep.subr.bf16.mxu0 0
      %6990 = vmatpush1.bf16.msra.mxu0 %v6964
      %6991 = vmatprep.subr.bf16.mxu0 0
      %6992 = vmatpush2.bf16.msra.mxu0 0
      %6993 = vmatprep.subr.bf16.mxu0 0
      %6994 = vmatpush2.bf16.msra.mxu0 0
      %6995 = vmatprep.subr.bf16.mxu0 0
      %6996 = vmatpush2.bf16.msra.mxu0 0
      %6997 = vmatprep.subr.bf16.mxu0 0
      %6998 = vmatpush2.bf16.msra.mxu0 0
      %6999 = vmatprep.subr.bf16.mxu0 0
      %7000 = vmatpush2.bf16.msra.mxu0 0
      %7001 = vmatprep.subr.bf16.mxu0 0
      %7002 = vmatpush2.bf16.msra.mxu0 0
      %7003 = vmatprep.subr.bf16.mxu0 0
      %7004 = vmatpush2.bf16.msra.mxu0 0
      %7005 = vmatprep.subr.bf16.mxu0 0
      %7006 = vmatpush2.bf16.msra.mxu0 0
      %7007 = vmatprep.mubr.bf16.mxu0 0
      %7008 = vmatmul.mubr.bf16.gmra.mxu0 %v6970
      %v7009 = vpop.f32.mrf.mxu0
      %v7010 = vadd.f32 %v972, %v7009
      %v7011 = vpop.f32.mrf.mxu0
      %v7012 = vpop.f32.mrf.mxu0
      %v7013 = vpop.f32.mrf.mxu0
      %7014 = vdwg.mxu0
      %v7020 = vunpack.c.l.b16 %v823
      %v7021 = vunpack.c.l.b16 %v824
      %v7022 = vunpack.c.l.b16 %v825
      %v7023 = vunpack.c.l.b16 %v826
      %v7024 = vunpack.c.l.b16 %v827
      %v7025 = vpack.c.b16 %v7021, %v7020
      %v7026 = vpack.c.b16 %v7023, %v7022
      %v7027 = vpack.c.b16 %v7024, %v7024
      %v7031 = vsel %vm989, %v299, 0
      %v7034 = vsel %vm993, %v7027, 0
      %7036 = vmatprep.subr.bf16.mxu0 0
      %7037 = vmatpush1.bf16.msra.mxu0 0
      %7038 = vmatprep.subr.bf16.mxu0 0
      %7039 = vmatpush1.bf16.msra.mxu0 0
      %7040 = vmatprep.subr.bf16.mxu0 0
      %7041 = vmatpush1.bf16.msra.mxu0 0
      %7042 = vmatprep.subr.bf16.mxu0 0
      %7043 = vmatpush1.bf16.msra.mxu0 0
      %7044 = vmatprep.subr.bf16.mxu0 0
      %7045 = vmatpush1.bf16.msra.mxu0 0
      %7046 = vmatprep.subr.bf16.mxu0 0
      %7047 = vmatpush1.bf16.msra.mxu0 %v7034
      %7048 = vmatprep.subr.bf16.mxu0 0
      %7049 = vmatpush1.bf16.msra.mxu0 %v7026
      %7050 = vmatprep.subr.bf16.mxu0 0
      %7051 = vmatpush1.bf16.msra.mxu0 %v7025
      %7052 = vmatprep.subr.bf16.mxu0 0
      %7053 = vmatpush2.bf16.msra.mxu0 0
      %7054 = vmatprep.subr.bf16.mxu0 0
      %7055 = vmatpush2.bf16.msra.mxu0 0
      %7056 = vmatprep.subr.bf16.mxu0 0
      %7057 = vmatpush2.bf16.msra.mxu0 0
      %7058 = vmatprep.subr.bf16.mxu0 0
      %7059 = vmatpush2.bf16.msra.mxu0 0
      %7060 = vmatprep.subr.bf16.mxu0 0
      %7061 = vmatpush2.bf16.msra.mxu0 0
      %7062 = vmatprep.subr.bf16.mxu0 0
      %7063 = vmatpush2.bf16.msra.mxu0 0
      %7064 = vmatprep.subr.bf16.mxu0 0
      %7065 = vmatpush2.bf16.msra.mxu0 0
      %7066 = vmatprep.subr.bf16.mxu0 0
      %7067 = vmatpush2.bf16.msra.mxu0 0
      %7068 = vmatprep.mubr.bf16.mxu0 0
      %7069 = vmatmul.mubr.bf16.gmra.mxu0 %v7031
      %v7070 = vpop.f32.mrf.mxu0
      %v7071 = vadd.f32 %v972, %v7070
      %v7072 = vpop.f32.mrf.mxu0
      %v7073 = vpop.f32.mrf.mxu0
      %v7074 = vpop.f32.mrf.mxu0
      %7075 = vdwg.mxu0
      %v7081 = vunpack.c.l.b16 %v828
      %v7082 = vunpack.c.l.b16 %v829
      %v7083 = vunpack.c.l.b16 %v830
      %v7084 = vunpack.c.l.b16 %v831
      %v7085 = vunpack.c.l.b16 %v832
      %v7086 = vpack.c.b16 %v7082, %v7081
      %v7087 = vpack.c.b16 %v7084, %v7083
      %v7088 = vpack.c.b16 %v7085, %v7085
      %v7092 = vsel %vm989, %v300, 0
      %v7095 = vsel %vm993, %v7088, 0
      %7097 = vmatprep.subr.bf16.mxu0 0
      %7098 = vmatpush1.bf16.msra.mxu0 0
      %7099 = vmatprep.subr.bf16.mxu0 0
      %7100 = vmatpush1.bf16.msra.mxu0 0
      %7101 = vmatprep.subr.bf16.mxu0 0
      %7102 = vmatpush1.bf16.msra.mxu0 0
      %7103 = vmatprep.subr.bf16.mxu0 0
      %7104 = vmatpush1.bf16.msra.mxu0 0
      %7105 = vmatprep.subr.bf16.mxu0 0
      %7106 = vmatpush1.bf16.msra.mxu0 0
      %7107 = vmatprep.subr.bf16.mxu0 0
      %7108 = vmatpush1.bf16.msra.mxu0 %v7095
      %7109 = vmatprep.subr.bf16.mxu0 0
      %7110 = vmatpush1.bf16.msra.mxu0 %v7087
      %7111 = vmatprep.subr.bf16.mxu0 0
      %7112 = vmatpush1.bf16.msra.mxu0 %v7086
      %7113 = vmatprep.subr.bf16.mxu0 0
      %7114 = vmatpush2.bf16.msra.mxu0 0
      %7115 = vmatprep.subr.bf16.mxu0 0
      %7116 = vmatpush2.bf16.msra.mxu0 0
      %7117 = vmatprep.subr.bf16.mxu0 0
      %7118 = vmatpush2.bf16.msra.mxu0 0
      %7119 = vmatprep.subr.bf16.mxu0 0
      %7120 = vmatpush2.bf16.msra.mxu0 0
      %7121 = vmatprep.subr.bf16.mxu0 0
      %7122 = vmatpush2.bf16.msra.mxu0 0
      %7123 = vmatprep.subr.bf16.mxu0 0
      %7124 = vmatpush2.bf16.msra.mxu0 0
      %7125 = vmatprep.subr.bf16.mxu0 0
      %7126 = vmatpush2.bf16.msra.mxu0 0
      %7127 = vmatprep.subr.bf16.mxu0 0
      %7128 = vmatpush2.bf16.msra.mxu0 0
      %7129 = vmatprep.mubr.bf16.mxu0 0
      %7130 = vmatmul.mubr.bf16.gmra.mxu0 %v7092
      %v7131 = vpop.f32.mrf.mxu0
      %v7132 = vadd.f32 %v972, %v7131
      %v7133 = vpop.f32.mrf.mxu0
      %v7134 = vpop.f32.mrf.mxu0
      %v7135 = vpop.f32.mrf.mxu0
      %7136 = vdwg.mxu0
      %v7142 = vunpack.c.l.b16 %v833
      %v7143 = vunpack.c.l.b16 %v834
      %v7144 = vunpack.c.l.b16 %v835
      %v7145 = vunpack.c.l.b16 %v836
      %v7146 = vunpack.c.l.b16 %v837
      %v7147 = vpack.c.b16 %v7143, %v7142
      %v7148 = vpack.c.b16 %v7145, %v7144
      %v7149 = vpack.c.b16 %v7146, %v7146
      %v7153 = vsel %vm989, %v301, 0
      %v7156 = vsel %vm993, %v7149, 0
      %7158 = vmatprep.subr.bf16.mxu0 0
      %7159 = vmatpush1.bf16.msra.mxu0 0
      %7160 = vmatprep.subr.bf16.mxu0 0
      %7161 = vmatpush1.bf16.msra.mxu0 0
      %7162 = vmatprep.subr.bf16.mxu0 0
      %7163 = vmatpush1.bf16.msra.mxu0 0
      %7164 = vmatprep.subr.bf16.mxu0 0
      %7165 = vmatpush1.bf16.msra.mxu0 0
      %7166 = vmatprep.subr.bf16.mxu0 0
      %7167 = vmatpush1.bf16.msra.mxu0 0
      %7168 = vmatprep.subr.bf16.mxu0 0
      %7169 = vmatpush1.bf16.msra.mxu0 %v7156
      %7170 = vmatprep.subr.bf16.mxu0 0
      %7171 = vmatpush1.bf16.msra.mxu0 %v7148
      %7172 = vmatprep.subr.bf16.mxu0 0
      %7173 = vmatpush1.bf16.msra.mxu0 %v7147
      %7174 = vmatprep.subr.bf16.mxu0 0
      %7175 = vmatpush2.bf16.msra.mxu0 0
      %7176 = vmatprep.subr.bf16.mxu0 0
      %7177 = vmatpush2.bf16.msra.mxu0 0
      %7178 = vmatprep.subr.bf16.mxu0 0
      %7179 = vmatpush2.bf16.msra.mxu0 0
      %7180 = vmatprep.subr.bf16.mxu0 0
      %7181 = vmatpush2.bf16.msra.mxu0 0
      %7182 = vmatprep.subr.bf16.mxu0 0
      %7183 = vmatpush2.bf16.msra.mxu0 0
      %7184 = vmatprep.subr.bf16.mxu0 0
      %7185 = vmatpush2.bf16.msra.mxu0 0
      %7186 = vmatprep.subr.bf16.mxu0 0
      %7187 = vmatpush2.bf16.msra.mxu0 0
      %7188 = vmatprep.subr.bf16.mxu0 0
      %7189 = vmatpush2.bf16.msra.mxu0 0
      %7190 = vmatprep.mubr.bf16.mxu0 0
      %7191 = vmatmul.mubr.bf16.gmra.mxu0 %v7153
      %v7192 = vpop.f32.mrf.mxu0
      %v7193 = vadd.f32 %v972, %v7192
      %v7194 = vpop.f32.mrf.mxu0
      %v7195 = vpop.f32.mrf.mxu0
      %v7196 = vpop.f32.mrf.mxu0
      %7197 = vdwg.mxu0
      %v7203 = vunpack.c.l.b16 %v838
      %v7204 = vunpack.c.l.b16 %v839
      %v7205 = vunpack.c.l.b16 %v840
      %v7206 = vunpack.c.l.b16 %v841
      %v7207 = vunpack.c.l.b16 %v842
      %v7208 = vpack.c.b16 %v7204, %v7203
      %v7209 = vpack.c.b16 %v7206, %v7205
      %v7210 = vpack.c.b16 %v7207, %v7207
      %v7214 = vsel %vm989, %v302, 0
      %v7217 = vsel %vm993, %v7210, 0
      %7219 = vmatprep.subr.bf16.mxu0 0
      %7220 = vmatpush1.bf16.msra.mxu0 0
      %7221 = vmatprep.subr.bf16.mxu0 0
      %7222 = vmatpush1.bf16.msra.mxu0 0
      %7223 = vmatprep.subr.bf16.mxu0 0
      %7224 = vmatpush1.bf16.msra.mxu0 0
      %7225 = vmatprep.subr.bf16.mxu0 0
      %7226 = vmatpush1.bf16.msra.mxu0 0
      %7227 = vmatprep.subr.bf16.mxu0 0
      %7228 = vmatpush1.bf16.msra.mxu0 0
      %7229 = vmatprep.subr.bf16.mxu0 0
      %7230 = vmatpush1.bf16.msra.mxu0 %v7217
      %7231 = vmatprep.subr.bf16.mxu0 0
      %7232 = vmatpush1.bf16.msra.mxu0 %v7209
      %7233 = vmatprep.subr.bf16.mxu0 0
      %7234 = vmatpush1.bf16.msra.mxu0 %v7208
      %7235 = vmatprep.subr.bf16.mxu0 0
      %7236 = vmatpush2.bf16.msra.mxu0 0
      %7237 = vmatprep.subr.bf16.mxu0 0
      %7238 = vmatpush2.bf16.msra.mxu0 0
      %7239 = vmatprep.subr.bf16.mxu0 0
      %7240 = vmatpush2.bf16.msra.mxu0 0
      %7241 = vmatprep.subr.bf16.mxu0 0
      %7242 = vmatpush2.bf16.msra.mxu0 0
      %7243 = vmatprep.subr.bf16.mxu0 0
      %7244 = vmatpush2.bf16.msra.mxu0 0
      %7245 = vmatprep.subr.bf16.mxu0 0
      %7246 = vmatpush2.bf16.msra.mxu0 0
      %7247 = vmatprep.subr.bf16.mxu0 0
      %7248 = vmatpush2.bf16.msra.mxu0 0
      %7249 = vmatprep.subr.bf16.mxu0 0
      %7250 = vmatpush2.bf16.msra.mxu0 0
      %7251 = vmatprep.mubr.bf16.mxu0 0
      %7252 = vmatmul.mubr.bf16.gmra.mxu0 %v7214
      %v7253 = vpop.f32.mrf.mxu0
      %v7254 = vadd.f32 %v972, %v7253
      %v7255 = vpop.f32.mrf.mxu0
      %v7256 = vpop.f32.mrf.mxu0
      %v7257 = vpop.f32.mrf.mxu0
      %7258 = vdwg.mxu0
      %v7264 = vunpack.c.l.b16 %v843
      %v7265 = vunpack.c.l.b16 %v844
      %v7266 = vunpack.c.l.b16 %v845
      %v7267 = vunpack.c.l.b16 %v846
      %v7268 = vunpack.c.l.b16 %v847
      %v7269 = vpack.c.b16 %v7265, %v7264
      %v7270 = vpack.c.b16 %v7267, %v7266
      %v7271 = vpack.c.b16 %v7268, %v7268
      %v7275 = vsel %vm989, %v303, 0
      %v7278 = vsel %vm993, %v7271, 0
      %7280 = vmatprep.subr.bf16.mxu0 0
      %7281 = vmatpush1.bf16.msra.mxu0 0
      %7282 = vmatprep.subr.bf16.mxu0 0
      %7283 = vmatpush1.bf16.msra.mxu0 0
      %7284 = vmatprep.subr.bf16.mxu0 0
      %7285 = vmatpush1.bf16.msra.mxu0 0
      %7286 = vmatprep.subr.bf16.mxu0 0
      %7287 = vmatpush1.bf16.msra.mxu0 0
      %7288 = vmatprep.subr.bf16.mxu0 0
      %7289 = vmatpush1.bf16.msra.mxu0 0
      %7290 = vmatprep.subr.bf16.mxu0 0
      %7291 = vmatpush1.bf16.msra.mxu0 %v7278
      %7292 = vmatprep.subr.bf16.mxu0 0
      %7293 = vmatpush1.bf16.msra.mxu0 %v7270
      %7294 = vmatprep.subr.bf16.mxu0 0
      %7295 = vmatpush1.bf16.msra.mxu0 %v7269
      %7296 = vmatprep.subr.bf16.mxu0 0
      %7297 = vmatpush2.bf16.msra.mxu0 0
      %7298 = vmatprep.subr.bf16.mxu0 0
      %7299 = vmatpush2.bf16.msra.mxu0 0
      %7300 = vmatprep.subr.bf16.mxu0 0
      %7301 = vmatpush2.bf16.msra.mxu0 0
      %7302 = vmatprep.subr.bf16.mxu0 0
      %7303 = vmatpush2.bf16.msra.mxu0 0
      %7304 = vmatprep.subr.bf16.mxu0 0
      %7305 = vmatpush2.bf16.msra.mxu0 0
      %7306 = vmatprep.subr.bf16.mxu0 0
      %7307 = vmatpush2.bf16.msra.mxu0 0
      %7308 = vmatprep.subr.bf16.mxu0 0
      %7309 = vmatpush2.bf16.msra.mxu0 0
      %7310 = vmatprep.subr.bf16.mxu0 0
      %7311 = vmatpush2.bf16.msra.mxu0 0
      %7312 = vmatprep.mubr.bf16.mxu0 0
      %7313 = vmatmul.mubr.bf16.gmra.mxu0 %v7275
      %v7314 = vpop.f32.mrf.mxu0
      %v7315 = vadd.f32 %v972, %v7314
      %v7316 = vpop.f32.mrf.mxu0
      %v7317 = vpop.f32.mrf.mxu0
      %v7318 = vpop.f32.mrf.mxu0
      %7319 = vdwg.mxu0
      %v7325 = vunpack.c.l.b16 %v848
      %v7326 = vunpack.c.l.b16 %v849
      %v7327 = vunpack.c.l.b16 %v850
      %v7328 = vunpack.c.l.b16 %v851
      %v7329 = vunpack.c.l.b16 %v852
      %v7330 = vpack.c.b16 %v7326, %v7325
      %v7331 = vpack.c.b16 %v7328, %v7327
      %v7332 = vpack.c.b16 %v7329, %v7329
      %v7336 = vsel %vm989, %v304, 0
      %v7339 = vsel %vm993, %v7332, 0
      %7341 = vmatprep.subr.bf16.mxu0 0
      %7342 = vmatpush1.bf16.msra.mxu0 0
      %7343 = vmatprep.subr.bf16.mxu0 0
      %7344 = vmatpush1.bf16.msra.mxu0 0
      %7345 = vmatprep.subr.bf16.mxu0 0
      %7346 = vmatpush1.bf16.msra.mxu0 0
      %7347 = vmatprep.subr.bf16.mxu0 0
      %7348 = vmatpush1.bf16.msra.mxu0 0
      %7349 = vmatprep.subr.bf16.mxu0 0
      %7350 = vmatpush1.bf16.msra.mxu0 0
      %7351 = vmatprep.subr.bf16.mxu0 0
      %7352 = vmatpush1.bf16.msra.mxu0 %v7339
      %7353 = vmatprep.subr.bf16.mxu0 0
      %7354 = vmatpush1.bf16.msra.mxu0 %v7331
      %7355 = vmatprep.subr.bf16.mxu0 0
      %7356 = vmatpush1.bf16.msra.mxu0 %v7330
      %7357 = vmatprep.subr.bf16.mxu0 0
      %7358 = vmatpush2.bf16.msra.mxu0 0
      %7359 = vmatprep.subr.bf16.mxu0 0
      %7360 = vmatpush2.bf16.msra.mxu0 0
      %7361 = vmatprep.subr.bf16.mxu0 0
      %7362 = vmatpush2.bf16.msra.mxu0 0
      %7363 = vmatprep.subr.bf16.mxu0 0
      %7364 = vmatpush2.bf16.msra.mxu0 0
      %7365 = vmatprep.subr.bf16.mxu0 0
      %7366 = vmatpush2.bf16.msra.mxu0 0
      %7367 = vmatprep.subr.bf16.mxu0 0
      %7368 = vmatpush2.bf16.msra.mxu0 0
      %7369 = vmatprep.subr.bf16.mxu0 0
      %7370 = vmatpush2.bf16.msra.mxu0 0
      %7371 = vmatprep.subr.bf16.mxu0 0
      %7372 = vmatpush2.bf16.msra.mxu0 0
      %7373 = vmatprep.mubr.bf16.mxu0 0
      %7374 = vmatmul.mubr.bf16.gmra.mxu0 %v7336
      %v7375 = vpop.f32.mrf.mxu0
      %v7376 = vadd.f32 %v972, %v7375
      %v7377 = vpop.f32.mrf.mxu0
      %v7378 = vpop.f32.mrf.mxu0
      %v7379 = vpop.f32.mrf.mxu0
      %7380 = vdwg.mxu0
      %v7386 = vunpack.c.l.b16 %v853
      %v7387 = vunpack.c.l.b16 %v854
      %v7388 = vunpack.c.l.b16 %v855
      %v7389 = vunpack.c.l.b16 %v856
      %v7390 = vunpack.c.l.b16 %v857
      %v7391 = vpack.c.b16 %v7387, %v7386
      %v7392 = vpack.c.b16 %v7389, %v7388
      %v7393 = vpack.c.b16 %v7390, %v7390
      %v7397 = vsel %vm989, %v305, 0
      %v7400 = vsel %vm993, %v7393, 0
      %7402 = vmatprep.subr.bf16.mxu0 0
      %7403 = vmatpush1.bf16.msra.mxu0 0
      %7404 = vmatprep.subr.bf16.mxu0 0
      %7405 = vmatpush1.bf16.msra.mxu0 0
      %7406 = vmatprep.subr.bf16.mxu0 0
      %7407 = vmatpush1.bf16.msra.mxu0 0
      %7408 = vmatprep.subr.bf16.mxu0 0
      %7409 = vmatpush1.bf16.msra.mxu0 0
      %7410 = vmatprep.subr.bf16.mxu0 0
      %7411 = vmatpush1.bf16.msra.mxu0 0
      %7412 = vmatprep.subr.bf16.mxu0 0
      %7413 = vmatpush1.bf16.msra.mxu0 %v7400
      %7414 = vmatprep.subr.bf16.mxu0 0
      %7415 = vmatpush1.bf16.msra.mxu0 %v7392
      %7416 = vmatprep.subr.bf16.mxu0 0
      %7417 = vmatpush1.bf16.msra.mxu0 %v7391
      %7418 = vmatprep.subr.bf16.mxu0 0
      %7419 = vmatpush2.bf16.msra.mxu0 0
      %7420 = vmatprep.subr.bf16.mxu0 0
      %7421 = vmatpush2.bf16.msra.mxu0 0
      %7422 = vmatprep.subr.bf16.mxu0 0
      %7423 = vmatpush2.bf16.msra.mxu0 0
      %7424 = vmatprep.subr.bf16.mxu0 0
      %7425 = vmatpush2.bf16.msra.mxu0 0
      %7426 = vmatprep.subr.bf16.mxu0 0
      %7427 = vmatpush2.bf16.msra.mxu0 0
      %7428 = vmatprep.subr.bf16.mxu0 0
      %7429 = vmatpush2.bf16.msra.mxu0 0
      %7430 = vmatprep.subr.bf16.mxu0 0
      %7431 = vmatpush2.bf16.msra.mxu0 0
      %7432 = vmatprep.subr.bf16.mxu0 0
      %7433 = vmatpush2.bf16.msra.mxu0 0
      %7434 = vmatprep.mubr.bf16.mxu0 0
      %7435 = vmatmul.mubr.bf16.gmra.mxu0 %v7397
      %v7436 = vpop.f32.mrf.mxu0
      %v7437 = vadd.f32 %v972, %v7436
      %v7438 = vpop.f32.mrf.mxu0
      %v7439 = vpop.f32.mrf.mxu0
      %v7440 = vpop.f32.mrf.mxu0
      %7441 = vdwg.mxu0
      %v7447 = vunpack.c.l.b16 %v858
      %v7448 = vunpack.c.l.b16 %v859
      %v7449 = vunpack.c.l.b16 %v860
      %v7450 = vunpack.c.l.b16 %v861
      %v7451 = vunpack.c.l.b16 %v862
      %v7452 = vpack.c.b16 %v7448, %v7447
      %v7453 = vpack.c.b16 %v7450, %v7449
      %v7454 = vpack.c.b16 %v7451, %v7451
      %v7458 = vsel %vm989, %v306, 0
      %v7461 = vsel %vm993, %v7454, 0
      %7463 = vmatprep.subr.bf16.mxu0 0
      %7464 = vmatpush1.bf16.msra.mxu0 0
      %7465 = vmatprep.subr.bf16.mxu0 0
      %7466 = vmatpush1.bf16.msra.mxu0 0
      %7467 = vmatprep.subr.bf16.mxu0 0
      %7468 = vmatpush1.bf16.msra.mxu0 0
      %7469 = vmatprep.subr.bf16.mxu0 0
      %7470 = vmatpush1.bf16.msra.mxu0 0
      %7471 = vmatprep.subr.bf16.mxu0 0
      %7472 = vmatpush1.bf16.msra.mxu0 0
      %7473 = vmatprep.subr.bf16.mxu0 0
      %7474 = vmatpush1.bf16.msra.mxu0 %v7461
      %7475 = vmatprep.subr.bf16.mxu0 0
      %7476 = vmatpush1.bf16.msra.mxu0 %v7453
      %7477 = vmatprep.subr.bf16.mxu0 0
      %7478 = vmatpush1.bf16.msra.mxu0 %v7452
      %7479 = vmatprep.subr.bf16.mxu0 0
      %7480 = vmatpush2.bf16.msra.mxu0 0
      %7481 = vmatprep.subr.bf16.mxu0 0
      %7482 = vmatpush2.bf16.msra.mxu0 0
      %7483 = vmatprep.subr.bf16.mxu0 0
      %7484 = vmatpush2.bf16.msra.mxu0 0
      %7485 = vmatprep.subr.bf16.mxu0 0
      %7486 = vmatpush2.bf16.msra.mxu0 0
      %7487 = vmatprep.subr.bf16.mxu0 0
      %7488 = vmatpush2.bf16.msra.mxu0 0
      %7489 = vmatprep.subr.bf16.mxu0 0
      %7490 = vmatpush2.bf16.msra.mxu0 0
      %7491 = vmatprep.subr.bf16.mxu0 0
      %7492 = vmatpush2.bf16.msra.mxu0 0
      %7493 = vmatprep.subr.bf16.mxu0 0
      %7494 = vmatpush2.bf16.msra.mxu0 0
      %7495 = vmatprep.mubr.bf16.mxu0 0
      %7496 = vmatmul.mubr.bf16.gmra.mxu0 %v7458
      %v7497 = vpop.f32.mrf.mxu0
      %v7498 = vadd.f32 %v972, %v7497
      %v7499 = vpop.f32.mrf.mxu0
      %v7500 = vpop.f32.mrf.mxu0
      %v7501 = vpop.f32.mrf.mxu0
      %7502 = vdwg.mxu0
      %v7508 = vunpack.c.l.b16 %v863
      %v7509 = vunpack.c.l.b16 %v864
      %v7510 = vunpack.c.l.b16 %v865
      %v7511 = vunpack.c.l.b16 %v866
      %v7512 = vunpack.c.l.b16 %v867
      %v7513 = vpack.c.b16 %v7509, %v7508
      %v7514 = vpack.c.b16 %v7511, %v7510
      %v7515 = vpack.c.b16 %v7512, %v7512
      %v7519 = vsel %vm989, %v307, 0
      %v7522 = vsel %vm993, %v7515, 0
      %7524 = vmatprep.subr.bf16.mxu0 0
      %7525 = vmatpush1.bf16.msra.mxu0 0
      %7526 = vmatprep.subr.bf16.mxu0 0
      %7527 = vmatpush1.bf16.msra.mxu0 0
      %7528 = vmatprep.subr.bf16.mxu0 0
      %7529 = vmatpush1.bf16.msra.mxu0 0
      %7530 = vmatprep.subr.bf16.mxu0 0
      %7531 = vmatpush1.bf16.msra.mxu0 0
      %7532 = vmatprep.subr.bf16.mxu0 0
      %7533 = vmatpush1.bf16.msra.mxu0 0
      %7534 = vmatprep.subr.bf16.mxu0 0
      %7535 = vmatpush1.bf16.msra.mxu0 %v7522
      %7536 = vmatprep.subr.bf16.mxu0 0
      %7537 = vmatpush1.bf16.msra.mxu0 %v7514
      %7538 = vmatprep.subr.bf16.mxu0 0
      %7539 = vmatpush1.bf16.msra.mxu0 %v7513
      %7540 = vmatprep.subr.bf16.mxu0 0
      %7541 = vmatpush2.bf16.msra.mxu0 0
      %7542 = vmatprep.subr.bf16.mxu0 0
      %7543 = vmatpush2.bf16.msra.mxu0 0
      %7544 = vmatprep.subr.bf16.mxu0 0
      %7545 = vmatpush2.bf16.msra.mxu0 0
      %7546 = vmatprep.subr.bf16.mxu0 0
      %7547 = vmatpush2.bf16.msra.mxu0 0
      %7548 = vmatprep.subr.bf16.mxu0 0
      %7549 = vmatpush2.bf16.msra.mxu0 0
      %7550 = vmatprep.subr.bf16.mxu0 0
      %7551 = vmatpush2.bf16.msra.mxu0 0
      %7552 = vmatprep.subr.bf16.mxu0 0
      %7553 = vmatpush2.bf16.msra.mxu0 0
      %7554 = vmatprep.subr.bf16.mxu0 0
      %7555 = vmatpush2.bf16.msra.mxu0 0
      %7556 = vmatprep.mubr.bf16.mxu0 0
      %7557 = vmatmul.mubr.bf16.gmra.mxu0 %v7519
      %v7558 = vpop.f32.mrf.mxu0
      %v7559 = vadd.f32 %v972, %v7558
      %v7560 = vpop.f32.mrf.mxu0
      %v7561 = vpop.f32.mrf.mxu0
      %v7562 = vpop.f32.mrf.mxu0
      %7563 = vdwg.mxu0
      %v7569 = vunpack.c.l.b16 %v868
      %v7570 = vunpack.c.l.b16 %v869
      %v7571 = vunpack.c.l.b16 %v870
      %v7572 = vunpack.c.l.b16 %v871
      %v7573 = vunpack.c.l.b16 %v872
      %v7574 = vpack.c.b16 %v7570, %v7569
      %v7575 = vpack.c.b16 %v7572, %v7571
      %v7576 = vpack.c.b16 %v7573, %v7573
      %v7580 = vsel %vm989, %v308, 0
      %v7583 = vsel %vm993, %v7576, 0
      %7585 = vmatprep.subr.bf16.mxu0 0
      %7586 = vmatpush1.bf16.msra.mxu0 0
      %7587 = vmatprep.subr.bf16.mxu0 0
      %7588 = vmatpush1.bf16.msra.mxu0 0
      %7589 = vmatprep.subr.bf16.mxu0 0
      %7590 = vmatpush1.bf16.msra.mxu0 0
      %7591 = vmatprep.subr.bf16.mxu0 0
      %7592 = vmatpush1.bf16.msra.mxu0 0
      %7593 = vmatprep.subr.bf16.mxu0 0
      %7594 = vmatpush1.bf16.msra.mxu0 0
      %7595 = vmatprep.subr.bf16.mxu0 0
      %7596 = vmatpush1.bf16.msra.mxu0 %v7583
      %7597 = vmatprep.subr.bf16.mxu0 0
      %7598 = vmatpush1.bf16.msra.mxu0 %v7575
      %7599 = vmatprep.subr.bf16.mxu0 0
      %7600 = vmatpush1.bf16.msra.mxu0 %v7574
      %7601 = vmatprep.subr.bf16.mxu0 0
      %7602 = vmatpush2.bf16.msra.mxu0 0
      %7603 = vmatprep.subr.bf16.mxu0 0
      %7604 = vmatpush2.bf16.msra.mxu0 0
      %7605 = vmatprep.subr.bf16.mxu0 0
      %7606 = vmatpush2.bf16.msra.mxu0 0
      %7607 = vmatprep.subr.bf16.mxu0 0
      %7608 = vmatpush2.bf16.msra.mxu0 0
      %7609 = vmatprep.subr.bf16.mxu0 0
      %7610 = vmatpush2.bf16.msra.mxu0 0
      %7611 = vmatprep.subr.bf16.mxu0 0
      %7612 = vmatpush2.bf16.msra.mxu0 0
      %7613 = vmatprep.subr.bf16.mxu0 0
      %7614 = vmatpush2.bf16.msra.mxu0 0
      %7615 = vmatprep.subr.bf16.mxu0 0
      %7616 = vmatpush2.bf16.msra.mxu0 0
      %7617 = vmatprep.mubr.bf16.mxu0 0
      %7618 = vmatmul.mubr.bf16.gmra.mxu0 %v7580
      %v7619 = vpop.f32.mrf.mxu0
      %v7620 = vadd.f32 %v972, %v7619
      %v7621 = vpop.f32.mrf.mxu0
      %v7622 = vpop.f32.mrf.mxu0
      %v7623 = vpop.f32.mrf.mxu0
      %7624 = vdwg.mxu0
      %v7630 = vunpack.c.l.b16 %v873
      %v7631 = vunpack.c.l.b16 %v874
      %v7632 = vunpack.c.l.b16 %v875
      %v7633 = vunpack.c.l.b16 %v876
      %v7634 = vunpack.c.l.b16 %v877
      %v7635 = vpack.c.b16 %v7631, %v7630
      %v7636 = vpack.c.b16 %v7633, %v7632
      %v7637 = vpack.c.b16 %v7634, %v7634
      %v7641 = vsel %vm989, %v309, 0
      %v7644 = vsel %vm993, %v7637, 0
      %7646 = vmatprep.subr.bf16.mxu0 0
      %7647 = vmatpush1.bf16.msra.mxu0 0
      %7648 = vmatprep.subr.bf16.mxu0 0
      %7649 = vmatpush1.bf16.msra.mxu0 0
      %7650 = vmatprep.subr.bf16.mxu0 0
      %7651 = vmatpush1.bf16.msra.mxu0 0
      %7652 = vmatprep.subr.bf16.mxu0 0
      %7653 = vmatpush1.bf16.msra.mxu0 0
      %7654 = vmatprep.subr.bf16.mxu0 0
      %7655 = vmatpush1.bf16.msra.mxu0 0
      %7656 = vmatprep.subr.bf16.mxu0 0
      %7657 = vmatpush1.bf16.msra.mxu0 %v7644
      %7658 = vmatprep.subr.bf16.mxu0 0
      %7659 = vmatpush1.bf16.msra.mxu0 %v7636
      %7660 = vmatprep.subr.bf16.mxu0 0
      %7661 = vmatpush1.bf16.msra.mxu0 %v7635
      %7662 = vmatprep.subr.bf16.mxu0 0
      %7663 = vmatpush2.bf16.msra.mxu0 0
      %7664 = vmatprep.subr.bf16.mxu0 0
      %7665 = vmatpush2.bf16.msra.mxu0 0
      %7666 = vmatprep.subr.bf16.mxu0 0
      %7667 = vmatpush2.bf16.msra.mxu0 0
      %7668 = vmatprep.subr.bf16.mxu0 0
      %7669 = vmatpush2.bf16.msra.mxu0 0
      %7670 = vmatprep.subr.bf16.mxu0 0
      %7671 = vmatpush2.bf16.msra.mxu0 0
      %7672 = vmatprep.subr.bf16.mxu0 0
      %7673 = vmatpush2.bf16.msra.mxu0 0
      %7674 = vmatprep.subr.bf16.mxu0 0
      %7675 = vmatpush2.bf16.msra.mxu0 0
      %7676 = vmatprep.subr.bf16.mxu0 0
      %7677 = vmatpush2.bf16.msra.mxu0 0
      %7678 = vmatprep.mubr.bf16.mxu0 0
      %7679 = vmatmul.mubr.bf16.gmra.mxu0 %v7641
      %v7680 = vpop.f32.mrf.mxu0
      %v7681 = vadd.f32 %v972, %v7680
      %v7682 = vpop.f32.mrf.mxu0
      %v7683 = vpop.f32.mrf.mxu0
      %v7684 = vpop.f32.mrf.mxu0
      %7685 = vdwg.mxu0
      %v7691 = vunpack.c.l.b16 %v878
      %v7692 = vunpack.c.l.b16 %v879
      %v7693 = vunpack.c.l.b16 %v880
      %v7694 = vunpack.c.l.b16 %v881
      %v7695 = vunpack.c.l.b16 %v882
      %v7696 = vpack.c.b16 %v7692, %v7691
      %v7697 = vpack.c.b16 %v7694, %v7693
      %v7698 = vpack.c.b16 %v7695, %v7695
      %v7702 = vsel %vm989, %v310, 0
      %v7705 = vsel %vm993, %v7698, 0
      %7707 = vmatprep.subr.bf16.mxu0 0
      %7708 = vmatpush1.bf16.msra.mxu0 0
      %7709 = vmatprep.subr.bf16.mxu0 0
      %7710 = vmatpush1.bf16.msra.mxu0 0
      %7711 = vmatprep.subr.bf16.mxu0 0
      %7712 = vmatpush1.bf16.msra.mxu0 0
      %7713 = vmatprep.subr.bf16.mxu0 0
      %7714 = vmatpush1.bf16.msra.mxu0 0
      %7715 = vmatprep.subr.bf16.mxu0 0
      %7716 = vmatpush1.bf16.msra.mxu0 0
      %7717 = vmatprep.subr.bf16.mxu0 0
      %7718 = vmatpush1.bf16.msra.mxu0 %v7705
      %7719 = vmatprep.subr.bf16.mxu0 0
      %7720 = vmatpush1.bf16.msra.mxu0 %v7697
      %7721 = vmatprep.subr.bf16.mxu0 0
      %7722 = vmatpush1.bf16.msra.mxu0 %v7696
      %7723 = vmatprep.subr.bf16.mxu0 0
      %7724 = vmatpush2.bf16.msra.mxu0 0
      %7725 = vmatprep.subr.bf16.mxu0 0
      %7726 = vmatpush2.bf16.msra.mxu0 0
      %7727 = vmatprep.subr.bf16.mxu0 0
      %7728 = vmatpush2.bf16.msra.mxu0 0
      %7729 = vmatprep.subr.bf16.mxu0 0
      %7730 = vmatpush2.bf16.msra.mxu0 0
      %7731 = vmatprep.subr.bf16.mxu0 0
      %7732 = vmatpush2.bf16.msra.mxu0 0
      %7733 = vmatprep.subr.bf16.mxu0 0
      %7734 = vmatpush2.bf16.msra.mxu0 0
      %7735 = vmatprep.subr.bf16.mxu0 0
      %7736 = vmatpush2.bf16.msra.mxu0 0
      %7737 = vmatprep.subr.bf16.mxu0 0
      %7738 = vmatpush2.bf16.msra.mxu0 0
      %7739 = vmatprep.mubr.bf16.mxu0 0
      %7740 = vmatmul.mubr.bf16.gmra.mxu0 %v7702
      %v7741 = vpop.f32.mrf.mxu0
      %v7742 = vadd.f32 %v972, %v7741
      %v7743 = vpop.f32.mrf.mxu0
      %v7744 = vpop.f32.mrf.mxu0
      %v7745 = vpop.f32.mrf.mxu0
      %7746 = vdwg.mxu0
      %v7752 = vunpack.c.l.b16 %v883
      %v7753 = vunpack.c.l.b16 %v884
      %v7754 = vunpack.c.l.b16 %v885
      %v7755 = vunpack.c.l.b16 %v886
      %v7756 = vunpack.c.l.b16 %v887
      %v7757 = vpack.c.b16 %v7753, %v7752
      %v7758 = vpack.c.b16 %v7755, %v7754
      %v7759 = vpack.c.b16 %v7756, %v7756
      %v7763 = vsel %vm989, %v311, 0
      %v7766 = vsel %vm993, %v7759, 0
      %7768 = vmatprep.subr.bf16.mxu0 0
      %7769 = vmatpush1.bf16.msra.mxu0 0
      %7770 = vmatprep.subr.bf16.mxu0 0
      %7771 = vmatpush1.bf16.msra.mxu0 0
      %7772 = vmatprep.subr.bf16.mxu0 0
      %7773 = vmatpush1.bf16.msra.mxu0 0
      %7774 = vmatprep.subr.bf16.mxu0 0
      %7775 = vmatpush1.bf16.msra.mxu0 0
      %7776 = vmatprep.subr.bf16.mxu0 0
      %7777 = vmatpush1.bf16.msra.mxu0 0
      %7778 = vmatprep.subr.bf16.mxu0 0
      %7779 = vmatpush1.bf16.msra.mxu0 %v7766
      %7780 = vmatprep.subr.bf16.mxu0 0
      %7781 = vmatpush1.bf16.msra.mxu0 %v7758
      %7782 = vmatprep.subr.bf16.mxu0 0
      %7783 = vmatpush1.bf16.msra.mxu0 %v7757
      %7784 = vmatprep.subr.bf16.mxu0 0
      %7785 = vmatpush2.bf16.msra.mxu0 0
      %7786 = vmatprep.subr.bf16.mxu0 0
      %7787 = vmatpush2.bf16.msra.mxu0 0
      %7788 = vmatprep.subr.bf16.mxu0 0
      %7789 = vmatpush2.bf16.msra.mxu0 0
      %7790 = vmatprep.subr.bf16.mxu0 0
      %7791 = vmatpush2.bf16.msra.mxu0 0
      %7792 = vmatprep.subr.bf16.mxu0 0
      %7793 = vmatpush2.bf16.msra.mxu0 0
      %7794 = vmatprep.subr.bf16.mxu0 0
      %7795 = vmatpush2.bf16.msra.mxu0 0
      %7796 = vmatprep.subr.bf16.mxu0 0
      %7797 = vmatpush2.bf16.msra.mxu0 0
      %7798 = vmatprep.subr.bf16.mxu0 0
      %7799 = vmatpush2.bf16.msra.mxu0 0
      %7800 = vmatprep.mubr.bf16.mxu0 0
      %7801 = vmatmul.mubr.bf16.gmra.mxu0 %v7763
      %v7802 = vpop.f32.mrf.mxu0
      %v7803 = vadd.f32 %v972, %v7802
      %v7804 = vpop.f32.mrf.mxu0
      %v7805 = vpop.f32.mrf.mxu0
      %v7806 = vpop.f32.mrf.mxu0
      %7807 = vdwg.mxu0
      %v7813 = vunpack.c.l.b16 %v888
      %v7814 = vunpack.c.l.b16 %v889
      %v7815 = vunpack.c.l.b16 %v890
      %v7816 = vunpack.c.l.b16 %v891
      %v7817 = vunpack.c.l.b16 %v892
      %v7818 = vpack.c.b16 %v7814, %v7813
      %v7819 = vpack.c.b16 %v7816, %v7815
      %v7820 = vpack.c.b16 %v7817, %v7817
      %v7824 = vsel %vm989, %v312, 0
      %v7827 = vsel %vm993, %v7820, 0
      %7829 = vmatprep.subr.bf16.mxu0 0
      %7830 = vmatpush1.bf16.msra.mxu0 0
      %7831 = vmatprep.subr.bf16.mxu0 0
      %7832 = vmatpush1.bf16.msra.mxu0 0
      %7833 = vmatprep.subr.bf16.mxu0 0
      %7834 = vmatpush1.bf16.msra.mxu0 0
      %7835 = vmatprep.subr.bf16.mxu0 0
      %7836 = vmatpush1.bf16.msra.mxu0 0
      %7837 = vmatprep.subr.bf16.mxu0 0
      %7838 = vmatpush1.bf16.msra.mxu0 0
      %7839 = vmatprep.subr.bf16.mxu0 0
      %7840 = vmatpush1.bf16.msra.mxu0 %v7827
      %7841 = vmatprep.subr.bf16.mxu0 0
      %7842 = vmatpush1.bf16.msra.mxu0 %v7819
      %7843 = vmatprep.subr.bf16.mxu0 0
      %7844 = vmatpush1.bf16.msra.mxu0 %v7818
      %7845 = vmatprep.subr.bf16.mxu0 0
      %7846 = vmatpush2.bf16.msra.mxu0 0
      %7847 = vmatprep.subr.bf16.mxu0 0
      %7848 = vmatpush2.bf16.msra.mxu0 0
      %7849 = vmatprep.subr.bf16.mxu0 0
      %7850 = vmatpush2.bf16.msra.mxu0 0
      %7851 = vmatprep.subr.bf16.mxu0 0
      %7852 = vmatpush2.bf16.msra.mxu0 0
      %7853 = vmatprep.subr.bf16.mxu0 0
      %7854 = vmatpush2.bf16.msra.mxu0 0
      %7855 = vmatprep.subr.bf16.mxu0 0
      %7856 = vmatpush2.bf16.msra.mxu0 0
      %7857 = vmatprep.subr.bf16.mxu0 0
      %7858 = vmatpush2.bf16.msra.mxu0 0
      %7859 = vmatprep.subr.bf16.mxu0 0
      %7860 = vmatpush2.bf16.msra.mxu0 0
      %7861 = vmatprep.mubr.bf16.mxu0 0
      %7862 = vmatmul.mubr.bf16.gmra.mxu0 %v7824
      %v7863 = vpop.f32.mrf.mxu0
      %v7864 = vadd.f32 %v972, %v7863
      %v7865 = vpop.f32.mrf.mxu0
      %v7866 = vpop.f32.mrf.mxu0
      %v7867 = vpop.f32.mrf.mxu0
      %7868 = vdwg.mxu0
      %v7874 = vunpack.c.l.b16 %v893
      %v7875 = vunpack.c.l.b16 %v894
      %v7876 = vunpack.c.l.b16 %v895
      %v7877 = vunpack.c.l.b16 %v896
      %v7878 = vunpack.c.l.b16 %v897
      %v7879 = vpack.c.b16 %v7875, %v7874
      %v7880 = vpack.c.b16 %v7877, %v7876
      %v7881 = vpack.c.b16 %v7878, %v7878
      %v7885 = vsel %vm989, %v313, 0
      %v7888 = vsel %vm993, %v7881, 0
      %7890 = vmatprep.subr.bf16.mxu0 0
      %7891 = vmatpush1.bf16.msra.mxu0 0
      %7892 = vmatprep.subr.bf16.mxu0 0
      %7893 = vmatpush1.bf16.msra.mxu0 0
      %7894 = vmatprep.subr.bf16.mxu0 0
      %7895 = vmatpush1.bf16.msra.mxu0 0
      %7896 = vmatprep.subr.bf16.mxu0 0
      %7897 = vmatpush1.bf16.msra.mxu0 0
      %7898 = vmatprep.subr.bf16.mxu0 0
      %7899 = vmatpush1.bf16.msra.mxu0 0
      %7900 = vmatprep.subr.bf16.mxu0 0
      %7901 = vmatpush1.bf16.msra.mxu0 %v7888
      %7902 = vmatprep.subr.bf16.mxu0 0
      %7903 = vmatpush1.bf16.msra.mxu0 %v7880
      %7904 = vmatprep.subr.bf16.mxu0 0
      %7905 = vmatpush1.bf16.msra.mxu0 %v7879
      %7906 = vmatprep.subr.bf16.mxu0 0
      %7907 = vmatpush2.bf16.msra.mxu0 0
      %7908 = vmatprep.subr.bf16.mxu0 0
      %7909 = vmatpush2.bf16.msra.mxu0 0
      %7910 = vmatprep.subr.bf16.mxu0 0
      %7911 = vmatpush2.bf16.msra.mxu0 0
      %7912 = vmatprep.subr.bf16.mxu0 0
      %7913 = vmatpush2.bf16.msra.mxu0 0
      %7914 = vmatprep.subr.bf16.mxu0 0
      %7915 = vmatpush2.bf16.msra.mxu0 0
      %7916 = vmatprep.subr.bf16.mxu0 0
      %7917 = vmatpush2.bf16.msra.mxu0 0
      %7918 = vmatprep.subr.bf16.mxu0 0
      %7919 = vmatpush2.bf16.msra.mxu0 0
      %7920 = vmatprep.subr.bf16.mxu0 0
      %7921 = vmatpush2.bf16.msra.mxu0 0
      %7922 = vmatprep.mubr.bf16.mxu0 0
      %7923 = vmatmul.mubr.bf16.gmra.mxu0 %v7885
      %v7924 = vpop.f32.mrf.mxu0
      %v7925 = vadd.f32 %v972, %v7924
      %v7926 = vpop.f32.mrf.mxu0
      %v7927 = vpop.f32.mrf.mxu0
      %v7928 = vpop.f32.mrf.mxu0
      %7929 = vdwg.mxu0
      %v7935 = vunpack.c.l.b16 %v898
      %v7936 = vunpack.c.l.b16 %v899
      %v7937 = vunpack.c.l.b16 %v900
      %v7938 = vunpack.c.l.b16 %v901
      %v7939 = vunpack.c.l.b16 %v902
      %v7940 = vpack.c.b16 %v7936, %v7935
      %v7941 = vpack.c.b16 %v7938, %v7937
      %v7942 = vpack.c.b16 %v7939, %v7939
      %v7946 = vsel %vm989, %v314, 0
      %v7949 = vsel %vm993, %v7942, 0
      %7951 = vmatprep.subr.bf16.mxu0 0
      %7952 = vmatpush1.bf16.msra.mxu0 0
      %7953 = vmatprep.subr.bf16.mxu0 0
      %7954 = vmatpush1.bf16.msra.mxu0 0
      %7955 = vmatprep.subr.bf16.mxu0 0
      %7956 = vmatpush1.bf16.msra.mxu0 0
      %7957 = vmatprep.subr.bf16.mxu0 0
      %7958 = vmatpush1.bf16.msra.mxu0 0
      %7959 = vmatprep.subr.bf16.mxu0 0
      %7960 = vmatpush1.bf16.msra.mxu0 0
      %7961 = vmatprep.subr.bf16.mxu0 0
      %7962 = vmatpush1.bf16.msra.mxu0 %v7949
      %7963 = vmatprep.subr.bf16.mxu0 0
      %7964 = vmatpush1.bf16.msra.mxu0 %v7941
      %7965 = vmatprep.subr.bf16.mxu0 0
      %7966 = vmatpush1.bf16.msra.mxu0 %v7940
      %7967 = vmatprep.subr.bf16.mxu0 0
      %7968 = vmatpush2.bf16.msra.mxu0 0
      %7969 = vmatprep.subr.bf16.mxu0 0
      %7970 = vmatpush2.bf16.msra.mxu0 0
      %7971 = vmatprep.subr.bf16.mxu0 0
      %7972 = vmatpush2.bf16.msra.mxu0 0
      %7973 = vmatprep.subr.bf16.mxu0 0
      %7974 = vmatpush2.bf16.msra.mxu0 0
      %7975 = vmatprep.subr.bf16.mxu0 0
      %7976 = vmatpush2.bf16.msra.mxu0 0
      %7977 = vmatprep.subr.bf16.mxu0 0
      %7978 = vmatpush2.bf16.msra.mxu0 0
      %7979 = vmatprep.subr.bf16.mxu0 0
      %7980 = vmatpush2.bf16.msra.mxu0 0
      %7981 = vmatprep.subr.bf16.mxu0 0
      %7982 = vmatpush2.bf16.msra.mxu0 0
      %7983 = vmatprep.mubr.bf16.mxu0 0
      %7984 = vmatmul.mubr.bf16.gmra.mxu0 %v7946
      %v7985 = vpop.f32.mrf.mxu0
      %v7986 = vadd.f32 %v972, %v7985
      %v7987 = vpop.f32.mrf.mxu0
      %v7988 = vpop.f32.mrf.mxu0
      %v7989 = vpop.f32.mrf.mxu0
      %7990 = vdwg.mxu0
      %v7996 = vunpack.c.l.b16 %v903
      %v7997 = vunpack.c.l.b16 %v904
      %v7998 = vunpack.c.l.b16 %v905
      %v7999 = vunpack.c.l.b16 %v906
      %v8000 = vunpack.c.l.b16 %v907
      %v8001 = vpack.c.b16 %v7997, %v7996
      %v8002 = vpack.c.b16 %v7999, %v7998
      %v8003 = vpack.c.b16 %v8000, %v8000
      %v8007 = vsel %vm989, %v315, 0
      %v8010 = vsel %vm993, %v8003, 0
      %8012 = vmatprep.subr.bf16.mxu0 0
      %8013 = vmatpush1.bf16.msra.mxu0 0
      %8014 = vmatprep.subr.bf16.mxu0 0
      %8015 = vmatpush1.bf16.msra.mxu0 0
      %8016 = vmatprep.subr.bf16.mxu0 0
      %8017 = vmatpush1.bf16.msra.mxu0 0
      %8018 = vmatprep.subr.bf16.mxu0 0
      %8019 = vmatpush1.bf16.msra.mxu0 0
      %8020 = vmatprep.subr.bf16.mxu0 0
      %8021 = vmatpush1.bf16.msra.mxu0 0
      %8022 = vmatprep.subr.bf16.mxu0 0
      %8023 = vmatpush1.bf16.msra.mxu0 %v8010
      %8024 = vmatprep.subr.bf16.mxu0 0
      %8025 = vmatpush1.bf16.msra.mxu0 %v8002
      %8026 = vmatprep.subr.bf16.mxu0 0
      %8027 = vmatpush1.bf16.msra.mxu0 %v8001
      %8028 = vmatprep.subr.bf16.mxu0 0
      %8029 = vmatpush2.bf16.msra.mxu0 0
      %8030 = vmatprep.subr.bf16.mxu0 0
      %8031 = vmatpush2.bf16.msra.mxu0 0
      %8032 = vmatprep.subr.bf16.mxu0 0
      %8033 = vmatpush2.bf16.msra.mxu0 0
      %8034 = vmatprep.subr.bf16.mxu0 0
      %8035 = vmatpush2.bf16.msra.mxu0 0
      %8036 = vmatprep.subr.bf16.mxu0 0
      %8037 = vmatpush2.bf16.msra.mxu0 0
      %8038 = vmatprep.subr.bf16.mxu0 0
      %8039 = vmatpush2.bf16.msra.mxu0 0
      %8040 = vmatprep.subr.bf16.mxu0 0
      %8041 = vmatpush2.bf16.msra.mxu0 0
      %8042 = vmatprep.subr.bf16.mxu0 0
      %8043 = vmatpush2.bf16.msra.mxu0 0
      %8044 = vmatprep.mubr.bf16.mxu0 0
      %8045 = vmatmul.mubr.bf16.gmra.mxu0 %v8007
      %v8046 = vpop.f32.mrf.mxu0
      %v8047 = vadd.f32 %v972, %v8046
      %v8048 = vpop.f32.mrf.mxu0
      %v8049 = vpop.f32.mrf.mxu0
      %v8050 = vpop.f32.mrf.mxu0
      %8051 = vdwg.mxu0
      %v8057 = vunpack.c.l.b16 %v908
      %v8058 = vunpack.c.l.b16 %v909
      %v8059 = vunpack.c.l.b16 %v910
      %v8060 = vunpack.c.l.b16 %v911
      %v8061 = vunpack.c.l.b16 %v912
      %v8062 = vpack.c.b16 %v8058, %v8057
      %v8063 = vpack.c.b16 %v8060, %v8059
      %v8064 = vpack.c.b16 %v8061, %v8061
      %v8068 = vsel %vm989, %v316, 0
      %v8071 = vsel %vm993, %v8064, 0
      %8073 = vmatprep.subr.bf16.mxu0 0
      %8074 = vmatpush1.bf16.msra.mxu0 0
      %8075 = vmatprep.subr.bf16.mxu0 0
      %8076 = vmatpush1.bf16.msra.mxu0 0
      %8077 = vmatprep.subr.bf16.mxu0 0
      %8078 = vmatpush1.bf16.msra.mxu0 0
      %8079 = vmatprep.subr.bf16.mxu0 0
      %8080 = vmatpush1.bf16.msra.mxu0 0
      %8081 = vmatprep.subr.bf16.mxu0 0
      %8082 = vmatpush1.bf16.msra.mxu0 0
      %8083 = vmatprep.subr.bf16.mxu0 0
      %8084 = vmatpush1.bf16.msra.mxu0 %v8071
      %8085 = vmatprep.subr.bf16.mxu0 0
      %8086 = vmatpush1.bf16.msra.mxu0 %v8063
      %8087 = vmatprep.subr.bf16.mxu0 0
      %8088 = vmatpush1.bf16.msra.mxu0 %v8062
      %8089 = vmatprep.subr.bf16.mxu0 0
      %8090 = vmatpush2.bf16.msra.mxu0 0
      %8091 = vmatprep.subr.bf16.mxu0 0
      %8092 = vmatpush2.bf16.msra.mxu0 0
      %8093 = vmatprep.subr.bf16.mxu0 0
      %8094 = vmatpush2.bf16.msra.mxu0 0
      %8095 = vmatprep.subr.bf16.mxu0 0
      %8096 = vmatpush2.bf16.msra.mxu0 0
      %8097 = vmatprep.subr.bf16.mxu0 0
      %8098 = vmatpush2.bf16.msra.mxu0 0
      %8099 = vmatprep.subr.bf16.mxu0 0
      %8100 = vmatpush2.bf16.msra.mxu0 0
      %8101 = vmatprep.subr.bf16.mxu0 0
      %8102 = vmatpush2.bf16.msra.mxu0 0
      %8103 = vmatprep.subr.bf16.mxu0 0
      %8104 = vmatpush2.bf16.msra.mxu0 0
      %8105 = vmatprep.mubr.bf16.mxu0 0
      %8106 = vmatmul.mubr.bf16.gmra.mxu0 %v8068
      %v8107 = vpop.f32.mrf.mxu0
      %v8108 = vadd.f32 %v972, %v8107
      %v8109 = vpop.f32.mrf.mxu0
      %v8110 = vpop.f32.mrf.mxu0
      %v8111 = vpop.f32.mrf.mxu0
      %8112 = vdwg.mxu0
      %v8118 = vunpack.c.l.b16 %v913
      %v8119 = vunpack.c.l.b16 %v914
      %v8120 = vunpack.c.l.b16 %v915
      %v8121 = vunpack.c.l.b16 %v916
      %v8122 = vunpack.c.l.b16 %v917
      %v8123 = vpack.c.b16 %v8119, %v8118
      %v8124 = vpack.c.b16 %v8121, %v8120
      %v8125 = vpack.c.b16 %v8122, %v8122
      %v8129 = vsel %vm989, %v317, 0
      %v8132 = vsel %vm993, %v8125, 0
      %8134 = vmatprep.subr.bf16.mxu0 0
      %8135 = vmatpush1.bf16.msra.mxu0 0
      %8136 = vmatprep.subr.bf16.mxu0 0
      %8137 = vmatpush1.bf16.msra.mxu0 0
      %8138 = vmatprep.subr.bf16.mxu0 0
      %8139 = vmatpush1.bf16.msra.mxu0 0
      %8140 = vmatprep.subr.bf16.mxu0 0
      %8141 = vmatpush1.bf16.msra.mxu0 0
      %8142 = vmatprep.subr.bf16.mxu0 0
      %8143 = vmatpush1.bf16.msra.mxu0 0
      %8144 = vmatprep.subr.bf16.mxu0 0
      %8145 = vmatpush1.bf16.msra.mxu0 %v8132
      %8146 = vmatprep.subr.bf16.mxu0 0
      %8147 = vmatpush1.bf16.msra.mxu0 %v8124
      %8148 = vmatprep.subr.bf16.mxu0 0
      %8149 = vmatpush1.bf16.msra.mxu0 %v8123
      %8150 = vmatprep.subr.bf16.mxu0 0
      %8151 = vmatpush2.bf16.msra.mxu0 0
      %8152 = vmatprep.subr.bf16.mxu0 0
      %8153 = vmatpush2.bf16.msra.mxu0 0
      %8154 = vmatprep.subr.bf16.mxu0 0
      %8155 = vmatpush2.bf16.msra.mxu0 0
      %8156 = vmatprep.subr.bf16.mxu0 0
      %8157 = vmatpush2.bf16.msra.mxu0 0
      %8158 = vmatprep.subr.bf16.mxu0 0
      %8159 = vmatpush2.bf16.msra.mxu0 0
      %8160 = vmatprep.subr.bf16.mxu0 0
      %8161 = vmatpush2.bf16.msra.mxu0 0
      %8162 = vmatprep.subr.bf16.mxu0 0
      %8163 = vmatpush2.bf16.msra.mxu0 0
      %8164 = vmatprep.subr.bf16.mxu0 0
      %8165 = vmatpush2.bf16.msra.mxu0 0
      %8166 = vmatprep.mubr.bf16.mxu0 0
      %8167 = vmatmul.mubr.bf16.gmra.mxu0 %v8129
      %v8168 = vpop.f32.mrf.mxu0
      %v8169 = vadd.f32 %v972, %v8168
      %v8170 = vpop.f32.mrf.mxu0
      %v8171 = vpop.f32.mrf.mxu0
      %v8172 = vpop.f32.mrf.mxu0
      %8173 = vdwg.mxu0
      %v8179 = vunpack.c.l.b16 %v918
      %v8180 = vunpack.c.l.b16 %v919
      %v8181 = vunpack.c.l.b16 %v920
      %v8182 = vunpack.c.l.b16 %v921
      %v8183 = vunpack.c.l.b16 %v922
      %v8184 = vpack.c.b16 %v8180, %v8179
      %v8185 = vpack.c.b16 %v8182, %v8181
      %v8186 = vpack.c.b16 %v8183, %v8183
      %v8190 = vsel %vm989, %v318, 0
      %v8193 = vsel %vm993, %v8186, 0
      %8195 = vmatprep.subr.bf16.mxu0 0
      %8196 = vmatpush1.bf16.msra.mxu0 0
      %8197 = vmatprep.subr.bf16.mxu0 0
      %8198 = vmatpush1.bf16.msra.mxu0 0
      %8199 = vmatprep.subr.bf16.mxu0 0
      %8200 = vmatpush1.bf16.msra.mxu0 0
      %8201 = vmatprep.subr.bf16.mxu0 0
      %8202 = vmatpush1.bf16.msra.mxu0 0
      %8203 = vmatprep.subr.bf16.mxu0 0
      %8204 = vmatpush1.bf16.msra.mxu0 0
      %8205 = vmatprep.subr.bf16.mxu0 0
      %8206 = vmatpush1.bf16.msra.mxu0 %v8193
      %8207 = vmatprep.subr.bf16.mxu0 0
      %8208 = vmatpush1.bf16.msra.mxu0 %v8185
      %8209 = vmatprep.subr.bf16.mxu0 0
      %8210 = vmatpush1.bf16.msra.mxu0 %v8184
      %8211 = vmatprep.subr.bf16.mxu0 0
      %8212 = vmatpush2.bf16.msra.mxu0 0
      %8213 = vmatprep.subr.bf16.mxu0 0
      %8214 = vmatpush2.bf16.msra.mxu0 0
      %8215 = vmatprep.subr.bf16.mxu0 0
      %8216 = vmatpush2.bf16.msra.mxu0 0
      %8217 = vmatprep.subr.bf16.mxu0 0
      %8218 = vmatpush2.bf16.msra.mxu0 0
      %8219 = vmatprep.subr.bf16.mxu0 0
      %8220 = vmatpush2.bf16.msra.mxu0 0
      %8221 = vmatprep.subr.bf16.mxu0 0
      %8222 = vmatpush2.bf16.msra.mxu0 0
      %8223 = vmatprep.subr.bf16.mxu0 0
      %8224 = vmatpush2.bf16.msra.mxu0 0
      %8225 = vmatprep.subr.bf16.mxu0 0
      %8226 = vmatpush2.bf16.msra.mxu0 0
      %8227 = vmatprep.mubr.bf16.mxu0 0
      %8228 = vmatmul.mubr.bf16.gmra.mxu0 %v8190
      %v8229 = vpop.f32.mrf.mxu0
      %v8230 = vadd.f32 %v972, %v8229
      %v8231 = vpop.f32.mrf.mxu0
      %v8232 = vpop.f32.mrf.mxu0
      %v8233 = vpop.f32.mrf.mxu0
      %8234 = vdwg.mxu0
      %v8240 = vunpack.c.l.b16 %v923
      %v8241 = vunpack.c.l.b16 %v924
      %v8242 = vunpack.c.l.b16 %v925
      %v8243 = vunpack.c.l.b16 %v926
      %v8244 = vunpack.c.l.b16 %v927
      %v8245 = vpack.c.b16 %v8241, %v8240
      %v8246 = vpack.c.b16 %v8243, %v8242
      %v8247 = vpack.c.b16 %v8244, %v8244
      %v8251 = vsel %vm989, %v319, 0
      %v8254 = vsel %vm993, %v8247, 0
      %8256 = vmatprep.subr.bf16.mxu0 0
      %8257 = vmatpush1.bf16.msra.mxu0 0
      %8258 = vmatprep.subr.bf16.mxu0 0
      %8259 = vmatpush1.bf16.msra.mxu0 0
      %8260 = vmatprep.subr.bf16.mxu0 0
      %8261 = vmatpush1.bf16.msra.mxu0 0
      %8262 = vmatprep.subr.bf16.mxu0 0
      %8263 = vmatpush1.bf16.msra.mxu0 0
      %8264 = vmatprep.subr.bf16.mxu0 0
      %8265 = vmatpush1.bf16.msra.mxu0 0
      %8266 = vmatprep.subr.bf16.mxu0 0
      %8267 = vmatpush1.bf16.msra.mxu0 %v8254
      %8268 = vmatprep.subr.bf16.mxu0 0
      %8269 = vmatpush1.bf16.msra.mxu0 %v8246
      %8270 = vmatprep.subr.bf16.mxu0 0
      %8271 = vmatpush1.bf16.msra.mxu0 %v8245
      %8272 = vmatprep.subr.bf16.mxu0 0
      %8273 = vmatpush2.bf16.msra.mxu0 0
      %8274 = vmatprep.subr.bf16.mxu0 0
      %8275 = vmatpush2.bf16.msra.mxu0 0
      %8276 = vmatprep.subr.bf16.mxu0 0
      %8277 = vmatpush2.bf16.msra.mxu0 0
      %8278 = vmatprep.subr.bf16.mxu0 0
      %8279 = vmatpush2.bf16.msra.mxu0 0
      %8280 = vmatprep.subr.bf16.mxu0 0
      %8281 = vmatpush2.bf16.msra.mxu0 0
      %8282 = vmatprep.subr.bf16.mxu0 0
      %8283 = vmatpush2.bf16.msra.mxu0 0
      %8284 = vmatprep.subr.bf16.mxu0 0
      %8285 = vmatpush2.bf16.msra.mxu0 0
      %8286 = vmatprep.subr.bf16.mxu0 0
      %8287 = vmatpush2.bf16.msra.mxu0 0
      %8288 = vmatprep.mubr.bf16.mxu0 0
      %8289 = vmatmul.mubr.bf16.gmra.mxu0 %v8251
      %v8290 = vpop.f32.mrf.mxu0
      %v8291 = vadd.f32 %v972, %v8290
      %v8292 = vpop.f32.mrf.mxu0
      %v8293 = vpop.f32.mrf.mxu0
      %v8294 = vpop.f32.mrf.mxu0
      %8295 = vdwg.mxu0
      %v8301 = vunpack.c.l.b16 %v928
      %v8302 = vunpack.c.l.b16 %v929
      %v8303 = vunpack.c.l.b16 %v930
      %v8304 = vunpack.c.l.b16 %v931
      %v8305 = vunpack.c.l.b16 %v932
      %v8306 = vpack.c.b16 %v8302, %v8301
      %v8307 = vpack.c.b16 %v8304, %v8303
      %v8308 = vpack.c.b16 %v8305, %v8305
      %v8312 = vsel %vm989, %v320, 0
      %v8315 = vsel %vm993, %v8308, 0
      %8317 = vmatprep.subr.bf16.mxu0 0
      %8318 = vmatpush1.bf16.msra.mxu0 0
      %8319 = vmatprep.subr.bf16.mxu0 0
      %8320 = vmatpush1.bf16.msra.mxu0 0
      %8321 = vmatprep.subr.bf16.mxu0 0
      %8322 = vmatpush1.bf16.msra.mxu0 0
      %8323 = vmatprep.subr.bf16.mxu0 0
      %8324 = vmatpush1.bf16.msra.mxu0 0
      %8325 = vmatprep.subr.bf16.mxu0 0
      %8326 = vmatpush1.bf16.msra.mxu0 0
      %8327 = vmatprep.subr.bf16.mxu0 0
      %8328 = vmatpush1.bf16.msra.mxu0 %v8315
      %8329 = vmatprep.subr.bf16.mxu0 0
      %8330 = vmatpush1.bf16.msra.mxu0 %v8307
      %8331 = vmatprep.subr.bf16.mxu0 0
      %8332 = vmatpush1.bf16.msra.mxu0 %v8306
      %8333 = vmatprep.subr.bf16.mxu0 0
      %8334 = vmatpush2.bf16.msra.mxu0 0
      %8335 = vmatprep.subr.bf16.mxu0 0
      %8336 = vmatpush2.bf16.msra.mxu0 0
      %8337 = vmatprep.subr.bf16.mxu0 0
      %8338 = vmatpush2.bf16.msra.mxu0 0
      %8339 = vmatprep.subr.bf16.mxu0 0
      %8340 = vmatpush2.bf16.msra.mxu0 0
      %8341 = vmatprep.subr.bf16.mxu0 0
      %8342 = vmatpush2.bf16.msra.mxu0 0
      %8343 = vmatprep.subr.bf16.mxu0 0
      %8344 = vmatpush2.bf16.msra.mxu0 0
      %8345 = vmatprep.subr.bf16.mxu0 0
      %8346 = vmatpush2.bf16.msra.mxu0 0
      %8347 = vmatprep.subr.bf16.mxu0 0
      %8348 = vmatpush2.bf16.msra.mxu0 0
      %8349 = vmatprep.mubr.bf16.mxu0 0
      %8350 = vmatmul.mubr.bf16.gmra.mxu0 %v8312
      %v8351 = vpop.f32.mrf.mxu0
      %v8352 = vadd.f32 %v972, %v8351
      %v8353 = vpop.f32.mrf.mxu0
      %v8354 = vpop.f32.mrf.mxu0
      %v8355 = vpop.f32.mrf.mxu0
      %8356 = vdwg.mxu0
      %v8362 = vunpack.c.l.b16 %v933
      %v8363 = vunpack.c.l.b16 %v934
      %v8364 = vunpack.c.l.b16 %v935
      %v8365 = vunpack.c.l.b16 %v936
      %v8366 = vunpack.c.l.b16 %v937
      %v8367 = vpack.c.b16 %v8363, %v8362
      %v8368 = vpack.c.b16 %v8365, %v8364
      %v8369 = vpack.c.b16 %v8366, %v8366
      %v8373 = vsel %vm989, %v321, 0
      %v8376 = vsel %vm993, %v8369, 0
      %8378 = vmatprep.subr.bf16.mxu0 0
      %8379 = vmatpush1.bf16.msra.mxu0 0
      %8380 = vmatprep.subr.bf16.mxu0 0
      %8381 = vmatpush1.bf16.msra.mxu0 0
      %8382 = vmatprep.subr.bf16.mxu0 0
      %8383 = vmatpush1.bf16.msra.mxu0 0
      %8384 = vmatprep.subr.bf16.mxu0 0
      %8385 = vmatpush1.bf16.msra.mxu0 0
      %8386 = vmatprep.subr.bf16.mxu0 0
      %8387 = vmatpush1.bf16.msra.mxu0 0
      %8388 = vmatprep.subr.bf16.mxu0 0
      %8389 = vmatpush1.bf16.msra.mxu0 %v8376
      %8390 = vmatprep.subr.bf16.mxu0 0
      %8391 = vmatpush1.bf16.msra.mxu0 %v8368
      %8392 = vmatprep.subr.bf16.mxu0 0
      %8393 = vmatpush1.bf16.msra.mxu0 %v8367
      %8394 = vmatprep.subr.bf16.mxu0 0
      %8395 = vmatpush2.bf16.msra.mxu0 0
      %8396 = vmatprep.subr.bf16.mxu0 0
      %8397 = vmatpush2.bf16.msra.mxu0 0
      %8398 = vmatprep.subr.bf16.mxu0 0
      %8399 = vmatpush2.bf16.msra.mxu0 0
      %8400 = vmatprep.subr.bf16.mxu0 0
      %8401 = vmatpush2.bf16.msra.mxu0 0
      %8402 = vmatprep.subr.bf16.mxu0 0
      %8403 = vmatpush2.bf16.msra.mxu0 0
      %8404 = vmatprep.subr.bf16.mxu0 0
      %8405 = vmatpush2.bf16.msra.mxu0 0
      %8406 = vmatprep.subr.bf16.mxu0 0
      %8407 = vmatpush2.bf16.msra.mxu0 0
      %8408 = vmatprep.subr.bf16.mxu0 0
      %8409 = vmatpush2.bf16.msra.mxu0 0
      %8410 = vmatprep.mubr.bf16.mxu0 0
      %8411 = vmatmul.mubr.bf16.gmra.mxu0 %v8373
      %v8412 = vpop.f32.mrf.mxu0
      %v8413 = vadd.f32 %v972, %v8412
      %v8414 = vpop.f32.mrf.mxu0
      %v8415 = vpop.f32.mrf.mxu0
      %v8416 = vpop.f32.mrf.mxu0
      %8417 = vdwg.mxu0
      %v8423 = vunpack.c.l.b16 %v938
      %v8424 = vunpack.c.l.b16 %v939
      %v8425 = vunpack.c.l.b16 %v940
      %v8426 = vunpack.c.l.b16 %v941
      %v8427 = vunpack.c.l.b16 %v942
      %v8428 = vpack.c.b16 %v8424, %v8423
      %v8429 = vpack.c.b16 %v8426, %v8425
      %v8430 = vpack.c.b16 %v8427, %v8427
      %v8434 = vsel %vm989, %v322, 0
      %v8437 = vsel %vm993, %v8430, 0
      %8439 = vmatprep.subr.bf16.mxu0 0
      %8440 = vmatpush1.bf16.msra.mxu0 0
      %8441 = vmatprep.subr.bf16.mxu0 0
      %8442 = vmatpush1.bf16.msra.mxu0 0
      %8443 = vmatprep.subr.bf16.mxu0 0
      %8444 = vmatpush1.bf16.msra.mxu0 0
      %8445 = vmatprep.subr.bf16.mxu0 0
      %8446 = vmatpush1.bf16.msra.mxu0 0
      %8447 = vmatprep.subr.bf16.mxu0 0
      %8448 = vmatpush1.bf16.msra.mxu0 0
      %8449 = vmatprep.subr.bf16.mxu0 0
      %8450 = vmatpush1.bf16.msra.mxu0 %v8437
      %8451 = vmatprep.subr.bf16.mxu0 0
      %8452 = vmatpush1.bf16.msra.mxu0 %v8429
      %8453 = vmatprep.subr.bf16.mxu0 0
      %8454 = vmatpush1.bf16.msra.mxu0 %v8428
      %8455 = vmatprep.subr.bf16.mxu0 0
      %8456 = vmatpush2.bf16.msra.mxu0 0
      %8457 = vmatprep.subr.bf16.mxu0 0
      %8458 = vmatpush2.bf16.msra.mxu0 0
      %8459 = vmatprep.subr.bf16.mxu0 0
      %8460 = vmatpush2.bf16.msra.mxu0 0
      %8461 = vmatprep.subr.bf16.mxu0 0
      %8462 = vmatpush2.bf16.msra.mxu0 0
      %8463 = vmatprep.subr.bf16.mxu0 0
      %8464 = vmatpush2.bf16.msra.mxu0 0
      %8465 = vmatprep.subr.bf16.mxu0 0
      %8466 = vmatpush2.bf16.msra.mxu0 0
      %8467 = vmatprep.subr.bf16.mxu0 0
      %8468 = vmatpush2.bf16.msra.mxu0 0
      %8469 = vmatprep.subr.bf16.mxu0 0
      %8470 = vmatpush2.bf16.msra.mxu0 0
      %8471 = vmatprep.mubr.bf16.mxu0 0
      %8472 = vmatmul.mubr.bf16.gmra.mxu0 %v8434
      %v8473 = vpop.f32.mrf.mxu0
      %v8474 = vadd.f32 %v972, %v8473
      %v8475 = vpop.f32.mrf.mxu0
      %v8476 = vpop.f32.mrf.mxu0
      %v8477 = vpop.f32.mrf.mxu0
      %8478 = vdwg.mxu0
      %v8484 = vunpack.c.l.b16 %v943
      %v8485 = vunpack.c.l.b16 %v944
      %v8486 = vunpack.c.l.b16 %v945
      %v8487 = vunpack.c.l.b16 %v946
      %v8488 = vunpack.c.l.b16 %v947
      %v8489 = vpack.c.b16 %v8485, %v8484
      %v8490 = vpack.c.b16 %v8487, %v8486
      %v8491 = vpack.c.b16 %v8488, %v8488
      %v8495 = vsel %vm989, %v323, 0
      %v8498 = vsel %vm993, %v8491, 0
      %8500 = vmatprep.subr.bf16.mxu0 0
      %8501 = vmatpush1.bf16.msra.mxu0 0
      %8502 = vmatprep.subr.bf16.mxu0 0
      %8503 = vmatpush1.bf16.msra.mxu0 0
      %8504 = vmatprep.subr.bf16.mxu0 0
      %8505 = vmatpush1.bf16.msra.mxu0 0
      %8506 = vmatprep.subr.bf16.mxu0 0
      %8507 = vmatpush1.bf16.msra.mxu0 0
      %8508 = vmatprep.subr.bf16.mxu0 0
      %8509 = vmatpush1.bf16.msra.mxu0 0
      %8510 = vmatprep.subr.bf16.mxu0 0
      %8511 = vmatpush1.bf16.msra.mxu0 %v8498
      %8512 = vmatprep.subr.bf16.mxu0 0
      %8513 = vmatpush1.bf16.msra.mxu0 %v8490
      %8514 = vmatprep.subr.bf16.mxu0 0
      %8515 = vmatpush1.bf16.msra.mxu0 %v8489
      %8516 = vmatprep.subr.bf16.mxu0 0
      %8517 = vmatpush2.bf16.msra.mxu0 0
      %8518 = vmatprep.subr.bf16.mxu0 0
      %8519 = vmatpush2.bf16.msra.mxu0 0
      %8520 = vmatprep.subr.bf16.mxu0 0
      %8521 = vmatpush2.bf16.msra.mxu0 0
      %8522 = vmatprep.subr.bf16.mxu0 0
      %8523 = vmatpush2.bf16.msra.mxu0 0
      %8524 = vmatprep.subr.bf16.mxu0 0
      %8525 = vmatpush2.bf16.msra.mxu0 0
      %8526 = vmatprep.subr.bf16.mxu0 0
      %8527 = vmatpush2.bf16.msra.mxu0 0
      %8528 = vmatprep.subr.bf16.mxu0 0
      %8529 = vmatpush2.bf16.msra.mxu0 0
      %8530 = vmatprep.subr.bf16.mxu0 0
      %8531 = vmatpush2.bf16.msra.mxu0 0
      %8532 = vmatprep.mubr.bf16.mxu0 0
      %8533 = vmatmul.mubr.bf16.gmra.mxu0 %v8495
      %v8534 = vpop.f32.mrf.mxu0
      %v8535 = vadd.f32 %v972, %v8534
      %v8536 = vpop.f32.mrf.mxu0
      %v8537 = vpop.f32.mrf.mxu0
      %v8538 = vpop.f32.mrf.mxu0
      %8539 = vdwg.mxu0
      %v8545 = vunpack.c.l.b16 %v948
      %v8546 = vunpack.c.l.b16 %v949
      %v8547 = vunpack.c.l.b16 %v950
      %v8548 = vunpack.c.l.b16 %v951
      %v8549 = vunpack.c.l.b16 %v952
      %v8550 = vpack.c.b16 %v8546, %v8545
      %v8551 = vpack.c.b16 %v8548, %v8547
      %v8552 = vpack.c.b16 %v8549, %v8549
      %v8556 = vsel %vm989, %v324, 0
      %v8559 = vsel %vm993, %v8552, 0
      %8561 = vmatprep.subr.bf16.mxu0 0
      %8562 = vmatpush1.bf16.msra.mxu0 0
      %8563 = vmatprep.subr.bf16.mxu0 0
      %8564 = vmatpush1.bf16.msra.mxu0 0
      %8565 = vmatprep.subr.bf16.mxu0 0
      %8566 = vmatpush1.bf16.msra.mxu0 0
      %8567 = vmatprep.subr.bf16.mxu0 0
      %8568 = vmatpush1.bf16.msra.mxu0 0
      %8569 = vmatprep.subr.bf16.mxu0 0
      %8570 = vmatpush1.bf16.msra.mxu0 0
      %8571 = vmatprep.subr.bf16.mxu0 0
      %8572 = vmatpush1.bf16.msra.mxu0 %v8559
      %8573 = vmatprep.subr.bf16.mxu0 0
      %8574 = vmatpush1.bf16.msra.mxu0 %v8551
      %8575 = vmatprep.subr.bf16.mxu0 0
      %8576 = vmatpush1.bf16.msra.mxu0 %v8550
      %8577 = vmatprep.subr.bf16.mxu0 0
      %8578 = vmatpush2.bf16.msra.mxu0 0
      %8579 = vmatprep.subr.bf16.mxu0 0
      %8580 = vmatpush2.bf16.msra.mxu0 0
      %8581 = vmatprep.subr.bf16.mxu0 0
      %8582 = vmatpush2.bf16.msra.mxu0 0
      %8583 = vmatprep.subr.bf16.mxu0 0
      %8584 = vmatpush2.bf16.msra.mxu0 0
      %8585 = vmatprep.subr.bf16.mxu0 0
      %8586 = vmatpush2.bf16.msra.mxu0 0
      %8587 = vmatprep.subr.bf16.mxu0 0
      %8588 = vmatpush2.bf16.msra.mxu0 0
      %8589 = vmatprep.subr.bf16.mxu0 0
      %8590 = vmatpush2.bf16.msra.mxu0 0
      %8591 = vmatprep.subr.bf16.mxu0 0
      %8592 = vmatpush2.bf16.msra.mxu0 0
      %8593 = vmatprep.mubr.bf16.mxu0 0
      %8594 = vmatmul.mubr.bf16.gmra.mxu0 %v8556
      %v8595 = vpop.f32.mrf.mxu0
      %v8596 = vadd.f32 %v972, %v8595
      %v8597 = vpop.f32.mrf.mxu0
      %v8598 = vpop.f32.mrf.mxu0
      %v8599 = vpop.f32.mrf.mxu0
      %8600 = vdwg.mxu0
      %v8606 = vunpack.c.l.b16 %v953
      %v8607 = vunpack.c.l.b16 %v954
      %v8608 = vunpack.c.l.b16 %v955
      %v8609 = vunpack.c.l.b16 %v956
      %v8610 = vunpack.c.l.b16 %v957
      %v8611 = vpack.c.b16 %v8607, %v8606
      %v8612 = vpack.c.b16 %v8609, %v8608
      %v8613 = vpack.c.b16 %v8610, %v8610
      %v8617 = vsel %vm989, %v325, 0
      %v8620 = vsel %vm993, %v8613, 0
      %8622 = vmatprep.subr.bf16.mxu0 0
      %8623 = vmatpush1.bf16.msra.mxu0 0
      %8624 = vmatprep.subr.bf16.mxu0 0
      %8625 = vmatpush1.bf16.msra.mxu0 0
      %8626 = vmatprep.subr.bf16.mxu0 0
      %8627 = vmatpush1.bf16.msra.mxu0 0
      %8628 = vmatprep.subr.bf16.mxu0 0
      %8629 = vmatpush1.bf16.msra.mxu0 0
      %8630 = vmatprep.subr.bf16.mxu0 0
      %8631 = vmatpush1.bf16.msra.mxu0 0
      %8632 = vmatprep.subr.bf16.mxu0 0
      %8633 = vmatpush1.bf16.msra.mxu0 %v8620
      %8634 = vmatprep.subr.bf16.mxu0 0
      %8635 = vmatpush1.bf16.msra.mxu0 %v8612
      %8636 = vmatprep.subr.bf16.mxu0 0
      %8637 = vmatpush1.bf16.msra.mxu0 %v8611
      %8638 = vmatprep.subr.bf16.mxu0 0
      %8639 = vmatpush2.bf16.msra.mxu0 0
      %8640 = vmatprep.subr.bf16.mxu0 0
      %8641 = vmatpush2.bf16.msra.mxu0 0
      %8642 = vmatprep.subr.bf16.mxu0 0
      %8643 = vmatpush2.bf16.msra.mxu0 0
      %8644 = vmatprep.subr.bf16.mxu0 0
      %8645 = vmatpush2.bf16.msra.mxu0 0
      %8646 = vmatprep.subr.bf16.mxu0 0
      %8647 = vmatpush2.bf16.msra.mxu0 0
      %8648 = vmatprep.subr.bf16.mxu0 0
      %8649 = vmatpush2.bf16.msra.mxu0 0
      %8650 = vmatprep.subr.bf16.mxu0 0
      %8651 = vmatpush2.bf16.msra.mxu0 0
      %8652 = vmatprep.subr.bf16.mxu0 0
      %8653 = vmatpush2.bf16.msra.mxu0 0
      %8654 = vmatprep.mubr.bf16.mxu0 0
      %8655 = vmatmul.mubr.bf16.gmra.mxu0 %v8617
      %v8656 = vpop.f32.mrf.mxu0
      %v8657 = vadd.f32 %v972, %v8656
      %v8658 = vpop.f32.mrf.mxu0
      %v8659 = vpop.f32.mrf.mxu0
      %v8660 = vpop.f32.mrf.mxu0
      %8661 = vdwg.mxu0
      %v8667 = vunpack.c.l.b16 %v958
      %v8668 = vunpack.c.l.b16 %v959
      %v8669 = vunpack.c.l.b16 %v960
      %v8670 = vunpack.c.l.b16 %v961
      %v8671 = vunpack.c.l.b16 %v962
      %v8672 = vpack.c.b16 %v8668, %v8667
      %v8673 = vpack.c.b16 %v8670, %v8669
      %v8674 = vpack.c.b16 %v8671, %v8671
      %v8678 = vsel %vm989, %v326, 0
      %v8681 = vsel %vm993, %v8674, 0
      %8683 = vmatprep.subr.bf16.mxu0 0
      %8684 = vmatpush1.bf16.msra.mxu0 0
      %8685 = vmatprep.subr.bf16.mxu0 0
      %8686 = vmatpush1.bf16.msra.mxu0 0
      %8687 = vmatprep.subr.bf16.mxu0 0
      %8688 = vmatpush1.bf16.msra.mxu0 0
      %8689 = vmatprep.subr.bf16.mxu0 0
      %8690 = vmatpush1.bf16.msra.mxu0 0
      %8691 = vmatprep.subr.bf16.mxu0 0
      %8692 = vmatpush1.bf16.msra.mxu0 0
      %8693 = vmatprep.subr.bf16.mxu0 0
      %8694 = vmatpush1.bf16.msra.mxu0 %v8681
      %8695 = vmatprep.subr.bf16.mxu0 0
      %8696 = vmatpush1.bf16.msra.mxu0 %v8673
      %8697 = vmatprep.subr.bf16.mxu0 0
      %8698 = vmatpush1.bf16.msra.mxu0 %v8672
      %8699 = vmatprep.subr.bf16.mxu0 0
      %8700 = vmatpush2.bf16.msra.mxu0 0
      %8701 = vmatprep.subr.bf16.mxu0 0
      %8702 = vmatpush2.bf16.msra.mxu0 0
      %8703 = vmatprep.subr.bf16.mxu0 0
      %8704 = vmatpush2.bf16.msra.mxu0 0
      %8705 = vmatprep.subr.bf16.mxu0 0
      %8706 = vmatpush2.bf16.msra.mxu0 0
      %8707 = vmatprep.subr.bf16.mxu0 0
      %8708 = vmatpush2.bf16.msra.mxu0 0
      %8709 = vmatprep.subr.bf16.mxu0 0
      %8710 = vmatpush2.bf16.msra.mxu0 0
      %8711 = vmatprep.subr.bf16.mxu0 0
      %8712 = vmatpush2.bf16.msra.mxu0 0
      %8713 = vmatprep.subr.bf16.mxu0 0
      %8714 = vmatpush2.bf16.msra.mxu0 0
      %8715 = vmatprep.mubr.bf16.mxu0 0
      %8716 = vmatmul.mubr.bf16.gmra.mxu0 %v8678
      %v8717 = vpop.f32.mrf.mxu0
      %v8718 = vadd.f32 %v972, %v8717
      %v8719 = vpop.f32.mrf.mxu0
      %v8720 = vpop.f32.mrf.mxu0
      %v8721 = vpop.f32.mrf.mxu0
      %8722 = vdwg.mxu0
      %v8728 = vunpack.c.l.b16 %v963
      %v8729 = vunpack.c.l.b16 %v964
      %v8730 = vunpack.c.l.b16 %v965
      %v8731 = vunpack.c.l.b16 %v966
      %v8732 = vunpack.c.l.b16 %v967
      %v8733 = vpack.c.b16 %v8729, %v8728
      %v8734 = vpack.c.b16 %v8731, %v8730
      %v8735 = vpack.c.b16 %v8732, %v8732
      %v8739 = vsel %vm989, %v327, 0
      %v8742 = vsel %vm993, %v8735, 0
      %8744 = vmatprep.subr.bf16.mxu0 0
      %8745 = vmatpush1.bf16.msra.mxu0 0
      %8746 = vmatprep.subr.bf16.mxu0 0
      %8747 = vmatpush1.bf16.msra.mxu0 0
      %8748 = vmatprep.subr.bf16.mxu0 0
      %8749 = vmatpush1.bf16.msra.mxu0 0
      %8750 = vmatprep.subr.bf16.mxu0 0
      %8751 = vmatpush1.bf16.msra.mxu0 0
      %8752 = vmatprep.subr.bf16.mxu0 0
      %8753 = vmatpush1.bf16.msra.mxu0 0
      %8754 = vmatprep.subr.bf16.mxu0 0
      %8755 = vmatpush1.bf16.msra.mxu0 %v8742
      %8756 = vmatprep.subr.bf16.mxu0 0
      %8757 = vmatpush1.bf16.msra.mxu0 %v8734
      %8758 = vmatprep.subr.bf16.mxu0 0
      %8759 = vmatpush1.bf16.msra.mxu0 %v8733
      %8760 = vmatprep.subr.bf16.mxu0 0
      %8761 = vmatpush2.bf16.msra.mxu0 0
      %8762 = vmatprep.subr.bf16.mxu0 0
      %8763 = vmatpush2.bf16.msra.mxu0 0
      %8764 = vmatprep.subr.bf16.mxu0 0
      %8765 = vmatpush2.bf16.msra.mxu0 0
      %8766 = vmatprep.subr.bf16.mxu0 0
      %8767 = vmatpush2.bf16.msra.mxu0 0
      %8768 = vmatprep.subr.bf16.mxu0 0
      %8769 = vmatpush2.bf16.msra.mxu0 0
      %8770 = vmatprep.subr.bf16.mxu0 0
      %8771 = vmatpush2.bf16.msra.mxu0 0
      %8772 = vmatprep.subr.bf16.mxu0 0
      %8773 = vmatpush2.bf16.msra.mxu0 0
      %8774 = vmatprep.subr.bf16.mxu0 0
      %8775 = vmatpush2.bf16.msra.mxu0 0
      %8776 = vmatprep.mubr.bf16.mxu0 0
      %8777 = vmatmul.mubr.bf16.gmra.mxu0 %v8739
      %v8778 = vpop.f32.mrf.mxu0
      %v8779 = vadd.f32 %v972, %v8778
      %v8780 = vpop.f32.mrf.mxu0
      %v8781 = vpop.f32.mrf.mxu0
      %v8782 = vpop.f32.mrf.mxu0
      %8783 = vdwg.mxu0
      %vm8784 = vcmask 15360
      %8785 = vst.msk [vmem:[%s197] sm:$0xff] %vm8784, %v1032
      %8786 = vst.msk [vmem:[%s197 + $0x8] sm:$0xff] %vm8784, %v1093
      %8787 = vst.msk [vmem:[%s197 + $0x10] sm:$0xff] %vm8784, %v1154
      %8788 = vst.msk [vmem:[%s197 + $0x18] sm:$0xff] %vm8784, %v1215
      %8789 = vst.msk [vmem:[%s197 + $0x20] sm:$0xff] %vm8784, %v1276
      %8790 = vst.msk [vmem:[%s197 + $0x28] sm:$0xff] %vm8784, %v1337
      %8791 = vst.msk [vmem:[%s197 + $0x30] sm:$0xff] %vm8784, %v1398
      %8792 = vst.msk [vmem:[%s197 + $0x38] sm:$0xff] %vm8784, %v1459
      %8793 = vst.msk [vmem:[%s197 + $0x40] sm:$0xff] %vm8784, %v1520
      %8794 = vst.msk [vmem:[%s197 + $0x48] sm:$0xff] %vm8784, %v1581
      %8795 = vst.msk [vmem:[%s197 + $0x50] sm:$0xff] %vm8784, %v1642
      %8796 = vst.msk [vmem:[%s197 + $0x58] sm:$0xff] %vm8784, %v1703
      %8797 = vst.msk [vmem:[%s197 + $0x60] sm:$0xff] %vm8784, %v1764
      %8798 = vst.msk [vmem:[%s197 + $0x68] sm:$0xff] %vm8784, %v1825
      %8799 = vst.msk [vmem:[%s197 + $0x70] sm:$0xff] %vm8784, %v1886
      %8800 = vst.msk [vmem:[%s197 + $0x78] sm:$0xff] %vm8784, %v1947
      %8801 = vst.msk [vmem:[%s197 + $0x80] sm:$0xff] %vm8784, %v2008
      %8802 = vst.msk [vmem:[%s197 + $0x88] sm:$0xff] %vm8784, %v2069
      %8803 = vst.msk [vmem:[%s197 + $0x90] sm:$0xff] %vm8784, %v2130
      %8804 = vst.msk [vmem:[%s197 + $0x98] sm:$0xff] %vm8784, %v2191
      %8805 = vst.msk [vmem:[%s197 + $0xa0] sm:$0xff] %vm8784, %v2252
      %8806 = vst.msk [vmem:[%s197 + $0xa8] sm:$0xff] %vm8784, %v2313
      %8807 = vst.msk [vmem:[%s197 + $0xb0] sm:$0xff] %vm8784, %v2374
      %8808 = vst.msk [vmem:[%s197 + $0xb8] sm:$0xff] %vm8784, %v2435
      %8809 = vst.msk [vmem:[%s197 + $0xc0] sm:$0xff] %vm8784, %v2496
      %8810 = vst.msk [vmem:[%s197 + $0xc8] sm:$0xff] %vm8784, %v2557
      %8811 = vst.msk [vmem:[%s197 + $0xd0] sm:$0xff] %vm8784, %v2618
      %8812 = vst.msk [vmem:[%s197 + $0xd8] sm:$0xff] %vm8784, %v2679
      %8813 = vst.msk [vmem:[%s197 + $0xe0] sm:$0xff] %vm8784, %v2740
      %8814 = vst.msk [vmem:[%s197 + $0xe8] sm:$0xff] %vm8784, %v2801
      %8815 = vst.msk [vmem:[%s197 + $0xf0] sm:$0xff] %vm8784, %v2862
      %8816 = vst.msk [vmem:[%s197 + $0xf8] sm:$0xff] %vm8784, %v2923
      %8817 = vst.msk [vmem:[%s197 + $0x100] sm:$0xff] %vm8784, %v2984
      %8818 = vst.msk [vmem:[%s197 + $0x108] sm:$0xff] %vm8784, %v3045
      %8819 = vst.msk [vmem:[%s197 + $0x110] sm:$0xff] %vm8784, %v3106
      %8820 = vst.msk [vmem:[%s197 + $0x118] sm:$0xff] %vm8784, %v3167
      %8821 = vst.msk [vmem:[%s197 + $0x120] sm:$0xff] %vm8784, %v3228
      %8822 = vst.msk [vmem:[%s197 + $0x128] sm:$0xff] %vm8784, %v3289
      %8823 = vst.msk [vmem:[%s197 + $0x130] sm:$0xff] %vm8784, %v3350
      %8824 = vst.msk [vmem:[%s197 + $0x138] sm:$0xff] %vm8784, %v3411
      %8825 = vst.msk [vmem:[%s197 + $0x140] sm:$0xff] %vm8784, %v3472
      %8826 = vst.msk [vmem:[%s197 + $0x148] sm:$0xff] %vm8784, %v3533
      %8827 = vst.msk [vmem:[%s197 + $0x150] sm:$0xff] %vm8784, %v3594
      %8828 = vst.msk [vmem:[%s197 + $0x158] sm:$0xff] %vm8784, %v3655
      %8829 = vst.msk [vmem:[%s197 + $0x160] sm:$0xff] %vm8784, %v3716
      %8830 = vst.msk [vmem:[%s197 + $0x168] sm:$0xff] %vm8784, %v3777
      %8831 = vst.msk [vmem:[%s197 + $0x170] sm:$0xff] %vm8784, %v3838
      %8832 = vst.msk [vmem:[%s197 + $0x178] sm:$0xff] %vm8784, %v3899
      %8833 = vst.msk [vmem:[%s197 + $0x180] sm:$0xff] %vm8784, %v3960
      %8834 = vst.msk [vmem:[%s197 + $0x188] sm:$0xff] %vm8784, %v4021
      %8835 = vst.msk [vmem:[%s197 + $0x190] sm:$0xff] %vm8784, %v4082
      %8836 = vst.msk [vmem:[%s197 + $0x198] sm:$0xff] %vm8784, %v4143
      %8837 = vst.msk [vmem:[%s197 + $0x1a0] sm:$0xff] %vm8784, %v4204
      %8838 = vst.msk [vmem:[%s197 + $0x1a8] sm:$0xff] %vm8784, %v4265
      %8839 = vst.msk [vmem:[%s197 + $0x1b0] sm:$0xff] %vm8784, %v4326
      %8840 = vst.msk [vmem:[%s197 + $0x1b8] sm:$0xff] %vm8784, %v4387
      %8841 = vst.msk [vmem:[%s197 + $0x1c0] sm:$0xff] %vm8784, %v4448
      %8842 = vst.msk [vmem:[%s197 + $0x1c8] sm:$0xff] %vm8784, %v4509
      %8843 = vst.msk [vmem:[%s197 + $0x1d0] sm:$0xff] %vm8784, %v4570
      %8844 = vst.msk [vmem:[%s197 + $0x1d8] sm:$0xff] %vm8784, %v4631
      %8845 = vst.msk [vmem:[%s197 + $0x1e0] sm:$0xff] %vm8784, %v4692
      %8846 = vst.msk [vmem:[%s197 + $0x1e8] sm:$0xff] %vm8784, %v4753
      %8847 = vst.msk [vmem:[%s197 + $0x1f0] sm:$0xff] %vm8784, %v4814
      %8848 = vst.msk [vmem:[%s197 + $0x1f8] sm:$0xff] %vm8784, %v4875
      %8849 = vst.msk [vmem:[%s197 + $0x200] sm:$0xff] %vm8784, %v4936
      %8850 = vst.msk [vmem:[%s197 + $0x208] sm:$0xff] %vm8784, %v4997
      %8851 = vst.msk [vmem:[%s197 + $0x210] sm:$0xff] %vm8784, %v5058
      %8852 = vst.msk [vmem:[%s197 + $0x218] sm:$0xff] %vm8784, %v5119
      %8853 = vst.msk [vmem:[%s197 + $0x220] sm:$0xff] %vm8784, %v5180
      %8854 = vst.msk [vmem:[%s197 + $0x228] sm:$0xff] %vm8784, %v5241
      %8855 = vst.msk [vmem:[%s197 + $0x230] sm:$0xff] %vm8784, %v5302
      %8856 = vst.msk [vmem:[%s197 + $0x238] sm:$0xff] %vm8784, %v5363
      %8857 = vst.msk [vmem:[%s197 + $0x240] sm:$0xff] %vm8784, %v5424
      %8858 = vst.msk [vmem:[%s197 + $0x248] sm:$0xff] %vm8784, %v5485
      %8859 = vst.msk [vmem:[%s197 + $0x250] sm:$0xff] %vm8784, %v5546
      %8860 = vst.msk [vmem:[%s197 + $0x258] sm:$0xff] %vm8784, %v5607
      %8861 = vst.msk [vmem:[%s197 + $0x260] sm:$0xff] %vm8784, %v5668
      %8862 = vst.msk [vmem:[%s197 + $0x268] sm:$0xff] %vm8784, %v5729
      %8863 = vst.msk [vmem:[%s197 + $0x270] sm:$0xff] %vm8784, %v5790
      %8864 = vst.msk [vmem:[%s197 + $0x278] sm:$0xff] %vm8784, %v5851
      %8865 = vst.msk [vmem:[%s197 + $0x280] sm:$0xff] %vm8784, %v5912
      %8866 = vst.msk [vmem:[%s197 + $0x288] sm:$0xff] %vm8784, %v5973
      %8867 = vst.msk [vmem:[%s197 + $0x290] sm:$0xff] %vm8784, %v6034
      %8868 = vst.msk [vmem:[%s197 + $0x298] sm:$0xff] %vm8784, %v6095
      %8869 = vst.msk [vmem:[%s197 + $0x2a0] sm:$0xff] %vm8784, %v6156
      %8870 = vst.msk [vmem:[%s197 + $0x2a8] sm:$0xff] %vm8784, %v6217
      %8871 = vst.msk [vmem:[%s197 + $0x2b0] sm:$0xff] %vm8784, %v6278
      %8872 = vst.msk [vmem:[%s197 + $0x2b8] sm:$0xff] %vm8784, %v6339
      %8873 = vst.msk [vmem:[%s197 + $0x2c0] sm:$0xff] %vm8784, %v6400
      %8874 = vst.msk [vmem:[%s197 + $0x2c8] sm:$0xff] %vm8784, %v6461
      %8875 = vst.msk [vmem:[%s197 + $0x2d0] sm:$0xff] %vm8784, %v6522
      %8876 = vst.msk [vmem:[%s197 + $0x2d8] sm:$0xff] %vm8784, %v6583
      %8877 = vst.msk [vmem:[%s197 + $0x2e0] sm:$0xff] %vm8784, %v6644
      %8878 = vst.msk [vmem:[%s197 + $0x2e8] sm:$0xff] %vm8784, %v6705
      %8879 = vst.msk [vmem:[%s197 + $0x2f0] sm:$0xff] %vm8784, %v6766
      %8880 = vst.msk [vmem:[%s197 + $0x2f8] sm:$0xff] %vm8784, %v6827
      %8881 = vst.msk [vmem:[%s197 + $0x300] sm:$0xff] %vm8784, %v6888
      %8882 = vst.msk [vmem:[%s197 + $0x308] sm:$0xff] %vm8784, %v6949
      %8883 = vst.msk [vmem:[%s197 + $0x310] sm:$0xff] %vm8784, %v7010
      %8884 = vst.msk [vmem:[%s197 + $0x318] sm:$0xff] %vm8784, %v7071
      %8885 = vst.msk [vmem:[%s197 + $0x320] sm:$0xff] %vm8784, %v7132
      %8886 = vst.msk [vmem:[%s197 + $0x328] sm:$0xff] %vm8784, %v7193
      %8887 = vst.msk [vmem:[%s197 + $0x330] sm:$0xff] %vm8784, %v7254
      %8888 = vst.msk [vmem:[%s197 + $0x338] sm:$0xff] %vm8784, %v7315
      %8889 = vst.msk [vmem:[%s197 + $0x340] sm:$0xff] %vm8784, %v7376
      %8890 = vst.msk [vmem:[%s197 + $0x348] sm:$0xff] %vm8784, %v7437
      %8891 = vst.msk [vmem:[%s197 + $0x350] sm:$0xff] %vm8784, %v7498
      %8892 = vst.msk [vmem:[%s197 + $0x358] sm:$0xff] %vm8784, %v7559
      %8893 = vst.msk [vmem:[%s197 + $0x360] sm:$0xff] %vm8784, %v7620
      %8894 = vst.msk [vmem:[%s197 + $0x368] sm:$0xff] %vm8784, %v7681
      %8895 = vst.msk [vmem:[%s197 + $0x370] sm:$0xff] %vm8784, %v7742
      %8896 = vst.msk [vmem:[%s197 + $0x378] sm:$0xff] %vm8784, %v7803
      %8897 = vst.msk [vmem:[%s197 + $0x380] sm:$0xff] %vm8784, %v7864
      %8898 = vst.msk [vmem:[%s197 + $0x388] sm:$0xff] %vm8784, %v7925
      %8899 = vst.msk [vmem:[%s197 + $0x390] sm:$0xff] %vm8784, %v7986
      %8900 = vst.msk [vmem:[%s197 + $0x398] sm:$0xff] %vm8784, %v8047
      %8901 = vst.msk [vmem:[%s197 + $0x3a0] sm:$0xff] %vm8784, %v8108
      %8902 = vst.msk [vmem:[%s197 + $0x3a8] sm:$0xff] %vm8784, %v8169
      %8903 = vst.msk [vmem:[%s197 + $0x3b0] sm:$0xff] %vm8784, %v8230
      %8904 = vst.msk [vmem:[%s197 + $0x3b8] sm:$0xff] %vm8784, %v8291
      %8905 = vst.msk [vmem:[%s197 + $0x3c0] sm:$0xff] %vm8784, %v8352
      %8906 = vst.msk [vmem:[%s197 + $0x3c8] sm:$0xff] %vm8784, %v8413
      %8907 = vst.msk [vmem:[%s197 + $0x3d0] sm:$0xff] %vm8784, %v8474
      %8908 = vst.msk [vmem:[%s197 + $0x3d8] sm:$0xff] %vm8784, %v8535
      %8909 = vst.msk [vmem:[%s197 + $0x3e0] sm:$0xff] %vm8784, %v8596
      %8910 = vst.msk [vmem:[%s197 + $0x3e8] sm:$0xff] %vm8784, %v8657
      %8911 = vst.msk [vmem:[%s197 + $0x3f0] sm:$0xff] %vm8784, %v8718
      %8912 = vst.msk [vmem:[%s197 + $0x3f8] sm:$0xff] %vm8784, %v8779
      %s8913 = smul.u32 128, %s14
      %p8914 = scmp.lt.s32.totalorder %s8913, 255
      %s8915 = scalar_select %p8914, %s8913, 255
      %s8916 = smul.addr %s8915, 8
      %s8917 = scalar_lea.vmem %s3, %s8916
      // Predicated region
      $region33: #{tpu_custom_call.1} parent=31 // pred_check
        %p8918 = pneg %p105
      $region34: #{tpu_custom_call.1} parent=31 // pred_check_branch
        %8920 = sbr.rel (%p8918) target = $region36
      $region35: #{tpu_custom_call.1} parent=31 // pred_region
        %s8921 = smul.u32 128, %s14
      $region36: #{tpu_custom_call.1} parent=31 // pred_fallthru
        _
    $region32: #{tpu_custom_call.1} parent=5 // pred_fallthru
      _
    %p8922 = scmp.le.s32.totalorder 2, %s9
    // Predicated region
    $region37: #{tpu_custom_call.1} parent=5 // pred_check
      %p8923 = pneg %p8922
    $region38: #{tpu_custom_call.1} parent=5 // pred_check_branch
      %8925 = sbr.rel (%p8923) target = $region40
    $region39: #{tpu_custom_call.1} parent=5 // pred_region
      %s8926 = ssub.s32 %s9, 2
      // Predicated region
      $region41: #{tpu_custom_call.1} parent=39 // pred_check
        %p8927 = pneg %p111
      $region42: #{tpu_custom_call.1} parent=39 // pred_check_branch
        %8929 = sbr.rel (%p8927) target = $region44
      $region43: #{tpu_custom_call.1} parent=39 // pred_region
        %s8930 = smul.u32 128, %s15
        %p8931 = scmp.lt.s32.totalorder %s8930, 255
        %s8932 = scalar_select %p8931, %s8930, 255
        %s8933 = smul.addr %s8932, 8
        %s8934 = scalar_lea.vmem %s3, %s8933
      $region44: #{tpu_custom_call.1} parent=39 // pred_fallthru
        _
    $region40: #{tpu_custom_call.1} parent=5 // pred_fallthru
      _
  $region6: #{tpu_custom_call.1} parent=0 // loop_footer
    %s13 = sadd.s32 1, %s9
  $region7: #{tpu_custom_call.1} parent=0 // loop_footer_branch
    %8 = sbr.rel target = $region3
  $region8: #{tpu_custom_call.1} parent=0 // loop_exit
    _

</llo_original>
